<compile_context>
chip_gen: v7x
topology: tpu7x:2x2x1
jax: 0.10.0
libtpu: 0.0.40
codegen_flags: <defaults>
</compile_context>

<pallas_src>
import functools
import math

import jax
import jax.numpy as jnp
from jax import lax
from jax.experimental import pallas as pl
from jax.experimental.pallas import tpu as pltpu

_MXU_DTYPE = jnp.bfloat16   # MXU operand / inter-kernel activation dtype
_APPROX_RECIP = True        # softmax 1/denominator on the EUP (~1e-3 rel err)


# ---------------------------------------------------------------------------
# VMEM budgeting helpers
# ---------------------------------------------------------------------------

@functools.lru_cache(maxsize=None)
def _vmem_limit_bytes():
    """Scoped-VMEM limit: ~28 MiB on v7x (64 MiB phys), ~56 MiB on v5e/v6e."""
    phys = 128 * 1024 * 1024
    try:
        phys = int(pltpu.get_tpu_info().vmem_capacity_bytes)
    except Exception:
        pass
    return int(phys * 0.44)


def _tile_rows(n_rows, bytes_per_row, resident_bytes, budget, max_rows):
    """Largest multiple-of-8 row tile whose double-buffered streamed blocks plus
    the resident blocks fit the VMEM budget (capped at max_rows)."""
    fit = (budget - resident_bytes) // max(2 * bytes_per_row, 1)
    cap = int(min(max_rows, fit))
    if cap >= n_rows:
        return int(n_rows)
    return max(cap - cap % 8, 8)


def _const_spec(block_shape, index_map):
    # Constant-index blocks (weights / biases).  On v7x these could be
    # single-buffered via pipeline_mode=pl.Buffered(1) to halve their VMEM
    # footprint; left at the default double-buffering for portability.
    return pl.BlockSpec(block_shape, index_map)


# ---------------------------------------------------------------------------
# Pallas kernels
# ---------------------------------------------------------------------------

def _fused_linear_kernel(x_ref, w_ref, b_ref, *o_refs, out_dims):
    # x: (tm, K) bf16, w: (K, sum(out_dims)) bf16, b: (1, sum(out_dims)) f32
    y = jnp.dot(x_ref[...], w_ref[...],
                preferred_element_type=jnp.float32) + b_ref[...]
    off = 0
    for o_ref, n in zip(o_refs, out_dims):
        o_ref[...] = y[:, off:off + n].astype(o_ref.dtype)
        off += n


def _linear_ln_kernel(x_ref, w_ref, b_ref, g_ref, bb_ref, o_ref):
    # Fused sr-conv-as-matmul + LayerNorm (statistics in f32).
    y = jnp.dot(x_ref[...], w_ref[...],
                preferred_element_type=jnp.float32) + b_ref[...]
    mu = jnp.mean(y, axis=-1, keepdims=True)
    var = jnp.mean(jnp.square(y - mu), axis=-1, keepdims=True)
    yn = (y - mu) * lax.rsqrt(var + 1e-5)
    o_ref[...] = (yn * g_ref[...] + bb_ref[...]).astype(o_ref.dtype)


def _attn_resident_kernel(q_ref, k_ref, v_ref, pw_ref, pb_ref, o_ref, *,
                          num_heads, head_dim):
    """Whole-KV-resident attention + fused output projection.

    q_ref (1,tn,C) bf16 (softmax scale folded into the q projection),
    k_ref/v_ref (1,Nk,C) bf16, pw (C,C) bf16, pb (1,C) f32, o (1,tn,C) f32.
    Per-head contexts are concatenated in-register into a lane-dense (tn, C)
    slab and projected with ONE K=C matmul (no per-head K=head_dim matmuls,
    no VMEM accumulator read-modify-write, o_ref written exactly once).
    """
    q = q_ref[0]
    k = k_ref[0]
    v = v_ref[0]
    heads = []
    for h in range(num_heads):                         # static unroll (small)
        lo = h * head_dim
        qh = q[:, lo:lo + head_dim]
        kh = k[:, lo:lo + head_dim]
        vh = v[:, lo:lo + head_dim]
        s = lax.dot_general(qh, kh, (((1,), (1,)), ((), ())),
                            preferred_element_type=jnp.float32)    # (tn, Nk)
        s = s - jnp.max(s, axis=-1, keepdims=True)
        p = jnp.exp(s)
        p = p * pl.reciprocal(jnp.sum(p, axis=-1, keepdims=True),
                              approx=_APPROX_RECIP)
        heads.append(jnp.dot(p.astype(_MXU_DTYPE), vh,
                             preferred_element_type=jnp.float32))  # (tn, d)
    ctx = jnp.concatenate(heads, axis=-1).astype(_MXU_DTYPE)       # (tn, C)
    o_ref[0] = (jnp.dot(ctx, pw_ref[...], preferred_element_type=jnp.float32)
                + pb_ref[...]).astype(o_ref.dtype)


def _attn_flash_kernel(q_ref, k_ref, v_ref, pw_ref, pb_ref, o_ref,
                       m_ref, l_ref, acc_ref, *, num_heads, head_dim, n_kv):
    """Online-softmax fallback when KV does not fit VMEM (KV axis innermost)."""
    kv_i = pl.program_id(2)
    tk = k_ref.shape[1]

    @pl.when(kv_i == 0)
    def _():
        m_ref[...] = jnp.full(m_ref.shape, -jnp.inf, m_ref.dtype)
        l_ref[...] = jnp.zeros(l_ref.shape, l_ref.dtype)
        acc_ref[...] = jnp.zeros(acc_ref.shape, acc_ref.dtype)

    q = q_ref[0]
    k = k_ref[0]
    v = v_ref[0]
    if n_kv % tk != 0:   # mask padded KV columns of the (partial) last tile
        valid = (kv_i * tk + lax.broadcasted_iota(jnp.int32, (1, tk), 1)) < n_kv
    else:
        valid = None

    for h in range(num_heads):
        lo = h * head_dim
        qh = q[:, lo:lo + head_dim]
        kh = k[:, lo:lo + head_dim]
        vh = v[:, lo:lo + head_dim]
        s = lax.dot_general(qh, kh, (((1,), (1,)), ((), ())),
                            preferred_element_type=jnp.float32)    # (tn, tk)
        if valid is not None:
            s = jnp.where(valid, s, -jnp.inf)
        m_prev = m_ref[h]                                           # (tn, 1)
        m_new = jnp.maximum(m_prev, jnp.max(s, axis=-1, keepdims=True))
        alpha = jnp.exp(m_prev - m_new)
        p = jnp.exp(s - m_new)
        l_ref[h] = alpha * l_ref[h] + jnp.sum(p, axis=-1, keepdims=True)
        acc_ref[h] = alpha * acc_ref[h] + jnp.dot(
            p.astype(_MXU_DTYPE), vh, preferred_element_type=jnp.float32)
        m_ref[h] = m_new

    @pl.when(kv_i == pl.num_programs(2) - 1)
    def _():
        parts = [acc_ref[h] * pl.reciprocal(l_ref[h], approx=_APPROX_RECIP)
                 for h in range(num_heads)]
        ctx = jnp.concatenate(parts, axis=-1).astype(_MXU_DTYPE)    # (tn, C)
        o_ref[0] = (jnp.dot(ctx, pw_ref[...], preferred_element_type=jnp.float32)
                    + pb_ref[...]).astype(o_ref.dtype)


# ---------------------------------------------------------------------------
# pallas_call wrappers
# ---------------------------------------------------------------------------

def fused_linear(x2d, w, b, out_dims, *, out_dtype=_MXU_DTYPE, max_tile_m=1024):
    """y = x @ w + b, split along the output lanes into len(out_dims) arrays.

    One HBM pass over x, weight/bias VMEM-resident, M tiled on a 'parallel'
    grid axis.  Returns a tuple of arrays."""
    M, K = x2d.shape
    Ntot = int(w.shape[1])
    assert sum(out_dims) == Ntot
    limit = _vmem_limit_bytes()
    budget = (limit * 3) // 4
    resident = 2 * (K * Ntot * w.dtype.itemsize + 8 * Ntot * 4)
    row_bytes = K * x2d.dtype.itemsize + Ntot * jnp.dtype(out_dtype).itemsize
    tm = _tile_rows(M, row_bytes, resident, budget, max_tile_m)
    kern = functools.partial(_fused_linear_kernel, out_dims=tuple(out_dims))
    out_shape = tuple(jax.ShapeDtypeStruct((M, n), out_dtype) for n in out_dims)
    out_specs = tuple(pl.BlockSpec((tm, n), lambda i: (i, 0)) for n in out_dims)
    return pl.pallas_call(
        kern,
        out_shape=out_shape,
        grid=(pl.cdiv(M, tm),),
        in_specs=[
            pl.BlockSpec((tm, K), lambda i: (i, 0)),
            _const_spec((K, Ntot), lambda i: (0, 0)),
            _const_spec((1, Ntot), lambda i: (0, 0)),
        ],
        out_specs=out_specs,
        compiler_params=pltpu.CompilerParams(
            dimension_semantics=("parallel",),
            vmem_limit_bytes=limit),
    )(x2d, w, b)


def linear_layernorm(x2d, w, b, gamma, beta, *, out_dtype=_MXU_DTYPE,
                     max_tile_m=1024):
    M, K = x2d.shape
    Nout = int(w.shape[1])
    limit = _vmem_limit_bytes()
    budget = (limit * 3) // 4
    resident = 2 * (K * Nout * w.dtype.itemsize + 3 * 8 * Nout * 4)
    row_bytes = K * x2d.dtype.itemsize + Nout * jnp.dtype(out_dtype).itemsize
    tm = _tile_rows(M, row_bytes, resident, budget, max_tile_m)
    # TODO(synk): tile K ('arbitrary' grid axis + f32 accumulator, LN in the
    # epilogue) when K = sr^2*C alone exceeds the VMEM budget (huge sr_ratio).
    return pl.pallas_call(
        _linear_ln_kernel,
        out_shape=jax.ShapeDtypeStruct((M, Nout), out_dtype),
        grid=(pl.cdiv(M, tm),),
        in_specs=[
            pl.BlockSpec((tm, K), lambda i: (i, 0)),
            _const_spec((K, Nout), lambda i: (0, 0)),
            _const_spec((1, Nout), lambda i: (0, 0)),
            _const_spec((1, Nout), lambda i: (0, 0)),
            _const_spec((1, Nout), lambda i: (0, 0)),
        ],
        out_specs=pl.BlockSpec((tm, Nout), lambda i: (i, 0)),
        compiler_params=pltpu.CompilerParams(
            dimension_semantics=("parallel",),
            vmem_limit_bytes=limit),
    )(x2d, w, b, gamma, beta)


def attention_core(q, k, v, proj_w, proj_b, *, num_heads,
                   out_dtype=jnp.float32, force_flash=False,
                   max_tile_n=512, max_tile_kv=512):
    B, N, C = q.shape
    Nk = k.shape[1]
    assert C % num_heads == 0
    head_dim = C // num_heads
    limit = _vmem_limit_bytes()
    budget = (limit * 3) // 4
    act_isz = q.dtype.itemsize
    out_isz = jnp.dtype(out_dtype).itemsize
    proj_bytes = 2 * (C * C * proj_w.dtype.itemsize + 8 * C * 4)
    kv_resident = 2 * 2 * Nk * C * act_isz            # k + v, double-buffered
    row_bytes = C * act_isz + C * out_isz              # q in + o out per row

    use_resident = (not force_flash) and (kv_resident + proj_bytes <= budget // 2)

    if use_resident:
        tn = _tile_rows(N, row_bytes, kv_resident + proj_bytes, budget, max_tile_n)
        kern = functools.partial(_attn_resident_kernel,
                                 num_heads=num_heads, head_dim=head_dim)
        return pl.pallas_call(
            kern,
            out_shape=jax.ShapeDtypeStruct((B, N, C), out_dtype),
            grid=(B, pl.cdiv(N, tn)),
            in_specs=[
                pl.BlockSpec((1, tn, C), lambda b, n: (b, n, 0)),
                pl.BlockSpec((1, Nk, C), lambda b, n: (b, 0, 0)),
                pl.BlockSpec((1, Nk, C), lambda b, n: (b, 0, 0)),
                _const_spec((C, C), lambda b, n: (0, 0)),
                _const_spec((1, C), lambda b, n: (0, 0)),
            ],
            out_specs=pl.BlockSpec((1, tn, C), lambda b, n: (b, n, 0)),
            compiler_params=pltpu.CompilerParams(
                dimension_semantics=("parallel", "parallel"),
                vmem_limit_bytes=limit),
        )(q, k, v, proj_w, proj_b)

    # Flash fallback: KV on an innermost 'arbitrary' axis, online softmax.
    tn = N if N <= max_tile_n else max(max_tile_n - max_tile_n % 8, 8)
    tk = Nk if Nk <= max_tile_kv else max(max_tile_kv - max_tile_kv % 8, 8)
    kern = functools.partial(_attn_flash_kernel, num_heads=num_heads,
                             head_dim=head_dim, n_kv=Nk)
    return pl.pallas_call(
        kern,
        out_shape=jax.ShapeDtypeStruct((B, N, C), out_dtype),
        grid=(B, pl.cdiv(N, tn), pl.cdiv(Nk, tk)),
        in_specs=[
            pl.BlockSpec((1, tn, C), lambda b, n, s: (b, n, 0)),
            pl.BlockSpec((1, tk, C), lambda b, n, s: (b, s, 0)),
            pl.BlockSpec((1, tk, C), lambda b, n, s: (b, s, 0)),
            _const_spec((C, C), lambda b, n, s: (0, 0)),
            _const_spec((1, C), lambda b, n, s: (0, 0)),
        ],
        out_specs=pl.BlockSpec((1, tn, C), lambda b, n, s: (b, n, 0)),
        scratch_shapes=[
            pltpu.VMEM((num_heads, tn, 1), jnp.float32),           # running max
            pltpu.VMEM((num_heads, tn, 1), jnp.float32),           # running sum
            pltpu.VMEM((num_heads, tn, head_dim), jnp.float32),    # per-head acc
        ],
        compiler_params=pltpu.CompilerParams(
            dimension_semantics=("parallel", "parallel", "arbitrary"),
            vmem_limit_bytes=limit),
    )(q, k, v, proj_w, proj_b)


# ---------------------------------------------------------------------------
# Module: parameters + forward
# ---------------------------------------------------------------------------

def init_params(key, dim, num_heads, sr_ratio, dtype=jnp.float32):
    ks = jax.random.split(key, 4)

    def trunc_normal(k, shape, std=0.02):
        return jax.random.truncated_normal(k, -2.0, 2.0, shape, dtype) * std

    params = {
        # linear weights stored (in, out) so kernels compute x @ W
        "q_w": trunc_normal(ks[0], (dim, dim)),
        "q_b": jnp.zeros((dim,), dtype),               # qkv_bias=False
        "kv_w": trunc_normal(ks[1], (dim, 2 * dim)),
        "kv_b": jnp.zeros((2 * dim,), dtype),
        "proj_w": trunc_normal(ks[2], (dim, dim)),
        "proj_b": jnp.zeros((dim,), dtype),
    }
    if sr_ratio > 1:
        fan_out = sr_ratio * sr_ratio * dim
        # PyTorch conv weight layout (C_out, C_in, kh, kw)
        params["sr_w"] = (jax.random.normal(ks[3], (dim, dim, sr_ratio, sr_ratio),
                                            dtype) * math.sqrt(2.0 / fan_out))
        params["sr_b"] = jnp.zeros((dim,), dtype)
        params["norm_g"] = jnp.ones((dim,), dtype)
        params["norm_b"] = jnp.zeros((dim,), dtype)
    return params


def prepare_params(params, *, num_heads, sr_ratio):
    """One-time prep: fold the softmax scale into the q projection, reshape the
    sr conv to matmul form, and cast all matmul weights to bf16 (cast once here
    instead of per grid step).  Biases / LayerNorm affine stay in f32."""
    C = params["q_w"].shape[0]
    scale = (C // num_heads) ** -0.5
    qw = params["q_w"] * scale
    qb = params["q_b"] * scale
    out = {
        "proj_w": params["proj_w"].astype(_MXU_DTYPE),
        "proj_b": params["proj_b"].reshape(1, C).astype(jnp.float32),
    }
    if sr_ratio == 1:
        # single fused x @ [q | k | v] projection (one HBM pass over x)
        out["qkv_w"] = jnp.concatenate([qw, params["kv_w"]],
                                       axis=1).astype(_MXU_DTYPE)
        out["qkv_b"] = (jnp.concatenate([qb, params["kv_b"]])
                        .reshape(1, 3 * C).astype(jnp.float32))
    else:
        out["q_w"] = qw.astype(_MXU_DTYPE)
        out["q_b"] = qb.reshape(1, C).astype(jnp.float32)
        out["kv_w"] = params["kv_w"].astype(_MXU_DTYPE)
        out["kv_b"] = params["kv_b"].reshape(1, 2 * C).astype(jnp.float32)
        sr = sr_ratio
        out["sr_w"] = (params["sr_w"].transpose(2, 3, 1, 0)
                       .reshape(sr * sr * C, C).astype(_MXU_DTYPE))
        out["sr_b"] = params["sr_b"].reshape(1, C).astype(jnp.float32)
        out["norm_g"] = params["norm_g"].reshape(1, C).astype(jnp.float32)
        out["norm_b"] = params["norm_b"].reshape(1, C).astype(jnp.float32)
    return out


def attention_forward(prep, x, H, W, *, num_heads, sr_ratio,
                      force_flash=False, max_tile_n=512, max_tile_kv=512):
    """Forward pass of the Attention module (eval mode; dropout p=0.0)."""
    B, N, C = x.shape
    assert N == H * W
    xb = x.astype(_MXU_DTYPE)

    if sr_ratio == 1:
        q2, k2, v2 = fused_linear(xb.reshape(B * N, C),
                                  prep["qkv_w"], prep["qkv_b"], (C, C, C))
        Nk = N
    else:
        q2 = fused_linear(xb.reshape(B * N, C),
                          prep["q_w"], prep["q_b"], (C,))[0]
        sr = sr_ratio
        Hs, Ws = H // sr, W // sr
        patches = (xb.reshape(B, Hs, sr, Ws, sr, C)
                   .transpose(0, 1, 3, 2, 4, 5)
                   .reshape(B * Hs * Ws, sr * sr * C))
        x_ = linear_layernorm(patches, prep["sr_w"], prep["sr_b"],
                              prep["norm_g"], prep["norm_b"])
        k2, v2 = fused_linear(x_, prep["kv_w"], prep["kv_b"], (C, C))
        Nk = Hs * Ws

    q = q2.reshape(B, N, C)
    k = k2.reshape(B, Nk, C)
    v = v2.reshape(B, Nk, C)
    # attn_drop / proj_drop are p=0.0 -> identity in eval; omitted.
    return attention_core(q, k, v, prep["proj_w"], prep["proj_b"],
                          num_heads=num_heads, force_flash=force_flash,
                          max_tile_n=max_tile_n, max_tile_kv=max_tile_kv)


# Plain-JAX f32 reference (uses the raw PyTorch-layout params) for validation.
def attention_reference(params, x, H, W, *, num_heads, sr_ratio):
    B, N, C = x.shape
    d = C // num_heads
    scale = d ** (-0.5)
    q = (x @ params["q_w"] + params["q_b"]).reshape(B, N, num_heads, d).transpose(0, 2, 1, 3)
    if sr_ratio > 1:
        sr = sr_ratio
        Hs, Ws = H // sr, W // sr
        patches = (x.reshape(B, Hs, sr, Ws, sr, C)
                   .transpose(0, 1, 3, 2, 4, 5).reshape(B, Hs * Ws, sr * sr * C))
        w_mat = params["sr_w"].transpose(2, 3, 1, 0).reshape(sr * sr * C, C)
        x_ = patches @ w_mat + params["sr_b"]
        mu = x_.mean(-1, keepdims=True)
        var = ((x_ - mu) ** 2).mean(-1, keepdims=True)
        x_ = (x_ - mu) / jnp.sqrt(var + 1e-5) * params["norm_g"] + params["norm_b"]
    else:
        x_ = x
    Nk = x_.shape[1]
    kv = (x_ @ params["kv_w"] + params["kv_b"]).reshape(
        B, Nk, 2, num_heads, d).transpose(2, 0, 3, 1, 4)
    k_, v_ = kv[0], kv[1]
    attn = jnp.einsum("bhnd,bhmd->bhnm", q, k_) * scale
    attn = jax.nn.softmax(attn, axis=-1)
    o = jnp.einsum("bhnm,bhmd->bhnd", attn, v_).transpose(0, 2, 1, 3).reshape(B, N, C)
    return o @ params["proj_w"] + params["proj_b"]


if __name__ == "__main__":
    B, H, W = 2, 16, 16
    dim, num_heads = 64, 8
    N = H * W

    key = jax.random.PRNGKey(0)
    kp, kx = jax.random.split(key)
    x = jax.random.normal(kx, (B, N, dim), jnp.float32)

    def run_and_check(sr_ratio, **kw):
        params = init_params(kp, dim, num_heads, sr_ratio)
        prep = prepare_params(params, num_heads=num_heads, sr_ratio=sr_ratio)
        fwd = jax.jit(functools.partial(attention_forward, num_heads=num_heads,
                                        sr_ratio=sr_ratio, **kw),
                      static_argnums=(2, 3))
        out = jax.block_until_ready(fwd(prep, x, H, W))
        ref = attention_reference(params, x, H, W,
                                  num_heads=num_heads, sr_ratio=sr_ratio)
        assert out.shape == (B, N, dim)
        # bf16 activations / MXU operands (f32 accumulation, softmax & LN stats
        # in f32, EUP-approx softmax reciprocal) vs. a pure-f32 reference.
        err = float(jnp.max(jnp.abs(out - ref)) / (jnp.max(jnp.abs(ref)) + 1e-12))
        assert err < 5e-2, f"sr_ratio={sr_ratio} {kw}: rel-max err {err:.4f}"
        assert jnp.allclose(out, ref, atol=2e-2, rtol=2e-2)

    run_and_check(sr_ratio=2)                       # sr conv + LN, resident-KV path
    run_and_check(sr_ratio=1)                       # fused x @ [q|k|v] path
    run_and_check(sr_ratio=1, force_flash=True,     # KV-tiled online-softmax path
                  max_tile_kv=64)

    print("KERNEL_OK")
</pallas_src>

<mosaic_0001>
module attributes {stable_mosaic.version = 11 : i64} {
  func.func @_fused_linear_kernel(%arg0: i32, %arg1: memref<128x64xbf16, #tpu.memory_space<vmem>>, %arg2: memref<64x128xbf16, #tpu.memory_space<vmem>>, %arg3: memref<1x128xf32, #tpu.memory_space<vmem>>, %arg4: memref<128x64xbf16, #tpu.memory_space<vmem>>, %arg5: memref<128x64xbf16, #tpu.memory_space<vmem>>) attributes {dimension_semantics = [#tpu.dimension_semantics<parallel>], iteration_bounds = array<i64: 1>, scalar_prefetch = 0 : i64, scratch_operands = 0 : i64, tpu.core_type = #tpu.core_type<tc>, window_params = [{transform_indices = @transform_0, window_bounds = array<i64: 128, 64>}, {pipeline_mode = #tpu.pipeline_mode<synchronous>, transform_indices = @transform_1, window_bounds = array<i64: 64, 128>}, {pipeline_mode = #tpu.pipeline_mode<synchronous>, transform_indices = @transform_2, window_bounds = array<i64: 1, 128>}, {transform_indices = @transform_3, window_bounds = array<i64: 128, 64>}, {transform_indices = @transform_4, window_bounds = array<i64: 128, 64>}]} {
    %c0 = arith.constant 0 : index
    %c0_0 = arith.constant 0 : index
    %0 = vector.load %arg1[%c0, %c0_0] : memref<128x64xbf16, #tpu.memory_space<vmem>>, vector<128x64xbf16>
    %c0_1 = arith.constant 0 : index
    %c0_2 = arith.constant 0 : index
    %1 = vector.load %arg2[%c0_1, %c0_2] : memref<64x128xbf16, #tpu.memory_space<vmem>>, vector<64x128xbf16>
    %cst = arith.constant dense<0.000000e+00> : vector<128x128xf32>
    %2 = tpu.matmul %0, %1, %cst {dimension_numbers = #tpu.dot_dimension_numbers<[1], [0], [0], [1], [0, 0, 1, 1], [], []>} : vector<128x64xbf16>, vector<64x128xbf16>, vector<128x128xf32> -> vector<128x128xf32>
    %c0_3 = arith.constant 0 : index
    %c0_4 = arith.constant 0 : index
    %3 = vector.load %arg3[%c0_3, %c0_4] : memref<1x128xf32, #tpu.memory_space<vmem>>, vector<1x128xf32>
    %4 = vector.broadcast %3 : vector<1x128xf32> to vector<128x128xf32>
    %5 = arith.addf %2, %4 : vector<128x128xf32>
    %6 = vector.extract_strided_slice %5 {offsets = [0, 0], sizes = [128, 64], strides = [1, 1]} : vector<128x128xf32> to vector<128x64xf32>
    %7 = arith.truncf %6 : vector<128x64xf32> to vector<128x64xbf16>
    %c0_5 = arith.constant 0 : index
    %c0_6 = arith.constant 0 : index
    %8 = vector.load %arg4[%c0_5, %c0_6] : memref<128x64xbf16, #tpu.memory_space<vmem>>, vector<128x64xbf16>
    tpu.vector_store %arg4[%c0_5, %c0_6], %7 {strides = array<i32>} : memref<128x64xbf16, #tpu.memory_space<vmem>>, vector<128x64xbf16>,
    %9 = vector.extract_strided_slice %5 {offsets = [0, 64], sizes = [128, 64], strides = [1, 1]} : vector<128x128xf32> to vector<128x64xf32>
    %10 = arith.truncf %9 : vector<128x64xf32> to vector<128x64xbf16>
    %c0_7 = arith.constant 0 : index
    %c0_8 = arith.constant 0 : index
    %11 = vector.load %arg5[%c0_7, %c0_8] : memref<128x64xbf16, #tpu.memory_space<vmem>>, vector<128x64xbf16>
    tpu.vector_store %arg5[%c0_7, %c0_8], %10 {strides = array<i32>} : memref<128x64xbf16, #tpu.memory_space<vmem>>, vector<128x64xbf16>,
    return
  }
  func.func @transform_0(%arg0: i32) -> (i32, i32) {
    %c0_i32 = arith.constant 0 : i32
    %c0_i32_0 = arith.constant 0 : i32
    return %arg0, %c0_i32 : i32, i32
  }
  func.func @transform_1(%arg0: i32) -> (i32, i32) {
    %c0_i32 = arith.constant 0 : i32
    %c0_i32_0 = arith.constant 0 : i32
    %c0_i32_1 = arith.constant 0 : i32
    return %c0_i32, %c0_i32_0 : i32, i32
  }
  func.func @transform_2(%arg0: i32) -> (i32, i32) {
    %c0_i32 = arith.constant 0 : i32
    %c0_i32_0 = arith.constant 0 : i32
    %c0_i32_1 = arith.constant 0 : i32
    return %c0_i32, %c0_i32_0 : i32, i32
  }
  func.func @transform_3(%arg0: i32) -> (i32, i32) {
    %c0_i32 = arith.constant 0 : i32
    %c0_i32_0 = arith.constant 0 : i32
    return %arg0, %c0_i32 : i32, i32
  }
  func.func @transform_4(%arg0: i32) -> (i32, i32) {
    %c0_i32 = arith.constant 0 : i32
    %c0_i32_0 = arith.constant 0 : i32
    return %arg0, %c0_i32 : i32, i32
  }
}

module attributes {stable_mosaic.version = 11 : i64} {
  func.func @_linear_ln_kernel(%arg0: i32, %arg1: memref<128x256xbf16, #tpu.memory_space<vmem>>, %arg2: memref<256x64xbf16, #tpu.memory_space<vmem>>, %arg3: memref<1x64xf32, #tpu.memory_space<vmem>>, %arg4: memref<1x64xf32, #tpu.memory_space<vmem>>, %arg5: memref<1x64xf32, #tpu.memory_space<vmem>>, %arg6: memref<128x64xbf16, #tpu.memory_space<vmem>>) attributes {dimension_semantics = [#tpu.dimension_semantics<parallel>], iteration_bounds = array<i64: 1>, scalar_prefetch = 0 : i64, scratch_operands = 0 : i64, tpu.core_type = #tpu.core_type<tc>, window_params = [{transform_indices = @transform_0, window_bounds = array<i64: 128, 256>}, {pipeline_mode = #tpu.pipeline_mode<synchronous>, transform_indices = @transform_1, window_bounds = array<i64: 256, 64>}, {pipeline_mode = #tpu.pipeline_mode<synchronous>, transform_indices = @transform_2, window_bounds = array<i64: 1, 64>}, {pipeline_mode = #tpu.pipeline_mode<synchronous>, transform_indices = @transform_3, window_bounds = array<i64: 1, 64>}, {pipeline_mode = #tpu.pipeline_mode<synchronous>, transform_indices = @transform_4, window_bounds = array<i64: 1, 64>}, {transform_indices = @transform_5, window_bounds = array<i64: 128, 64>}]} {
    %c0 = arith.constant 0 : index
    %c0_0 = arith.constant 0 : index
    %0 = vector.load %arg1[%c0, %c0_0] : memref<128x256xbf16, #tpu.memory_space<vmem>>, vector<128x256xbf16>
    %c0_1 = arith.constant 0 : index
    %c0_2 = arith.constant 0 : index
    %1 = vector.load %arg2[%c0_1, %c0_2] : memref<256x64xbf16, #tpu.memory_space<vmem>>, vector<256x64xbf16>
    %cst = arith.constant dense<0.000000e+00> : vector<128x64xf32>
    %2 = tpu.matmul %0, %1, %cst {dimension_numbers = #tpu.dot_dimension_numbers<[1], [0], [0], [1], [0, 0, 1, 1], [], []>} : vector<128x256xbf16>, vector<256x64xbf16>, vector<128x64xf32> -> vector<128x64xf32>
    %c0_3 = arith.constant 0 : index
    %c0_4 = arith.constant 0 : index
    %3 = vector.load %arg3[%c0_3, %c0_4] : memref<1x64xf32, #tpu.memory_space<vmem>>, vector<1x64xf32>
    %4 = vector.broadcast %3 : vector<1x64xf32> to vector<128x64xf32>
    %5 = arith.addf %2, %4 : vector<128x64xf32>
    %cst_5 = arith.constant dense<0.000000e+00> : vector<128xf32>
    %6 = vector.multi_reduction <add>, %5, %cst_5 [1] : vector<128x64xf32> to vector<128xf32>
    %7 = vector.shape_cast %6 : vector<128xf32> to vector<128x1xf32>
    %cst_6 = arith.constant 6.400000e+01 : f32
    %8 = vector.broadcast %cst_6 : f32 to vector<128x1xf32>
    %9 = arith.divf %7, %8 : vector<128x1xf32>
    %10 = vector.broadcast %9 : vector<128x1xf32> to vector<128x64xf32>
    %11 = arith.subf %5, %10 : vector<128x64xf32>
    %12 = arith.mulf %11, %11 : vector<128x64xf32>
    %cst_7 = arith.constant dense<0.000000e+00> : vector<128xf32>
    %13 = vector.multi_reduction <add>, %12, %cst_7 [1] : vector<128x64xf32> to vector<128xf32>
    %14 = vector.shape_cast %13 : vector<128xf32> to vector<128x1xf32>
    %cst_8 = arith.constant 6.400000e+01 : f32
    %15 = vector.broadcast %cst_8 : f32 to vector<128x1xf32>
    %16 = arith.divf %14, %15 : vector<128x1xf32>
    %17 = vector.broadcast %9 : vector<128x1xf32> to vector<128x64xf32>
    %18 = arith.subf %5, %17 : vector<128x64xf32>
    %cst_9 = arith.constant 9.99999974E-6 : f32
    %19 = vector.broadcast %cst_9 : f32 to vector<128x1xf32>
    %20 = arith.addf %16, %19 : vector<128x1xf32>
    %21 = math.rsqrt %20 : vector<128x1xf32>
    %22 = vector.broadcast %21 : vector<128x1xf32> to vector<128x64xf32>
    %23 = arith.mulf %18, %22 : vector<128x64xf32>
    %c0_10 = arith.constant 0 : index
    %c0_11 = arith.constant 0 : index
    %24 = vector.load %arg4[%c0_10, %c0_11] : memref<1x64xf32, #tpu.memory_space<vmem>>, vector<1x64xf32>
    %25 = vector.broadcast %24 : vector<1x64xf32> to vector<128x64xf32>
    %26 = arith.mulf %23, %25 : vector<128x64xf32>
    %c0_12 = arith.constant 0 : index
    %c0_13 = arith.constant 0 : index
    %27 = vector.load %arg5[%c0_12, %c0_13] : memref<1x64xf32, #tpu.memory_space<vmem>>, vector<1x64xf32>
    %28 = vector.broadcast %27 : vector<1x64xf32> to vector<128x64xf32>
    %29 = arith.addf %26, %28 : vector<128x64xf32>
    %30 = arith.truncf %29 : vector<128x64xf32> to vector<128x64xbf16>
    %c0_14 = arith.constant 0 : index
    %c0_15 = arith.constant 0 : index
    %31 = vector.load %arg6[%c0_14, %c0_15] : memref<128x64xbf16, #tpu.memory_space<vmem>>, vector<128x64xbf16>
    tpu.vector_store %arg6[%c0_14, %c0_15], %30 {strides = array<i32>} : memref<128x64xbf16, #tpu.memory_space<vmem>>, vector<128x64xbf16>,
    return
  }
  func.func @transform_0(%arg0: i32) -> (i32, i32) {
    %c0_i32 = arith.constant 0 : i32
    %c0_i32_0 = arith.constant 0 : i32
    return %arg0, %c0_i32 : i32, i32
  }
  func.func @transform_1(%arg0: i32) -> (i32, i32) {
    %c0_i32 = arith.constant 0 : i32
    %c0_i32_0 = arith.constant 0 : i32
    %c0_i32_1 = arith.constant 0 : i32
    return %c0_i32, %c0_i32_0 : i32, i32
  }
  func.func @transform_2(%arg0: i32) -> (i32, i32) {
    %c0_i32 = arith.constant 0 : i32
    %c0_i32_0 = arith.constant 0 : i32
    %c0_i32_1 = arith.constant 0 : i32
    return %c0_i32, %c0_i32_0 : i32, i32
  }
  func.func @transform_3(%arg0: i32) -> (i32, i32) {
    %c0_i32 = arith.constant 0 : i32
    %c0_i32_0 = arith.constant 0 : i32
    %c0_i32_1 = arith.constant 0 : i32
    return %c0_i32, %c0_i32_0 : i32, i32
  }
  func.func @transform_4(%arg0: i32) -> (i32, i32) {
    %c0_i32 = arith.constant 0 : i32
    %c0_i32_0 = arith.constant 0 : i32
    %c0_i32_1 = arith.constant 0 : i32
    return %c0_i32, %c0_i32_0 : i32, i32
  }
  func.func @transform_5(%arg0: i32) -> (i32, i32) {
    %c0_i32 = arith.constant 0 : i32
    %c0_i32_0 = arith.constant 0 : i32
    return %arg0, %c0_i32 : i32, i32
  }
}

module attributes {stable_mosaic.version = 11 : i64} {
  func.func @_fused_linear_kernel(%arg0: i32, %arg1: memref<512x64xbf16, #tpu.memory_space<vmem>>, %arg2: memref<64x64xbf16, #tpu.memory_space<vmem>>, %arg3: memref<1x64xf32, #tpu.memory_space<vmem>>, %arg4: memref<512x64xbf16, #tpu.memory_space<vmem>>) attributes {dimension_semantics = [#tpu.dimension_semantics<parallel>], iteration_bounds = array<i64: 1>, scalar_prefetch = 0 : i64, scratch_operands = 0 : i64, tpu.core_type = #tpu.core_type<tc>, window_params = [{transform_indices = @transform_0, window_bounds = array<i64: 512, 64>}, {pipeline_mode = #tpu.pipeline_mode<synchronous>, transform_indices = @transform_1, window_bounds = array<i64: 64, 64>}, {pipeline_mode = #tpu.pipeline_mode<synchronous>, transform_indices = @transform_2, window_bounds = array<i64: 1, 64>}, {transform_indices = @transform_3, window_bounds = array<i64: 512, 64>}]} {
    %c0 = arith.constant 0 : index
    %c0_0 = arith.constant 0 : index
    %0 = vector.load %arg1[%c0, %c0_0] : memref<512x64xbf16, #tpu.memory_space<vmem>>, vector<512x64xbf16>
    %c0_1 = arith.constant 0 : index
    %c0_2 = arith.constant 0 : index
    %1 = vector.load %arg2[%c0_1, %c0_2] : memref<64x64xbf16, #tpu.memory_space<vmem>>, vector<64x64xbf16>
    %cst = arith.constant dense<0.000000e+00> : vector<512x64xf32>
    %2 = tpu.matmul %0, %1, %cst {dimension_numbers = #tpu.dot_dimension_numbers<[1], [0], [0], [1], [0, 0, 1, 1], [], []>} : vector<512x64xbf16>, vector<64x64xbf16>, vector<512x64xf32> -> vector<512x64xf32>
    %c0_3 = arith.constant 0 : index
    %c0_4 = arith.constant 0 : index
    %3 = vector.load %arg3[%c0_3, %c0_4] : memref<1x64xf32, #tpu.memory_space<vmem>>, vector<1x64xf32>
    %4 = vector.broadcast %3 : vector<1x64xf32> to vector<512x64xf32>
    %5 = arith.addf %2, %4 : vector<512x64xf32>
    %6 = arith.truncf %5 : vector<512x64xf32> to vector<512x64xbf16>
    %c0_5 = arith.constant 0 : index
    %c0_6 = arith.constant 0 : index
    %7 = vector.load %arg4[%c0_5, %c0_6] : memref<512x64xbf16, #tpu.memory_space<vmem>>, vector<512x64xbf16>
    tpu.vector_store %arg4[%c0_5, %c0_6], %6 {strides = array<i32>} : memref<512x64xbf16, #tpu.memory_space<vmem>>, vector<512x64xbf16>,
    return
  }
  func.func @transform_0(%arg0: i32) -> (i32, i32) {
    %c0_i32 = arith.constant 0 : i32
    %c0_i32_0 = arith.constant 0 : i32
    return %arg0, %c0_i32 : i32, i32
  }
  func.func @transform_1(%arg0: i32) -> (i32, i32) {
    %c0_i32 = arith.constant 0 : i32
    %c0_i32_0 = arith.constant 0 : i32
    %c0_i32_1 = arith.constant 0 : i32
    return %c0_i32, %c0_i32_0 : i32, i32
  }
  func.func @transform_2(%arg0: i32) -> (i32, i32) {
    %c0_i32 = arith.constant 0 : i32
    %c0_i32_0 = arith.constant 0 : i32
    %c0_i32_1 = arith.constant 0 : i32
    return %c0_i32, %c0_i32_0 : i32, i32
  }
  func.func @transform_3(%arg0: i32) -> (i32, i32) {
    %c0_i32 = arith.constant 0 : i32
    %c0_i32_0 = arith.constant 0 : i32
    return %arg0, %c0_i32 : i32, i32
  }
}

module attributes {stable_mosaic.version = 11 : i64} {
  func.func @_attn_resident_kernel(%arg0: i32, %arg1: i32, %arg2: memref<1x256x64xbf16, #tpu.memory_space<vmem>>, %arg3: memref<1x64x64xbf16, #tpu.memory_space<vmem>>, %arg4: memref<1x64x64xbf16, #tpu.memory_space<vmem>>, %arg5: memref<64x64xbf16, #tpu.memory_space<vmem>>, %arg6: memref<1x64xf32, #tpu.memory_space<vmem>>, %arg7: memref<1x256x64xf32, #tpu.memory_space<vmem>>) attributes {dimension_semantics = [#tpu.dimension_semantics<parallel>, #tpu.dimension_semantics<parallel>], iteration_bounds = array<i64: 2, 1>, scalar_prefetch = 0 : i64, scratch_operands = 0 : i64, tpu.core_type = #tpu.core_type<tc>, window_params = [{transform_indices = @transform_0, window_bounds = array<i64: 1, 256, 64>}, {transform_indices = @transform_1, window_bounds = array<i64: 1, 64, 64>}, {transform_indices = @transform_2, window_bounds = array<i64: 1, 64, 64>}, {pipeline_mode = #tpu.pipeline_mode<synchronous>, transform_indices = @transform_3, window_bounds = array<i64: 64, 64>}, {pipeline_mode = #tpu.pipeline_mode<synchronous>, transform_indices = @transform_4, window_bounds = array<i64: 1, 64>}, {transform_indices = @transform_5, window_bounds = array<i64: 1, 256, 64>}]} {
    %c0 = arith.constant 0 : index
    %c0_0 = arith.constant 0 : index
    %c0_1 = arith.constant 0 : index
    %0 = vector.load %arg2[%c0, %c0_0, %c0_1] : memref<1x256x64xbf16, #tpu.memory_space<vmem>>, vector<1x256x64xbf16>
    %1 = vector.shape_cast %0 : vector<1x256x64xbf16> to vector<256x64xbf16>
    %c0_2 = arith.constant 0 : index
    %c0_3 = arith.constant 0 : index
    %c0_4 = arith.constant 0 : index
    %2 = vector.load %arg3[%c0_2, %c0_3, %c0_4] : memref<1x64x64xbf16, #tpu.memory_space<vmem>>, vector<1x64x64xbf16>
    %3 = vector.shape_cast %2 : vector<1x64x64xbf16> to vector<64x64xbf16>
    %c0_5 = arith.constant 0 : index
    %c0_6 = arith.constant 0 : index
    %c0_7 = arith.constant 0 : index
    %4 = vector.load %arg4[%c0_5, %c0_6, %c0_7] : memref<1x64x64xbf16, #tpu.memory_space<vmem>>, vector<1x64x64xbf16>
    %5 = vector.shape_cast %4 : vector<1x64x64xbf16> to vector<64x64xbf16>
    %6 = vector.extract_strided_slice %1 {offsets = [0, 0], sizes = [256, 8], strides = [1, 1]} : vector<256x64xbf16> to vector<256x8xbf16>
    %7 = vector.extract_strided_slice %3 {offsets = [0, 0], sizes = [64, 8], strides = [1, 1]} : vector<64x64xbf16> to vector<64x8xbf16>
    %8 = vector.extract_strided_slice %5 {offsets = [0, 0], sizes = [64, 8], strides = [1, 1]} : vector<64x64xbf16> to vector<64x8xbf16>
    %cst = arith.constant dense<0.000000e+00> : vector<256x64xf32>
    %9 = tpu.matmul %6, %7, %cst {dimension_numbers = #tpu.dot_dimension_numbers<[1], [1], [0], [0], [0, 0, 1, 0], [], []>} : vector<256x8xbf16>, vector<64x8xbf16>, vector<256x64xf32> -> vector<256x64xf32>
    %cst_8 = arith.constant dense<0xFF800000> : vector<256xf32>
    %10 = vector.multi_reduction <maximumf>, %9, %cst_8 [1] : vector<256x64xf32> to vector<256xf32>
    %11 = vector.shape_cast %10 : vector<256xf32> to vector<256x1xf32>
    %12 = vector.broadcast %11 : vector<256x1xf32> to vector<256x64xf32>
    %13 = arith.subf %9, %12 : vector<256x64xf32>
    %14 = math.exp %13 : vector<256x64xf32>
    %cst_9 = arith.constant dense<0.000000e+00> : vector<256xf32>
    %15 = vector.multi_reduction <add>, %14, %cst_9 [1] : vector<256x64xf32> to vector<256xf32>
    %16 = vector.shape_cast %15 : vector<256xf32> to vector<256x1xf32>
    %17 = tpu.reciprocal %16 {approx = true} : vector<256x1xf32> -> vector<256x1xf32>
    %18 = vector.broadcast %17 : vector<256x1xf32> to vector<256x64xf32>
    %19 = arith.mulf %14, %18 : vector<256x64xf32>
    %20 = arith.truncf %19 : vector<256x64xf32> to vector<256x64xbf16>
    %cst_10 = arith.constant dense<0.000000e+00> : vector<256x8xf32>
    %21 = tpu.matmul %20, %8, %cst_10 {dimension_numbers = #tpu.dot_dimension_numbers<[1], [0], [0], [1], [0, 0, 1, 1], [], []>} : vector<256x64xbf16>, vector<64x8xbf16>, vector<256x8xf32> -> vector<256x8xf32>
    %22 = vector.extract_strided_slice %1 {offsets = [0, 8], sizes = [256, 8], strides = [1, 1]} : vector<256x64xbf16> to vector<256x8xbf16>
    %23 = vector.extract_strided_slice %3 {offsets = [0, 8], sizes = [64, 8], strides = [1, 1]} : vector<64x64xbf16> to vector<64x8xbf16>
    %24 = vector.extract_strided_slice %5 {offsets = [0, 8], sizes = [64, 8], strides = [1, 1]} : vector<64x64xbf16> to vector<64x8xbf16>
    %cst_11 = arith.constant dense<0.000000e+00> : vector<256x64xf32>
    %25 = tpu.matmul %22, %23, %cst_11 {dimension_numbers = #tpu.dot_dimension_numbers<[1], [1], [0], [0], [0, 0, 1, 0], [], []>} : vector<256x8xbf16>, vector<64x8xbf16>, vector<256x64xf32> -> vector<256x64xf32>
    %cst_12 = arith.constant dense<0xFF800000> : vector<256xf32>
    %26 = vector.multi_reduction <maximumf>, %25, %cst_12 [1] : vector<256x64xf32> to vector<256xf32>
    %27 = vector.shape_cast %26 : vector<256xf32> to vector<256x1xf32>
    %28 = vector.broadcast %27 : vector<256x1xf32> to vector<256x64xf32>
    %29 = arith.subf %25, %28 : vector<256x64xf32>
    %30 = math.exp %29 : vector<256x64xf32>
    %cst_13 = arith.constant dense<0.000000e+00> : vector<256xf32>
    %31 = vector.multi_reduction <add>, %30, %cst_13 [1] : vector<256x64xf32> to vector<256xf32>
    %32 = vector.shape_cast %31 : vector<256xf32> to vector<256x1xf32>
    %33 = tpu.reciprocal %32 {approx = true} : vector<256x1xf32> -> vector<256x1xf32>
    %34 = vector.broadcast %33 : vector<256x1xf32> to vector<256x64xf32>
    %35 = arith.mulf %30, %34 : vector<256x64xf32>
    %36 = arith.truncf %35 : vector<256x64xf32> to vector<256x64xbf16>
    %cst_14 = arith.constant dense<0.000000e+00> : vector<256x8xf32>
    %37 = tpu.matmul %36, %24, %cst_14 {dimension_numbers = #tpu.dot_dimension_numbers<[1], [0], [0], [1], [0, 0, 1, 1], [], []>} : vector<256x64xbf16>, vector<64x8xbf16>, vector<256x8xf32> -> vector<256x8xf32>
    %38 = vector.extract_strided_slice %1 {offsets = [0, 16], sizes = [256, 8], strides = [1, 1]} : vector<256x64xbf16> to vector<256x8xbf16>
    %39 = vector.extract_strided_slice %3 {offsets = [0, 16], sizes = [64, 8], strides = [1, 1]} : vector<64x64xbf16> to vector<64x8xbf16>
    %40 = vector.extract_strided_slice %5 {offsets = [0, 16], sizes = [64, 8], strides = [1, 1]} : vector<64x64xbf16> to vector<64x8xbf16>
    %cst_15 = arith.constant dense<0.000000e+00> : vector<256x64xf32>
    %41 = tpu.matmul %38, %39, %cst_15 {dimension_numbers = #tpu.dot_dimension_numbers<[1], [1], [0], [0], [0, 0, 1, 0], [], []>} : vector<256x8xbf16>, vector<64x8xbf16>, vector<256x64xf32> -> vector<256x64xf32>
    %cst_16 = arith.constant dense<0xFF800000> : vector<256xf32>
    %42 = vector.multi_reduction <maximumf>, %41, %cst_16 [1] : vector<256x64xf32> to vector<256xf32>
    %43 = vector.shape_cast %42 : vector<256xf32> to vector<256x1xf32>
    %44 = vector.broadcast %43 : vector<256x1xf32> to vector<256x64xf32>
    %45 = arith.subf %41, %44 : vector<256x64xf32>
    %46 = math.exp %45 : vector<256x64xf32>
    %cst_17 = arith.constant dense<0.000000e+00> : vector<256xf32>
    %47 = vector.multi_reduction <add>, %46, %cst_17 [1] : vector<256x64xf32> to vector<256xf32>
    %48 = vector.shape_cast %47 : vector<256xf32> to vector<256x1xf32>
    %49 = tpu.reciprocal %48 {approx = true} : vector<256x1xf32> -> vector<256x1xf32>
    %50 = vector.broadcast %49 : vector<256x1xf32> to vector<256x64xf32>
    %51 = arith.mulf %46, %50 : vector<256x64xf32>
    %52 = arith.truncf %51 : vector<256x64xf32> to vector<256x64xbf16>
    %cst_18 = arith.constant dense<0.000000e+00> : vector<256x8xf32>
    %53 = tpu.matmul %52, %40, %cst_18 {dimension_numbers = #tpu.dot_dimension_numbers<[1], [0], [0], [1], [0, 0, 1, 1], [], []>} : vector<256x64xbf16>, vector<64x8xbf16>, vector<256x8xf32> -> vector<256x8xf32>
    %54 = vector.extract_strided_slice %1 {offsets = [0, 24], sizes = [256, 8], strides = [1, 1]} : vector<256x64xbf16> to vector<256x8xbf16>
    %55 = vector.extract_strided_slice %3 {offsets = [0, 24], sizes = [64, 8], strides = [1, 1]} : vector<64x64xbf16> to vector<64x8xbf16>
    %56 = vector.extract_strided_slice %5 {offsets = [0, 24], sizes = [64, 8], strides = [1, 1]} : vector<64x64xbf16> to vector<64x8xbf16>
    %cst_19 = arith.constant dense<0.000000e+00> : vector<256x64xf32>
    %57 = tpu.matmul %54, %55, %cst_19 {dimension_numbers = #tpu.dot_dimension_numbers<[1], [1], [0], [0], [0, 0, 1, 0], [], []>} : vector<256x8xbf16>, vector<64x8xbf16>, vector<256x64xf32> -> vector<256x64xf32>
    %cst_20 = arith.constant dense<0xFF800000> : vector<256xf32>
    %58 = vector.multi_reduction <maximumf>, %57, %cst_20 [1] : vector<256x64xf32> to vector<256xf32>
    %59 = vector.shape_cast %58 : vector<256xf32> to vector<256x1xf32>
    %60 = vector.broadcast %59 : vector<256x1xf32> to vector<256x64xf32>
    %61 = arith.subf %57, %60 : vector<256x64xf32>
    %62 = math.exp %61 : vector<256x64xf32>
    %cst_21 = arith.constant dense<0.000000e+00> : vector<256xf32>
    %63 = vector.multi_reduction <add>, %62, %cst_21 [1] : vector<256x64xf32> to vector<256xf32>
    %64 = vector.shape_cast %63 : vector<256xf32> to vector<256x1xf32>
    %65 = tpu.reciprocal %64 {approx = true} : vector<256x1xf32> -> vector<256x1xf32>
    %66 = vector.broadcast %65 : vector<256x1xf32> to vector<256x64xf32>
    %67 = arith.mulf %62, %66 : vector<256x64xf32>
    %68 = arith.truncf %67 : vector<256x64xf32> to vector<256x64xbf16>
    %cst_22 = arith.constant dense<0.000000e+00> : vector<256x8xf32>
    %69 = tpu.matmul %68, %56, %cst_22 {dimension_numbers = #tpu.dot_dimension_numbers<[1], [0], [0], [1], [0, 0, 1, 1], [], []>} : vector<256x64xbf16>, vector<64x8xbf16>, vector<256x8xf32> -> vector<256x8xf32>
    %70 = vector.extract_strided_slice %1 {offsets = [0, 32], sizes = [256, 8], strides = [1, 1]} : vector<256x64xbf16> to vector<256x8xbf16>
    %71 = vector.extract_strided_slice %3 {offsets = [0, 32], sizes = [64, 8], strides = [1, 1]} : vector<64x64xbf16> to vector<64x8xbf16>
    %72 = vector.extract_strided_slice %5 {offsets = [0, 32], sizes = [64, 8], strides = [1, 1]} : vector<64x64xbf16> to vector<64x8xbf16>
    %cst_23 = arith.constant dense<0.000000e+00> : vector<256x64xf32>
    %73 = tpu.matmul %70, %71, %cst_23 {dimension_numbers = #tpu.dot_dimension_numbers<[1], [1], [0], [0], [0, 0, 1, 0], [], []>} : vector<256x8xbf16>, vector<64x8xbf16>, vector<256x64xf32> -> vector<256x64xf32>
    %cst_24 = arith.constant dense<0xFF800000> : vector<256xf32>
    %74 = vector.multi_reduction <maximumf>, %73, %cst_24 [1] : vector<256x64xf32> to vector<256xf32>
    %75 = vector.shape_cast %74 : vector<256xf32> to vector<256x1xf32>
    %76 = vector.broadcast %75 : vector<256x1xf32> to vector<256x64xf32>
    %77 = arith.subf %73, %76 : vector<256x64xf32>
    %78 = math.exp %77 : vector<256x64xf32>
    %cst_25 = arith.constant dense<0.000000e+00> : vector<256xf32>
    %79 = vector.multi_reduction <add>, %78, %cst_25 [1] : vector<256x64xf32> to vector<256xf32>
    %80 = vector.shape_cast %79 : vector<256xf32> to vector<256x1xf32>
    %81 = tpu.reciprocal %80 {approx = true} : vector<256x1xf32> -> vector<256x1xf32>
    %82 = vector.broadcast %81 : vector<256x1xf32> to vector<256x64xf32>
    %83 = arith.mulf %78, %82 : vector<256x64xf32>
    %84 = arith.truncf %83 : vector<256x64xf32> to vector<256x64xbf16>
    %cst_26 = arith.constant dense<0.000000e+00> : vector<256x8xf32>
    %85 = tpu.matmul %84, %72, %cst_26 {dimension_numbers = #tpu.dot_dimension_numbers<[1], [0], [0], [1], [0, 0, 1, 1], [], []>} : vector<256x64xbf16>, vector<64x8xbf16>, vector<256x8xf32> -> vector<256x8xf32>
    %86 = vector.extract_strided_slice %1 {offsets = [0, 40], sizes = [256, 8], strides = [1, 1]} : vector<256x64xbf16> to vector<256x8xbf16>
    %87 = vector.extract_strided_slice %3 {offsets = [0, 40], sizes = [64, 8], strides = [1, 1]} : vector<64x64xbf16> to vector<64x8xbf16>
    %88 = vector.extract_strided_slice %5 {offsets = [0, 40], sizes = [64, 8], strides = [1, 1]} : vector<64x64xbf16> to vector<64x8xbf16>
    %cst_27 = arith.constant dense<0.000000e+00> : vector<256x64xf32>
    %89 = tpu.matmul %86, %87, %cst_27 {dimension_numbers = #tpu.dot_dimension_numbers<[1], [1], [0], [0], [0, 0, 1, 0], [], []>} : vector<256x8xbf16>, vector<64x8xbf16>, vector<256x64xf32> -> vector<256x64xf32>
    %cst_28 = arith.constant dense<0xFF800000> : vector<256xf32>
    %90 = vector.multi_reduction <maximumf>, %89, %cst_28 [1] : vector<256x64xf32> to vector<256xf32>
    %91 = vector.shape_cast %90 : vector<256xf32> to vector<256x1xf32>
    %92 = vector.broadcast %91 : vector<256x1xf32> to vector<256x64xf32>
    %93 = arith.subf %89, %92 : vector<256x64xf32>
    %94 = math.exp %93 : vector<256x64xf32>
    %cst_29 = arith.constant dense<0.000000e+00> : vector<256xf32>
    %95 = vector.multi_reduction <add>, %94, %cst_29 [1] : vector<256x64xf32> to vector<256xf32>
    %96 = vector.shape_cast %95 : vector<256xf32> to vector<256x1xf32>
    %97 = tpu.reciprocal %96 {approx = true} : vector<256x1xf32> -> vector<256x1xf32>
    %98 = vector.broadcast %97 : vector<256x1xf32> to vector<256x64xf32>
    %99 = arith.mulf %94, %98 : vector<256x64xf32>
    %100 = arith.truncf %99 : vector<256x64xf32> to vector<256x64xbf16>
    %cst_30 = arith.constant dense<0.000000e+00> : vector<256x8xf32>
    %101 = tpu.matmul %100, %88, %cst_30 {dimension_numbers = #tpu.dot_dimension_numbers<[1], [0], [0], [1], [0, 0, 1, 1], [], []>} : vector<256x64xbf16>, vector<64x8xbf16>, vector<256x8xf32> -> vector<256x8xf32>
    %102 = vector.extract_strided_slice %1 {offsets = [0, 48], sizes = [256, 8], strides = [1, 1]} : vector<256x64xbf16> to vector<256x8xbf16>
    %103 = vector.extract_strided_slice %3 {offsets = [0, 48], sizes = [64, 8], strides = [1, 1]} : vector<64x64xbf16> to vector<64x8xbf16>
    %104 = vector.extract_strided_slice %5 {offsets = [0, 48], sizes = [64, 8], strides = [1, 1]} : vector<64x64xbf16> to vector<64x8xbf16>
    %cst_31 = arith.constant dense<0.000000e+00> : vector<256x64xf32>
    %105 = tpu.matmul %102, %103, %cst_31 {dimension_numbers = #tpu.dot_dimension_numbers<[1], [1], [0], [0], [0, 0, 1, 0], [], []>} : vector<256x8xbf16>, vector<64x8xbf16>, vector<256x64xf32> -> vector<256x64xf32>
    %cst_32 = arith.constant dense<0xFF800000> : vector<256xf32>
    %106 = vector.multi_reduction <maximumf>, %105, %cst_32 [1] : vector<256x64xf32> to vector<256xf32>
    %107 = vector.shape_cast %106 : vector<256xf32> to vector<256x1xf32>
    %108 = vector.broadcast %107 : vector<256x1xf32> to vector<256x64xf32>
    %109 = arith.subf %105, %108 : vector<256x64xf32>
    %110 = math.exp %109 : vector<256x64xf32>
    %cst_33 = arith.constant dense<0.000000e+00> : vector<256xf32>
    %111 = vector.multi_reduction <add>, %110, %cst_33 [1] : vector<256x64xf32> to vector<256xf32>
    %112 = vector.shape_cast %111 : vector<256xf32> to vector<256x1xf32>
    %113 = tpu.reciprocal %112 {approx = true} : vector<256x1xf32> -> vector<256x1xf32>
    %114 = vector.broadcast %113 : vector<256x1xf32> to vector<256x64xf32>
    %115 = arith.mulf %110, %114 : vector<256x64xf32>
    %116 = arith.truncf %115 : vector<256x64xf32> to vector<256x64xbf16>
    %cst_34 = arith.constant dense<0.000000e+00> : vector<256x8xf32>
    %117 = tpu.matmul %116, %104, %cst_34 {dimension_numbers = #tpu.dot_dimension_numbers<[1], [0], [0], [1], [0, 0, 1, 1], [], []>} : vector<256x64xbf16>, vector<64x8xbf16>, vector<256x8xf32> -> vector<256x8xf32>
    %118 = vector.extract_strided_slice %1 {offsets = [0, 56], sizes = [256, 8], strides = [1, 1]} : vector<256x64xbf16> to vector<256x8xbf16>
    %119 = vector.extract_strided_slice %3 {offsets = [0, 56], sizes = [64, 8], strides = [1, 1]} : vector<64x64xbf16> to vector<64x8xbf16>
    %120 = vector.extract_strided_slice %5 {offsets = [0, 56], sizes = [64, 8], strides = [1, 1]} : vector<64x64xbf16> to vector<64x8xbf16>
    %cst_35 = arith.constant dense<0.000000e+00> : vector<256x64xf32>
    %121 = tpu.matmul %118, %119, %cst_35 {dimension_numbers = #tpu.dot_dimension_numbers<[1], [1], [0], [0], [0, 0, 1, 0], [], []>} : vector<256x8xbf16>, vector<64x8xbf16>, vector<256x64xf32> -> vector<256x64xf32>
    %cst_36 = arith.constant dense<0xFF800000> : vector<256xf32>
    %122 = vector.multi_reduction <maximumf>, %121, %cst_36 [1] : vector<256x64xf32> to vector<256xf32>
    %123 = vector.shape_cast %122 : vector<256xf32> to vector<256x1xf32>
    %124 = vector.broadcast %123 : vector<256x1xf32> to vector<256x64xf32>
    %125 = arith.subf %121, %124 : vector<256x64xf32>
    %126 = math.exp %125 : vector<256x64xf32>
    %cst_37 = arith.constant dense<0.000000e+00> : vector<256xf32>
    %127 = vector.multi_reduction <add>, %126, %cst_37 [1] : vector<256x64xf32> to vector<256xf32>
    %128 = vector.shape_cast %127 : vector<256xf32> to vector<256x1xf32>
    %129 = tpu.reciprocal %128 {approx = true} : vector<256x1xf32> -> vector<256x1xf32>
    %130 = vector.broadcast %129 : vector<256x1xf32> to vector<256x64xf32>
    %131 = arith.mulf %126, %130 : vector<256x64xf32>
    %132 = arith.truncf %131 : vector<256x64xf32> to vector<256x64xbf16>
    %cst_38 = arith.constant dense<0.000000e+00> : vector<256x8xf32>
    %133 = tpu.matmul %132, %120, %cst_38 {dimension_numbers = #tpu.dot_dimension_numbers<[1], [0], [0], [1], [0, 0, 1, 1], [], []>} : vector<256x64xbf16>, vector<64x8xbf16>, vector<256x8xf32> -> vector<256x8xf32>
    %134 = tpu.concatenate %21, %37, %53, %69, %85, %101, %117, %133 in 1 : vector<256x8xf32>, vector<256x8xf32>, vector<256x8xf32>, vector<256x8xf32>, vector<256x8xf32>, vector<256x8xf32>, vector<256x8xf32>, vector<256x8xf32> -> vector<256x64xf32>
    %135 = arith.truncf %134 : vector<256x64xf32> to vector<256x64xbf16>
    %c0_39 = arith.constant 0 : index
    %c0_40 = arith.constant 0 : index
    %136 = vector.load %arg5[%c0_39, %c0_40] : memref<64x64xbf16, #tpu.memory_space<vmem>>, vector<64x64xbf16>
    %cst_41 = arith.constant dense<0.000000e+00> : vector<256x64xf32>
    %137 = tpu.matmul %135, %136, %cst_41 {dimension_numbers = #tpu.dot_dimension_numbers<[1], [0], [0], [1], [0, 0, 1, 1], [], []>} : vector<256x64xbf16>, vector<64x64xbf16>, vector<256x64xf32> -> vector<256x64xf32>
    %c0_42 = arith.constant 0 : index
    %c0_43 = arith.constant 0 : index
    %138 = vector.load %arg6[%c0_42, %c0_43] : memref<1x64xf32, #tpu.memory_space<vmem>>, vector<1x64xf32>
    %139 = vector.broadcast %138 : vector<1x64xf32> to vector<256x64xf32>
    %140 = arith.addf %137, %139 : vector<256x64xf32>
    %c0_44 = arith.constant 0 : index
    %c0_45 = arith.constant 0 : index
    %c0_46 = arith.constant 0 : index
    %141 = vector.load %arg7[%c0_44, %c0_45, %c0_46] : memref<1x256x64xf32, #tpu.memory_space<vmem>>, vector<1x256x64xf32>
    %142 = vector.shape_cast %141 : vector<1x256x64xf32> to vector<256x64xf32>
    %143 = vector.shape_cast %140 : vector<256x64xf32> to vector<1x256x64xf32>
    tpu.vector_store %arg7[%c0_44, %c0_45, %c0_46], %143 {strides = array<i32>} : memref<1x256x64xf32, #tpu.memory_space<vmem>>, vector<1x256x64xf32>,
    return
  }
  func.func @transform_0(%arg0: i32, %arg1: i32) -> (i32, i32, i32) {
    %c0_i32 = arith.constant 0 : i32
    %c0_i32_0 = arith.constant 0 : i32
    return %arg0, %arg1, %c0_i32 : i32, i32, i32
  }
  func.func @transform_1(%arg0: i32, %arg1: i32) -> (i32, i32, i32) {
    %c0_i32 = arith.constant 0 : i32
    %c0_i32_0 = arith.constant 0 : i32
    %c0_i32_1 = arith.constant 0 : i32
    return %arg0, %c0_i32, %c0_i32_0 : i32, i32, i32
  }
  func.func @transform_2(%arg0: i32, %arg1: i32) -> (i32, i32, i32) {
    %c0_i32 = arith.constant 0 : i32
    %c0_i32_0 = arith.constant 0 : i32
    %c0_i32_1 = arith.constant 0 : i32
    return %arg0, %c0_i32, %c0_i32_0 : i32, i32, i32
  }
  func.func @transform_3(%arg0: i32, %arg1: i32) -> (i32, i32) {
    %c0_i32 = arith.constant 0 : i32
    %c0_i32_0 = arith.constant 0 : i32
    %c0_i32_1 = arith.constant 0 : i32
    return %c0_i32, %c0_i32_0 : i32, i32
  }
  func.func @transform_4(%arg0: i32, %arg1: i32) -> (i32, i32) {
    %c0_i32 = arith.constant 0 : i32
    %c0_i32_0 = arith.constant 0 : i32
    %c0_i32_1 = arith.constant 0 : i32
    return %c0_i32, %c0_i32_0 : i32, i32
  }
  func.func @transform_5(%arg0: i32, %arg1: i32) -> (i32, i32, i32) {
    %c0_i32 = arith.constant 0 : i32
    %c0_i32_0 = arith.constant 0 : i32
    return %arg0, %arg1, %c0_i32 : i32, i32, i32
  }
}

</mosaic_0001>

<llo_original>
// kernel: attention_forward.6
$region0: #{attention_forward.6}
  #allocation0 [shape = 'u32[]', space=smem, size = 0x4, offset = 0x4, fixed_abs, tag = 'smem constant byte address 0x4 - core index']
  #allocation1 [shape = 'u32[144,128]{1,0:T(1,128)}', space=vmem, size = 0x12000, scoped, tag = 'internal scratch']
  %s0 = inlined_call_operand.vmem [shape: bf16[128,64], index: 0, kind: input, shape index: {}]
  %s1 = inlined_call_operand.vmem [shape: bf16[64,128], index: 1, kind: input, shape index: {}]
  %s2 = inlined_call_operand.vmem [shape: f32[1,128], index: 2, kind: input, shape index: {}]
  %s3 = inlined_call_operand.vmem [shape: bf16[128,64], index: 3, kind: output, shape index: {0}]
  %s4 = inlined_call_operand.vmem [shape: bf16[128,64], index: 4, kind: output, shape index: {1}]
  %5 = xla_tuple %s3, %s4
  %s6 = sld [smem:[#allocation0]]
  $region30: #{attention_forward.6} parent=0
    _
  %s8 = ssub.s32 1, %s6
  %s9 = scalar_select 0, %s8, %s6
  // Predicated region
  $region2: #{attention_forward.6} parent=0 // pred_check
    _
  $region3: #{attention_forward.6} parent=0 // pred_check_branch
    %11 = sbr.rel (0) target = $region5
  $region4: #{attention_forward.6} parent=0 // pred_region
    _
  $region5: #{attention_forward.6} parent=0 // pred_fallthru
    _
  // Predicated region
  $region6: #{attention_forward.6} parent=0 // pred_check
    _
  $region7: #{attention_forward.6} parent=0 // pred_check_branch
    %13 = sbr.rel (0) target = $region9
  $region8: #{attention_forward.6} parent=0 // pred_region
    _
  $region9: #{attention_forward.6} parent=0 // pred_fallthru
    _
  // Predicated region
  $region10: #{attention_forward.6} parent=0 // pred_check
    _
  $region11: #{attention_forward.6} parent=0 // pred_check_branch
    %15 = sbr.rel (0) target = $region13
  $region12: #{attention_forward.6} parent=0 // pred_region
    _
  $region13: #{attention_forward.6} parent=0 // pred_fallthru
    _
  %v17 = vld [vmem:[%s0] sm:$0xf]
  %v18 = vld [vmem:[%s0 + $0x4] sm:$0xf]
  %v19 = vld [vmem:[%s0 + $0x8] sm:$0xf]
  %v20 = vld [vmem:[%s0 + $0xc] sm:$0xf]
  %v21 = vld [vmem:[%s0 + $0x10] sm:$0xf]
  %v22 = vld [vmem:[%s0 + $0x14] sm:$0xf]
  %v23 = vld [vmem:[%s0 + $0x18] sm:$0xf]
  %v24 = vld [vmem:[%s0 + $0x1c] sm:$0xf]
  %v25 = vld [vmem:[%s0 + $0x20] sm:$0xf]
  %v26 = vld [vmem:[%s0 + $0x24] sm:$0xf]
  %v27 = vld [vmem:[%s0 + $0x28] sm:$0xf]
  %v28 = vld [vmem:[%s0 + $0x2c] sm:$0xf]
  %v29 = vld [vmem:[%s0 + $0x30] sm:$0xf]
  %v30 = vld [vmem:[%s0 + $0x34] sm:$0xf]
  %v31 = vld [vmem:[%s0 + $0x38] sm:$0xf]
  %v32 = vld [vmem:[%s0 + $0x3c] sm:$0xf]
  %v33 = vld [vmem:[%s1] sm:$0xf]
  %v34 = vld [vmem:[%s1 + $0x4] sm:$0xf]
  %v35 = vld [vmem:[%s1 + $0x8] sm:$0xf]
  %v36 = vld [vmem:[%s1 + $0xc] sm:$0xf]
  %v37 = vld [vmem:[%s1 + $0x10] sm:$0xf]
  %v38 = vld [vmem:[%s1 + $0x14] sm:$0xf]
  %v39 = vld [vmem:[%s1 + $0x18] sm:$0xf]
  %v40 = vld [vmem:[%s1 + $0x1c] sm:$0xf]
  %v41 = vld [vmem:[%s2] sm:$0x1]
  %v43 = vlaneseq
  %v44 = vshrl.u32 %v43, 7
  %v45 = vsub.s32 0, %v44
  %v46 = vrot.slane %v41, %v45
  %v64 = vunpack.c.l.b16 %v17
  %v65 = vunpack.c.l.b16 %v18
  %v66 = vunpack.c.l.b16 %v19
  %v67 = vunpack.c.l.b16 %v20
  %v68 = vunpack.c.l.b16 %v21
  %v69 = vunpack.c.l.b16 %v22
  %v70 = vunpack.c.l.b16 %v23
  %v71 = vunpack.c.l.b16 %v24
  %v72 = vunpack.c.l.b16 %v25
  %v73 = vunpack.c.l.b16 %v26
  %v74 = vunpack.c.l.b16 %v27
  %v75 = vunpack.c.l.b16 %v28
  %v76 = vunpack.c.l.b16 %v29
  %v77 = vunpack.c.l.b16 %v30
  %v78 = vunpack.c.l.b16 %v31
  %v79 = vunpack.c.l.b16 %v32
  %v80 = vpack.c.b16 %v65, %v64
  %v81 = vpack.c.b16 %v67, %v66
  %v82 = vpack.c.b16 %v69, %v68
  %v83 = vpack.c.b16 %v71, %v70
  %v84 = vpack.c.b16 %v73, %v72
  %v85 = vpack.c.b16 %v75, %v74
  %v86 = vpack.c.b16 %v77, %v76
  %v87 = vpack.c.b16 %v79, %v78
  %v96 = vunpack.c.l.b16 %v33
  %v97 = vunpack.c.l.b16 %v34
  %v98 = vunpack.c.l.b16 %v35
  %v99 = vunpack.c.l.b16 %v36
  %v100 = vunpack.c.l.b16 %v37
  %v101 = vunpack.c.l.b16 %v38
  %v102 = vunpack.c.l.b16 %v39
  %v103 = vunpack.c.l.b16 %v40
  %v104 = vpack.c.b16 %v97, %v96
  %v105 = vpack.c.b16 %v99, %v98
  %v106 = vpack.c.b16 %v101, %v100
  %v107 = vpack.c.b16 %v103, %v102
  %vm112 = vcmask 523264
  %v114 = vsel %vm112, %v80, 0
  %v117 = vsel %vm112, %v81, 0
  %v120 = vsel %vm112, %v82, 0
  %v123 = vsel %vm112, %v83, 0
  %v126 = vsel %vm112, %v84, 0
  %v129 = vsel %vm112, %v85, 0
  %v132 = vsel %vm112, %v86, 0
  %v135 = vsel %vm112, %v87, 0
  %137 = vmatprep.subr.bf16.mxu0 0
  %138 = vmatpush1.bf16.msra.mxu0 %v104
  %139 = vmatprep.subr.bf16.mxu0 0
  %140 = vmatpush1.bf16.msra.mxu0 %v105
  %141 = vmatprep.subr.bf16.mxu0 0
  %142 = vmatpush1.bf16.msra.mxu0 %v106
  %143 = vmatprep.subr.bf16.mxu0 0
  %144 = vmatpush1.bf16.msra.mxu0 %v107
  %145 = vmatprep.subr.bf16.mxu0 0
  %146 = vmatpush1.bf16.msra.mxu0 0
  %147 = vmatprep.subr.bf16.mxu0 0
  %148 = vmatpush1.bf16.msra.mxu0 0
  %149 = vmatprep.subr.bf16.mxu0 0
  %150 = vmatpush1.bf16.msra.mxu0 0
  %151 = vmatprep.subr.bf16.mxu0 0
  %152 = vmatpush1.bf16.msra.mxu0 0
  %153 = vmatprep.subr.bf16.mxu0 0
  %154 = vmatpush1.bf16.msra.mxu0 0
  %155 = vmatprep.subr.bf16.mxu0 0
  %156 = vmatpush1.bf16.msra.mxu0 0
  %157 = vmatprep.subr.bf16.mxu0 0
  %158 = vmatpush1.bf16.msra.mxu0 0
  %159 = vmatprep.subr.bf16.mxu0 0
  %160 = vmatpush1.bf16.msra.mxu0 0
  %161 = vmatprep.subr.bf16.mxu0 0
  %162 = vmatpush1.bf16.msra.mxu0 0
  %163 = vmatprep.subr.bf16.mxu0 0
  %164 = vmatpush1.bf16.msra.mxu0 0
  %165 = vmatprep.subr.bf16.mxu0 0
  %166 = vmatpush1.bf16.msra.mxu0 0
  %167 = vmatprep.subr.bf16.mxu0 0
  %168 = vmatpush1.bf16.msra.mxu0 0
  %169 = vmatprep.mubr.bf16.mxu0 0
  %170 = vmatmul.mubr.bf16.gmra.mrb[0].mxu0 %v114
  %v171 = vpop.f32.mrb[0].mxu0
  %v172 = vadd.f32 %v46, %v171
  %v173 = vpop.f32.mrb[0].mxu0
  %v174 = vpop.f32.mrb[0].mxu0
  %v175 = vadd.f32 %v46, %v174
  %v176 = vpop.f32.mrb[0].mxu0
  %177 = vmatprep.mubr.bf16.mxu0 0
  %178 = vmatmul.mubr.bf16.gmra.mrb[0].mxu0 %v117
  %v179 = vpop.f32.mrb[0].mxu0
  %v180 = vadd.f32 %v46, %v179
  %v181 = vpop.f32.mrb[0].mxu0
  %v182 = vpop.f32.mrb[0].mxu0
  %v183 = vadd.f32 %v46, %v182
  %v184 = vpop.f32.mrb[0].mxu0
  %185 = vmatprep.mubr.bf16.mxu0 0
  %186 = vmatmul.mubr.bf16.gmra.mrb[0].mxu0 %v120
  %v187 = vpop.f32.mrb[0].mxu0
  %v188 = vadd.f32 %v46, %v187
  %v189 = vpop.f32.mrb[0].mxu0
  %v190 = vpop.f32.mrb[0].mxu0
  %v191 = vadd.f32 %v46, %v190
  %v192 = vpop.f32.mrb[0].mxu0
  %193 = vmatprep.mubr.bf16.mxu0 0
  %194 = vmatmul.mubr.bf16.gmra.mrb[0].mxu0 %v123
  %v195 = vpop.f32.mrb[0].mxu0
  %v196 = vadd.f32 %v46, %v195
  %v197 = vpop.f32.mrb[0].mxu0
  %v198 = vpop.f32.mrb[0].mxu0
  %v199 = vadd.f32 %v46, %v198
  %v200 = vpop.f32.mrb[0].mxu0
  %201 = vmatprep.mubr.bf16.mxu0 0
  %202 = vmatmul.mubr.bf16.gmra.mrb[0].mxu0 %v126
  %v203 = vpop.f32.mrb[0].mxu0
  %v204 = vadd.f32 %v46, %v203
  %v205 = vpop.f32.mrb[0].mxu0
  %v206 = vpop.f32.mrb[0].mxu0
  %v207 = vadd.f32 %v46, %v206
  %v208 = vpop.f32.mrb[0].mxu0
  %209 = vmatprep.mubr.bf16.mxu0 0
  %210 = vmatmul.mubr.bf16.gmra.mrb[0].mxu0 %v129
  %v211 = vpop.f32.mrb[0].mxu0
  %v212 = vadd.f32 %v46, %v211
  %v213 = vpop.f32.mrb[0].mxu0
  %v214 = vpop.f32.mrb[0].mxu0
  %v215 = vadd.f32 %v46, %v214
  %v216 = vpop.f32.mrb[0].mxu0
  %217 = vmatprep.mubr.bf16.mxu0 0
  %218 = vmatmul.mubr.bf16.gmra.mrb[0].mxu0 %v132
  %v219 = vpop.f32.mrb[0].mxu0
  %v220 = vadd.f32 %v46, %v219
  %v221 = vpop.f32.mrb[0].mxu0
  %v222 = vpop.f32.mrb[0].mxu0
  %v223 = vadd.f32 %v46, %v222
  %v224 = vpop.f32.mrb[0].mxu0
  %225 = vmatprep.mubr.bf16.mxu0 0
  %226 = vmatmul.mubr.bf16.gmra.mrb[0].mxu0 %v135
  %v227 = vpop.f32.mrb[0].mxu0
  %v228 = vadd.f32 %v46, %v227
  %v229 = vpop.f32.mrb[0].mxu0
  %v230 = vpop.f32.mrb[0].mxu0
  %v231 = vadd.f32 %v46, %v230
  %v232 = vpop.f32.mrb[0].mxu0
  %233 = vdwg.mxu0
  %v234 = vpack.c.bf16 %v175, %v172
  %v235 = vpack.c.bf16 %v183, %v180
  %v236 = vpack.c.bf16 %v191, %v188
  %v237 = vpack.c.bf16 %v199, %v196
  %v238 = vpack.c.bf16 %v207, %v204
  %v239 = vpack.c.bf16 %v215, %v212
  %v240 = vpack.c.bf16 %v223, %v220
  %v241 = vpack.c.bf16 %v231, %v228
  %v250 = vunpack.c.l.b16 %v234
  %v251 = vunpack.c.h.b16 %v234
  %v252 = vunpack.c.l.b16 %v235
  %v253 = vunpack.c.h.b16 %v235
  %v254 = vunpack.c.l.b16 %v236
  %v255 = vunpack.c.h.b16 %v236
  %v256 = vunpack.c.l.b16 %v237
  %v257 = vunpack.c.h.b16 %v237
  %v258 = vunpack.c.l.b16 %v238
  %v259 = vunpack.c.h.b16 %v238
  %v260 = vunpack.c.l.b16 %v239
  %v261 = vunpack.c.h.b16 %v239
  %v262 = vunpack.c.l.b16 %v240
  %v263 = vunpack.c.h.b16 %v240
  %v264 = vunpack.c.l.b16 %v241
  %v265 = vunpack.c.h.b16 %v241
  %v266 = vpack.c.b16 %v250, %v250
  %v267 = vpack.c.b16 %v251, %v251
  %v268 = vpack.c.b16 %v252, %v252
  %v269 = vpack.c.b16 %v253, %v253
  %v270 = vpack.c.b16 %v254, %v254
  %v271 = vpack.c.b16 %v255, %v255
  %v272 = vpack.c.b16 %v256, %v256
  %v273 = vpack.c.b16 %v257, %v257
  %v274 = vpack.c.b16 %v258, %v258
  %v275 = vpack.c.b16 %v259, %v259
  %v276 = vpack.c.b16 %v260, %v260
  %v277 = vpack.c.b16 %v261, %v261
  %v278 = vpack.c.b16 %v262, %v262
  %v279 = vpack.c.b16 %v263, %v263
  %v280 = vpack.c.b16 %v264, %v264
  %v281 = vpack.c.b16 %v265, %v265
  %vm298 = vcmask 519168
  %299 = vst.msk [vmem:[%s3] sm:$0xf] %vm298, %v266
  %300 = vst.msk [vmem:[%s3 + $0x4] sm:$0xf] %vm298, %v267
  %301 = vst.msk [vmem:[%s3 + $0x8] sm:$0xf] %vm298, %v268
  %302 = vst.msk [vmem:[%s3 + $0xc] sm:$0xf] %vm298, %v269
  %303 = vst.msk [vmem:[%s3 + $0x10] sm:$0xf] %vm298, %v270
  %304 = vst.msk [vmem:[%s3 + $0x14] sm:$0xf] %vm298, %v271
  %305 = vst.msk [vmem:[%s3 + $0x18] sm:$0xf] %vm298, %v272
  %306 = vst.msk [vmem:[%s3 + $0x1c] sm:$0xf] %vm298, %v273
  %307 = vst.msk [vmem:[%s3 + $0x20] sm:$0xf] %vm298, %v274
  %308 = vst.msk [vmem:[%s3 + $0x24] sm:$0xf] %vm298, %v275
  %309 = vst.msk [vmem:[%s3 + $0x28] sm:$0xf] %vm298, %v276
  %310 = vst.msk [vmem:[%s3 + $0x2c] sm:$0xf] %vm298, %v277
  %311 = vst.msk [vmem:[%s3 + $0x30] sm:$0xf] %vm298, %v278
  %312 = vst.msk [vmem:[%s3 + $0x34] sm:$0xf] %vm298, %v279
  %313 = vst.msk [vmem:[%s3 + $0x38] sm:$0xf] %vm298, %v280
  %314 = vst.msk [vmem:[%s3 + $0x3c] sm:$0xf] %vm298, %v281
  %315 = vrot.lane.b32.xlu0 %v266, 64
  %v316 = vpop.permute.xlu0 %315
  %317 = vrot.lane.b32.xlu0 %v267, 64
  %v318 = vpop.permute.xlu0 %317
  %319 = vrot.lane.b32.xlu0 %v268, 64
  %v320 = vpop.permute.xlu0 %319
  %321 = vrot.lane.b32.xlu0 %v269, 64
  %v322 = vpop.permute.xlu0 %321
  %323 = vrot.lane.b32.xlu0 %v270, 64
  %v324 = vpop.permute.xlu0 %323
  %325 = vrot.lane.b32.xlu0 %v271, 64
  %v326 = vpop.permute.xlu0 %325
  %327 = vrot.lane.b32.xlu0 %v272, 64
  %v328 = vpop.permute.xlu0 %327
  %329 = vrot.lane.b32.xlu0 %v273, 64
  %v330 = vpop.permute.xlu0 %329
  %331 = vrot.lane.b32.xlu0 %v274, 64
  %v332 = vpop.permute.xlu0 %331
  %333 = vrot.lane.b32.xlu0 %v275, 64
  %v334 = vpop.permute.xlu0 %333
  %335 = vrot.lane.b32.xlu0 %v276, 64
  %v336 = vpop.permute.xlu0 %335
  %337 = vrot.lane.b32.xlu0 %v277, 64
  %v338 = vpop.permute.xlu0 %337
  %339 = vrot.lane.b32.xlu0 %v278, 64
  %v340 = vpop.permute.xlu0 %339
  %341 = vrot.lane.b32.xlu0 %v279, 64
  %v342 = vpop.permute.xlu0 %341
  %343 = vrot.lane.b32.xlu0 %v280, 64
  %v344 = vpop.permute.xlu0 %343
  %345 = vrot.lane.b32.xlu0 %v281, 64
  %v346 = vpop.permute.xlu0 %345
  %363 = vst.msk [vmem:[%s4] sm:$0xf] %vm298, %v316
  %364 = vst.msk [vmem:[%s4 + $0x4] sm:$0xf] %vm298, %v318
  %365 = vst.msk [vmem:[%s4 + $0x8] sm:$0xf] %vm298, %v320
  %366 = vst.msk [vmem:[%s4 + $0xc] sm:$0xf] %vm298, %v322
  %367 = vst.msk [vmem:[%s4 + $0x10] sm:$0xf] %vm298, %v324
  %368 = vst.msk [vmem:[%s4 + $0x14] sm:$0xf] %vm298, %v326
  %369 = vst.msk [vmem:[%s4 + $0x18] sm:$0xf] %vm298, %v328
  %370 = vst.msk [vmem:[%s4 + $0x1c] sm:$0xf] %vm298, %v330
  %371 = vst.msk [vmem:[%s4 + $0x20] sm:$0xf] %vm298, %v332
  %372 = vst.msk [vmem:[%s4 + $0x24] sm:$0xf] %vm298, %v334
  %373 = vst.msk [vmem:[%s4 + $0x28] sm:$0xf] %vm298, %v336
  %374 = vst.msk [vmem:[%s4 + $0x2c] sm:$0xf] %vm298, %v338
  %375 = vst.msk [vmem:[%s4 + $0x30] sm:$0xf] %vm298, %v340
  %376 = vst.msk [vmem:[%s4 + $0x34] sm:$0xf] %vm298, %v342
  %377 = vst.msk [vmem:[%s4 + $0x38] sm:$0xf] %vm298, %v344
  %378 = vst.msk [vmem:[%s4 + $0x3c] sm:$0xf] %vm298, %v346
  // Predicated region
  $region14: #{attention_forward.6} parent=0 // pred_check
    _
  $region15: #{attention_forward.6} parent=0 // pred_check_branch
    %380 = sbr.rel (0) target = $region17
  $region16: #{attention_forward.6} parent=0 // pred_region
    _
  $region17: #{attention_forward.6} parent=0 // pred_fallthru
    _
  // Predicated region
  $region18: #{attention_forward.6} parent=0 // pred_check
    _
  $region19: #{attention_forward.6} parent=0 // pred_check_branch
    %382 = sbr.rel (0) target = $region21
  $region20: #{attention_forward.6} parent=0 // pred_region
    _
  $region21: #{attention_forward.6} parent=0 // pred_fallthru
    _
  // Predicated region
  $region22: #{attention_forward.6} parent=0 // pred_check
    _
  $region23: #{attention_forward.6} parent=0 // pred_check_branch
    %384 = sbr.rel (0) target = $region25
  $region24: #{attention_forward.6} parent=0 // pred_region
    _
  $region25: #{attention_forward.6} parent=0 // pred_fallthru
    _
  // Predicated region
  $region26: #{attention_forward.6} parent=0 // pred_check
    _
  $region27: #{attention_forward.6} parent=0 // pred_check_branch
    %386 = sbr.rel (0) target = $region29
  $region28: #{attention_forward.6} parent=0 // pred_region
    _
  $region29: #{attention_forward.6} parent=0 // pred_fallthru
    _

// kernel: attention_forward.5
$region0: #{attention_forward.5}
  #allocation0 [shape = 'u32[]', space=smem, size = 0x4, offset = 0x4, fixed_abs, tag = 'smem constant byte address 0x4 - core index']
  #allocation1 [shape = 'u32[144,128]{1,0:T(1,128)}', space=vmem, size = 0x12000, scoped, tag = 'internal scratch']
  %s0 = inlined_call_operand.vmem [shape: bf16[128,256], index: 0, kind: input, shape index: {}]
  %s1 = inlined_call_operand.vmem [shape: bf16[256,64], index: 1, kind: input, shape index: {}]
  %s2 = inlined_call_operand.vmem [shape: f32[1,64], index: 2, kind: input, shape index: {}]
  %s3 = inlined_call_operand.vmem [shape: f32[1,64], index: 3, kind: input, shape index: {}]
  %s4 = inlined_call_operand.vmem [shape: f32[1,64], index: 4, kind: input, shape index: {}]
  %s5 = inlined_call_operand.vmem [shape: bf16[128,64], index: 5, kind: output, shape index: {}]
  %s6 = sld [smem:[#allocation0]]
  $region30: #{attention_forward.5} parent=0
    _
  %s8 = ssub.s32 1, %s6
  %s9 = scalar_select 0, %s8, %s6
  // Predicated region
  $region2: #{attention_forward.5} parent=0 // pred_check
    _
  $region3: #{attention_forward.5} parent=0 // pred_check_branch
    %11 = sbr.rel (0) target = $region5
  $region4: #{attention_forward.5} parent=0 // pred_region
    _
  $region5: #{attention_forward.5} parent=0 // pred_fallthru
    _
  // Predicated region
  $region6: #{attention_forward.5} parent=0 // pred_check
    _
  $region7: #{attention_forward.5} parent=0 // pred_check_branch
    %13 = sbr.rel (0) target = $region9
  $region8: #{attention_forward.5} parent=0 // pred_region
    _
  $region9: #{attention_forward.5} parent=0 // pred_fallthru
    _
  // Predicated region
  $region10: #{attention_forward.5} parent=0 // pred_check
    _
  $region11: #{attention_forward.5} parent=0 // pred_check_branch
    %15 = sbr.rel (0) target = $region13
  $region12: #{attention_forward.5} parent=0 // pred_region
    _
  $region13: #{attention_forward.5} parent=0 // pred_fallthru
    _
  // Predicated region
  $region14: #{attention_forward.5} parent=0 // pred_check
    _
  $region15: #{attention_forward.5} parent=0 // pred_check_branch
    %17 = sbr.rel (0) target = $region17
  $region16: #{attention_forward.5} parent=0 // pred_region
    _
  $region17: #{attention_forward.5} parent=0 // pred_fallthru
    _
  // Predicated region
  $region18: #{attention_forward.5} parent=0 // pred_check
    _
  $region19: #{attention_forward.5} parent=0 // pred_check_branch
    %19 = sbr.rel (0) target = $region21
  $region20: #{attention_forward.5} parent=0 // pred_region
    _
  $region21: #{attention_forward.5} parent=0 // pred_fallthru
    _
  %v21 = vld [vmem:[%s0] sm:$0xff]
  %v22 = vld [vmem:[%s0 + $0x8] sm:$0xff]
  %v23 = vld [vmem:[%s0 + $0x10] sm:$0xff]
  %v24 = vld [vmem:[%s0 + $0x18] sm:$0xff]
  %v25 = vld [vmem:[%s0 + $0x20] sm:$0xff]
  %v26 = vld [vmem:[%s0 + $0x28] sm:$0xff]
  %v27 = vld [vmem:[%s0 + $0x30] sm:$0xff]
  %v28 = vld [vmem:[%s0 + $0x38] sm:$0xff]
  %v29 = vld [vmem:[%s0 + $0x40] sm:$0xff]
  %v30 = vld [vmem:[%s0 + $0x48] sm:$0xff]
  %v31 = vld [vmem:[%s0 + $0x50] sm:$0xff]
  %v32 = vld [vmem:[%s0 + $0x58] sm:$0xff]
  %v33 = vld [vmem:[%s0 + $0x60] sm:$0xff]
  %v34 = vld [vmem:[%s0 + $0x68] sm:$0xff]
  %v35 = vld [vmem:[%s0 + $0x70] sm:$0xff]
  %v36 = vld [vmem:[%s0 + $0x78] sm:$0xff]
  %v37 = vld [vmem:[%s1] sm:$0xf]
  %v38 = vld [vmem:[%s1 + $0x4] sm:$0xf]
  %v39 = vld [vmem:[%s1 + $0x8] sm:$0xf]
  %v40 = vld [vmem:[%s1 + $0xc] sm:$0xf]
  %v41 = vld [vmem:[%s1 + $0x10] sm:$0xf]
  %v42 = vld [vmem:[%s1 + $0x14] sm:$0xf]
  %v43 = vld [vmem:[%s1 + $0x18] sm:$0xf]
  %v44 = vld [vmem:[%s1 + $0x1c] sm:$0xf]
  %v45 = vld [vmem:[%s1 + $0x20] sm:$0xf]
  %v46 = vld [vmem:[%s1 + $0x24] sm:$0xf]
  %v47 = vld [vmem:[%s1 + $0x28] sm:$0xf]
  %v48 = vld [vmem:[%s1 + $0x2c] sm:$0xf]
  %v49 = vld [vmem:[%s1 + $0x30] sm:$0xf]
  %v50 = vld [vmem:[%s1 + $0x34] sm:$0xf]
  %v51 = vld [vmem:[%s1 + $0x38] sm:$0xf]
  %v52 = vld [vmem:[%s1 + $0x3c] sm:$0xf]
  %v53 = vld [vmem:[%s1 + $0x40] sm:$0xf]
  %v54 = vld [vmem:[%s1 + $0x44] sm:$0xf]
  %v55 = vld [vmem:[%s1 + $0x48] sm:$0xf]
  %v56 = vld [vmem:[%s1 + $0x4c] sm:$0xf]
  %v57 = vld [vmem:[%s1 + $0x50] sm:$0xf]
  %v58 = vld [vmem:[%s1 + $0x54] sm:$0xf]
  %v59 = vld [vmem:[%s1 + $0x58] sm:$0xf]
  %v60 = vld [vmem:[%s1 + $0x5c] sm:$0xf]
  %v61 = vld [vmem:[%s1 + $0x60] sm:$0xf]
  %v62 = vld [vmem:[%s1 + $0x64] sm:$0xf]
  %v63 = vld [vmem:[%s1 + $0x68] sm:$0xf]
  %v64 = vld [vmem:[%s1 + $0x6c] sm:$0xf]
  %v65 = vld [vmem:[%s1 + $0x70] sm:$0xf]
  %v66 = vld [vmem:[%s1 + $0x74] sm:$0xf]
  %v67 = vld [vmem:[%s1 + $0x78] sm:$0xf]
  %v68 = vld [vmem:[%s1 + $0x7c] sm:$0xf]
  %v69 = vld [vmem:[%s2] sm:$0x1]
  %v71 = vlaneseq
  %v72 = vshrl.u32 %v71, 7
  %v73 = vsub.s32 0, %v72
  %v74 = vrot.slane %v69, %v73
  %v92 = vunpack.c.l.b16 %v21
  %v93 = vunpack.c.h.b16 %v21
  %v94 = vunpack.c.l.b16 %v22
  %v95 = vunpack.c.h.b16 %v22
  %v96 = vunpack.c.l.b16 %v23
  %v97 = vunpack.c.h.b16 %v23
  %v98 = vunpack.c.l.b16 %v24
  %v99 = vunpack.c.h.b16 %v24
  %v100 = vunpack.c.l.b16 %v25
  %v101 = vunpack.c.h.b16 %v25
  %v102 = vunpack.c.l.b16 %v26
  %v103 = vunpack.c.h.b16 %v26
  %v104 = vunpack.c.l.b16 %v27
  %v105 = vunpack.c.h.b16 %v27
  %v106 = vunpack.c.l.b16 %v28
  %v107 = vunpack.c.h.b16 %v28
  %v108 = vunpack.c.l.b16 %v29
  %v109 = vunpack.c.h.b16 %v29
  %v110 = vunpack.c.l.b16 %v30
  %v111 = vunpack.c.h.b16 %v30
  %v112 = vunpack.c.l.b16 %v31
  %v113 = vunpack.c.h.b16 %v31
  %v114 = vunpack.c.l.b16 %v32
  %v115 = vunpack.c.h.b16 %v32
  %v116 = vunpack.c.l.b16 %v33
  %v117 = vunpack.c.h.b16 %v33
  %v118 = vunpack.c.l.b16 %v34
  %v119 = vunpack.c.h.b16 %v34
  %v120 = vunpack.c.l.b16 %v35
  %v121 = vunpack.c.h.b16 %v35
  %v122 = vunpack.c.l.b16 %v36
  %v123 = vunpack.c.h.b16 %v36
  %v124 = vpack.c.b16 %v94, %v92
  %v125 = vpack.c.b16 %v95, %v93
  %v126 = vpack.c.b16 %v98, %v96
  %v127 = vpack.c.b16 %v99, %v97
  %v128 = vpack.c.b16 %v102, %v100
  %v129 = vpack.c.b16 %v103, %v101
  %v130 = vpack.c.b16 %v106, %v104
  %v131 = vpack.c.b16 %v107, %v105
  %v132 = vpack.c.b16 %v110, %v108
  %v133 = vpack.c.b16 %v111, %v109
  %v134 = vpack.c.b16 %v114, %v112
  %v135 = vpack.c.b16 %v115, %v113
  %v136 = vpack.c.b16 %v118, %v116
  %v137 = vpack.c.b16 %v119, %v117
  %v138 = vpack.c.b16 %v122, %v120
  %v139 = vpack.c.b16 %v123, %v121
  %v188 = vunpack.c.l.b16 %v37
  %v189 = vunpack.c.l.b16 %v38
  %v190 = vunpack.c.l.b16 %v39
  %v191 = vunpack.c.l.b16 %v40
  %v192 = vunpack.c.l.b16 %v41
  %v193 = vunpack.c.l.b16 %v42
  %v194 = vunpack.c.l.b16 %v43
  %v195 = vunpack.c.l.b16 %v44
  %v196 = vunpack.c.l.b16 %v45
  %v197 = vunpack.c.l.b16 %v46
  %v198 = vunpack.c.l.b16 %v47
  %v199 = vunpack.c.l.b16 %v48
  %v200 = vunpack.c.l.b16 %v49
  %v201 = vunpack.c.l.b16 %v50
  %v202 = vunpack.c.l.b16 %v51
  %v203 = vunpack.c.l.b16 %v52
  %v204 = vunpack.c.l.b16 %v53
  %v205 = vunpack.c.l.b16 %v54
  %v206 = vunpack.c.l.b16 %v55
  %v207 = vunpack.c.l.b16 %v56
  %v208 = vunpack.c.l.b16 %v57
  %v209 = vunpack.c.l.b16 %v58
  %v210 = vunpack.c.l.b16 %v59
  %v211 = vunpack.c.l.b16 %v60
  %v212 = vunpack.c.l.b16 %v61
  %v213 = vunpack.c.l.b16 %v62
  %v214 = vunpack.c.l.b16 %v63
  %v215 = vunpack.c.l.b16 %v64
  %v216 = vunpack.c.l.b16 %v65
  %v217 = vunpack.c.l.b16 %v66
  %v218 = vunpack.c.l.b16 %v67
  %v219 = vunpack.c.l.b16 %v68
  %v220 = vpack.c.b16 %v189, %v188
  %v221 = vpack.c.b16 %v191, %v190
  %v222 = vpack.c.b16 %v193, %v192
  %v223 = vpack.c.b16 %v195, %v194
  %v224 = vpack.c.b16 %v197, %v196
  %v225 = vpack.c.b16 %v199, %v198
  %v226 = vpack.c.b16 %v201, %v200
  %v227 = vpack.c.b16 %v203, %v202
  %v228 = vpack.c.b16 %v205, %v204
  %v229 = vpack.c.b16 %v207, %v206
  %v230 = vpack.c.b16 %v209, %v208
  %v231 = vpack.c.b16 %v211, %v210
  %v232 = vpack.c.b16 %v213, %v212
  %v233 = vpack.c.b16 %v215, %v214
  %v234 = vpack.c.b16 %v217, %v216
  %v235 = vpack.c.b16 %v219, %v218
  %252 = vmatprep.subr.bf16.mxu0 0
  %253 = vmatpush1.bf16.msra.mxu0 %v220
  %254 = vmatprep.subr.bf16.mxu0 0
  %255 = vmatpush1.bf16.msra.mxu0 %v221
  %256 = vmatprep.subr.bf16.mxu0 0
  %257 = vmatpush1.bf16.msra.mxu0 %v222
  %258 = vmatprep.subr.bf16.mxu0 0
  %259 = vmatpush1.bf16.msra.mxu0 %v223
  %260 = vmatprep.subr.bf16.mxu0 0
  %261 = vmatpush1.bf16.msra.mxu0 %v224
  %262 = vmatprep.subr.bf16.mxu0 0
  %263 = vmatpush1.bf16.msra.mxu0 %v225
  %264 = vmatprep.subr.bf16.mxu0 0
  %265 = vmatpush1.bf16.msra.mxu0 %v226
  %266 = vmatprep.subr.bf16.mxu0 0
  %267 = vmatpush1.bf16.msra.mxu0 %v227
  %268 = vmatprep.subr.bf16.mxu0 0
  %269 = vmatpush1.bf16.msra.mxu0 %v228
  %270 = vmatprep.subr.bf16.mxu0 0
  %271 = vmatpush1.bf16.msra.mxu0 %v229
  %272 = vmatprep.subr.bf16.mxu0 0
  %273 = vmatpush1.bf16.msra.mxu0 %v230
  %274 = vmatprep.subr.bf16.mxu0 0
  %275 = vmatpush1.bf16.msra.mxu0 %v231
  %276 = vmatprep.subr.bf16.mxu0 0
  %277 = vmatpush1.bf16.msra.mxu0 %v232
  %278 = vmatprep.subr.bf16.mxu0 0
  %279 = vmatpush1.bf16.msra.mxu0 %v233
  %280 = vmatprep.subr.bf16.mxu0 0
  %281 = vmatpush1.bf16.msra.mxu0 %v234
  %282 = vmatprep.subr.bf16.mxu0 0
  %283 = vmatpush1.bf16.msra.mxu0 %v235
  %284 = vmatprep.mubr.bf16.mxu0 %v125
  %285 = vmatmul.mubr.bf16.gmra.mrb[0].mxu0 %v124
  %v286 = vpop.f32.mrb[0].mxu0
  %v287 = vadd.f32 %v74, %v286
  %v288 = vpop.f32.mrb[0].mxu0
  %v289 = vpop.f32.mrb[0].mxu0
  %v290 = vadd.f32 %v74, %v289
  %v291 = vpop.f32.mrb[0].mxu0
  %292 = vmatprep.mubr.bf16.mxu0 %v127
  %293 = vmatmul.mubr.bf16.gmra.mrb[0].mxu0 %v126
  %v294 = vpop.f32.mrb[0].mxu0
  %v295 = vadd.f32 %v74, %v294
  %v296 = vpop.f32.mrb[0].mxu0
  %v297 = vpop.f32.mrb[0].mxu0
  %v298 = vadd.f32 %v74, %v297
  %v299 = vpop.f32.mrb[0].mxu0
  %300 = vmatprep.mubr.bf16.mxu0 %v129
  %301 = vmatmul.mubr.bf16.gmra.mrb[0].mxu0 %v128
  %v302 = vpop.f32.mrb[0].mxu0
  %v303 = vadd.f32 %v74, %v302
  %v304 = vpop.f32.mrb[0].mxu0
  %v305 = vpop.f32.mrb[0].mxu0
  %v306 = vadd.f32 %v74, %v305
  %v307 = vpop.f32.mrb[0].mxu0
  %308 = vmatprep.mubr.bf16.mxu0 %v131
  %309 = vmatmul.mubr.bf16.gmra.mrb[0].mxu0 %v130
  %v310 = vpop.f32.mrb[0].mxu0
  %v311 = vadd.f32 %v74, %v310
  %v312 = vpop.f32.mrb[0].mxu0
  %v313 = vpop.f32.mrb[0].mxu0
  %v314 = vadd.f32 %v74, %v313
  %v315 = vpop.f32.mrb[0].mxu0
  %316 = vmatprep.mubr.bf16.mxu0 %v133
  %317 = vmatmul.mubr.bf16.gmra.mrb[0].mxu0 %v132
  %v318 = vpop.f32.mrb[0].mxu0
  %v319 = vadd.f32 %v74, %v318
  %v320 = vpop.f32.mrb[0].mxu0
  %v321 = vpop.f32.mrb[0].mxu0
  %v322 = vadd.f32 %v74, %v321
  %v323 = vpop.f32.mrb[0].mxu0
  %324 = vmatprep.mubr.bf16.mxu0 %v135
  %325 = vmatmul.mubr.bf16.gmra.mrb[0].mxu0 %v134
  %v326 = vpop.f32.mrb[0].mxu0
  %v327 = vadd.f32 %v74, %v326
  %v328 = vpop.f32.mrb[0].mxu0
  %v329 = vpop.f32.mrb[0].mxu0
  %v330 = vadd.f32 %v74, %v329
  %v331 = vpop.f32.mrb[0].mxu0
  %332 = vmatprep.mubr.bf16.mxu0 %v137
  %333 = vmatmul.mubr.bf16.gmra.mrb[0].mxu0 %v136
  %v334 = vpop.f32.mrb[0].mxu0
  %v335 = vadd.f32 %v74, %v334
  %v336 = vpop.f32.mrb[0].mxu0
  %v337 = vpop.f32.mrb[0].mxu0
  %v338 = vadd.f32 %v74, %v337
  %v339 = vpop.f32.mrb[0].mxu0
  %340 = vmatprep.mubr.bf16.mxu0 %v139
  %341 = vmatmul.mubr.bf16.gmra.mrb[0].mxu0 %v138
  %v342 = vpop.f32.mrb[0].mxu0
  %v343 = vadd.f32 %v74, %v342
  %v344 = vpop.f32.mrb[0].mxu0
  %v345 = vpop.f32.mrb[0].mxu0
  %v346 = vadd.f32 %v74, %v345
  %v347 = vpop.f32.mrb[0].mxu0
  %348 = vdwg.mxu0
  %vm349 = vcmask 523264
  %v350 = vsel %vm349, %v287, 0.0
  %351 = vadd.xlane.f32.xlu0 %v350
  %v352 = vpop.xlane.xlu0 %351
  %v353 = vsel %vm349, %v290, 0.0
  %354 = vadd.xlane.f32.xlu0 %v353
  %v355 = vpop.xlane.xlu0 %354
  %v356 = vsel %vm349, %v295, 0.0
  %357 = vadd.xlane.f32.xlu0 %v356
  %v358 = vpop.xlane.xlu0 %357
  %v359 = vsel %vm349, %v298, 0.0
  %360 = vadd.xlane.f32.xlu0 %v359
  %v361 = vpop.xlane.xlu0 %360
  %v362 = vsel %vm349, %v303, 0.0
  %363 = vadd.xlane.f32.xlu0 %v362
  %v364 = vpop.xlane.xlu0 %363
  %v365 = vsel %vm349, %v306, 0.0
  %366 = vadd.xlane.f32.xlu0 %v365
  %v367 = vpop.xlane.xlu0 %366
  %v368 = vsel %vm349, %v311, 0.0
  %369 = vadd.xlane.f32.xlu0 %v368
  %v370 = vpop.xlane.xlu0 %369
  %v371 = vsel %vm349, %v314, 0.0
  %372 = vadd.xlane.f32.xlu0 %v371
  %v373 = vpop.xlane.xlu0 %372
  %v374 = vsel %vm349, %v319, 0.0
  %375 = vadd.xlane.f32.xlu0 %v374
  %v376 = vpop.xlane.xlu0 %375
  %v377 = vsel %vm349, %v322, 0.0
  %378 = vadd.xlane.f32.xlu0 %v377
  %v379 = vpop.xlane.xlu0 %378
  %v380 = vsel %vm349, %v327, 0.0
  %381 = vadd.xlane.f32.xlu0 %v380
  %v382 = vpop.xlane.xlu0 %381
  %v383 = vsel %vm349, %v330, 0.0
  %384 = vadd.xlane.f32.xlu0 %v383
  %v385 = vpop.xlane.xlu0 %384
  %v386 = vsel %vm349, %v335, 0.0
  %387 = vadd.xlane.f32.xlu0 %v386
  %v388 = vpop.xlane.xlu0 %387
  %v389 = vsel %vm349, %v338, 0.0
  %390 = vadd.xlane.f32.xlu0 %v389
  %v391 = vpop.xlane.xlu0 %390
  %v392 = vsel %vm349, %v343, 0.0
  %393 = vadd.xlane.f32.xlu0 %v392
  %v394 = vpop.xlane.xlu0 %393
  %v395 = vsel %vm349, %v346, 0.0
  %396 = vadd.xlane.f32.xlu0 %v395
  %v397 = vpop.xlane.xlu0 %396
  %v398 = vrcp.pop 64.0
  %v399 = vmul.f32 %v352, %v398
  %v400 = vmul.f32 %v355, %v398
  %v401 = vmul.f32 %v358, %v398
  %v402 = vmul.f32 %v361, %v398
  %v403 = vmul.f32 %v364, %v398
  %v404 = vmul.f32 %v367, %v398
  %v405 = vmul.f32 %v370, %v398
  %v406 = vmul.f32 %v373, %v398
  %v407 = vmul.f32 %v376, %v398
  %v408 = vmul.f32 %v379, %v398
  %v409 = vmul.f32 %v382, %v398
  %v410 = vmul.f32 %v385, %v398
  %v411 = vmul.f32 %v388, %v398
  %v412 = vmul.f32 %v391, %v398
  %v413 = vmul.f32 %v394, %v398
  %v414 = vmul.f32 %v397, %v398
  %v415 = vsub.f32 %v287, %v399
  %v416 = vsub.f32 %v290, %v400
  %v417 = vsub.f32 %v295, %v401
  %v418 = vsub.f32 %v298, %v402
  %v419 = vsub.f32 %v303, %v403
  %v420 = vsub.f32 %v306, %v404
  %v421 = vsub.f32 %v311, %v405
  %v422 = vsub.f32 %v314, %v406
  %v423 = vsub.f32 %v319, %v407
  %v424 = vsub.f32 %v322, %v408
  %v425 = vsub.f32 %v327, %v409
  %v426 = vsub.f32 %v330, %v410
  %v427 = vsub.f32 %v335, %v411
  %v428 = vsub.f32 %v338, %v412
  %v429 = vsub.f32 %v343, %v413
  %v430 = vsub.f32 %v346, %v414
  %v431 = vmul.f32 %v415, %v415
  %v432 = vmul.f32 %v416, %v416
  %v433 = vmul.f32 %v417, %v417
  %v434 = vmul.f32 %v418, %v418
  %v435 = vmul.f32 %v419, %v419
  %v436 = vmul.f32 %v420, %v420
  %v437 = vmul.f32 %v421, %v421
  %v438 = vmul.f32 %v422, %v422
  %v439 = vmul.f32 %v423, %v423
  %v440 = vmul.f32 %v424, %v424
  %v441 = vmul.f32 %v425, %v425
  %v442 = vmul.f32 %v426, %v426
  %v443 = vmul.f32 %v427, %v427
  %v444 = vmul.f32 %v428, %v428
  %v445 = vmul.f32 %v429, %v429
  %v446 = vmul.f32 %v430, %v430
  %v447 = vsel %vm349, %v431, 0.0
  %448 = vadd.xlane.f32.xlu0 %v447
  %v449 = vpop.xlane.xlu0 %448
  %v450 = vsel %vm349, %v432, 0.0
  %451 = vadd.xlane.f32.xlu0 %v450
  %v452 = vpop.xlane.xlu0 %451
  %v453 = vsel %vm349, %v433, 0.0
  %454 = vadd.xlane.f32.xlu0 %v453
  %v455 = vpop.xlane.xlu0 %454
  %v456 = vsel %vm349, %v434, 0.0
  %457 = vadd.xlane.f32.xlu0 %v456
  %v458 = vpop.xlane.xlu0 %457
  %v459 = vsel %vm349, %v435, 0.0
  %460 = vadd.xlane.f32.xlu0 %v459
  %v461 = vpop.xlane.xlu0 %460
  %v462 = vsel %vm349, %v436, 0.0
  %463 = vadd.xlane.f32.xlu0 %v462
  %v464 = vpop.xlane.xlu0 %463
  %v465 = vsel %vm349, %v437, 0.0
  %466 = vadd.xlane.f32.xlu0 %v465
  %v467 = vpop.xlane.xlu0 %466
  %v468 = vsel %vm349, %v438, 0.0
  %469 = vadd.xlane.f32.xlu0 %v468
  %v470 = vpop.xlane.xlu0 %469
  %v471 = vsel %vm349, %v439, 0.0
  %472 = vadd.xlane.f32.xlu0 %v471
  %v473 = vpop.xlane.xlu0 %472
  %v474 = vsel %vm349, %v440, 0.0
  %475 = vadd.xlane.f32.xlu0 %v474
  %v476 = vpop.xlane.xlu0 %475
  %v477 = vsel %vm349, %v441, 0.0
  %478 = vadd.xlane.f32.xlu0 %v477
  %v479 = vpop.xlane.xlu0 %478
  %v480 = vsel %vm349, %v442, 0.0
  %481 = vadd.xlane.f32.xlu0 %v480
  %v482 = vpop.xlane.xlu0 %481
  %v483 = vsel %vm349, %v443, 0.0
  %484 = vadd.xlane.f32.xlu0 %v483
  %v485 = vpop.xlane.xlu0 %484
  %v486 = vsel %vm349, %v444, 0.0
  %487 = vadd.xlane.f32.xlu0 %v486
  %v488 = vpop.xlane.xlu0 %487
  %v489 = vsel %vm349, %v445, 0.0
  %490 = vadd.xlane.f32.xlu0 %v489
  %v491 = vpop.xlane.xlu0 %490
  %v492 = vsel %vm349, %v446, 0.0
  %493 = vadd.xlane.f32.xlu0 %v492
  %v494 = vpop.xlane.xlu0 %493
  %v495 = vmul.f32 %v449, %v398
  %v496 = vmul.f32 %v452, %v398
  %v497 = vmul.f32 %v455, %v398
  %v498 = vmul.f32 %v458, %v398
  %v499 = vmul.f32 %v461, %v398
  %v500 = vmul.f32 %v464, %v398
  %v501 = vmul.f32 %v467, %v398
  %v502 = vmul.f32 %v470, %v398
  %v503 = vmul.f32 %v473, %v398
  %v504 = vmul.f32 %v476, %v398
  %v505 = vmul.f32 %v479, %v398
  %v506 = vmul.f32 %v482, %v398
  %v507 = vmul.f32 %v485, %v398
  %v508 = vmul.f32 %v488, %v398
  %v509 = vmul.f32 %v491, %v398
  %v510 = vmul.f32 %v494, %v398
  %v511 = vadd.f32 %v495, 1e-05
  %v512 = vadd.f32 %v496, 1e-05
  %v513 = vadd.f32 %v497, 1e-05
  %v514 = vadd.f32 %v498, 1e-05
  %v515 = vadd.f32 %v499, 1e-05
  %v516 = vadd.f32 %v500, 1e-05
  %v517 = vadd.f32 %v501, 1e-05
  %v518 = vadd.f32 %v502, 1e-05
  %v519 = vadd.f32 %v503, 1e-05
  %v520 = vadd.f32 %v504, 1e-05
  %v521 = vadd.f32 %v505, 1e-05
  %v522 = vadd.f32 %v506, 1e-05
  %v523 = vadd.f32 %v507, 1e-05
  %v524 = vadd.f32 %v508, 1e-05
  %v525 = vadd.f32 %v509, 1e-05
  %v526 = vadd.f32 %v510, 1e-05
  %v527 = vrsqrt.pop %v511
  %v528 = vrsqrt.pop %v512
  %v529 = vrsqrt.pop %v513
  %v530 = vrsqrt.pop %v514
  %v531 = vrsqrt.pop %v515
  %v532 = vrsqrt.pop %v516
  %v533 = vrsqrt.pop %v517
  %v534 = vrsqrt.pop %v518
  %v535 = vrsqrt.pop %v519
  %v536 = vrsqrt.pop %v520
  %v537 = vrsqrt.pop %v521
  %v538 = vrsqrt.pop %v522
  %v539 = vrsqrt.pop %v523
  %v540 = vrsqrt.pop %v524
  %v541 = vrsqrt.pop %v525
  %v542 = vrsqrt.pop %v526
  %v543 = vmul.f32 %v415, %v527
  %v544 = vmul.f32 %v416, %v528
  %v545 = vmul.f32 %v417, %v529
  %v546 = vmul.f32 %v418, %v530
  %v547 = vmul.f32 %v419, %v531
  %v548 = vmul.f32 %v420, %v532
  %v549 = vmul.f32 %v421, %v533
  %v550 = vmul.f32 %v422, %v534
  %v551 = vmul.f32 %v423, %v535
  %v552 = vmul.f32 %v424, %v536
  %v553 = vmul.f32 %v425, %v537
  %v554 = vmul.f32 %v426, %v538
  %v555 = vmul.f32 %v427, %v539
  %v556 = vmul.f32 %v428, %v540
  %v557 = vmul.f32 %v429, %v541
  %v558 = vmul.f32 %v430, %v542
  %v559 = vld [vmem:[%s3] sm:$0x1]
  %v561 = vlaneseq
  %v562 = vshrl.u32 %v561, 7
  %v563 = vsub.s32 0, %v562
  %v564 = vrot.slane %v559, %v563
  %v566 = vmul.f32 %v543, %v564
  %v567 = vmul.f32 %v544, %v564
  %v568 = vmul.f32 %v545, %v564
  %v569 = vmul.f32 %v546, %v564
  %v570 = vmul.f32 %v547, %v564
  %v571 = vmul.f32 %v548, %v564
  %v572 = vmul.f32 %v549, %v564
  %v573 = vmul.f32 %v550, %v564
  %v574 = vmul.f32 %v551, %v564
  %v575 = vmul.f32 %v552, %v564
  %v576 = vmul.f32 %v553, %v564
  %v577 = vmul.f32 %v554, %v564
  %v578 = vmul.f32 %v555, %v564
  %v579 = vmul.f32 %v556, %v564
  %v580 = vmul.f32 %v557, %v564
  %v581 = vmul.f32 %v558, %v564
  %v582 = vld [vmem:[%s4] sm:$0x1]
  %v584 = vlaneseq
  %v585 = vshrl.u32 %v584, 7
  %v586 = vsub.s32 0, %v585
  %v587 = vrot.slane %v582, %v586
  %v589 = vadd.f32 %v566, %v587
  %v590 = vadd.f32 %v567, %v587
  %v591 = vadd.f32 %v568, %v587
  %v592 = vadd.f32 %v569, %v587
  %v593 = vadd.f32 %v570, %v587
  %v594 = vadd.f32 %v571, %v587
  %v595 = vadd.f32 %v572, %v587
  %v596 = vadd.f32 %v573, %v587
  %v597 = vadd.f32 %v574, %v587
  %v598 = vadd.f32 %v575, %v587
  %v599 = vadd.f32 %v576, %v587
  %v600 = vadd.f32 %v577, %v587
  %v601 = vadd.f32 %v578, %v587
  %v602 = vadd.f32 %v579, %v587
  %v603 = vadd.f32 %v580, %v587
  %v604 = vadd.f32 %v581, %v587
  %v605 = vpack.c.bf16 %v590, %v589
  %v606 = vpack.c.bf16 %v592, %v591
  %v607 = vpack.c.bf16 %v594, %v593
  %v608 = vpack.c.bf16 %v596, %v595
  %v609 = vpack.c.bf16 %v598, %v597
  %v610 = vpack.c.bf16 %v600, %v599
  %v611 = vpack.c.bf16 %v602, %v601
  %v612 = vpack.c.bf16 %v604, %v603
  %v621 = vunpack.c.l.b16 %v605
  %v622 = vunpack.c.h.b16 %v605
  %v623 = vunpack.c.l.b16 %v606
  %v624 = vunpack.c.h.b16 %v606
  %v625 = vunpack.c.l.b16 %v607
  %v626 = vunpack.c.h.b16 %v607
  %v627 = vunpack.c.l.b16 %v608
  %v628 = vunpack.c.h.b16 %v608
  %v629 = vunpack.c.l.b16 %v609
  %v630 = vunpack.c.h.b16 %v609
  %v631 = vunpack.c.l.b16 %v610
  %v632 = vunpack.c.h.b16 %v610
  %v633 = vunpack.c.l.b16 %v611
  %v634 = vunpack.c.h.b16 %v611
  %v635 = vunpack.c.l.b16 %v612
  %v636 = vunpack.c.h.b16 %v612
  %v637 = vpack.c.b16 %v621, %v621
  %v638 = vpack.c.b16 %v622, %v622
  %v639 = vpack.c.b16 %v623, %v623
  %v640 = vpack.c.b16 %v624, %v624
  %v641 = vpack.c.b16 %v625, %v625
  %v642 = vpack.c.b16 %v626, %v626
  %v643 = vpack.c.b16 %v627, %v627
  %v644 = vpack.c.b16 %v628, %v628
  %v645 = vpack.c.b16 %v629, %v629
  %v646 = vpack.c.b16 %v630, %v630
  %v647 = vpack.c.b16 %v631, %v631
  %v648 = vpack.c.b16 %v632, %v632
  %v649 = vpack.c.b16 %v633, %v633
  %v650 = vpack.c.b16 %v634, %v634
  %v651 = vpack.c.b16 %v635, %v635
  %v652 = vpack.c.b16 %v636, %v636
  %vm669 = vcmask 519168
  %670 = vst.msk [vmem:[%s5] sm:$0xf] %vm669, %v637
  %671 = vst.msk [vmem:[%s5 + $0x4] sm:$0xf] %vm669, %v638
  %672 = vst.msk [vmem:[%s5 + $0x8] sm:$0xf] %vm669, %v639
  %673 = vst.msk [vmem:[%s5 + $0xc] sm:$0xf] %vm669, %v640
  %674 = vst.msk [vmem:[%s5 + $0x10] sm:$0xf] %vm669, %v641
  %675 = vst.msk [vmem:[%s5 + $0x14] sm:$0xf] %vm669, %v642
  %676 = vst.msk [vmem:[%s5 + $0x18] sm:$0xf] %vm669, %v643
  %677 = vst.msk [vmem:[%s5 + $0x1c] sm:$0xf] %vm669, %v644
  %678 = vst.msk [vmem:[%s5 + $0x20] sm:$0xf] %vm669, %v645
  %679 = vst.msk [vmem:[%s5 + $0x24] sm:$0xf] %vm669, %v646
  %680 = vst.msk [vmem:[%s5 + $0x28] sm:$0xf] %vm669, %v647
  %681 = vst.msk [vmem:[%s5 + $0x2c] sm:$0xf] %vm669, %v648
  %682 = vst.msk [vmem:[%s5 + $0x30] sm:$0xf] %vm669, %v649
  %683 = vst.msk [vmem:[%s5 + $0x34] sm:$0xf] %vm669, %v650
  %684 = vst.msk [vmem:[%s5 + $0x38] sm:$0xf] %vm669, %v651
  %685 = vst.msk [vmem:[%s5 + $0x3c] sm:$0xf] %vm669, %v652
  // Predicated region
  $region22: #{attention_forward.5} parent=0 // pred_check
    _
  $region23: #{attention_forward.5} parent=0 // pred_check_branch
    %687 = sbr.rel (0) target = $region25
  $region24: #{attention_forward.5} parent=0 // pred_region
    _
  $region25: #{attention_forward.5} parent=0 // pred_fallthru
    _
  // Predicated region
  $region26: #{attention_forward.5} parent=0 // pred_check
    _
  $region27: #{attention_forward.5} parent=0 // pred_check_branch
    %689 = sbr.rel (0) target = $region29
  $region28: #{attention_forward.5} parent=0 // pred_region
    _
  $region29: #{attention_forward.5} parent=0 // pred_fallthru
    _

// kernel: attention_forward.4
$region0: #{attention_forward.4}
  #allocation0 [shape = 'u32[]', space=smem, size = 0x4, offset = 0x4, fixed_abs, tag = 'smem constant byte address 0x4 - core index']
  #allocation1 [shape = 'u32[144,128]{1,0:T(1,128)}', space=vmem, size = 0x12000, scoped, tag = 'internal scratch']
  %s0 = inlined_call_operand.vmem [shape: bf16[512,64], index: 0, kind: input, shape index: {}]
  %s1 = inlined_call_operand.vmem [shape: bf16[64,64], index: 1, kind: input, shape index: {}]
  %s2 = inlined_call_operand.vmem [shape: f32[1,64], index: 2, kind: input, shape index: {}]
  %s3 = inlined_call_operand.vmem [shape: bf16[512,64], index: 3, kind: output, shape index: {}]
  %s4 = sld [smem:[#allocation0]]
  $region22: #{attention_forward.4} parent=0
    _
  %s6 = ssub.s32 1, %s4
  %s7 = scalar_select 0, %s6, %s4
  // Predicated region
  $region2: #{attention_forward.4} parent=0 // pred_check
    _
  $region3: #{attention_forward.4} parent=0 // pred_check_branch
    %9 = sbr.rel (0) target = $region5
  $region4: #{attention_forward.4} parent=0 // pred_region
    _
  $region5: #{attention_forward.4} parent=0 // pred_fallthru
    _
  // Predicated region
  $region6: #{attention_forward.4} parent=0 // pred_check
    _
  $region7: #{attention_forward.4} parent=0 // pred_check_branch
    %11 = sbr.rel (0) target = $region9
  $region8: #{attention_forward.4} parent=0 // pred_region
    _
  $region9: #{attention_forward.4} parent=0 // pred_fallthru
    _
  // Predicated region
  $region10: #{attention_forward.4} parent=0 // pred_check
    _
  $region11: #{attention_forward.4} parent=0 // pred_check_branch
    %13 = sbr.rel (0) target = $region13
  $region12: #{attention_forward.4} parent=0 // pred_region
    _
  $region13: #{attention_forward.4} parent=0 // pred_fallthru
    _
  %v15 = vld [vmem:[%s0] sm:$0xf]
  %v16 = vld [vmem:[%s0 + $0x4] sm:$0xf]
  %v17 = vld [vmem:[%s0 + $0x8] sm:$0xf]
  %v18 = vld [vmem:[%s0 + $0xc] sm:$0xf]
  %v19 = vld [vmem:[%s0 + $0x10] sm:$0xf]
  %v20 = vld [vmem:[%s0 + $0x14] sm:$0xf]
  %v21 = vld [vmem:[%s0 + $0x18] sm:$0xf]
  %v22 = vld [vmem:[%s0 + $0x1c] sm:$0xf]
  %v23 = vld [vmem:[%s0 + $0x20] sm:$0xf]
  %v24 = vld [vmem:[%s0 + $0x24] sm:$0xf]
  %v25 = vld [vmem:[%s0 + $0x28] sm:$0xf]
  %v26 = vld [vmem:[%s0 + $0x2c] sm:$0xf]
  %v27 = vld [vmem:[%s0 + $0x30] sm:$0xf]
  %v28 = vld [vmem:[%s0 + $0x34] sm:$0xf]
  %v29 = vld [vmem:[%s0 + $0x38] sm:$0xf]
  %v30 = vld [vmem:[%s0 + $0x3c] sm:$0xf]
  %v31 = vld [vmem:[%s0 + $0x40] sm:$0xf]
  %v32 = vld [vmem:[%s0 + $0x44] sm:$0xf]
  %v33 = vld [vmem:[%s0 + $0x48] sm:$0xf]
  %v34 = vld [vmem:[%s0 + $0x4c] sm:$0xf]
  %v35 = vld [vmem:[%s0 + $0x50] sm:$0xf]
  %v36 = vld [vmem:[%s0 + $0x54] sm:$0xf]
  %v37 = vld [vmem:[%s0 + $0x58] sm:$0xf]
  %v38 = vld [vmem:[%s0 + $0x5c] sm:$0xf]
  %v39 = vld [vmem:[%s0 + $0x60] sm:$0xf]
  %v40 = vld [vmem:[%s0 + $0x64] sm:$0xf]
  %v41 = vld [vmem:[%s0 + $0x68] sm:$0xf]
  %v42 = vld [vmem:[%s0 + $0x6c] sm:$0xf]
  %v43 = vld [vmem:[%s0 + $0x70] sm:$0xf]
  %v44 = vld [vmem:[%s0 + $0x74] sm:$0xf]
  %v45 = vld [vmem:[%s0 + $0x78] sm:$0xf]
  %v46 = vld [vmem:[%s0 + $0x7c] sm:$0xf]
  %v47 = vld [vmem:[%s0 + $0x80] sm:$0xf]
  %v48 = vld [vmem:[%s0 + $0x84] sm:$0xf]
  %v49 = vld [vmem:[%s0 + $0x88] sm:$0xf]
  %v50 = vld [vmem:[%s0 + $0x8c] sm:$0xf]
  %v51 = vld [vmem:[%s0 + $0x90] sm:$0xf]
  %v52 = vld [vmem:[%s0 + $0x94] sm:$0xf]
  %v53 = vld [vmem:[%s0 + $0x98] sm:$0xf]
  %v54 = vld [vmem:[%s0 + $0x9c] sm:$0xf]
  %v55 = vld [vmem:[%s0 + $0xa0] sm:$0xf]
  %v56 = vld [vmem:[%s0 + $0xa4] sm:$0xf]
  %v57 = vld [vmem:[%s0 + $0xa8] sm:$0xf]
  %v58 = vld [vmem:[%s0 + $0xac] sm:$0xf]
  %v59 = vld [vmem:[%s0 + $0xb0] sm:$0xf]
  %v60 = vld [vmem:[%s0 + $0xb4] sm:$0xf]
  %v61 = vld [vmem:[%s0 + $0xb8] sm:$0xf]
  %v62 = vld [vmem:[%s0 + $0xbc] sm:$0xf]
  %v63 = vld [vmem:[%s0 + $0xc0] sm:$0xf]
  %v64 = vld [vmem:[%s0 + $0xc4] sm:$0xf]
  %v65 = vld [vmem:[%s0 + $0xc8] sm:$0xf]
  %v66 = vld [vmem:[%s0 + $0xcc] sm:$0xf]
  %v67 = vld [vmem:[%s0 + $0xd0] sm:$0xf]
  %v68 = vld [vmem:[%s0 + $0xd4] sm:$0xf]
  %v69 = vld [vmem:[%s0 + $0xd8] sm:$0xf]
  %v70 = vld [vmem:[%s0 + $0xdc] sm:$0xf]
  %v71 = vld [vmem:[%s0 + $0xe0] sm:$0xf]
  %v72 = vld [vmem:[%s0 + $0xe4] sm:$0xf]
  %v73 = vld [vmem:[%s0 + $0xe8] sm:$0xf]
  %v74 = vld [vmem:[%s0 + $0xec] sm:$0xf]
  %v75 = vld [vmem:[%s0 + $0xf0] sm:$0xf]
  %v76 = vld [vmem:[%s0 + $0xf4] sm:$0xf]
  %v77 = vld [vmem:[%s0 + $0xf8] sm:$0xf]
  %v78 = vld [vmem:[%s0 + $0xfc] sm:$0xf]
  %v79 = vld [vmem:[%s1] sm:$0xf]
  %v80 = vld [vmem:[%s1 + $0x4] sm:$0xf]
  %v81 = vld [vmem:[%s1 + $0x8] sm:$0xf]
  %v82 = vld [vmem:[%s1 + $0xc] sm:$0xf]
  %v83 = vld [vmem:[%s1 + $0x10] sm:$0xf]
  %v84 = vld [vmem:[%s1 + $0x14] sm:$0xf]
  %v85 = vld [vmem:[%s1 + $0x18] sm:$0xf]
  %v86 = vld [vmem:[%s1 + $0x1c] sm:$0xf]
  %v87 = vld [vmem:[%s2] sm:$0x1]
  %v89 = vlaneseq
  %v90 = vshrl.u32 %v89, 7
  %v91 = vsub.s32 0, %v90
  %v92 = vrot.slane %v87, %v91
  %v158 = vunpack.c.l.b16 %v15
  %v159 = vunpack.c.l.b16 %v16
  %v160 = vunpack.c.l.b16 %v17
  %v161 = vunpack.c.l.b16 %v18
  %v162 = vunpack.c.l.b16 %v19
  %v163 = vunpack.c.l.b16 %v20
  %v164 = vunpack.c.l.b16 %v21
  %v165 = vunpack.c.l.b16 %v22
  %v166 = vunpack.c.l.b16 %v23
  %v167 = vunpack.c.l.b16 %v24
  %v168 = vunpack.c.l.b16 %v25
  %v169 = vunpack.c.l.b16 %v26
  %v170 = vunpack.c.l.b16 %v27
  %v171 = vunpack.c.l.b16 %v28
  %v172 = vunpack.c.l.b16 %v29
  %v173 = vunpack.c.l.b16 %v30
  %v174 = vunpack.c.l.b16 %v31
  %v175 = vunpack.c.l.b16 %v32
  %v176 = vunpack.c.l.b16 %v33
  %v177 = vunpack.c.l.b16 %v34
  %v178 = vunpack.c.l.b16 %v35
  %v179 = vunpack.c.l.b16 %v36
  %v180 = vunpack.c.l.b16 %v37
  %v181 = vunpack.c.l.b16 %v38
  %v182 = vunpack.c.l.b16 %v39
  %v183 = vunpack.c.l.b16 %v40
  %v184 = vunpack.c.l.b16 %v41
  %v185 = vunpack.c.l.b16 %v42
  %v186 = vunpack.c.l.b16 %v43
  %v187 = vunpack.c.l.b16 %v44
  %v188 = vunpack.c.l.b16 %v45
  %v189 = vunpack.c.l.b16 %v46
  %v190 = vunpack.c.l.b16 %v47
  %v191 = vunpack.c.l.b16 %v48
  %v192 = vunpack.c.l.b16 %v49
  %v193 = vunpack.c.l.b16 %v50
  %v194 = vunpack.c.l.b16 %v51
  %v195 = vunpack.c.l.b16 %v52
  %v196 = vunpack.c.l.b16 %v53
  %v197 = vunpack.c.l.b16 %v54
  %v198 = vunpack.c.l.b16 %v55
  %v199 = vunpack.c.l.b16 %v56
  %v200 = vunpack.c.l.b16 %v57
  %v201 = vunpack.c.l.b16 %v58
  %v202 = vunpack.c.l.b16 %v59
  %v203 = vunpack.c.l.b16 %v60
  %v204 = vunpack.c.l.b16 %v61
  %v205 = vunpack.c.l.b16 %v62
  %v206 = vunpack.c.l.b16 %v63
  %v207 = vunpack.c.l.b16 %v64
  %v208 = vunpack.c.l.b16 %v65
  %v209 = vunpack.c.l.b16 %v66
  %v210 = vunpack.c.l.b16 %v67
  %v211 = vunpack.c.l.b16 %v68
  %v212 = vunpack.c.l.b16 %v69
  %v213 = vunpack.c.l.b16 %v70
  %v214 = vunpack.c.l.b16 %v71
  %v215 = vunpack.c.l.b16 %v72
  %v216 = vunpack.c.l.b16 %v73
  %v217 = vunpack.c.l.b16 %v74
  %v218 = vunpack.c.l.b16 %v75
  %v219 = vunpack.c.l.b16 %v76
  %v220 = vunpack.c.l.b16 %v77
  %v221 = vunpack.c.l.b16 %v78
  %v222 = vpack.c.b16 %v159, %v158
  %v223 = vpack.c.b16 %v161, %v160
  %v224 = vpack.c.b16 %v163, %v162
  %v225 = vpack.c.b16 %v165, %v164
  %v226 = vpack.c.b16 %v167, %v166
  %v227 = vpack.c.b16 %v169, %v168
  %v228 = vpack.c.b16 %v171, %v170
  %v229 = vpack.c.b16 %v173, %v172
  %v230 = vpack.c.b16 %v175, %v174
  %v231 = vpack.c.b16 %v177, %v176
  %v232 = vpack.c.b16 %v179, %v178
  %v233 = vpack.c.b16 %v181, %v180
  %v234 = vpack.c.b16 %v183, %v182
  %v235 = vpack.c.b16 %v185, %v184
  %v236 = vpack.c.b16 %v187, %v186
  %v237 = vpack.c.b16 %v189, %v188
  %v238 = vpack.c.b16 %v191, %v190
  %v239 = vpack.c.b16 %v193, %v192
  %v240 = vpack.c.b16 %v195, %v194
  %v241 = vpack.c.b16 %v197, %v196
  %v242 = vpack.c.b16 %v199, %v198
  %v243 = vpack.c.b16 %v201, %v200
  %v244 = vpack.c.b16 %v203, %v202
  %v245 = vpack.c.b16 %v205, %v204
  %v246 = vpack.c.b16 %v207, %v206
  %v247 = vpack.c.b16 %v209, %v208
  %v248 = vpack.c.b16 %v211, %v210
  %v249 = vpack.c.b16 %v213, %v212
  %v250 = vpack.c.b16 %v215, %v214
  %v251 = vpack.c.b16 %v217, %v216
  %v252 = vpack.c.b16 %v219, %v218
  %v253 = vpack.c.b16 %v221, %v220
  %v262 = vunpack.c.l.b16 %v79
  %v263 = vunpack.c.l.b16 %v80
  %v264 = vunpack.c.l.b16 %v81
  %v265 = vunpack.c.l.b16 %v82
  %v266 = vunpack.c.l.b16 %v83
  %v267 = vunpack.c.l.b16 %v84
  %v268 = vunpack.c.l.b16 %v85
  %v269 = vunpack.c.l.b16 %v86
  %v270 = vpack.c.b16 %v263, %v262
  %v271 = vpack.c.b16 %v265, %v264
  %v272 = vpack.c.b16 %v267, %v266
  %v273 = vpack.c.b16 %v269, %v268
  %vm278 = vcmask 523264
  %v280 = vsel %vm278, %v222, 0
  %v283 = vsel %vm278, %v223, 0
  %v286 = vsel %vm278, %v224, 0
  %v289 = vsel %vm278, %v225, 0
  %v292 = vsel %vm278, %v226, 0
  %v295 = vsel %vm278, %v227, 0
  %v298 = vsel %vm278, %v228, 0
  %v301 = vsel %vm278, %v229, 0
  %v304 = vsel %vm278, %v230, 0
  %v307 = vsel %vm278, %v231, 0
  %v310 = vsel %vm278, %v232, 0
  %v313 = vsel %vm278, %v233, 0
  %v316 = vsel %vm278, %v234, 0
  %v319 = vsel %vm278, %v235, 0
  %v322 = vsel %vm278, %v236, 0
  %v325 = vsel %vm278, %v237, 0
  %v328 = vsel %vm278, %v238, 0
  %v331 = vsel %vm278, %v239, 0
  %v334 = vsel %vm278, %v240, 0
  %v337 = vsel %vm278, %v241, 0
  %v340 = vsel %vm278, %v242, 0
  %v343 = vsel %vm278, %v243, 0
  %v346 = vsel %vm278, %v244, 0
  %v349 = vsel %vm278, %v245, 0
  %v352 = vsel %vm278, %v246, 0
  %v355 = vsel %vm278, %v247, 0
  %v358 = vsel %vm278, %v248, 0
  %v361 = vsel %vm278, %v249, 0
  %v364 = vsel %vm278, %v250, 0
  %v367 = vsel %vm278, %v251, 0
  %v370 = vsel %vm278, %v252, 0
  %v373 = vsel %vm278, %v253, 0
  %375 = vmatprep.subr.bf16.mxu0 0
  %376 = vmatpush1.bf16.msra.mxu0 %v270
  %377 = vmatprep.subr.bf16.mxu0 0
  %378 = vmatpush1.bf16.msra.mxu0 %v271
  %379 = vmatprep.subr.bf16.mxu0 0
  %380 = vmatpush1.bf16.msra.mxu0 %v272
  %381 = vmatprep.subr.bf16.mxu0 0
  %382 = vmatpush1.bf16.msra.mxu0 %v273
  %383 = vmatprep.subr.bf16.mxu0 0
  %384 = vmatpush1.bf16.msra.mxu0 0
  %385 = vmatprep.subr.bf16.mxu0 0
  %386 = vmatpush1.bf16.msra.mxu0 0
  %387 = vmatprep.subr.bf16.mxu0 0
  %388 = vmatpush1.bf16.msra.mxu0 0
  %389 = vmatprep.subr.bf16.mxu0 0
  %390 = vmatpush1.bf16.msra.mxu0 0
  %391 = vmatprep.subr.bf16.mxu0 0
  %392 = vmatpush1.bf16.msra.mxu0 0
  %393 = vmatprep.subr.bf16.mxu0 0
  %394 = vmatpush1.bf16.msra.mxu0 0
  %395 = vmatprep.subr.bf16.mxu0 0
  %396 = vmatpush1.bf16.msra.mxu0 0
  %397 = vmatprep.subr.bf16.mxu0 0
  %398 = vmatpush1.bf16.msra.mxu0 0
  %399 = vmatprep.subr.bf16.mxu0 0
  %400 = vmatpush1.bf16.msra.mxu0 0
  %401 = vmatprep.subr.bf16.mxu0 0
  %402 = vmatpush1.bf16.msra.mxu0 0
  %403 = vmatprep.subr.bf16.mxu0 0
  %404 = vmatpush1.bf16.msra.mxu0 0
  %405 = vmatprep.subr.bf16.mxu0 0
  %406 = vmatpush1.bf16.msra.mxu0 0
  %407 = vmatprep.mubr.bf16.mxu0 0
  %408 = vmatmul.mubr.bf16.gmra.mrb[0].mxu0 %v280
  %v409 = vpop.f32.mrb[0].mxu0
  %v410 = vadd.f32 %v92, %v409
  %v411 = vpop.f32.mrb[0].mxu0
  %v412 = vpop.f32.mrb[0].mxu0
  %v413 = vadd.f32 %v92, %v412
  %v414 = vpop.f32.mrb[0].mxu0
  %415 = vmatprep.mubr.bf16.mxu0 0
  %416 = vmatmul.mubr.bf16.gmra.mrb[0].mxu0 %v283
  %v417 = vpop.f32.mrb[0].mxu0
  %v418 = vadd.f32 %v92, %v417
  %v419 = vpop.f32.mrb[0].mxu0
  %v420 = vpop.f32.mrb[0].mxu0
  %v421 = vadd.f32 %v92, %v420
  %v422 = vpop.f32.mrb[0].mxu0
  %423 = vmatprep.mubr.bf16.mxu0 0
  %424 = vmatmul.mubr.bf16.gmra.mrb[0].mxu0 %v286
  %v425 = vpop.f32.mrb[0].mxu0
  %v426 = vadd.f32 %v92, %v425
  %v427 = vpop.f32.mrb[0].mxu0
  %v428 = vpop.f32.mrb[0].mxu0
  %v429 = vadd.f32 %v92, %v428
  %v430 = vpop.f32.mrb[0].mxu0
  %431 = vmatprep.mubr.bf16.mxu0 0
  %432 = vmatmul.mubr.bf16.gmra.mrb[0].mxu0 %v289
  %v433 = vpop.f32.mrb[0].mxu0
  %v434 = vadd.f32 %v92, %v433
  %v435 = vpop.f32.mrb[0].mxu0
  %v436 = vpop.f32.mrb[0].mxu0
  %v437 = vadd.f32 %v92, %v436
  %v438 = vpop.f32.mrb[0].mxu0
  %439 = vmatprep.mubr.bf16.mxu0 0
  %440 = vmatmul.mubr.bf16.gmra.mrb[0].mxu0 %v292
  %v441 = vpop.f32.mrb[0].mxu0
  %v442 = vadd.f32 %v92, %v441
  %v443 = vpop.f32.mrb[0].mxu0
  %v444 = vpop.f32.mrb[0].mxu0
  %v445 = vadd.f32 %v92, %v444
  %v446 = vpop.f32.mrb[0].mxu0
  %447 = vmatprep.mubr.bf16.mxu0 0
  %448 = vmatmul.mubr.bf16.gmra.mrb[0].mxu0 %v295
  %v449 = vpop.f32.mrb[0].mxu0
  %v450 = vadd.f32 %v92, %v449
  %v451 = vpop.f32.mrb[0].mxu0
  %v452 = vpop.f32.mrb[0].mxu0
  %v453 = vadd.f32 %v92, %v452
  %v454 = vpop.f32.mrb[0].mxu0
  %455 = vmatprep.mubr.bf16.mxu0 0
  %456 = vmatmul.mubr.bf16.gmra.mrb[0].mxu0 %v298
  %v457 = vpop.f32.mrb[0].mxu0
  %v458 = vadd.f32 %v92, %v457
  %v459 = vpop.f32.mrb[0].mxu0
  %v460 = vpop.f32.mrb[0].mxu0
  %v461 = vadd.f32 %v92, %v460
  %v462 = vpop.f32.mrb[0].mxu0
  %463 = vmatprep.mubr.bf16.mxu0 0
  %464 = vmatmul.mubr.bf16.gmra.mrb[0].mxu0 %v301
  %v465 = vpop.f32.mrb[0].mxu0
  %v466 = vadd.f32 %v92, %v465
  %v467 = vpop.f32.mrb[0].mxu0
  %v468 = vpop.f32.mrb[0].mxu0
  %v469 = vadd.f32 %v92, %v468
  %v470 = vpop.f32.mrb[0].mxu0
  %471 = vmatprep.mubr.bf16.mxu0 0
  %472 = vmatmul.mubr.bf16.gmra.mrb[0].mxu0 %v304
  %v473 = vpop.f32.mrb[0].mxu0
  %v474 = vadd.f32 %v92, %v473
  %v475 = vpop.f32.mrb[0].mxu0
  %v476 = vpop.f32.mrb[0].mxu0
  %v477 = vadd.f32 %v92, %v476
  %v478 = vpop.f32.mrb[0].mxu0
  %479 = vmatprep.mubr.bf16.mxu0 0
  %480 = vmatmul.mubr.bf16.gmra.mrb[0].mxu0 %v307
  %v481 = vpop.f32.mrb[0].mxu0
  %v482 = vadd.f32 %v92, %v481
  %v483 = vpop.f32.mrb[0].mxu0
  %v484 = vpop.f32.mrb[0].mxu0
  %v485 = vadd.f32 %v92, %v484
  %v486 = vpop.f32.mrb[0].mxu0
  %487 = vmatprep.mubr.bf16.mxu0 0
  %488 = vmatmul.mubr.bf16.gmra.mrb[0].mxu0 %v310
  %v489 = vpop.f32.mrb[0].mxu0
  %v490 = vadd.f32 %v92, %v489
  %v491 = vpop.f32.mrb[0].mxu0
  %v492 = vpop.f32.mrb[0].mxu0
  %v493 = vadd.f32 %v92, %v492
  %v494 = vpop.f32.mrb[0].mxu0
  %495 = vmatprep.mubr.bf16.mxu0 0
  %496 = vmatmul.mubr.bf16.gmra.mrb[0].mxu0 %v313
  %v497 = vpop.f32.mrb[0].mxu0
  %v498 = vadd.f32 %v92, %v497
  %v499 = vpop.f32.mrb[0].mxu0
  %v500 = vpop.f32.mrb[0].mxu0
  %v501 = vadd.f32 %v92, %v500
  %v502 = vpop.f32.mrb[0].mxu0
  %503 = vmatprep.mubr.bf16.mxu0 0
  %504 = vmatmul.mubr.bf16.gmra.mrb[0].mxu0 %v316
  %v505 = vpop.f32.mrb[0].mxu0
  %v506 = vadd.f32 %v92, %v505
  %v507 = vpop.f32.mrb[0].mxu0
  %v508 = vpop.f32.mrb[0].mxu0
  %v509 = vadd.f32 %v92, %v508
  %v510 = vpop.f32.mrb[0].mxu0
  %511 = vmatprep.mubr.bf16.mxu0 0
  %512 = vmatmul.mubr.bf16.gmra.mrb[0].mxu0 %v319
  %v513 = vpop.f32.mrb[0].mxu0
  %v514 = vadd.f32 %v92, %v513
  %v515 = vpop.f32.mrb[0].mxu0
  %v516 = vpop.f32.mrb[0].mxu0
  %v517 = vadd.f32 %v92, %v516
  %v518 = vpop.f32.mrb[0].mxu0
  %519 = vmatprep.mubr.bf16.mxu0 0
  %520 = vmatmul.mubr.bf16.gmra.mrb[0].mxu0 %v322
  %v521 = vpop.f32.mrb[0].mxu0
  %v522 = vadd.f32 %v92, %v521
  %v523 = vpop.f32.mrb[0].mxu0
  %v524 = vpop.f32.mrb[0].mxu0
  %v525 = vadd.f32 %v92, %v524
  %v526 = vpop.f32.mrb[0].mxu0
  %527 = vmatprep.mubr.bf16.mxu0 0
  %528 = vmatmul.mubr.bf16.gmra.mrb[0].mxu0 %v325
  %v529 = vpop.f32.mrb[0].mxu0
  %v530 = vadd.f32 %v92, %v529
  %v531 = vpop.f32.mrb[0].mxu0
  %v532 = vpop.f32.mrb[0].mxu0
  %v533 = vadd.f32 %v92, %v532
  %v534 = vpop.f32.mrb[0].mxu0
  %535 = vmatprep.mubr.bf16.mxu0 0
  %536 = vmatmul.mubr.bf16.gmra.mrb[0].mxu0 %v328
  %v537 = vpop.f32.mrb[0].mxu0
  %v538 = vadd.f32 %v92, %v537
  %v539 = vpop.f32.mrb[0].mxu0
  %v540 = vpop.f32.mrb[0].mxu0
  %v541 = vadd.f32 %v92, %v540
  %v542 = vpop.f32.mrb[0].mxu0
  %543 = vmatprep.mubr.bf16.mxu0 0
  %544 = vmatmul.mubr.bf16.gmra.mrb[0].mxu0 %v331
  %v545 = vpop.f32.mrb[0].mxu0
  %v546 = vadd.f32 %v92, %v545
  %v547 = vpop.f32.mrb[0].mxu0
  %v548 = vpop.f32.mrb[0].mxu0
  %v549 = vadd.f32 %v92, %v548
  %v550 = vpop.f32.mrb[0].mxu0
  %551 = vmatprep.mubr.bf16.mxu0 0
  %552 = vmatmul.mubr.bf16.gmra.mrb[0].mxu0 %v334
  %v553 = vpop.f32.mrb[0].mxu0
  %v554 = vadd.f32 %v92, %v553
  %v555 = vpop.f32.mrb[0].mxu0
  %v556 = vpop.f32.mrb[0].mxu0
  %v557 = vadd.f32 %v92, %v556
  %v558 = vpop.f32.mrb[0].mxu0
  %559 = vmatprep.mubr.bf16.mxu0 0
  %560 = vmatmul.mubr.bf16.gmra.mrb[0].mxu0 %v337
  %v561 = vpop.f32.mrb[0].mxu0
  %v562 = vadd.f32 %v92, %v561
  %v563 = vpop.f32.mrb[0].mxu0
  %v564 = vpop.f32.mrb[0].mxu0
  %v565 = vadd.f32 %v92, %v564
  %v566 = vpop.f32.mrb[0].mxu0
  %567 = vmatprep.mubr.bf16.mxu0 0
  %568 = vmatmul.mubr.bf16.gmra.mrb[0].mxu0 %v340
  %v569 = vpop.f32.mrb[0].mxu0
  %v570 = vadd.f32 %v92, %v569
  %v571 = vpop.f32.mrb[0].mxu0
  %v572 = vpop.f32.mrb[0].mxu0
  %v573 = vadd.f32 %v92, %v572
  %v574 = vpop.f32.mrb[0].mxu0
  %575 = vmatprep.mubr.bf16.mxu0 0
  %576 = vmatmul.mubr.bf16.gmra.mrb[0].mxu0 %v343
  %v577 = vpop.f32.mrb[0].mxu0
  %v578 = vadd.f32 %v92, %v577
  %v579 = vpop.f32.mrb[0].mxu0
  %v580 = vpop.f32.mrb[0].mxu0
  %v581 = vadd.f32 %v92, %v580
  %v582 = vpop.f32.mrb[0].mxu0
  %583 = vmatprep.mubr.bf16.mxu0 0
  %584 = vmatmul.mubr.bf16.gmra.mrb[0].mxu0 %v346
  %v585 = vpop.f32.mrb[0].mxu0
  %v586 = vadd.f32 %v92, %v585
  %v587 = vpop.f32.mrb[0].mxu0
  %v588 = vpop.f32.mrb[0].mxu0
  %v589 = vadd.f32 %v92, %v588
  %v590 = vpop.f32.mrb[0].mxu0
  %591 = vmatprep.mubr.bf16.mxu0 0
  %592 = vmatmul.mubr.bf16.gmra.mrb[0].mxu0 %v349
  %v593 = vpop.f32.mrb[0].mxu0
  %v594 = vadd.f32 %v92, %v593
  %v595 = vpop.f32.mrb[0].mxu0
  %v596 = vpop.f32.mrb[0].mxu0
  %v597 = vadd.f32 %v92, %v596
  %v598 = vpop.f32.mrb[0].mxu0
  %599 = vmatprep.mubr.bf16.mxu0 0
  %600 = vmatmul.mubr.bf16.gmra.mrb[0].mxu0 %v352
  %v601 = vpop.f32.mrb[0].mxu0
  %v602 = vadd.f32 %v92, %v601
  %v603 = vpop.f32.mrb[0].mxu0
  %v604 = vpop.f32.mrb[0].mxu0
  %v605 = vadd.f32 %v92, %v604
  %v606 = vpop.f32.mrb[0].mxu0
  %607 = vmatprep.mubr.bf16.mxu0 0
  %608 = vmatmul.mubr.bf16.gmra.mrb[0].mxu0 %v355
  %v609 = vpop.f32.mrb[0].mxu0
  %v610 = vadd.f32 %v92, %v609
  %v611 = vpop.f32.mrb[0].mxu0
  %v612 = vpop.f32.mrb[0].mxu0
  %v613 = vadd.f32 %v92, %v612
  %v614 = vpop.f32.mrb[0].mxu0
  %615 = vmatprep.mubr.bf16.mxu0 0
  %616 = vmatmul.mubr.bf16.gmra.mrb[0].mxu0 %v358
  %v617 = vpop.f32.mrb[0].mxu0
  %v618 = vadd.f32 %v92, %v617
  %v619 = vpop.f32.mrb[0].mxu0
  %v620 = vpop.f32.mrb[0].mxu0
  %v621 = vadd.f32 %v92, %v620
  %v622 = vpop.f32.mrb[0].mxu0
  %623 = vmatprep.mubr.bf16.mxu0 0
  %624 = vmatmul.mubr.bf16.gmra.mrb[0].mxu0 %v361
  %v625 = vpop.f32.mrb[0].mxu0
  %v626 = vadd.f32 %v92, %v625
  %v627 = vpop.f32.mrb[0].mxu0
  %v628 = vpop.f32.mrb[0].mxu0
  %v629 = vadd.f32 %v92, %v628
  %v630 = vpop.f32.mrb[0].mxu0
  %631 = vmatprep.mubr.bf16.mxu0 0
  %632 = vmatmul.mubr.bf16.gmra.mrb[0].mxu0 %v364
  %v633 = vpop.f32.mrb[0].mxu0
  %v634 = vadd.f32 %v92, %v633
  %v635 = vpop.f32.mrb[0].mxu0
  %v636 = vpop.f32.mrb[0].mxu0
  %v637 = vadd.f32 %v92, %v636
  %v638 = vpop.f32.mrb[0].mxu0
  %639 = vmatprep.mubr.bf16.mxu0 0
  %640 = vmatmul.mubr.bf16.gmra.mrb[0].mxu0 %v367
  %v641 = vpop.f32.mrb[0].mxu0
  %v642 = vadd.f32 %v92, %v641
  %v643 = vpop.f32.mrb[0].mxu0
  %v644 = vpop.f32.mrb[0].mxu0
  %v645 = vadd.f32 %v92, %v644
  %v646 = vpop.f32.mrb[0].mxu0
  %647 = vmatprep.mubr.bf16.mxu0 0
  %648 = vmatmul.mubr.bf16.gmra.mrb[0].mxu0 %v370
  %v649 = vpop.f32.mrb[0].mxu0
  %v650 = vadd.f32 %v92, %v649
  %v651 = vpop.f32.mrb[0].mxu0
  %v652 = vpop.f32.mrb[0].mxu0
  %v653 = vadd.f32 %v92, %v652
  %v654 = vpop.f32.mrb[0].mxu0
  %655 = vmatprep.mubr.bf16.mxu0 0
  %656 = vmatmul.mubr.bf16.gmra.mrb[0].mxu0 %v373
  %v657 = vpop.f32.mrb[0].mxu0
  %v658 = vadd.f32 %v92, %v657
  %v659 = vpop.f32.mrb[0].mxu0
  %v660 = vpop.f32.mrb[0].mxu0
  %v661 = vadd.f32 %v92, %v660
  %v662 = vpop.f32.mrb[0].mxu0
  %663 = vdwg.mxu0
  %v664 = vpack.c.bf16 %v413, %v410
  %v665 = vpack.c.bf16 %v421, %v418
  %v666 = vpack.c.bf16 %v429, %v426
  %v667 = vpack.c.bf16 %v437, %v434
  %v668 = vpack.c.bf16 %v445, %v442
  %v669 = vpack.c.bf16 %v453, %v450
  %v670 = vpack.c.bf16 %v461, %v458
  %v671 = vpack.c.bf16 %v469, %v466
  %v672 = vpack.c.bf16 %v477, %v474
  %v673 = vpack.c.bf16 %v485, %v482
  %v674 = vpack.c.bf16 %v493, %v490
  %v675 = vpack.c.bf16 %v501, %v498
  %v676 = vpack.c.bf16 %v509, %v506
  %v677 = vpack.c.bf16 %v517, %v514
  %v678 = vpack.c.bf16 %v525, %v522
  %v679 = vpack.c.bf16 %v533, %v530
  %v680 = vpack.c.bf16 %v541, %v538
  %v681 = vpack.c.bf16 %v549, %v546
  %v682 = vpack.c.bf16 %v557, %v554
  %v683 = vpack.c.bf16 %v565, %v562
  %v684 = vpack.c.bf16 %v573, %v570
  %v685 = vpack.c.bf16 %v581, %v578
  %v686 = vpack.c.bf16 %v589, %v586
  %v687 = vpack.c.bf16 %v597, %v594
  %v688 = vpack.c.bf16 %v605, %v602
  %v689 = vpack.c.bf16 %v613, %v610
  %v690 = vpack.c.bf16 %v621, %v618
  %v691 = vpack.c.bf16 %v629, %v626
  %v692 = vpack.c.bf16 %v637, %v634
  %v693 = vpack.c.bf16 %v645, %v642
  %v694 = vpack.c.bf16 %v653, %v650
  %v695 = vpack.c.bf16 %v661, %v658
  %v728 = vunpack.c.l.b16 %v664
  %v729 = vunpack.c.h.b16 %v664
  %v730 = vunpack.c.l.b16 %v665
  %v731 = vunpack.c.h.b16 %v665
  %v732 = vunpack.c.l.b16 %v666
  %v733 = vunpack.c.h.b16 %v666
  %v734 = vunpack.c.l.b16 %v667
  %v735 = vunpack.c.h.b16 %v667
  %v736 = vunpack.c.l.b16 %v668
  %v737 = vunpack.c.h.b16 %v668
  %v738 = vunpack.c.l.b16 %v669
  %v739 = vunpack.c.h.b16 %v669
  %v740 = vunpack.c.l.b16 %v670
  %v741 = vunpack.c.h.b16 %v670
  %v742 = vunpack.c.l.b16 %v671
  %v743 = vunpack.c.h.b16 %v671
  %v744 = vunpack.c.l.b16 %v672
  %v745 = vunpack.c.h.b16 %v672
  %v746 = vunpack.c.l.b16 %v673
  %v747 = vunpack.c.h.b16 %v673
  %v748 = vunpack.c.l.b16 %v674
  %v749 = vunpack.c.h.b16 %v674
  %v750 = vunpack.c.l.b16 %v675
  %v751 = vunpack.c.h.b16 %v675
  %v752 = vunpack.c.l.b16 %v676
  %v753 = vunpack.c.h.b16 %v676
  %v754 = vunpack.c.l.b16 %v677
  %v755 = vunpack.c.h.b16 %v677
  %v756 = vunpack.c.l.b16 %v678
  %v757 = vunpack.c.h.b16 %v678
  %v758 = vunpack.c.l.b16 %v679
  %v759 = vunpack.c.h.b16 %v679
  %v760 = vunpack.c.l.b16 %v680
  %v761 = vunpack.c.h.b16 %v680
  %v762 = vunpack.c.l.b16 %v681
  %v763 = vunpack.c.h.b16 %v681
  %v764 = vunpack.c.l.b16 %v682
  %v765 = vunpack.c.h.b16 %v682
  %v766 = vunpack.c.l.b16 %v683
  %v767 = vunpack.c.h.b16 %v683
  %v768 = vunpack.c.l.b16 %v684
  %v769 = vunpack.c.h.b16 %v684
  %v770 = vunpack.c.l.b16 %v685
  %v771 = vunpack.c.h.b16 %v685
  %v772 = vunpack.c.l.b16 %v686
  %v773 = vunpack.c.h.b16 %v686
  %v774 = vunpack.c.l.b16 %v687
  %v775 = vunpack.c.h.b16 %v687
  %v776 = vunpack.c.l.b16 %v688
  %v777 = vunpack.c.h.b16 %v688
  %v778 = vunpack.c.l.b16 %v689
  %v779 = vunpack.c.h.b16 %v689
  %v780 = vunpack.c.l.b16 %v690
  %v781 = vunpack.c.h.b16 %v690
  %v782 = vunpack.c.l.b16 %v691
  %v783 = vunpack.c.h.b16 %v691
  %v784 = vunpack.c.l.b16 %v692
  %v785 = vunpack.c.h.b16 %v692
  %v786 = vunpack.c.l.b16 %v693
  %v787 = vunpack.c.h.b16 %v693
  %v788 = vunpack.c.l.b16 %v694
  %v789 = vunpack.c.h.b16 %v694
  %v790 = vunpack.c.l.b16 %v695
  %v791 = vunpack.c.h.b16 %v695
  %v792 = vpack.c.b16 %v728, %v728
  %v793 = vpack.c.b16 %v729, %v729
  %v794 = vpack.c.b16 %v730, %v730
  %v795 = vpack.c.b16 %v731, %v731
  %v796 = vpack.c.b16 %v732, %v732
  %v797 = vpack.c.b16 %v733, %v733
  %v798 = vpack.c.b16 %v734, %v734
  %v799 = vpack.c.b16 %v735, %v735
  %v800 = vpack.c.b16 %v736, %v736
  %v801 = vpack.c.b16 %v737, %v737
  %v802 = vpack.c.b16 %v738, %v738
  %v803 = vpack.c.b16 %v739, %v739
  %v804 = vpack.c.b16 %v740, %v740
  %v805 = vpack.c.b16 %v741, %v741
  %v806 = vpack.c.b16 %v742, %v742
  %v807 = vpack.c.b16 %v743, %v743
  %v808 = vpack.c.b16 %v744, %v744
  %v809 = vpack.c.b16 %v745, %v745
  %v810 = vpack.c.b16 %v746, %v746
  %v811 = vpack.c.b16 %v747, %v747
  %v812 = vpack.c.b16 %v748, %v748
  %v813 = vpack.c.b16 %v749, %v749
  %v814 = vpack.c.b16 %v750, %v750
  %v815 = vpack.c.b16 %v751, %v751
  %v816 = vpack.c.b16 %v752, %v752
  %v817 = vpack.c.b16 %v753, %v753
  %v818 = vpack.c.b16 %v754, %v754
  %v819 = vpack.c.b16 %v755, %v755
  %v820 = vpack.c.b16 %v756, %v756
  %v821 = vpack.c.b16 %v757, %v757
  %v822 = vpack.c.b16 %v758, %v758
  %v823 = vpack.c.b16 %v759, %v759
  %v824 = vpack.c.b16 %v760, %v760
  %v825 = vpack.c.b16 %v761, %v761
  %v826 = vpack.c.b16 %v762, %v762
  %v827 = vpack.c.b16 %v763, %v763
  %v828 = vpack.c.b16 %v764, %v764
  %v829 = vpack.c.b16 %v765, %v765
  %v830 = vpack.c.b16 %v766, %v766
  %v831 = vpack.c.b16 %v767, %v767
  %v832 = vpack.c.b16 %v768, %v768
  %v833 = vpack.c.b16 %v769, %v769
  %v834 = vpack.c.b16 %v770, %v770
  %v835 = vpack.c.b16 %v771, %v771
  %v836 = vpack.c.b16 %v772, %v772
  %v837 = vpack.c.b16 %v773, %v773
  %v838 = vpack.c.b16 %v774, %v774
  %v839 = vpack.c.b16 %v775, %v775
  %v840 = vpack.c.b16 %v776, %v776
  %v841 = vpack.c.b16 %v777, %v777
  %v842 = vpack.c.b16 %v778, %v778
  %v843 = vpack.c.b16 %v779, %v779
  %v844 = vpack.c.b16 %v780, %v780
  %v845 = vpack.c.b16 %v781, %v781
  %v846 = vpack.c.b16 %v782, %v782
  %v847 = vpack.c.b16 %v783, %v783
  %v848 = vpack.c.b16 %v784, %v784
  %v849 = vpack.c.b16 %v785, %v785
  %v850 = vpack.c.b16 %v786, %v786
  %v851 = vpack.c.b16 %v787, %v787
  %v852 = vpack.c.b16 %v788, %v788
  %v853 = vpack.c.b16 %v789, %v789
  %v854 = vpack.c.b16 %v790, %v790
  %v855 = vpack.c.b16 %v791, %v791
  %vm920 = vcmask 519168
  %921 = vst.msk [vmem:[%s3] sm:$0xf] %vm920, %v792
  %922 = vst.msk [vmem:[%s3 + $0x4] sm:$0xf] %vm920, %v793
  %923 = vst.msk [vmem:[%s3 + $0x8] sm:$0xf] %vm920, %v794
  %924 = vst.msk [vmem:[%s3 + $0xc] sm:$0xf] %vm920, %v795
  %925 = vst.msk [vmem:[%s3 + $0x10] sm:$0xf] %vm920, %v796
  %926 = vst.msk [vmem:[%s3 + $0x14] sm:$0xf] %vm920, %v797
  %927 = vst.msk [vmem:[%s3 + $0x18] sm:$0xf] %vm920, %v798
  %928 = vst.msk [vmem:[%s3 + $0x1c] sm:$0xf] %vm920, %v799
  %929 = vst.msk [vmem:[%s3 + $0x20] sm:$0xf] %vm920, %v800
  %930 = vst.msk [vmem:[%s3 + $0x24] sm:$0xf] %vm920, %v801
  %931 = vst.msk [vmem:[%s3 + $0x28] sm:$0xf] %vm920, %v802
  %932 = vst.msk [vmem:[%s3 + $0x2c] sm:$0xf] %vm920, %v803
  %933 = vst.msk [vmem:[%s3 + $0x30] sm:$0xf] %vm920, %v804
  %934 = vst.msk [vmem:[%s3 + $0x34] sm:$0xf] %vm920, %v805
  %935 = vst.msk [vmem:[%s3 + $0x38] sm:$0xf] %vm920, %v806
  %936 = vst.msk [vmem:[%s3 + $0x3c] sm:$0xf] %vm920, %v807
  %937 = vst.msk [vmem:[%s3 + $0x40] sm:$0xf] %vm920, %v808
  %938 = vst.msk [vmem:[%s3 + $0x44] sm:$0xf] %vm920, %v809
  %939 = vst.msk [vmem:[%s3 + $0x48] sm:$0xf] %vm920, %v810
  %940 = vst.msk [vmem:[%s3 + $0x4c] sm:$0xf] %vm920, %v811
  %941 = vst.msk [vmem:[%s3 + $0x50] sm:$0xf] %vm920, %v812
  %942 = vst.msk [vmem:[%s3 + $0x54] sm:$0xf] %vm920, %v813
  %943 = vst.msk [vmem:[%s3 + $0x58] sm:$0xf] %vm920, %v814
  %944 = vst.msk [vmem:[%s3 + $0x5c] sm:$0xf] %vm920, %v815
  %945 = vst.msk [vmem:[%s3 + $0x60] sm:$0xf] %vm920, %v816
  %946 = vst.msk [vmem:[%s3 + $0x64] sm:$0xf] %vm920, %v817
  %947 = vst.msk [vmem:[%s3 + $0x68] sm:$0xf] %vm920, %v818
  %948 = vst.msk [vmem:[%s3 + $0x6c] sm:$0xf] %vm920, %v819
  %949 = vst.msk [vmem:[%s3 + $0x70] sm:$0xf] %vm920, %v820
  %950 = vst.msk [vmem:[%s3 + $0x74] sm:$0xf] %vm920, %v821
  %951 = vst.msk [vmem:[%s3 + $0x78] sm:$0xf] %vm920, %v822
  %952 = vst.msk [vmem:[%s3 + $0x7c] sm:$0xf] %vm920, %v823
  %953 = vst.msk [vmem:[%s3 + $0x80] sm:$0xf] %vm920, %v824
  %954 = vst.msk [vmem:[%s3 + $0x84] sm:$0xf] %vm920, %v825
  %955 = vst.msk [vmem:[%s3 + $0x88] sm:$0xf] %vm920, %v826
  %956 = vst.msk [vmem:[%s3 + $0x8c] sm:$0xf] %vm920, %v827
  %957 = vst.msk [vmem:[%s3 + $0x90] sm:$0xf] %vm920, %v828
  %958 = vst.msk [vmem:[%s3 + $0x94] sm:$0xf] %vm920, %v829
  %959 = vst.msk [vmem:[%s3 + $0x98] sm:$0xf] %vm920, %v830
  %960 = vst.msk [vmem:[%s3 + $0x9c] sm:$0xf] %vm920, %v831
  %961 = vst.msk [vmem:[%s3 + $0xa0] sm:$0xf] %vm920, %v832
  %962 = vst.msk [vmem:[%s3 + $0xa4] sm:$0xf] %vm920, %v833
  %963 = vst.msk [vmem:[%s3 + $0xa8] sm:$0xf] %vm920, %v834
  %964 = vst.msk [vmem:[%s3 + $0xac] sm:$0xf] %vm920, %v835
  %965 = vst.msk [vmem:[%s3 + $0xb0] sm:$0xf] %vm920, %v836
  %966 = vst.msk [vmem:[%s3 + $0xb4] sm:$0xf] %vm920, %v837
  %967 = vst.msk [vmem:[%s3 + $0xb8] sm:$0xf] %vm920, %v838
  %968 = vst.msk [vmem:[%s3 + $0xbc] sm:$0xf] %vm920, %v839
  %969 = vst.msk [vmem:[%s3 + $0xc0] sm:$0xf] %vm920, %v840
  %970 = vst.msk [vmem:[%s3 + $0xc4] sm:$0xf] %vm920, %v841
  %971 = vst.msk [vmem:[%s3 + $0xc8] sm:$0xf] %vm920, %v842
  %972 = vst.msk [vmem:[%s3 + $0xcc] sm:$0xf] %vm920, %v843
  %973 = vst.msk [vmem:[%s3 + $0xd0] sm:$0xf] %vm920, %v844
  %974 = vst.msk [vmem:[%s3 + $0xd4] sm:$0xf] %vm920, %v845
  %975 = vst.msk [vmem:[%s3 + $0xd8] sm:$0xf] %vm920, %v846
  %976 = vst.msk [vmem:[%s3 + $0xdc] sm:$0xf] %vm920, %v847
  %977 = vst.msk [vmem:[%s3 + $0xe0] sm:$0xf] %vm920, %v848
  %978 = vst.msk [vmem:[%s3 + $0xe4] sm:$0xf] %vm920, %v849
  %979 = vst.msk [vmem:[%s3 + $0xe8] sm:$0xf] %vm920, %v850
  %980 = vst.msk [vmem:[%s3 + $0xec] sm:$0xf] %vm920, %v851
  %981 = vst.msk [vmem:[%s3 + $0xf0] sm:$0xf] %vm920, %v852
  %982 = vst.msk [vmem:[%s3 + $0xf4] sm:$0xf] %vm920, %v853
  %983 = vst.msk [vmem:[%s3 + $0xf8] sm:$0xf] %vm920, %v854
  %984 = vst.msk [vmem:[%s3 + $0xfc] sm:$0xf] %vm920, %v855
  // Predicated region
  $region14: #{attention_forward.4} parent=0 // pred_check
    _
  $region15: #{attention_forward.4} parent=0 // pred_check_branch
    %986 = sbr.rel (0) target = $region17
  $region16: #{attention_forward.4} parent=0 // pred_region
    _
  $region17: #{attention_forward.4} parent=0 // pred_fallthru
    _
  // Predicated region
  $region18: #{attention_forward.4} parent=0 // pred_check
    _
  $region19: #{attention_forward.4} parent=0 // pred_check_branch
    %988 = sbr.rel (0) target = $region21
  $region20: #{attention_forward.4} parent=0 // pred_region
    _
  $region21: #{attention_forward.4} parent=0 // pred_fallthru
    _

// kernel: attention_forward.7
$region0: #{attention_forward.7}
  #allocation0 [shape = 'u32[]', space=smem, size = 0x4, offset = 0x4, fixed_abs, tag = 'smem constant byte address 0x4 - core index']
  #allocation1 [shape = 'u32[144,128]{1,0:T(1,128)}', space=vmem, size = 0x12000, scoped, tag = 'internal scratch']
  %s0 = inlined_call_operand.vmem [shape: bf16[2,256,64], index: 0, kind: input, shape index: {}]
  %s1 = inlined_call_operand.vmem [shape: bf16[2,64,64], index: 1, kind: input, shape index: {}]
  %s2 = inlined_call_operand.vmem [shape: bf16[2,64,64], index: 2, kind: input, shape index: {}]
  %s3 = inlined_call_operand.vmem [shape: bf16[64,64], index: 3, kind: input, shape index: {}]
  %s4 = inlined_call_operand.vmem [shape: f32[1,64], index: 4, kind: input, shape index: {}]
  %s5 = inlined_call_operand.vmem [shape: f32[2,256,64], index: 5, kind: output, shape index: {}]
  %s6 = sld [smem:[#allocation0]]
  $region53: #{attention_forward.7} parent=0
    _
  %s8 = ssub.s32 1, %s6
  %s9 = scalar_select 0, %s8, %s6
  loop: start=0, step=1, limit=4
  $region2: #{attention_forward.7} parent=0 // loop_pre_header
    _
  $region3: #{attention_forward.7} parent=0 // loop_header
    %s11 = sphi 0, %s15
    %p12 = scmp.ge.s32.totalorder %s11, 4
    %s18 = sphi 0, %s30
    %s19 = sphi 0, %s26
    %s20 = sphi 0, %s18
    %s21 = sphi 0, %s19
    %s22 = sphi 0, %s20
    %s23 = sphi 0, %s21
    %s35 = sphi 0, %s37
    %s38 = sphi 0, %s35
    %s39 = sphi 0, %s38
    %s55 = sphi 0, %s39
    %s61 = sphi 0, %s63
    %s64 = sphi 0, %s61
    %s65 = sphi 0, %s64
    %s81 = sphi 0, %s65
    %s87 = sphi 0, %s89
    %s90 = sphi 0, %s87
    %s91 = sphi 0, %s90
    %s107 = sphi 0, %s91
    %s111 = sphi 0, %s111
    %s113 = sphi 0, %s111
    %s114 = sphi 0, %s113
    %s128 = sphi 0, %s114
    %s132 = sphi 0, %s132
    %s134 = sphi 0, %s132
    %s135 = sphi 0, %s134
    %s149 = sphi 0, %s135
    %s157 = sphi 0, %s159
    %s160 = sphi 0, %s157
    %s161 = sphi 0, %s160
    %s177 = sphi 0, %s161
  $region4: #{attention_forward.7} parent=0 // loop_header_branch
    %14 = sbr.rel (%p12) target = $region8
  $region5: #{attention_forward.7} parent=0 // loop_body
    %s16 = ssub.s32 %s11, 1
    %s17 = ssub.s32 %s11, 2
    %s24 = sadd.s32 1, %s19
    %p25 = scmp.ge.s32.totalorder %s24, 1
    %s26 = scalar_select %p25, 0, %s24
    %s27 = sadd.s32 1, %s18
    %s28 = scalar_select %p25, %s27, %s18
    %p29 = scmp.ge.s32.totalorder %s28, 2
    %s30 = scalar_select %p29, 0, %s28
    %s31 = ssub.s32 %s18, %s30
    %s32 = ssub.s32 %s19, %s26
    %s33 = sor.u32 %s31, %s32
    %p34 = scmp.eq.s32.totalorder %s33, 0
    %s36 = sadd.s32 %s35, 1
    %s37 = scalar_select %p34, %s35, %s36
    %p40 = pneg %p34
    %p41 = scmp.eq.s32.totalorder %s11, 1
    %p42 = por %p40, %p41
    %p43 = scmp.ne.s32.totalorder %s35, %s38
    %p44 = scmp.eq.s32.totalorder %s11, 0
    %p45 = por %p43, %p44
    %p46 = scmp.ne.s32.totalorder %s35, %s38
    %p47 = scmp.eq.s32.totalorder %s16, 1
    %p48 = por %p46, %p47
    %p49 = scmp.ne.s32.totalorder %s38, %s39
    %p50 = scmp.eq.s32.totalorder %s16, 0
    %p51 = por %p49, %p50
    %p52 = scmp.ne.s32.totalorder %s38, %s39
    %p53 = scmp.eq.s32.totalorder %s17, 1
    %p54 = por %p52, %p53
    %p56 = scmp.ne.s32.totalorder %s39, %s55
    %p57 = scmp.eq.s32.totalorder %s17, 0
    %p58 = por %p56, %p57
    %s59 = ssub.s32 %s18, %s30
    %p60 = scmp.eq.s32.totalorder %s59, 0
    %s62 = sadd.s32 %s61, 1
    %s63 = scalar_select %p60, %s61, %s62
    %p66 = pneg %p60
    %p67 = scmp.eq.s32.totalorder %s11, 1
    %p68 = por %p66, %p67
    %p69 = scmp.ne.s32.totalorder %s61, %s64
    %p70 = scmp.eq.s32.totalorder %s11, 0
    %p71 = por %p69, %p70
    %p72 = scmp.ne.s32.totalorder %s61, %s64
    %p73 = scmp.eq.s32.totalorder %s16, 1
    %p74 = por %p72, %p73
    %p75 = scmp.ne.s32.totalorder %s64, %s65
    %p76 = scmp.eq.s32.totalorder %s16, 0
    %p77 = por %p75, %p76
    %p78 = scmp.ne.s32.totalorder %s64, %s65
    %p79 = scmp.eq.s32.totalorder %s17, 1
    %p80 = por %p78, %p79
    %p82 = scmp.ne.s32.totalorder %s65, %s81
    %p83 = scmp.eq.s32.totalorder %s17, 0
    %p84 = por %p82, %p83
    %s85 = ssub.s32 %s18, %s30
    %p86 = scmp.eq.s32.totalorder %s85, 0
    %s88 = sadd.s32 %s87, 1
    %s89 = scalar_select %p86, %s87, %s88
    %p92 = pneg %p86
    %p93 = scmp.eq.s32.totalorder %s11, 1
    %p94 = por %p92, %p93
    %p95 = scmp.ne.s32.totalorder %s87, %s90
    %p96 = scmp.eq.s32.totalorder %s11, 0
    %p97 = por %p95, %p96
    %p98 = scmp.ne.s32.totalorder %s87, %s90
    %p99 = scmp.eq.s32.totalorder %s16, 1
    %p100 = por %p98, %p99
    %p101 = scmp.ne.s32.totalorder %s90, %s91
    %p102 = scmp.eq.s32.totalorder %s16, 0
    %p103 = por %p101, %p102
    %p104 = scmp.ne.s32.totalorder %s90, %s91
    %p105 = scmp.eq.s32.totalorder %s17, 1
    %p106 = por %p104, %p105
    %p108 = scmp.ne.s32.totalorder %s91, %s107
    %p109 = scmp.eq.s32.totalorder %s17, 0
    %p110 = por %p108, %p109
    %s112 = sadd.s32 %s111, 1
    %p115 = scmp.eq.s32.totalorder %s11, 1
    %p116 = scmp.ne.s32.totalorder %s111, %s113
    %p117 = scmp.eq.s32.totalorder %s11, 0
    %p118 = por %p116, %p117
    %p119 = scmp.ne.s32.totalorder %s111, %s113
    %p120 = scmp.eq.s32.totalorder %s16, 1
    %p121 = por %p119, %p120
    %p122 = scmp.ne.s32.totalorder %s113, %s114
    %p123 = scmp.eq.s32.totalorder %s16, 0
    %p124 = por %p122, %p123
    %p125 = scmp.ne.s32.totalorder %s113, %s114
    %p126 = scmp.eq.s32.totalorder %s17, 1
    %p127 = por %p125, %p126
    %p129 = scmp.ne.s32.totalorder %s114, %s128
    %p130 = scmp.eq.s32.totalorder %s17, 0
    %p131 = por %p129, %p130
    %s133 = sadd.s32 %s132, 1
    %p136 = scmp.eq.s32.totalorder %s11, 1
    %p137 = scmp.ne.s32.totalorder %s132, %s134
    %p138 = scmp.eq.s32.totalorder %s11, 0
    %p139 = por %p137, %p138
    %p140 = scmp.ne.s32.totalorder %s132, %s134
    %p141 = scmp.eq.s32.totalorder %s16, 1
    %p142 = por %p140, %p141
    %p143 = scmp.ne.s32.totalorder %s134, %s135
    %p144 = scmp.eq.s32.totalorder %s16, 0
    %p145 = por %p143, %p144
    %p146 = scmp.ne.s32.totalorder %s134, %s135
    %p147 = scmp.eq.s32.totalorder %s17, 1
    %p148 = por %p146, %p147
    %p150 = scmp.ne.s32.totalorder %s135, %s149
    %p151 = scmp.eq.s32.totalorder %s17, 0
    %p152 = por %p150, %p151
    %s153 = ssub.s32 %s18, %s30
    %s154 = ssub.s32 %s19, %s26
    %s155 = sor.u32 %s153, %s154
    %p156 = scmp.eq.s32.totalorder %s155, 0
    %s158 = sadd.s32 %s157, 1
    %s159 = scalar_select %p156, %s157, %s158
    %p162 = pneg %p156
    %p163 = scmp.eq.s32.totalorder %s11, 1
    %p164 = por %p162, %p163
    %p165 = scmp.ne.s32.totalorder %s157, %s160
    %p166 = scmp.eq.s32.totalorder %s11, 0
    %p167 = por %p165, %p166
    %p168 = scmp.ne.s32.totalorder %s157, %s160
    %p169 = scmp.eq.s32.totalorder %s16, 1
    %p170 = por %p168, %p169
    %p171 = scmp.ne.s32.totalorder %s160, %s161
    %p172 = scmp.eq.s32.totalorder %s16, 0
    %p173 = por %p171, %p172
    %p174 = scmp.ne.s32.totalorder %s160, %s161
    %p175 = scmp.eq.s32.totalorder %s17, 1
    %p176 = por %p174, %p175
    %p178 = scmp.ne.s32.totalorder %s161, %s177
    %p179 = scmp.eq.s32.totalorder %s17, 0
    %p180 = por %p178, %p179
    %p181 = scmp.le.s32.totalorder 1, %s11
    %p182 = scmp.lt.s32.totalorder %s11, 3
    %p183 = pnand %p181, %p182
    %p184 = pneg %p183
    // Predicated region
    $region9: #{attention_forward.7} parent=5 // pred_check
      _
    $region10: #{attention_forward.7} parent=5 // pred_check_branch
      %186 = sbr.rel (%p183) target = $region12
    $region11: #{attention_forward.7} parent=5 // pred_region
      %s187 = ssub.s32 %s11, 1
      // Predicated region
      $region13: #{attention_forward.7} parent=11 // pred_check
        %p188 = pneg %p124
      $region14: #{attention_forward.7} parent=11 // pred_check_branch
        %190 = sbr.rel (%p188) target = $region16
      $region15: #{attention_forward.7} parent=11 // pred_region
        _
      $region16: #{attention_forward.7} parent=11 // pred_fallthru
        _
      // Predicated region
      $region17: #{attention_forward.7} parent=11 // pred_check
        %p191 = pneg %p145
      $region18: #{attention_forward.7} parent=11 // pred_check_branch
        %193 = sbr.rel (%p191) target = $region20
      $region19: #{attention_forward.7} parent=11 // pred_region
        _
      $region20: #{attention_forward.7} parent=11 // pred_fallthru
        _
    $region12: #{attention_forward.7} parent=5 // pred_fallthru
      _
    %p194 = scmp.lt.s32.totalorder %s11, 2
    // Predicated region
    $region21: #{attention_forward.7} parent=5 // pred_check
      %p195 = pneg %p194
    $region22: #{attention_forward.7} parent=5 // pred_check_branch
      %197 = sbr.rel (%p195) target = $region24
    $region23: #{attention_forward.7} parent=5 // pred_region
      // Predicated region
      $region25: #{attention_forward.7} parent=23 // pred_check
        %p198 = pneg %p45
      $region26: #{attention_forward.7} parent=23 // pred_check_branch
        %200 = sbr.rel (%p198) target = $region28
      $region27: #{attention_forward.7} parent=23 // pred_region
        %s201 = smul.u32 32, %s19
        %p202 = scmp.lt.s32.totalorder %s18, 1
        %s203 = scalar_select %p202, %s18, 1
        %p204 = scmp.lt.s32.totalorder %s201, 31
        %s205 = scalar_select %p204, %s201, 31
        %s206 = smul.addr %s203, 32
        %s207 = sadd.s32 %s205, %s206
        %s208 = smul.addr %s207, 4
        %s209 = scalar_lea.vmem %s0, %s208
        %s210 = smul.u32 32, %s19
      $region28: #{attention_forward.7} parent=23 // pred_fallthru
        _
      // Predicated region
      $region29: #{attention_forward.7} parent=23 // pred_check
        %p211 = pneg %p71
      $region30: #{attention_forward.7} parent=23 // pred_check_branch
        %213 = sbr.rel (%p211) target = $region32
      $region31: #{attention_forward.7} parent=23 // pred_region
        %p214 = scmp.lt.s32.totalorder %s18, 1
        %s215 = scalar_select %p214, %s18, 1
        %s216 = smul.addr %s215, 8
        %s217 = smul.addr %s216, 4
        %s218 = scalar_lea.vmem %s1, %s217
      $region32: #{attention_forward.7} parent=23 // pred_fallthru
        _
      // Predicated region
      $region33: #{attention_forward.7} parent=23 // pred_check
        %p219 = pneg %p97
      $region34: #{attention_forward.7} parent=23 // pred_check_branch
        %221 = sbr.rel (%p219) target = $region36
      $region35: #{attention_forward.7} parent=23 // pred_region
        %p222 = scmp.lt.s32.totalorder %s18, 1
        %s223 = scalar_select %p222, %s18, 1
        %s224 = smul.addr %s223, 8
        %s225 = smul.addr %s224, 4
        %s226 = scalar_lea.vmem %s2, %s225
      $region36: #{attention_forward.7} parent=23 // pred_fallthru
        _
    $region24: #{attention_forward.7} parent=5 // pred_fallthru
      _
    %p227 = scmp.le.s32.totalorder 1, %s11
    %p228 = scmp.lt.s32.totalorder %s11, 3
    %p229 = pnand %p227, %p228
    %p230 = pneg %p229
    // Predicated region
    $region37: #{attention_forward.7} parent=5 // pred_check
      _
    $region38: #{attention_forward.7} parent=5 // pred_check_branch
      %232 = sbr.rel (%p229) target = $region40
    $region39: #{attention_forward.7} parent=5 // pred_region
      %s233 = ssub.s32 %s11, 1
      %s234 = smul.u32 32, %s21
      %p235 = scmp.lt.s32.totalorder %s20, 1
      %s236 = scalar_select %p235, %s20, 1
      %p237 = scmp.lt.s32.totalorder %s234, 31
      %s238 = scalar_select %p237, %s234, 31
      %s239 = smul.addr %s236, 32
      %s240 = sadd.s32 %s238, %s239
      %s241 = smul.addr %s240, 4
      %s242 = scalar_lea.vmem %s0, %s241
      %p243 = pneg %p51
      %p244 = pneg %p48
      %p245 = scmp.lt.s32.totalorder %s20, 1
      %s246 = scalar_select %p245, %s20, 1
      %s247 = smul.addr %s246, 8
      %s248 = smul.addr %s247, 4
      %s249 = scalar_lea.vmem %s1, %s248
      %p250 = pneg %p77
      %p251 = pneg %p74
      %p252 = scmp.lt.s32.totalorder %s20, 1
      %s253 = scalar_select %p252, %s20, 1
      %s254 = smul.addr %s253, 8
      %s255 = smul.addr %s254, 4
      %s256 = scalar_lea.vmem %s2, %s255
      %p257 = pneg %p103
      %p258 = pneg %p100
      %p259 = pneg %p124
      %p260 = pneg %p121
      %p261 = pneg %p145
      %p262 = pneg %p142
      %p263 = pneg %p173
      %p264 = pneg %p170
      %s265 = smul.u32 32, %s21
      %p266 = scmp.lt.s32.totalorder %s20, 1
      %s267 = scalar_select %p266, %s20, 1
      %p268 = scmp.lt.s32.totalorder %s265, 31
      %s269 = scalar_select %p268, %s265, 31
      %s270 = smul.addr %s267, 32
      %s271 = sadd.s32 %s269, %s270
      %s272 = smul.addr %s271, 8
      %s273 = scalar_lea.vmem %s5, %s272
      %s274 = smul.u32 32, %s21
      %p275 = scmp.lt.s32.totalorder %s20, 1
      %s276 = scalar_select %p275, %s20, 1
      %p277 = scmp.lt.s32.totalorder %s274, 31
      %s278 = scalar_select %p277, %s274, 31
      %s279 = smul.addr %s276, 32
      %s280 = sadd.s32 %s278, %s279
      %s281 = smul.addr %s280, 4
      %s282 = scalar_lea.vmem %s0, %s281
      %s283 = smul.u32 32, %s21
      %p284 = scmp.lt.s32.totalorder %s20, 1
      %s285 = scalar_select %p284, %s20, 1
      %s286 = smul.addr %s285, 8
      %s287 = smul.addr %s286, 4
      %s288 = scalar_lea.vmem %s1, %s287
      %p289 = scmp.lt.s32.totalorder %s20, 1
      %s290 = scalar_select %p289, %s20, 1
      %s291 = smul.addr %s290, 8
      %s292 = smul.addr %s291, 4
      %s293 = scalar_lea.vmem %s2, %s292
      %s294 = smul.u32 32, %s21
      %p295 = scmp.lt.s32.totalorder %s20, 1
      %s296 = scalar_select %p295, %s20, 1
      %p297 = scmp.lt.s32.totalorder %s294, 31
      %s298 = scalar_select %p297, %s294, 31
      %s299 = smul.addr %s296, 32
      %s300 = sadd.s32 %s298, %s299
      %s301 = smul.addr %s300, 8
      %s302 = scalar_lea.vmem %s5, %s301
      %s303 = smul.u32 32, %s21
      %v305 = vld [vmem:[%s282] sm:$0xf]
      %v306 = vld [vmem:[%s282 + $0x4] sm:$0xf]
      %v307 = vld [vmem:[%s282 + $0x8] sm:$0xf]
      %v308 = vld [vmem:[%s282 + $0xc] sm:$0xf]
      %v309 = vld [vmem:[%s282 + $0x10] sm:$0xf]
      %v310 = vld [vmem:[%s282 + $0x14] sm:$0xf]
      %v311 = vld [vmem:[%s282 + $0x18] sm:$0xf]
      %v312 = vld [vmem:[%s282 + $0x1c] sm:$0xf]
      %v313 = vld [vmem:[%s282 + $0x20] sm:$0xf]
      %v314 = vld [vmem:[%s282 + $0x24] sm:$0xf]
      %v315 = vld [vmem:[%s282 + $0x28] sm:$0xf]
      %v316 = vld [vmem:[%s282 + $0x2c] sm:$0xf]
      %v317 = vld [vmem:[%s282 + $0x30] sm:$0xf]
      %v318 = vld [vmem:[%s282 + $0x34] sm:$0xf]
      %v319 = vld [vmem:[%s282 + $0x38] sm:$0xf]
      %v320 = vld [vmem:[%s282 + $0x3c] sm:$0xf]
      %v321 = vld [vmem:[%s282 + $0x40] sm:$0xf]
      %v322 = vld [vmem:[%s282 + $0x44] sm:$0xf]
      %v323 = vld [vmem:[%s282 + $0x48] sm:$0xf]
      %v324 = vld [vmem:[%s282 + $0x4c] sm:$0xf]
      %v325 = vld [vmem:[%s282 + $0x50] sm:$0xf]
      %v326 = vld [vmem:[%s282 + $0x54] sm:$0xf]
      %v327 = vld [vmem:[%s282 + $0x58] sm:$0xf]
      %v328 = vld [vmem:[%s282 + $0x5c] sm:$0xf]
      %v329 = vld [vmem:[%s282 + $0x60] sm:$0xf]
      %v330 = vld [vmem:[%s282 + $0x64] sm:$0xf]
      %v331 = vld [vmem:[%s282 + $0x68] sm:$0xf]
      %v332 = vld [vmem:[%s282 + $0x6c] sm:$0xf]
      %v333 = vld [vmem:[%s282 + $0x70] sm:$0xf]
      %v334 = vld [vmem:[%s282 + $0x74] sm:$0xf]
      %v335 = vld [vmem:[%s282 + $0x78] sm:$0xf]
      %v336 = vld [vmem:[%s282 + $0x7c] sm:$0xf]
      %v337 = vld [vmem:[%s288] sm:$0xf]
      %v338 = vld [vmem:[%s288 + $0x4] sm:$0xf]
      %v339 = vld [vmem:[%s288 + $0x8] sm:$0xf]
      %v340 = vld [vmem:[%s288 + $0xc] sm:$0xf]
      %v341 = vld [vmem:[%s288 + $0x10] sm:$0xf]
      %v342 = vld [vmem:[%s288 + $0x14] sm:$0xf]
      %v343 = vld [vmem:[%s288 + $0x18] sm:$0xf]
      %v344 = vld [vmem:[%s288 + $0x1c] sm:$0xf]
      %v345 = vld [vmem:[%s293] sm:$0xf]
      %v346 = vld [vmem:[%s293 + $0x4] sm:$0xf]
      %v347 = vld [vmem:[%s293 + $0x8] sm:$0xf]
      %v348 = vld [vmem:[%s293 + $0xc] sm:$0xf]
      %v349 = vld [vmem:[%s293 + $0x10] sm:$0xf]
      %v350 = vld [vmem:[%s293 + $0x14] sm:$0xf]
      %v351 = vld [vmem:[%s293 + $0x18] sm:$0xf]
      %v352 = vld [vmem:[%s293 + $0x1c] sm:$0xf]
      %v385 = vunpack.c.l.b16 %v305
      %v386 = vunpack.c.l.b16 %v306
      %v387 = vunpack.c.l.b16 %v307
      %v388 = vunpack.c.l.b16 %v308
      %v389 = vunpack.c.l.b16 %v309
      %v390 = vunpack.c.l.b16 %v310
      %v391 = vunpack.c.l.b16 %v311
      %v392 = vunpack.c.l.b16 %v312
      %v393 = vunpack.c.l.b16 %v313
      %v394 = vunpack.c.l.b16 %v314
      %v395 = vunpack.c.l.b16 %v315
      %v396 = vunpack.c.l.b16 %v316
      %v397 = vunpack.c.l.b16 %v317
      %v398 = vunpack.c.l.b16 %v318
      %v399 = vunpack.c.l.b16 %v319
      %v400 = vunpack.c.l.b16 %v320
      %v401 = vunpack.c.l.b16 %v321
      %v402 = vunpack.c.l.b16 %v322
      %v403 = vunpack.c.l.b16 %v323
      %v404 = vunpack.c.l.b16 %v324
      %v405 = vunpack.c.l.b16 %v325
      %v406 = vunpack.c.l.b16 %v326
      %v407 = vunpack.c.l.b16 %v327
      %v408 = vunpack.c.l.b16 %v328
      %v409 = vunpack.c.l.b16 %v329
      %v410 = vunpack.c.l.b16 %v330
      %v411 = vunpack.c.l.b16 %v331
      %v412 = vunpack.c.l.b16 %v332
      %v413 = vunpack.c.l.b16 %v333
      %v414 = vunpack.c.l.b16 %v334
      %v415 = vunpack.c.l.b16 %v335
      %v416 = vunpack.c.l.b16 %v336
      %v417 = vpack.c.b16 %v386, %v385
      %v418 = vpack.c.b16 %v388, %v387
      %v419 = vpack.c.b16 %v390, %v389
      %v420 = vpack.c.b16 %v392, %v391
      %v421 = vpack.c.b16 %v394, %v393
      %v422 = vpack.c.b16 %v396, %v395
      %v423 = vpack.c.b16 %v398, %v397
      %v424 = vpack.c.b16 %v400, %v399
      %v425 = vpack.c.b16 %v402, %v401
      %v426 = vpack.c.b16 %v404, %v403
      %v427 = vpack.c.b16 %v406, %v405
      %v428 = vpack.c.b16 %v408, %v407
      %v429 = vpack.c.b16 %v410, %v409
      %v430 = vpack.c.b16 %v412, %v411
      %v431 = vpack.c.b16 %v414, %v413
      %v432 = vpack.c.b16 %v416, %v415
      %v441 = vunpack.c.l.b16 %v337
      %v442 = vunpack.c.l.b16 %v338
      %v443 = vunpack.c.l.b16 %v339
      %v444 = vunpack.c.l.b16 %v340
      %v445 = vunpack.c.l.b16 %v341
      %v446 = vunpack.c.l.b16 %v342
      %v447 = vunpack.c.l.b16 %v343
      %v448 = vunpack.c.l.b16 %v344
      %v449 = vpack.c.b16 %v442, %v441
      %v450 = vpack.c.b16 %v444, %v443
      %v451 = vpack.c.b16 %v446, %v445
      %v452 = vpack.c.b16 %v448, %v447
      %vm453 = vcmask 64512
      %v455 = vsel %vm453, %v417, 0
      %v458 = vsel %vm453, %v418, 0
      %v461 = vsel %vm453, %v419, 0
      %v464 = vsel %vm453, %v420, 0
      %v467 = vsel %vm453, %v421, 0
      %v470 = vsel %vm453, %v422, 0
      %v473 = vsel %vm453, %v423, 0
      %v476 = vsel %vm453, %v424, 0
      %v479 = vsel %vm453, %v425, 0
      %v482 = vsel %vm453, %v426, 0
      %v485 = vsel %vm453, %v427, 0
      %v488 = vsel %vm453, %v428, 0
      %v491 = vsel %vm453, %v429, 0
      %v494 = vsel %vm453, %v430, 0
      %v497 = vsel %vm453, %v431, 0
      %v500 = vsel %vm453, %v432, 0
      %v503 = vsel %vm453, %v449, 0
      %v506 = vsel %vm453, %v450, 0
      %v509 = vsel %vm453, %v451, 0
      %v512 = vsel %vm453, %v452, 0
      %514 = vmatprep.subr.bf16.mxu0 0
      %515 = vmatpush1.bf16.xpose.msra.mxu0 %v503
      %516 = vmatprep.subr.bf16.mxu0 0
      %517 = vmatpush1.bf16.xpose.msra.mxu0 %v506
      %518 = vmatprep.subr.bf16.mxu0 0
      %519 = vmatpush1.bf16.xpose.msra.mxu0 %v509
      %520 = vmatprep.subr.bf16.mxu0 0
      %521 = vmatpush1.bf16.xpose.msra.mxu0 %v512
      %522 = vmatprep.subr.bf16.mxu0 0
      %523 = vmatpush1.bf16.xpose.msra.mxu0 0
      %524 = vmatprep.subr.bf16.mxu0 0
      %525 = vmatpush1.bf16.xpose.msra.mxu0 0
      %526 = vmatprep.subr.bf16.mxu0 0
      %527 = vmatpush1.bf16.xpose.msra.mxu0 0
      %528 = vmatprep.subr.bf16.mxu0 0
      %529 = vmatpush1.bf16.xpose.msra.mxu0 0
      %530 = vmatprep.subr.bf16.mxu0 0
      %531 = vmatpush1.bf16.xpose.msra.mxu0 0
      %532 = vmatprep.subr.bf16.mxu0 0
      %533 = vmatpush1.bf16.xpose.msra.mxu0 0
      %534 = vmatprep.subr.bf16.mxu0 0
      %535 = vmatpush1.bf16.xpose.msra.mxu0 0
      %536 = vmatprep.subr.bf16.mxu0 0
      %537 = vmatpush1.bf16.xpose.msra.mxu0 0
      %538 = vmatprep.subr.bf16.mxu0 0
      %539 = vmatpush1.bf16.xpose.msra.mxu0 0
      %540 = vmatprep.subr.bf16.mxu0 0
      %541 = vmatpush1.bf16.xpose.msra.mxu0 0
      %542 = vmatprep.subr.bf16.mxu0 0
      %543 = vmatpush1.bf16.xpose.msra.mxu0 0
      %544 = vmatprep.subr.bf16.mxu0 0
      %545 = vmatpush1.bf16.xpose.msra.mxu0 0
      %546 = vmatprep.mubr.bf16.mxu0 0
      %547 = vmatmul.mubr.bf16.gmra.mrb[0].mxu0 %v455
      %v548 = vpop.f32.mrb[0].mxu0
      %v549 = vadd.f32 0.0, %v548
      %v550 = vpop.f32.mrb[0].mxu0
      %v551 = vpop.f32.mrb[0].mxu0
      %v552 = vadd.f32 0.0, %v551
      %v553 = vpop.f32.mrb[0].mxu0
      %554 = vmatprep.mubr.bf16.mxu0 0
      %555 = vmatmul.mubr.bf16.gmra.mrb[0].mxu0 %v458
      %v556 = vpop.f32.mrb[0].mxu0
      %v557 = vadd.f32 0.0, %v556
      %v558 = vpop.f32.mrb[0].mxu0
      %v559 = vpop.f32.mrb[0].mxu0
      %v560 = vadd.f32 0.0, %v559
      %v561 = vpop.f32.mrb[0].mxu0
      %562 = vmatprep.mubr.bf16.mxu0 0
      %563 = vmatmul.mubr.bf16.gmra.mrb[0].mxu0 %v461
      %v564 = vpop.f32.mrb[0].mxu0
      %v565 = vadd.f32 0.0, %v564
      %v566 = vpop.f32.mrb[0].mxu0
      %v567 = vpop.f32.mrb[0].mxu0
      %v568 = vadd.f32 0.0, %v567
      %v569 = vpop.f32.mrb[0].mxu0
      %570 = vmatprep.mubr.bf16.mxu0 0
      %571 = vmatmul.mubr.bf16.gmra.mrb[0].mxu0 %v464
      %v572 = vpop.f32.mrb[0].mxu0
      %v573 = vadd.f32 0.0, %v572
      %v574 = vpop.f32.mrb[0].mxu0
      %v575 = vpop.f32.mrb[0].mxu0
      %v576 = vadd.f32 0.0, %v575
      %v577 = vpop.f32.mrb[0].mxu0
      %578 = vmatprep.mubr.bf16.mxu0 0
      %579 = vmatmul.mubr.bf16.gmra.mrb[0].mxu0 %v467
      %v580 = vpop.f32.mrb[0].mxu0
      %v581 = vadd.f32 0.0, %v580
      %v582 = vpop.f32.mrb[0].mxu0
      %v583 = vpop.f32.mrb[0].mxu0
      %v584 = vadd.f32 0.0, %v583
      %v585 = vpop.f32.mrb[0].mxu0
      %586 = vmatprep.mubr.bf16.mxu0 0
      %587 = vmatmul.mubr.bf16.gmra.mrb[0].mxu0 %v470
      %v588 = vpop.f32.mrb[0].mxu0
      %v589 = vadd.f32 0.0, %v588
      %v590 = vpop.f32.mrb[0].mxu0
      %v591 = vpop.f32.mrb[0].mxu0
      %v592 = vadd.f32 0.0, %v591
      %v593 = vpop.f32.mrb[0].mxu0
      %594 = vmatprep.mubr.bf16.mxu0 0
      %595 = vmatmul.mubr.bf16.gmra.mrb[0].mxu0 %v473
      %v596 = vpop.f32.mrb[0].mxu0
      %v597 = vadd.f32 0.0, %v596
      %v598 = vpop.f32.mrb[0].mxu0
      %v599 = vpop.f32.mrb[0].mxu0
      %v600 = vadd.f32 0.0, %v599
      %v601 = vpop.f32.mrb[0].mxu0
      %602 = vmatprep.mubr.bf16.mxu0 0
      %603 = vmatmul.mubr.bf16.gmra.mrb[0].mxu0 %v476
      %v604 = vpop.f32.mrb[0].mxu0
      %v605 = vadd.f32 0.0, %v604
      %v606 = vpop.f32.mrb[0].mxu0
      %v607 = vpop.f32.mrb[0].mxu0
      %v608 = vadd.f32 0.0, %v607
      %v609 = vpop.f32.mrb[0].mxu0
      %610 = vmatprep.mubr.bf16.mxu0 0
      %611 = vmatmul.mubr.bf16.gmra.mrb[0].mxu0 %v479
      %v612 = vpop.f32.mrb[0].mxu0
      %v613 = vadd.f32 0.0, %v612
      %v614 = vpop.f32.mrb[0].mxu0
      %v615 = vpop.f32.mrb[0].mxu0
      %v616 = vadd.f32 0.0, %v615
      %v617 = vpop.f32.mrb[0].mxu0
      %618 = vmatprep.mubr.bf16.mxu0 0
      %619 = vmatmul.mubr.bf16.gmra.mrb[0].mxu0 %v482
      %v620 = vpop.f32.mrb[0].mxu0
      %v621 = vadd.f32 0.0, %v620
      %v622 = vpop.f32.mrb[0].mxu0
      %v623 = vpop.f32.mrb[0].mxu0
      %v624 = vadd.f32 0.0, %v623
      %v625 = vpop.f32.mrb[0].mxu0
      %626 = vmatprep.mubr.bf16.mxu0 0
      %627 = vmatmul.mubr.bf16.gmra.mrb[0].mxu0 %v485
      %v628 = vpop.f32.mrb[0].mxu0
      %v629 = vadd.f32 0.0, %v628
      %v630 = vpop.f32.mrb[0].mxu0
      %v631 = vpop.f32.mrb[0].mxu0
      %v632 = vadd.f32 0.0, %v631
      %v633 = vpop.f32.mrb[0].mxu0
      %634 = vmatprep.mubr.bf16.mxu0 0
      %635 = vmatmul.mubr.bf16.gmra.mrb[0].mxu0 %v488
      %v636 = vpop.f32.mrb[0].mxu0
      %v637 = vadd.f32 0.0, %v636
      %v638 = vpop.f32.mrb[0].mxu0
      %v639 = vpop.f32.mrb[0].mxu0
      %v640 = vadd.f32 0.0, %v639
      %v641 = vpop.f32.mrb[0].mxu0
      %642 = vmatprep.mubr.bf16.mxu0 0
      %643 = vmatmul.mubr.bf16.gmra.mrb[0].mxu0 %v491
      %v644 = vpop.f32.mrb[0].mxu0
      %v645 = vadd.f32 0.0, %v644
      %v646 = vpop.f32.mrb[0].mxu0
      %v647 = vpop.f32.mrb[0].mxu0
      %v648 = vadd.f32 0.0, %v647
      %v649 = vpop.f32.mrb[0].mxu0
      %650 = vmatprep.mubr.bf16.mxu0 0
      %651 = vmatmul.mubr.bf16.gmra.mrb[0].mxu0 %v494
      %v652 = vpop.f32.mrb[0].mxu0
      %v653 = vadd.f32 0.0, %v652
      %v654 = vpop.f32.mrb[0].mxu0
      %v655 = vpop.f32.mrb[0].mxu0
      %v656 = vadd.f32 0.0, %v655
      %v657 = vpop.f32.mrb[0].mxu0
      %658 = vmatprep.mubr.bf16.mxu0 0
      %659 = vmatmul.mubr.bf16.gmra.mrb[0].mxu0 %v497
      %v660 = vpop.f32.mrb[0].mxu0
      %v661 = vadd.f32 0.0, %v660
      %v662 = vpop.f32.mrb[0].mxu0
      %v663 = vpop.f32.mrb[0].mxu0
      %v664 = vadd.f32 0.0, %v663
      %v665 = vpop.f32.mrb[0].mxu0
      %666 = vmatprep.mubr.bf16.mxu0 0
      %667 = vmatmul.mubr.bf16.gmra.mrb[0].mxu0 %v500
      %v668 = vpop.f32.mrb[0].mxu0
      %v669 = vadd.f32 0.0, %v668
      %v670 = vpop.f32.mrb[0].mxu0
      %v671 = vpop.f32.mrb[0].mxu0
      %v672 = vadd.f32 0.0, %v671
      %v673 = vpop.f32.mrb[0].mxu0
      %674 = vdwg.mxu0
      %vm675 = vcmask 523264
      %v676 = vsel %vm675, %v549, -inf
      %677 = vmax.xlane.f32.xlu0 %v676
      %v678 = vpop.xlane.xlu0 %677
      %v679 = vsel %vm675, %v552, -inf
      %680 = vmax.xlane.f32.xlu0 %v679
      %v681 = vpop.xlane.xlu0 %680
      %v682 = vsel %vm675, %v557, -inf
      %683 = vmax.xlane.f32.xlu0 %v682
      %v684 = vpop.xlane.xlu0 %683
      %v685 = vsel %vm675, %v560, -inf
      %686 = vmax.xlane.f32.xlu0 %v685
      %v687 = vpop.xlane.xlu0 %686
      %v688 = vsel %vm675, %v565, -inf
      %689 = vmax.xlane.f32.xlu0 %v688
      %v690 = vpop.xlane.xlu0 %689
      %v691 = vsel %vm675, %v568, -inf
      %692 = vmax.xlane.f32.xlu0 %v691
      %v693 = vpop.xlane.xlu0 %692
      %v694 = vsel %vm675, %v573, -inf
      %695 = vmax.xlane.f32.xlu0 %v694
      %v696 = vpop.xlane.xlu0 %695
      %v697 = vsel %vm675, %v576, -inf
      %698 = vmax.xlane.f32.xlu0 %v697
      %v699 = vpop.xlane.xlu0 %698
      %v700 = vsel %vm675, %v581, -inf
      %701 = vmax.xlane.f32.xlu0 %v700
      %v702 = vpop.xlane.xlu0 %701
      %v703 = vsel %vm675, %v584, -inf
      %704 = vmax.xlane.f32.xlu0 %v703
      %v705 = vpop.xlane.xlu0 %704
      %v706 = vsel %vm675, %v589, -inf
      %707 = vmax.xlane.f32.xlu0 %v706
      %v708 = vpop.xlane.xlu0 %707
      %v709 = vsel %vm675, %v592, -inf
      %710 = vmax.xlane.f32.xlu0 %v709
      %v711 = vpop.xlane.xlu0 %710
      %v712 = vsel %vm675, %v597, -inf
      %713 = vmax.xlane.f32.xlu0 %v712
      %v714 = vpop.xlane.xlu0 %713
      %v715 = vsel %vm675, %v600, -inf
      %716 = vmax.xlane.f32.xlu0 %v715
      %v717 = vpop.xlane.xlu0 %716
      %v718 = vsel %vm675, %v605, -inf
      %719 = vmax.xlane.f32.xlu0 %v718
      %v720 = vpop.xlane.xlu0 %719
      %v721 = vsel %vm675, %v608, -inf
      %722 = vmax.xlane.f32.xlu0 %v721
      %v723 = vpop.xlane.xlu0 %722
      %v724 = vsel %vm675, %v613, -inf
      %725 = vmax.xlane.f32.xlu0 %v724
      %v726 = vpop.xlane.xlu0 %725
      %v727 = vsel %vm675, %v616, -inf
      %728 = vmax.xlane.f32.xlu0 %v727
      %v729 = vpop.xlane.xlu0 %728
      %v730 = vsel %vm675, %v621, -inf
      %731 = vmax.xlane.f32.xlu0 %v730
      %v732 = vpop.xlane.xlu0 %731
      %v733 = vsel %vm675, %v624, -inf
      %734 = vmax.xlane.f32.xlu0 %v733
      %v735 = vpop.xlane.xlu0 %734
      %v736 = vsel %vm675, %v629, -inf
      %737 = vmax.xlane.f32.xlu0 %v736
      %v738 = vpop.xlane.xlu0 %737
      %v739 = vsel %vm675, %v632, -inf
      %740 = vmax.xlane.f32.xlu0 %v739
      %v741 = vpop.xlane.xlu0 %740
      %v742 = vsel %vm675, %v637, -inf
      %743 = vmax.xlane.f32.xlu0 %v742
      %v744 = vpop.xlane.xlu0 %743
      %v745 = vsel %vm675, %v640, -inf
      %746 = vmax.xlane.f32.xlu0 %v745
      %v747 = vpop.xlane.xlu0 %746
      %v748 = vsel %vm675, %v645, -inf
      %749 = vmax.xlane.f32.xlu0 %v748
      %v750 = vpop.xlane.xlu0 %749
      %v751 = vsel %vm675, %v648, -inf
      %752 = vmax.xlane.f32.xlu0 %v751
      %v753 = vpop.xlane.xlu0 %752
      %v754 = vsel %vm675, %v653, -inf
      %755 = vmax.xlane.f32.xlu0 %v754
      %v756 = vpop.xlane.xlu0 %755
      %v757 = vsel %vm675, %v656, -inf
      %758 = vmax.xlane.f32.xlu0 %v757
      %v759 = vpop.xlane.xlu0 %758
      %v760 = vsel %vm675, %v661, -inf
      %761 = vmax.xlane.f32.xlu0 %v760
      %v762 = vpop.xlane.xlu0 %761
      %v763 = vsel %vm675, %v664, -inf
      %764 = vmax.xlane.f32.xlu0 %v763
      %v765 = vpop.xlane.xlu0 %764
      %v766 = vsel %vm675, %v669, -inf
      %767 = vmax.xlane.f32.xlu0 %v766
      %v768 = vpop.xlane.xlu0 %767
      %v769 = vsel %vm675, %v672, -inf
      %770 = vmax.xlane.f32.xlu0 %v769
      %v771 = vpop.xlane.xlu0 %770
      %v772 = vsub.f32 %v549, %v678
      %v773 = vsub.f32 %v552, %v681
      %v774 = vsub.f32 %v557, %v684
      %v775 = vsub.f32 %v560, %v687
      %v776 = vsub.f32 %v565, %v690
      %v777 = vsub.f32 %v568, %v693
      %v778 = vsub.f32 %v573, %v696
      %v779 = vsub.f32 %v576, %v699
      %v780 = vsub.f32 %v581, %v702
      %v781 = vsub.f32 %v584, %v705
      %v782 = vsub.f32 %v589, %v708
      %v783 = vsub.f32 %v592, %v711
      %v784 = vsub.f32 %v597, %v714
      %v785 = vsub.f32 %v600, %v717
      %v786 = vsub.f32 %v605, %v720
      %v787 = vsub.f32 %v608, %v723
      %v788 = vsub.f32 %v613, %v726
      %v789 = vsub.f32 %v616, %v729
      %v790 = vsub.f32 %v621, %v732
      %v791 = vsub.f32 %v624, %v735
      %v792 = vsub.f32 %v629, %v738
      %v793 = vsub.f32 %v632, %v741
      %v794 = vsub.f32 %v637, %v744
      %v795 = vsub.f32 %v640, %v747
      %v796 = vsub.f32 %v645, %v750
      %v797 = vsub.f32 %v648, %v753
      %v798 = vsub.f32 %v653, %v756
      %v799 = vsub.f32 %v656, %v759
      %v800 = vsub.f32 %v661, %v762
      %v801 = vsub.f32 %v664, %v765
      %v802 = vsub.f32 %v669, %v768
      %v803 = vsub.f32 %v672, %v771
      %v804 = vmul.f32 %v772, 1.442695
      %v805 = vpow.pop %v804
      %v806 = vmul.f32 %v773, 1.442695
      %v807 = vpow.pop %v806
      %v808 = vmul.f32 %v774, 1.442695
      %v809 = vpow.pop %v808
      %v810 = vmul.f32 %v775, 1.442695
      %v811 = vpow.pop %v810
      %v812 = vmul.f32 %v776, 1.442695
      %v813 = vpow.pop %v812
      %v814 = vmul.f32 %v777, 1.442695
      %v815 = vpow.pop %v814
      %v816 = vmul.f32 %v778, 1.442695
      %v817 = vpow.pop %v816
      %v818 = vmul.f32 %v779, 1.442695
      %v819 = vpow.pop %v818
      %v820 = vmul.f32 %v780, 1.442695
      %v821 = vpow.pop %v820
      %v822 = vmul.f32 %v781, 1.442695
      %v823 = vpow.pop %v822
      %v824 = vmul.f32 %v782, 1.442695
      %v825 = vpow.pop %v824
      %v826 = vmul.f32 %v783, 1.442695
      %v827 = vpow.pop %v826
      %v828 = vmul.f32 %v784, 1.442695
      %v829 = vpow.pop %v828
      %v830 = vmul.f32 %v785, 1.442695
      %v831 = vpow.pop %v830
      %v832 = vmul.f32 %v786, 1.442695
      %v833 = vpow.pop %v832
      %v834 = vmul.f32 %v787, 1.442695
      %v835 = vpow.pop %v834
      %v836 = vmul.f32 %v788, 1.442695
      %v837 = vpow.pop %v836
      %v838 = vmul.f32 %v789, 1.442695
      %v839 = vpow.pop %v838
      %v840 = vmul.f32 %v790, 1.442695
      %v841 = vpow.pop %v840
      %v842 = vmul.f32 %v791, 1.442695
      %v843 = vpow.pop %v842
      %v844 = vmul.f32 %v792, 1.442695
      %v845 = vpow.pop %v844
      %v846 = vmul.f32 %v793, 1.442695
      %v847 = vpow.pop %v846
      %v848 = vmul.f32 %v794, 1.442695
      %v849 = vpow.pop %v848
      %v850 = vmul.f32 %v795, 1.442695
      %v851 = vpow.pop %v850
      %v852 = vmul.f32 %v796, 1.442695
      %v853 = vpow.pop %v852
      %v854 = vmul.f32 %v797, 1.442695
      %v855 = vpow.pop %v854
      %v856 = vmul.f32 %v798, 1.442695
      %v857 = vpow.pop %v856
      %v858 = vmul.f32 %v799, 1.442695
      %v859 = vpow.pop %v858
      %v860 = vmul.f32 %v800, 1.442695
      %v861 = vpow.pop %v860
      %v862 = vmul.f32 %v801, 1.442695
      %v863 = vpow.pop %v862
      %v864 = vmul.f32 %v802, 1.442695
      %v865 = vpow.pop %v864
      %v866 = vmul.f32 %v803, 1.442695
      %v867 = vpow.pop %v866
      %v868 = vsel %vm675, %v805, 0.0
      %869 = vadd.xlane.f32.xlu0 %v868
      %v870 = vpop.xlane.xlu0 %869
      %v871 = vsel %vm675, %v807, 0.0
      %872 = vadd.xlane.f32.xlu0 %v871
      %v873 = vpop.xlane.xlu0 %872
      %v874 = vsel %vm675, %v809, 0.0
      %875 = vadd.xlane.f32.xlu0 %v874
      %v876 = vpop.xlane.xlu0 %875
      %v877 = vsel %vm675, %v811, 0.0
      %878 = vadd.xlane.f32.xlu0 %v877
      %v879 = vpop.xlane.xlu0 %878
      %v880 = vsel %vm675, %v813, 0.0
      %881 = vadd.xlane.f32.xlu0 %v880
      %v882 = vpop.xlane.xlu0 %881
      %v883 = vsel %vm675, %v815, 0.0
      %884 = vadd.xlane.f32.xlu0 %v883
      %v885 = vpop.xlane.xlu0 %884
      %v886 = vsel %vm675, %v817, 0.0
      %887 = vadd.xlane.f32.xlu0 %v886
      %v888 = vpop.xlane.xlu0 %887
      %v889 = vsel %vm675, %v819, 0.0
      %890 = vadd.xlane.f32.xlu0 %v889
      %v891 = vpop.xlane.xlu0 %890
      %v892 = vsel %vm675, %v821, 0.0
      %893 = vadd.xlane.f32.xlu0 %v892
      %v894 = vpop.xlane.xlu0 %893
      %v895 = vsel %vm675, %v823, 0.0
      %896 = vadd.xlane.f32.xlu0 %v895
      %v897 = vpop.xlane.xlu0 %896
      %v898 = vsel %vm675, %v825, 0.0
      %899 = vadd.xlane.f32.xlu0 %v898
      %v900 = vpop.xlane.xlu0 %899
      %v901 = vsel %vm675, %v827, 0.0
      %902 = vadd.xlane.f32.xlu0 %v901
      %v903 = vpop.xlane.xlu0 %902
      %v904 = vsel %vm675, %v829, 0.0
      %905 = vadd.xlane.f32.xlu0 %v904
      %v906 = vpop.xlane.xlu0 %905
      %v907 = vsel %vm675, %v831, 0.0
      %908 = vadd.xlane.f32.xlu0 %v907
      %v909 = vpop.xlane.xlu0 %908
      %v910 = vsel %vm675, %v833, 0.0
      %911 = vadd.xlane.f32.xlu0 %v910
      %v912 = vpop.xlane.xlu0 %911
      %v913 = vsel %vm675, %v835, 0.0
      %914 = vadd.xlane.f32.xlu0 %v913
      %v915 = vpop.xlane.xlu0 %914
      %v916 = vsel %vm675, %v837, 0.0
      %917 = vadd.xlane.f32.xlu0 %v916
      %v918 = vpop.xlane.xlu0 %917
      %v919 = vsel %vm675, %v839, 0.0
      %920 = vadd.xlane.f32.xlu0 %v919
      %v921 = vpop.xlane.xlu0 %920
      %v922 = vsel %vm675, %v841, 0.0
      %923 = vadd.xlane.f32.xlu0 %v922
      %v924 = vpop.xlane.xlu0 %923
      %v925 = vsel %vm675, %v843, 0.0
      %926 = vadd.xlane.f32.xlu0 %v925
      %v927 = vpop.xlane.xlu0 %926
      %v928 = vsel %vm675, %v845, 0.0
      %929 = vadd.xlane.f32.xlu0 %v928
      %v930 = vpop.xlane.xlu0 %929
      %v931 = vsel %vm675, %v847, 0.0
      %932 = vadd.xlane.f32.xlu0 %v931
      %v933 = vpop.xlane.xlu0 %932
      %v934 = vsel %vm675, %v849, 0.0
      %935 = vadd.xlane.f32.xlu0 %v934
      %v936 = vpop.xlane.xlu0 %935
      %v937 = vsel %vm675, %v851, 0.0
      %938 = vadd.xlane.f32.xlu0 %v937
      %v939 = vpop.xlane.xlu0 %938
      %v940 = vsel %vm675, %v853, 0.0
      %941 = vadd.xlane.f32.xlu0 %v940
      %v942 = vpop.xlane.xlu0 %941
      %v943 = vsel %vm675, %v855, 0.0
      %944 = vadd.xlane.f32.xlu0 %v943
      %v945 = vpop.xlane.xlu0 %944
      %v946 = vsel %vm675, %v857, 0.0
      %947 = vadd.xlane.f32.xlu0 %v946
      %v948 = vpop.xlane.xlu0 %947
      %v949 = vsel %vm675, %v859, 0.0
      %950 = vadd.xlane.f32.xlu0 %v949
      %v951 = vpop.xlane.xlu0 %950
      %v952 = vsel %vm675, %v861, 0.0
      %953 = vadd.xlane.f32.xlu0 %v952
      %v954 = vpop.xlane.xlu0 %953
      %v955 = vsel %vm675, %v863, 0.0
      %956 = vadd.xlane.f32.xlu0 %v955
      %v957 = vpop.xlane.xlu0 %956
      %v958 = vsel %vm675, %v865, 0.0
      %959 = vadd.xlane.f32.xlu0 %v958
      %v960 = vpop.xlane.xlu0 %959
      %v961 = vsel %vm675, %v867, 0.0
      %962 = vadd.xlane.f32.xlu0 %v961
      %v963 = vpop.xlane.xlu0 %962
      %v964 = vrcp.pop %v870
      %v965 = vrcp.pop %v873
      %v966 = vrcp.pop %v876
      %v967 = vrcp.pop %v879
      %v968 = vrcp.pop %v882
      %v969 = vrcp.pop %v885
      %v970 = vrcp.pop %v888
      %v971 = vrcp.pop %v891
      %v972 = vrcp.pop %v894
      %v973 = vrcp.pop %v897
      %v974 = vrcp.pop %v900
      %v975 = vrcp.pop %v903
      %v976 = vrcp.pop %v906
      %v977 = vrcp.pop %v909
      %v978 = vrcp.pop %v912
      %v979 = vrcp.pop %v915
      %v980 = vrcp.pop %v918
      %v981 = vrcp.pop %v921
      %v982 = vrcp.pop %v924
      %v983 = vrcp.pop %v927
      %v984 = vrcp.pop %v930
      %v985 = vrcp.pop %v933
      %v986 = vrcp.pop %v936
      %v987 = vrcp.pop %v939
      %v988 = vrcp.pop %v942
      %v989 = vrcp.pop %v945
      %v990 = vrcp.pop %v948
      %v991 = vrcp.pop %v951
      %v992 = vrcp.pop %v954
      %v993 = vrcp.pop %v957
      %v994 = vrcp.pop %v960
      %v995 = vrcp.pop %v963
      %v996 = vmul.f32 %v805, %v964
      %v997 = vmul.f32 %v807, %v965
      %v998 = vmul.f32 %v809, %v966
      %v999 = vmul.f32 %v811, %v967
      %v1000 = vmul.f32 %v813, %v968
      %v1001 = vmul.f32 %v815, %v969
      %v1002 = vmul.f32 %v817, %v970
      %v1003 = vmul.f32 %v819, %v971
      %v1004 = vmul.f32 %v821, %v972
      %v1005 = vmul.f32 %v823, %v973
      %v1006 = vmul.f32 %v825, %v974
      %v1007 = vmul.f32 %v827, %v975
      %v1008 = vmul.f32 %v829, %v976
      %v1009 = vmul.f32 %v831, %v977
      %v1010 = vmul.f32 %v833, %v978
      %v1011 = vmul.f32 %v835, %v979
      %v1012 = vmul.f32 %v837, %v980
      %v1013 = vmul.f32 %v839, %v981
      %v1014 = vmul.f32 %v841, %v982
      %v1015 = vmul.f32 %v843, %v983
      %v1016 = vmul.f32 %v845, %v984
      %v1017 = vmul.f32 %v847, %v985
      %v1018 = vmul.f32 %v849, %v986
      %v1019 = vmul.f32 %v851, %v987
      %v1020 = vmul.f32 %v853, %v988
      %v1021 = vmul.f32 %v855, %v989
      %v1022 = vmul.f32 %v857, %v990
      %v1023 = vmul.f32 %v859, %v991
      %v1024 = vmul.f32 %v861, %v992
      %v1025 = vmul.f32 %v863, %v993
      %v1026 = vmul.f32 %v865, %v994
      %v1027 = vmul.f32 %v867, %v995
      %v1028 = vpack.c.bf16 %v997, %v996
      %v1029 = vpack.c.bf16 %v999, %v998
      %v1030 = vpack.c.bf16 %v1001, %v1000
      %v1031 = vpack.c.bf16 %v1003, %v1002
      %v1032 = vpack.c.bf16 %v1005, %v1004
      %v1033 = vpack.c.bf16 %v1007, %v1006
      %v1034 = vpack.c.bf16 %v1009, %v1008
      %v1035 = vpack.c.bf16 %v1011, %v1010
      %v1036 = vpack.c.bf16 %v1013, %v1012
      %v1037 = vpack.c.bf16 %v1015, %v1014
      %v1038 = vpack.c.bf16 %v1017, %v1016
      %v1039 = vpack.c.bf16 %v1019, %v1018
      %v1040 = vpack.c.bf16 %v1021, %v1020
      %v1041 = vpack.c.bf16 %v1023, %v1022
      %v1042 = vpack.c.bf16 %v1025, %v1024
      %v1043 = vpack.c.bf16 %v1027, %v1026
      %v1052 = vunpack.c.l.b16 %v345
      %v1053 = vunpack.c.l.b16 %v346
      %v1054 = vunpack.c.l.b16 %v347
      %v1055 = vunpack.c.l.b16 %v348
      %v1056 = vunpack.c.l.b16 %v349
      %v1057 = vunpack.c.l.b16 %v350
      %v1058 = vunpack.c.l.b16 %v351
      %v1059 = vunpack.c.l.b16 %v352
      %v1060 = vpack.c.b16 %v1053, %v1052
      %v1061 = vpack.c.b16 %v1055, %v1054
      %v1062 = vpack.c.b16 %v1057, %v1056
      %v1063 = vpack.c.b16 %v1059, %v1058
      %v1069 = vsel %vm675, %v1028, 0
      %v1072 = vsel %vm675, %v1029, 0
      %v1075 = vsel %vm675, %v1030, 0
      %v1078 = vsel %vm675, %v1031, 0
      %v1081 = vsel %vm675, %v1032, 0
      %v1084 = vsel %vm675, %v1033, 0
      %v1087 = vsel %vm675, %v1034, 0
      %v1090 = vsel %vm675, %v1035, 0
      %v1093 = vsel %vm675, %v1036, 0
      %v1096 = vsel %vm675, %v1037, 0
      %v1099 = vsel %vm675, %v1038, 0
      %v1102 = vsel %vm675, %v1039, 0
      %v1105 = vsel %vm675, %v1040, 0
      %v1108 = vsel %vm675, %v1041, 0
      %v1111 = vsel %vm675, %v1042, 0
      %v1114 = vsel %vm675, %v1043, 0
      %1116 = vmatprep.subr.bf16.mxu0 0
      %1117 = vmatpush1.bf16.msra.mxu0 %v1060
      %1118 = vmatprep.subr.bf16.mxu0 0
      %1119 = vmatpush1.bf16.msra.mxu0 %v1061
      %1120 = vmatprep.subr.bf16.mxu0 0
      %1121 = vmatpush1.bf16.msra.mxu0 %v1062
      %1122 = vmatprep.subr.bf16.mxu0 0
      %1123 = vmatpush1.bf16.msra.mxu0 %v1063
      %1124 = vmatprep.subr.bf16.mxu0 0
      %1125 = vmatpush1.bf16.msra.mxu0 0
      %1126 = vmatprep.subr.bf16.mxu0 0
      %1127 = vmatpush1.bf16.msra.mxu0 0
      %1128 = vmatprep.subr.bf16.mxu0 0
      %1129 = vmatpush1.bf16.msra.mxu0 0
      %1130 = vmatprep.subr.bf16.mxu0 0
      %1131 = vmatpush1.bf16.msra.mxu0 0
      %1132 = vmatprep.subr.bf16.mxu0 0
      %1133 = vmatpush1.bf16.msra.mxu0 0
      %1134 = vmatprep.subr.bf16.mxu0 0
      %1135 = vmatpush1.bf16.msra.mxu0 0
      %1136 = vmatprep.subr.bf16.mxu0 0
      %1137 = vmatpush1.bf16.msra.mxu0 0
      %1138 = vmatprep.subr.bf16.mxu0 0
      %1139 = vmatpush1.bf16.msra.mxu0 0
      %1140 = vmatprep.subr.bf16.mxu0 0
      %1141 = vmatpush1.bf16.msra.mxu0 0
      %1142 = vmatprep.subr.bf16.mxu0 0
      %1143 = vmatpush1.bf16.msra.mxu0 0
      %1144 = vmatprep.subr.bf16.mxu0 0
      %1145 = vmatpush1.bf16.msra.mxu0 0
      %1146 = vmatprep.subr.bf16.mxu0 0
      %1147 = vmatpush1.bf16.msra.mxu0 0
      %1148 = vmatprep.mubr.bf16.mxu0 0
      %1149 = vmatmul.mubr.bf16.gmra.mrb[0].mxu0 %v1069
      %v1150 = vpop.f32.mrb[0].mxu0
      %v1151 = vadd.f32 0.0, %v1150
      %v1152 = vpop.f32.mrb[0].mxu0
      %v1153 = vpop.f32.mrb[0].mxu0
      %v1154 = vadd.f32 0.0, %v1153
      %v1155 = vpop.f32.mrb[0].mxu0
      %1156 = vmatprep.mubr.bf16.mxu0 0
      %1157 = vmatmul.mubr.bf16.gmra.mrb[0].mxu0 %v1072
      %v1158 = vpop.f32.mrb[0].mxu0
      %v1159 = vadd.f32 0.0, %v1158
      %v1160 = vpop.f32.mrb[0].mxu0
      %v1161 = vpop.f32.mrb[0].mxu0
      %v1162 = vadd.f32 0.0, %v1161
      %v1163 = vpop.f32.mrb[0].mxu0
      %1164 = vmatprep.mubr.bf16.mxu0 0
      %1165 = vmatmul.mubr.bf16.gmra.mrb[0].mxu0 %v1075
      %v1166 = vpop.f32.mrb[0].mxu0
      %v1167 = vadd.f32 0.0, %v1166
      %v1168 = vpop.f32.mrb[0].mxu0
      %v1169 = vpop.f32.mrb[0].mxu0
      %v1170 = vadd.f32 0.0, %v1169
      %v1171 = vpop.f32.mrb[0].mxu0
      %1172 = vmatprep.mubr.bf16.mxu0 0
      %1173 = vmatmul.mubr.bf16.gmra.mrb[0].mxu0 %v1078
      %v1174 = vpop.f32.mrb[0].mxu0
      %v1175 = vadd.f32 0.0, %v1174
      %v1176 = vpop.f32.mrb[0].mxu0
      %v1177 = vpop.f32.mrb[0].mxu0
      %v1178 = vadd.f32 0.0, %v1177
      %v1179 = vpop.f32.mrb[0].mxu0
      %1180 = vmatprep.mubr.bf16.mxu0 0
      %1181 = vmatmul.mubr.bf16.gmra.mrb[0].mxu0 %v1081
      %v1182 = vpop.f32.mrb[0].mxu0
      %v1183 = vadd.f32 0.0, %v1182
      %v1184 = vpop.f32.mrb[0].mxu0
      %v1185 = vpop.f32.mrb[0].mxu0
      %v1186 = vadd.f32 0.0, %v1185
      %v1187 = vpop.f32.mrb[0].mxu0
      %1188 = vmatprep.mubr.bf16.mxu0 0
      %1189 = vmatmul.mubr.bf16.gmra.mrb[0].mxu0 %v1084
      %v1190 = vpop.f32.mrb[0].mxu0
      %v1191 = vadd.f32 0.0, %v1190
      %v1192 = vpop.f32.mrb[0].mxu0
      %v1193 = vpop.f32.mrb[0].mxu0
      %v1194 = vadd.f32 0.0, %v1193
      %v1195 = vpop.f32.mrb[0].mxu0
      %1196 = vmatprep.mubr.bf16.mxu0 0
      %1197 = vmatmul.mubr.bf16.gmra.mrb[0].mxu0 %v1087
      %v1198 = vpop.f32.mrb[0].mxu0
      %v1199 = vadd.f32 0.0, %v1198
      %v1200 = vpop.f32.mrb[0].mxu0
      %v1201 = vpop.f32.mrb[0].mxu0
      %v1202 = vadd.f32 0.0, %v1201
      %v1203 = vpop.f32.mrb[0].mxu0
      %1204 = vmatprep.mubr.bf16.mxu0 0
      %1205 = vmatmul.mubr.bf16.gmra.mrb[0].mxu0 %v1090
      %v1206 = vpop.f32.mrb[0].mxu0
      %v1207 = vadd.f32 0.0, %v1206
      %v1208 = vpop.f32.mrb[0].mxu0
      %v1209 = vpop.f32.mrb[0].mxu0
      %v1210 = vadd.f32 0.0, %v1209
      %v1211 = vpop.f32.mrb[0].mxu0
      %1212 = vmatprep.mubr.bf16.mxu0 0
      %1213 = vmatmul.mubr.bf16.gmra.mrb[0].mxu0 %v1093
      %v1214 = vpop.f32.mrb[0].mxu0
      %v1215 = vadd.f32 0.0, %v1214
      %v1216 = vpop.f32.mrb[0].mxu0
      %v1217 = vpop.f32.mrb[0].mxu0
      %v1218 = vadd.f32 0.0, %v1217
      %v1219 = vpop.f32.mrb[0].mxu0
      %1220 = vmatprep.mubr.bf16.mxu0 0
      %1221 = vmatmul.mubr.bf16.gmra.mrb[0].mxu0 %v1096
      %v1222 = vpop.f32.mrb[0].mxu0
      %v1223 = vadd.f32 0.0, %v1222
      %v1224 = vpop.f32.mrb[0].mxu0
      %v1225 = vpop.f32.mrb[0].mxu0
      %v1226 = vadd.f32 0.0, %v1225
      %v1227 = vpop.f32.mrb[0].mxu0
      %1228 = vmatprep.mubr.bf16.mxu0 0
      %1229 = vmatmul.mubr.bf16.gmra.mrb[0].mxu0 %v1099
      %v1230 = vpop.f32.mrb[0].mxu0
      %v1231 = vadd.f32 0.0, %v1230
      %v1232 = vpop.f32.mrb[0].mxu0
      %v1233 = vpop.f32.mrb[0].mxu0
      %v1234 = vadd.f32 0.0, %v1233
      %v1235 = vpop.f32.mrb[0].mxu0
      %1236 = vmatprep.mubr.bf16.mxu0 0
      %1237 = vmatmul.mubr.bf16.gmra.mrb[0].mxu0 %v1102
      %v1238 = vpop.f32.mrb[0].mxu0
      %v1239 = vadd.f32 0.0, %v1238
      %v1240 = vpop.f32.mrb[0].mxu0
      %v1241 = vpop.f32.mrb[0].mxu0
      %v1242 = vadd.f32 0.0, %v1241
      %v1243 = vpop.f32.mrb[0].mxu0
      %1244 = vmatprep.mubr.bf16.mxu0 0
      %1245 = vmatmul.mubr.bf16.gmra.mrb[0].mxu0 %v1105
      %v1246 = vpop.f32.mrb[0].mxu0
      %v1247 = vadd.f32 0.0, %v1246
      %v1248 = vpop.f32.mrb[0].mxu0
      %v1249 = vpop.f32.mrb[0].mxu0
      %v1250 = vadd.f32 0.0, %v1249
      %v1251 = vpop.f32.mrb[0].mxu0
      %1252 = vmatprep.mubr.bf16.mxu0 0
      %1253 = vmatmul.mubr.bf16.gmra.mrb[0].mxu0 %v1108
      %v1254 = vpop.f32.mrb[0].mxu0
      %v1255 = vadd.f32 0.0, %v1254
      %v1256 = vpop.f32.mrb[0].mxu0
      %v1257 = vpop.f32.mrb[0].mxu0
      %v1258 = vadd.f32 0.0, %v1257
      %v1259 = vpop.f32.mrb[0].mxu0
      %1260 = vmatprep.mubr.bf16.mxu0 0
      %1261 = vmatmul.mubr.bf16.gmra.mrb[0].mxu0 %v1111
      %v1262 = vpop.f32.mrb[0].mxu0
      %v1263 = vadd.f32 0.0, %v1262
      %v1264 = vpop.f32.mrb[0].mxu0
      %v1265 = vpop.f32.mrb[0].mxu0
      %v1266 = vadd.f32 0.0, %v1265
      %v1267 = vpop.f32.mrb[0].mxu0
      %1268 = vmatprep.mubr.bf16.mxu0 0
      %1269 = vmatmul.mubr.bf16.gmra.mrb[0].mxu0 %v1114
      %v1270 = vpop.f32.mrb[0].mxu0
      %v1271 = vadd.f32 0.0, %v1270
      %v1272 = vpop.f32.mrb[0].mxu0
      %v1273 = vpop.f32.mrb[0].mxu0
      %v1274 = vadd.f32 0.0, %v1273
      %v1275 = vpop.f32.mrb[0].mxu0
      %1276 = vdwg.mxu0
      %1277 = vrot.lane.b32.xlu0 %v417, 120
      %v1278 = vpop.permute.xlu0 %1277
      %1279 = vrot.lane.b32.xlu0 %v418, 120
      %v1280 = vpop.permute.xlu0 %1279
      %1281 = vrot.lane.b32.xlu0 %v419, 120
      %v1282 = vpop.permute.xlu0 %1281
      %1283 = vrot.lane.b32.xlu0 %v420, 120
      %v1284 = vpop.permute.xlu0 %1283
      %1285 = vrot.lane.b32.xlu0 %v421, 120
      %v1286 = vpop.permute.xlu0 %1285
      %1287 = vrot.lane.b32.xlu0 %v422, 120
      %v1288 = vpop.permute.xlu0 %1287
      %1289 = vrot.lane.b32.xlu0 %v423, 120
      %v1290 = vpop.permute.xlu0 %1289
      %1291 = vrot.lane.b32.xlu0 %v424, 120
      %v1292 = vpop.permute.xlu0 %1291
      %1293 = vrot.lane.b32.xlu0 %v425, 120
      %v1294 = vpop.permute.xlu0 %1293
      %1295 = vrot.lane.b32.xlu0 %v426, 120
      %v1296 = vpop.permute.xlu0 %1295
      %1297 = vrot.lane.b32.xlu0 %v427, 120
      %v1298 = vpop.permute.xlu0 %1297
      %1299 = vrot.lane.b32.xlu0 %v428, 120
      %v1300 = vpop.permute.xlu0 %1299
      %1301 = vrot.lane.b32.xlu0 %v429, 120
      %v1302 = vpop.permute.xlu0 %1301
      %1303 = vrot.lane.b32.xlu0 %v430, 120
      %v1304 = vpop.permute.xlu0 %1303
      %1305 = vrot.lane.b32.xlu0 %v431, 120
      %v1306 = vpop.permute.xlu0 %1305
      %1307 = vrot.lane.b32.xlu0 %v432, 120
      %v1308 = vpop.permute.xlu0 %1307
      %1309 = vrot.lane.b32.xlu0 %v449, 120
      %v1310 = vpop.permute.xlu0 %1309
      %1311 = vrot.lane.b32.xlu0 %v450, 120
      %v1312 = vpop.permute.xlu0 %1311
      %1313 = vrot.lane.b32.xlu0 %v451, 120
      %v1314 = vpop.permute.xlu0 %1313
      %1315 = vrot.lane.b32.xlu0 %v452, 120
      %v1316 = vpop.permute.xlu0 %1315
      %v1318 = vsel %vm453, %v1278, 0
      %v1321 = vsel %vm453, %v1280, 0
      %v1324 = vsel %vm453, %v1282, 0
      %v1327 = vsel %vm453, %v1284, 0
      %v1330 = vsel %vm453, %v1286, 0
      %v1333 = vsel %vm453, %v1288, 0
      %v1336 = vsel %vm453, %v1290, 0
      %v1339 = vsel %vm453, %v1292, 0
      %v1342 = vsel %vm453, %v1294, 0
      %v1345 = vsel %vm453, %v1296, 0
      %v1348 = vsel %vm453, %v1298, 0
      %v1351 = vsel %vm453, %v1300, 0
      %v1354 = vsel %vm453, %v1302, 0
      %v1357 = vsel %vm453, %v1304, 0
      %v1360 = vsel %vm453, %v1306, 0
      %v1363 = vsel %vm453, %v1308, 0
      %v1366 = vsel %vm453, %v1310, 0
      %v1369 = vsel %vm453, %v1312, 0
      %v1372 = vsel %vm453, %v1314, 0
      %v1375 = vsel %vm453, %v1316, 0
      %1377 = vmatprep.subr.bf16.mxu0 0
      %1378 = vmatpush1.bf16.xpose.msra.mxu0 %v1366
      %1379 = vmatprep.subr.bf16.mxu0 0
      %1380 = vmatpush1.bf16.xpose.msra.mxu0 %v1369
      %1381 = vmatprep.subr.bf16.mxu0 0
      %1382 = vmatpush1.bf16.xpose.msra.mxu0 %v1372
      %1383 = vmatprep.subr.bf16.mxu0 0
      %1384 = vmatpush1.bf16.xpose.msra.mxu0 %v1375
      %1385 = vmatprep.subr.bf16.mxu0 0
      %1386 = vmatpush1.bf16.xpose.msra.mxu0 0
      %1387 = vmatprep.subr.bf16.mxu0 0
      %1388 = vmatpush1.bf16.xpose.msra.mxu0 0
      %1389 = vmatprep.subr.bf16.mxu0 0
      %1390 = vmatpush1.bf16.xpose.msra.mxu0 0
      %1391 = vmatprep.subr.bf16.mxu0 0
      %1392 = vmatpush1.bf16.xpose.msra.mxu0 0
      %1393 = vmatprep.subr.bf16.mxu0 0
      %1394 = vmatpush1.bf16.xpose.msra.mxu0 0
      %1395 = vmatprep.subr.bf16.mxu0 0
      %1396 = vmatpush1.bf16.xpose.msra.mxu0 0
      %1397 = vmatprep.subr.bf16.mxu0 0
      %1398 = vmatpush1.bf16.xpose.msra.mxu0 0
      %1399 = vmatprep.subr.bf16.mxu0 0
      %1400 = vmatpush1.bf16.xpose.msra.mxu0 0
      %1401 = vmatprep.subr.bf16.mxu0 0
      %1402 = vmatpush1.bf16.xpose.msra.mxu0 0
      %1403 = vmatprep.subr.bf16.mxu0 0
      %1404 = vmatpush1.bf16.xpose.msra.mxu0 0
      %1405 = vmatprep.subr.bf16.mxu0 0
      %1406 = vmatpush1.bf16.xpose.msra.mxu0 0
      %1407 = vmatprep.subr.bf16.mxu0 0
      %1408 = vmatpush1.bf16.xpose.msra.mxu0 0
      %1409 = vmatprep.mubr.bf16.mxu0 0
      %1410 = vmatmul.mubr.bf16.gmra.mrb[0].mxu0 %v1318
      %v1411 = vpop.f32.mrb[0].mxu0
      %v1412 = vadd.f32 0.0, %v1411
      %v1413 = vpop.f32.mrb[0].mxu0
      %v1414 = vpop.f32.mrb[0].mxu0
      %v1415 = vadd.f32 0.0, %v1414
      %v1416 = vpop.f32.mrb[0].mxu0
      %1417 = vmatprep.mubr.bf16.mxu0 0
      %1418 = vmatmul.mubr.bf16.gmra.mrb[0].mxu0 %v1321
      %v1419 = vpop.f32.mrb[0].mxu0
      %v1420 = vadd.f32 0.0, %v1419
      %v1421 = vpop.f32.mrb[0].mxu0
      %v1422 = vpop.f32.mrb[0].mxu0
      %v1423 = vadd.f32 0.0, %v1422
      %v1424 = vpop.f32.mrb[0].mxu0
      %1425 = vmatprep.mubr.bf16.mxu0 0
      %1426 = vmatmul.mubr.bf16.gmra.mrb[0].mxu0 %v1324
      %v1427 = vpop.f32.mrb[0].mxu0
      %v1428 = vadd.f32 0.0, %v1427
      %v1429 = vpop.f32.mrb[0].mxu0
      %v1430 = vpop.f32.mrb[0].mxu0
      %v1431 = vadd.f32 0.0, %v1430
      %v1432 = vpop.f32.mrb[0].mxu0
      %1433 = vmatprep.mubr.bf16.mxu0 0
      %1434 = vmatmul.mubr.bf16.gmra.mrb[0].mxu0 %v1327
      %v1435 = vpop.f32.mrb[0].mxu0
      %v1436 = vadd.f32 0.0, %v1435
      %v1437 = vpop.f32.mrb[0].mxu0
      %v1438 = vpop.f32.mrb[0].mxu0
      %v1439 = vadd.f32 0.0, %v1438
      %v1440 = vpop.f32.mrb[0].mxu0
      %1441 = vmatprep.mubr.bf16.mxu0 0
      %1442 = vmatmul.mubr.bf16.gmra.mrb[0].mxu0 %v1330
      %v1443 = vpop.f32.mrb[0].mxu0
      %v1444 = vadd.f32 0.0, %v1443
      %v1445 = vpop.f32.mrb[0].mxu0
      %v1446 = vpop.f32.mrb[0].mxu0
      %v1447 = vadd.f32 0.0, %v1446
      %v1448 = vpop.f32.mrb[0].mxu0
      %1449 = vmatprep.mubr.bf16.mxu0 0
      %1450 = vmatmul.mubr.bf16.gmra.mrb[0].mxu0 %v1333
      %v1451 = vpop.f32.mrb[0].mxu0
      %v1452 = vadd.f32 0.0, %v1451
      %v1453 = vpop.f32.mrb[0].mxu0
      %v1454 = vpop.f32.mrb[0].mxu0
      %v1455 = vadd.f32 0.0, %v1454
      %v1456 = vpop.f32.mrb[0].mxu0
      %1457 = vmatprep.mubr.bf16.mxu0 0
      %1458 = vmatmul.mubr.bf16.gmra.mrb[0].mxu0 %v1336
      %v1459 = vpop.f32.mrb[0].mxu0
      %v1460 = vadd.f32 0.0, %v1459
      %v1461 = vpop.f32.mrb[0].mxu0
      %v1462 = vpop.f32.mrb[0].mxu0
      %v1463 = vadd.f32 0.0, %v1462
      %v1464 = vpop.f32.mrb[0].mxu0
      %1465 = vmatprep.mubr.bf16.mxu0 0
      %1466 = vmatmul.mubr.bf16.gmra.mrb[0].mxu0 %v1339
      %v1467 = vpop.f32.mrb[0].mxu0
      %v1468 = vadd.f32 0.0, %v1467
      %v1469 = vpop.f32.mrb[0].mxu0
      %v1470 = vpop.f32.mrb[0].mxu0
      %v1471 = vadd.f32 0.0, %v1470
      %v1472 = vpop.f32.mrb[0].mxu0
      %1473 = vmatprep.mubr.bf16.mxu0 0
      %1474 = vmatmul.mubr.bf16.gmra.mrb[0].mxu0 %v1342
      %v1475 = vpop.f32.mrb[0].mxu0
      %v1476 = vadd.f32 0.0, %v1475
      %v1477 = vpop.f32.mrb[0].mxu0
      %v1478 = vpop.f32.mrb[0].mxu0
      %v1479 = vadd.f32 0.0, %v1478
      %v1480 = vpop.f32.mrb[0].mxu0
      %1481 = vmatprep.mubr.bf16.mxu0 0
      %1482 = vmatmul.mubr.bf16.gmra.mrb[0].mxu0 %v1345
      %v1483 = vpop.f32.mrb[0].mxu0
      %v1484 = vadd.f32 0.0, %v1483
      %v1485 = vpop.f32.mrb[0].mxu0
      %v1486 = vpop.f32.mrb[0].mxu0
      %v1487 = vadd.f32 0.0, %v1486
      %v1488 = vpop.f32.mrb[0].mxu0
      %1489 = vmatprep.mubr.bf16.mxu0 0
      %1490 = vmatmul.mubr.bf16.gmra.mrb[0].mxu0 %v1348
      %v1491 = vpop.f32.mrb[0].mxu0
      %v1492 = vadd.f32 0.0, %v1491
      %v1493 = vpop.f32.mrb[0].mxu0
      %v1494 = vpop.f32.mrb[0].mxu0
      %v1495 = vadd.f32 0.0, %v1494
      %v1496 = vpop.f32.mrb[0].mxu0
      %1497 = vmatprep.mubr.bf16.mxu0 0
      %1498 = vmatmul.mubr.bf16.gmra.mrb[0].mxu0 %v1351
      %v1499 = vpop.f32.mrb[0].mxu0
      %v1500 = vadd.f32 0.0, %v1499
      %v1501 = vpop.f32.mrb[0].mxu0
      %v1502 = vpop.f32.mrb[0].mxu0
      %v1503 = vadd.f32 0.0, %v1502
      %v1504 = vpop.f32.mrb[0].mxu0
      %1505 = vmatprep.mubr.bf16.mxu0 0
      %1506 = vmatmul.mubr.bf16.gmra.mrb[0].mxu0 %v1354
      %v1507 = vpop.f32.mrb[0].mxu0
      %v1508 = vadd.f32 0.0, %v1507
      %v1509 = vpop.f32.mrb[0].mxu0
      %v1510 = vpop.f32.mrb[0].mxu0
      %v1511 = vadd.f32 0.0, %v1510
      %v1512 = vpop.f32.mrb[0].mxu0
      %1513 = vmatprep.mubr.bf16.mxu0 0
      %1514 = vmatmul.mubr.bf16.gmra.mrb[0].mxu0 %v1357
      %v1515 = vpop.f32.mrb[0].mxu0
      %v1516 = vadd.f32 0.0, %v1515
      %v1517 = vpop.f32.mrb[0].mxu0
      %v1518 = vpop.f32.mrb[0].mxu0
      %v1519 = vadd.f32 0.0, %v1518
      %v1520 = vpop.f32.mrb[0].mxu0
      %1521 = vmatprep.mubr.bf16.mxu0 0
      %1522 = vmatmul.mubr.bf16.gmra.mrb[0].mxu0 %v1360
      %v1523 = vpop.f32.mrb[0].mxu0
      %v1524 = vadd.f32 0.0, %v1523
      %v1525 = vpop.f32.mrb[0].mxu0
      %v1526 = vpop.f32.mrb[0].mxu0
      %v1527 = vadd.f32 0.0, %v1526
      %v1528 = vpop.f32.mrb[0].mxu0
      %1529 = vmatprep.mubr.bf16.mxu0 0
      %1530 = vmatmul.mubr.bf16.gmra.mrb[0].mxu0 %v1363
      %v1531 = vpop.f32.mrb[0].mxu0
      %v1532 = vadd.f32 0.0, %v1531
      %v1533 = vpop.f32.mrb[0].mxu0
      %v1534 = vpop.f32.mrb[0].mxu0
      %v1535 = vadd.f32 0.0, %v1534
      %v1536 = vpop.f32.mrb[0].mxu0
      %1537 = vdwg.mxu0
      %v1538 = vsel %vm675, %v1412, -inf
      %1539 = vmax.xlane.f32.xlu0 %v1538
      %v1540 = vpop.xlane.xlu0 %1539
      %v1541 = vsel %vm675, %v1415, -inf
      %1542 = vmax.xlane.f32.xlu0 %v1541
      %v1543 = vpop.xlane.xlu0 %1542
      %v1544 = vsel %vm675, %v1420, -inf
      %1545 = vmax.xlane.f32.xlu0 %v1544
      %v1546 = vpop.xlane.xlu0 %1545
      %v1547 = vsel %vm675, %v1423, -inf
      %1548 = vmax.xlane.f32.xlu0 %v1547
      %v1549 = vpop.xlane.xlu0 %1548
      %v1550 = vsel %vm675, %v1428, -inf
      %1551 = vmax.xlane.f32.xlu0 %v1550
      %v1552 = vpop.xlane.xlu0 %1551
      %v1553 = vsel %vm675, %v1431, -inf
      %1554 = vmax.xlane.f32.xlu0 %v1553
      %v1555 = vpop.xlane.xlu0 %1554
      %v1556 = vsel %vm675, %v1436, -inf
      %1557 = vmax.xlane.f32.xlu0 %v1556
      %v1558 = vpop.xlane.xlu0 %1557
      %v1559 = vsel %vm675, %v1439, -inf
      %1560 = vmax.xlane.f32.xlu0 %v1559
      %v1561 = vpop.xlane.xlu0 %1560
      %v1562 = vsel %vm675, %v1444, -inf
      %1563 = vmax.xlane.f32.xlu0 %v1562
      %v1564 = vpop.xlane.xlu0 %1563
      %v1565 = vsel %vm675, %v1447, -inf
      %1566 = vmax.xlane.f32.xlu0 %v1565
      %v1567 = vpop.xlane.xlu0 %1566
      %v1568 = vsel %vm675, %v1452, -inf
      %1569 = vmax.xlane.f32.xlu0 %v1568
      %v1570 = vpop.xlane.xlu0 %1569
      %v1571 = vsel %vm675, %v1455, -inf
      %1572 = vmax.xlane.f32.xlu0 %v1571
      %v1573 = vpop.xlane.xlu0 %1572
      %v1574 = vsel %vm675, %v1460, -inf
      %1575 = vmax.xlane.f32.xlu0 %v1574
      %v1576 = vpop.xlane.xlu0 %1575
      %v1577 = vsel %vm675, %v1463, -inf
      %1578 = vmax.xlane.f32.xlu0 %v1577
      %v1579 = vpop.xlane.xlu0 %1578
      %v1580 = vsel %vm675, %v1468, -inf
      %1581 = vmax.xlane.f32.xlu0 %v1580
      %v1582 = vpop.xlane.xlu0 %1581
      %v1583 = vsel %vm675, %v1471, -inf
      %1584 = vmax.xlane.f32.xlu0 %v1583
      %v1585 = vpop.xlane.xlu0 %1584
      %v1586 = vsel %vm675, %v1476, -inf
      %1587 = vmax.xlane.f32.xlu0 %v1586
      %v1588 = vpop.xlane.xlu0 %1587
      %v1589 = vsel %vm675, %v1479, -inf
      %1590 = vmax.xlane.f32.xlu0 %v1589
      %v1591 = vpop.xlane.xlu0 %1590
      %v1592 = vsel %vm675, %v1484, -inf
      %1593 = vmax.xlane.f32.xlu0 %v1592
      %v1594 = vpop.xlane.xlu0 %1593
      %v1595 = vsel %vm675, %v1487, -inf
      %1596 = vmax.xlane.f32.xlu0 %v1595
      %v1597 = vpop.xlane.xlu0 %1596
      %v1598 = vsel %vm675, %v1492, -inf
      %1599 = vmax.xlane.f32.xlu0 %v1598
      %v1600 = vpop.xlane.xlu0 %1599
      %v1601 = vsel %vm675, %v1495, -inf
      %1602 = vmax.xlane.f32.xlu0 %v1601
      %v1603 = vpop.xlane.xlu0 %1602
      %v1604 = vsel %vm675, %v1500, -inf
      %1605 = vmax.xlane.f32.xlu0 %v1604
      %v1606 = vpop.xlane.xlu0 %1605
      %v1607 = vsel %vm675, %v1503, -inf
      %1608 = vmax.xlane.f32.xlu0 %v1607
      %v1609 = vpop.xlane.xlu0 %1608
      %v1610 = vsel %vm675, %v1508, -inf
      %1611 = vmax.xlane.f32.xlu0 %v1610
      %v1612 = vpop.xlane.xlu0 %1611
      %v1613 = vsel %vm675, %v1511, -inf
      %1614 = vmax.xlane.f32.xlu0 %v1613
      %v1615 = vpop.xlane.xlu0 %1614
      %v1616 = vsel %vm675, %v1516, -inf
      %1617 = vmax.xlane.f32.xlu0 %v1616
      %v1618 = vpop.xlane.xlu0 %1617
      %v1619 = vsel %vm675, %v1519, -inf
      %1620 = vmax.xlane.f32.xlu0 %v1619
      %v1621 = vpop.xlane.xlu0 %1620
      %v1622 = vsel %vm675, %v1524, -inf
      %1623 = vmax.xlane.f32.xlu0 %v1622
      %v1624 = vpop.xlane.xlu0 %1623
      %v1625 = vsel %vm675, %v1527, -inf
      %1626 = vmax.xlane.f32.xlu0 %v1625
      %v1627 = vpop.xlane.xlu0 %1626
      %v1628 = vsel %vm675, %v1532, -inf
      %1629 = vmax.xlane.f32.xlu0 %v1628
      %v1630 = vpop.xlane.xlu0 %1629
      %v1631 = vsel %vm675, %v1535, -inf
      %1632 = vmax.xlane.f32.xlu0 %v1631
      %v1633 = vpop.xlane.xlu0 %1632
      %v1634 = vsub.f32 %v1412, %v1540
      %v1635 = vsub.f32 %v1415, %v1543
      %v1636 = vsub.f32 %v1420, %v1546
      %v1637 = vsub.f32 %v1423, %v1549
      %v1638 = vsub.f32 %v1428, %v1552
      %v1639 = vsub.f32 %v1431, %v1555
      %v1640 = vsub.f32 %v1436, %v1558
      %v1641 = vsub.f32 %v1439, %v1561
      %v1642 = vsub.f32 %v1444, %v1564
      %v1643 = vsub.f32 %v1447, %v1567
      %v1644 = vsub.f32 %v1452, %v1570
      %v1645 = vsub.f32 %v1455, %v1573
      %v1646 = vsub.f32 %v1460, %v1576
      %v1647 = vsub.f32 %v1463, %v1579
      %v1648 = vsub.f32 %v1468, %v1582
      %v1649 = vsub.f32 %v1471, %v1585
      %v1650 = vsub.f32 %v1476, %v1588
      %v1651 = vsub.f32 %v1479, %v1591
      %v1652 = vsub.f32 %v1484, %v1594
      %v1653 = vsub.f32 %v1487, %v1597
      %v1654 = vsub.f32 %v1492, %v1600
      %v1655 = vsub.f32 %v1495, %v1603
      %v1656 = vsub.f32 %v1500, %v1606
      %v1657 = vsub.f32 %v1503, %v1609
      %v1658 = vsub.f32 %v1508, %v1612
      %v1659 = vsub.f32 %v1511, %v1615
      %v1660 = vsub.f32 %v1516, %v1618
      %v1661 = vsub.f32 %v1519, %v1621
      %v1662 = vsub.f32 %v1524, %v1624
      %v1663 = vsub.f32 %v1527, %v1627
      %v1664 = vsub.f32 %v1532, %v1630
      %v1665 = vsub.f32 %v1535, %v1633
      %v1666 = vmul.f32 %v1634, 1.442695
      %v1667 = vpow.pop %v1666
      %v1668 = vmul.f32 %v1635, 1.442695
      %v1669 = vpow.pop %v1668
      %v1670 = vmul.f32 %v1636, 1.442695
      %v1671 = vpow.pop %v1670
      %v1672 = vmul.f32 %v1637, 1.442695
      %v1673 = vpow.pop %v1672
      %v1674 = vmul.f32 %v1638, 1.442695
      %v1675 = vpow.pop %v1674
      %v1676 = vmul.f32 %v1639, 1.442695
      %v1677 = vpow.pop %v1676
      %v1678 = vmul.f32 %v1640, 1.442695
      %v1679 = vpow.pop %v1678
      %v1680 = vmul.f32 %v1641, 1.442695
      %v1681 = vpow.pop %v1680
      %v1682 = vmul.f32 %v1642, 1.442695
      %v1683 = vpow.pop %v1682
      %v1684 = vmul.f32 %v1643, 1.442695
      %v1685 = vpow.pop %v1684
      %v1686 = vmul.f32 %v1644, 1.442695
      %v1687 = vpow.pop %v1686
      %v1688 = vmul.f32 %v1645, 1.442695
      %v1689 = vpow.pop %v1688
      %v1690 = vmul.f32 %v1646, 1.442695
      %v1691 = vpow.pop %v1690
      %v1692 = vmul.f32 %v1647, 1.442695
      %v1693 = vpow.pop %v1692
      %v1694 = vmul.f32 %v1648, 1.442695
      %v1695 = vpow.pop %v1694
      %v1696 = vmul.f32 %v1649, 1.442695
      %v1697 = vpow.pop %v1696
      %v1698 = vmul.f32 %v1650, 1.442695
      %v1699 = vpow.pop %v1698
      %v1700 = vmul.f32 %v1651, 1.442695
      %v1701 = vpow.pop %v1700
      %v1702 = vmul.f32 %v1652, 1.442695
      %v1703 = vpow.pop %v1702
      %v1704 = vmul.f32 %v1653, 1.442695
      %v1705 = vpow.pop %v1704
      %v1706 = vmul.f32 %v1654, 1.442695
      %v1707 = vpow.pop %v1706
      %v1708 = vmul.f32 %v1655, 1.442695
      %v1709 = vpow.pop %v1708
      %v1710 = vmul.f32 %v1656, 1.442695
      %v1711 = vpow.pop %v1710
      %v1712 = vmul.f32 %v1657, 1.442695
      %v1713 = vpow.pop %v1712
      %v1714 = vmul.f32 %v1658, 1.442695
      %v1715 = vpow.pop %v1714
      %v1716 = vmul.f32 %v1659, 1.442695
      %v1717 = vpow.pop %v1716
      %v1718 = vmul.f32 %v1660, 1.442695
      %v1719 = vpow.pop %v1718
      %v1720 = vmul.f32 %v1661, 1.442695
      %v1721 = vpow.pop %v1720
      %v1722 = vmul.f32 %v1662, 1.442695
      %v1723 = vpow.pop %v1722
      %v1724 = vmul.f32 %v1663, 1.442695
      %v1725 = vpow.pop %v1724
      %v1726 = vmul.f32 %v1664, 1.442695
      %v1727 = vpow.pop %v1726
      %v1728 = vmul.f32 %v1665, 1.442695
      %v1729 = vpow.pop %v1728
      %v1730 = vsel %vm675, %v1667, 0.0
      %1731 = vadd.xlane.f32.xlu0 %v1730
      %v1732 = vpop.xlane.xlu0 %1731
      %v1733 = vsel %vm675, %v1669, 0.0
      %1734 = vadd.xlane.f32.xlu0 %v1733
      %v1735 = vpop.xlane.xlu0 %1734
      %v1736 = vsel %vm675, %v1671, 0.0
      %1737 = vadd.xlane.f32.xlu0 %v1736
      %v1738 = vpop.xlane.xlu0 %1737
      %v1739 = vsel %vm675, %v1673, 0.0
      %1740 = vadd.xlane.f32.xlu0 %v1739
      %v1741 = vpop.xlane.xlu0 %1740
      %v1742 = vsel %vm675, %v1675, 0.0
      %1743 = vadd.xlane.f32.xlu0 %v1742
      %v1744 = vpop.xlane.xlu0 %1743
      %v1745 = vsel %vm675, %v1677, 0.0
      %1746 = vadd.xlane.f32.xlu0 %v1745
      %v1747 = vpop.xlane.xlu0 %1746
      %v1748 = vsel %vm675, %v1679, 0.0
      %1749 = vadd.xlane.f32.xlu0 %v1748
      %v1750 = vpop.xlane.xlu0 %1749
      %v1751 = vsel %vm675, %v1681, 0.0
      %1752 = vadd.xlane.f32.xlu0 %v1751
      %v1753 = vpop.xlane.xlu0 %1752
      %v1754 = vsel %vm675, %v1683, 0.0
      %1755 = vadd.xlane.f32.xlu0 %v1754
      %v1756 = vpop.xlane.xlu0 %1755
      %v1757 = vsel %vm675, %v1685, 0.0
      %1758 = vadd.xlane.f32.xlu0 %v1757
      %v1759 = vpop.xlane.xlu0 %1758
      %v1760 = vsel %vm675, %v1687, 0.0
      %1761 = vadd.xlane.f32.xlu0 %v1760
      %v1762 = vpop.xlane.xlu0 %1761
      %v1763 = vsel %vm675, %v1689, 0.0
      %1764 = vadd.xlane.f32.xlu0 %v1763
      %v1765 = vpop.xlane.xlu0 %1764
      %v1766 = vsel %vm675, %v1691, 0.0
      %1767 = vadd.xlane.f32.xlu0 %v1766
      %v1768 = vpop.xlane.xlu0 %1767
      %v1769 = vsel %vm675, %v1693, 0.0
      %1770 = vadd.xlane.f32.xlu0 %v1769
      %v1771 = vpop.xlane.xlu0 %1770
      %v1772 = vsel %vm675, %v1695, 0.0
      %1773 = vadd.xlane.f32.xlu0 %v1772
      %v1774 = vpop.xlane.xlu0 %1773
      %v1775 = vsel %vm675, %v1697, 0.0
      %1776 = vadd.xlane.f32.xlu0 %v1775
      %v1777 = vpop.xlane.xlu0 %1776
      %v1778 = vsel %vm675, %v1699, 0.0
      %1779 = vadd.xlane.f32.xlu0 %v1778
      %v1780 = vpop.xlane.xlu0 %1779
      %v1781 = vsel %vm675, %v1701, 0.0
      %1782 = vadd.xlane.f32.xlu0 %v1781
      %v1783 = vpop.xlane.xlu0 %1782
      %v1784 = vsel %vm675, %v1703, 0.0
      %1785 = vadd.xlane.f32.xlu0 %v1784
      %v1786 = vpop.xlane.xlu0 %1785
      %v1787 = vsel %vm675, %v1705, 0.0
      %1788 = vadd.xlane.f32.xlu0 %v1787
      %v1789 = vpop.xlane.xlu0 %1788
      %v1790 = vsel %vm675, %v1707, 0.0
      %1791 = vadd.xlane.f32.xlu0 %v1790
      %v1792 = vpop.xlane.xlu0 %1791
      %v1793 = vsel %vm675, %v1709, 0.0
      %1794 = vadd.xlane.f32.xlu0 %v1793
      %v1795 = vpop.xlane.xlu0 %1794
      %v1796 = vsel %vm675, %v1711, 0.0
      %1797 = vadd.xlane.f32.xlu0 %v1796
      %v1798 = vpop.xlane.xlu0 %1797
      %v1799 = vsel %vm675, %v1713, 0.0
      %1800 = vadd.xlane.f32.xlu0 %v1799
      %v1801 = vpop.xlane.xlu0 %1800
      %v1802 = vsel %vm675, %v1715, 0.0
      %1803 = vadd.xlane.f32.xlu0 %v1802
      %v1804 = vpop.xlane.xlu0 %1803
      %v1805 = vsel %vm675, %v1717, 0.0
      %1806 = vadd.xlane.f32.xlu0 %v1805
      %v1807 = vpop.xlane.xlu0 %1806
      %v1808 = vsel %vm675, %v1719, 0.0
      %1809 = vadd.xlane.f32.xlu0 %v1808
      %v1810 = vpop.xlane.xlu0 %1809
      %v1811 = vsel %vm675, %v1721, 0.0
      %1812 = vadd.xlane.f32.xlu0 %v1811
      %v1813 = vpop.xlane.xlu0 %1812
      %v1814 = vsel %vm675, %v1723, 0.0
      %1815 = vadd.xlane.f32.xlu0 %v1814
      %v1816 = vpop.xlane.xlu0 %1815
      %v1817 = vsel %vm675, %v1725, 0.0
      %1818 = vadd.xlane.f32.xlu0 %v1817
      %v1819 = vpop.xlane.xlu0 %1818
      %v1820 = vsel %vm675, %v1727, 0.0
      %1821 = vadd.xlane.f32.xlu0 %v1820
      %v1822 = vpop.xlane.xlu0 %1821
      %v1823 = vsel %vm675, %v1729, 0.0
      %1824 = vadd.xlane.f32.xlu0 %v1823
      %v1825 = vpop.xlane.xlu0 %1824
      %v1826 = vrcp.pop %v1732
      %v1827 = vrcp.pop %v1735
      %v1828 = vrcp.pop %v1738
      %v1829 = vrcp.pop %v1741
      %v1830 = vrcp.pop %v1744
      %v1831 = vrcp.pop %v1747
      %v1832 = vrcp.pop %v1750
      %v1833 = vrcp.pop %v1753
      %v1834 = vrcp.pop %v1756
      %v1835 = vrcp.pop %v1759
      %v1836 = vrcp.pop %v1762
      %v1837 = vrcp.pop %v1765
      %v1838 = vrcp.pop %v1768
      %v1839 = vrcp.pop %v1771
      %v1840 = vrcp.pop %v1774
      %v1841 = vrcp.pop %v1777
      %v1842 = vrcp.pop %v1780
      %v1843 = vrcp.pop %v1783
      %v1844 = vrcp.pop %v1786
      %v1845 = vrcp.pop %v1789
      %v1846 = vrcp.pop %v1792
      %v1847 = vrcp.pop %v1795
      %v1848 = vrcp.pop %v1798
      %v1849 = vrcp.pop %v1801
      %v1850 = vrcp.pop %v1804
      %v1851 = vrcp.pop %v1807
      %v1852 = vrcp.pop %v1810
      %v1853 = vrcp.pop %v1813
      %v1854 = vrcp.pop %v1816
      %v1855 = vrcp.pop %v1819
      %v1856 = vrcp.pop %v1822
      %v1857 = vrcp.pop %v1825
      %v1858 = vmul.f32 %v1667, %v1826
      %v1859 = vmul.f32 %v1669, %v1827
      %v1860 = vmul.f32 %v1671, %v1828
      %v1861 = vmul.f32 %v1673, %v1829
      %v1862 = vmul.f32 %v1675, %v1830
      %v1863 = vmul.f32 %v1677, %v1831
      %v1864 = vmul.f32 %v1679, %v1832
      %v1865 = vmul.f32 %v1681, %v1833
      %v1866 = vmul.f32 %v1683, %v1834
      %v1867 = vmul.f32 %v1685, %v1835
      %v1868 = vmul.f32 %v1687, %v1836
      %v1869 = vmul.f32 %v1689, %v1837
      %v1870 = vmul.f32 %v1691, %v1838
      %v1871 = vmul.f32 %v1693, %v1839
      %v1872 = vmul.f32 %v1695, %v1840
      %v1873 = vmul.f32 %v1697, %v1841
      %v1874 = vmul.f32 %v1699, %v1842
      %v1875 = vmul.f32 %v1701, %v1843
      %v1876 = vmul.f32 %v1703, %v1844
      %v1877 = vmul.f32 %v1705, %v1845
      %v1878 = vmul.f32 %v1707, %v1846
      %v1879 = vmul.f32 %v1709, %v1847
      %v1880 = vmul.f32 %v1711, %v1848
      %v1881 = vmul.f32 %v1713, %v1849
      %v1882 = vmul.f32 %v1715, %v1850
      %v1883 = vmul.f32 %v1717, %v1851
      %v1884 = vmul.f32 %v1719, %v1852
      %v1885 = vmul.f32 %v1721, %v1853
      %v1886 = vmul.f32 %v1723, %v1854
      %v1887 = vmul.f32 %v1725, %v1855
      %v1888 = vmul.f32 %v1727, %v1856
      %v1889 = vmul.f32 %v1729, %v1857
      %v1890 = vpack.c.bf16 %v1859, %v1858
      %v1891 = vpack.c.bf16 %v1861, %v1860
      %v1892 = vpack.c.bf16 %v1863, %v1862
      %v1893 = vpack.c.bf16 %v1865, %v1864
      %v1894 = vpack.c.bf16 %v1867, %v1866
      %v1895 = vpack.c.bf16 %v1869, %v1868
      %v1896 = vpack.c.bf16 %v1871, %v1870
      %v1897 = vpack.c.bf16 %v1873, %v1872
      %v1898 = vpack.c.bf16 %v1875, %v1874
      %v1899 = vpack.c.bf16 %v1877, %v1876
      %v1900 = vpack.c.bf16 %v1879, %v1878
      %v1901 = vpack.c.bf16 %v1881, %v1880
      %v1902 = vpack.c.bf16 %v1883, %v1882
      %v1903 = vpack.c.bf16 %v1885, %v1884
      %v1904 = vpack.c.bf16 %v1887, %v1886
      %v1905 = vpack.c.bf16 %v1889, %v1888
      %1906 = vrot.lane.b32.xlu0 %v1060, 120
      %v1907 = vpop.permute.xlu0 %1906
      %1908 = vrot.lane.b32.xlu0 %v1061, 120
      %v1909 = vpop.permute.xlu0 %1908
      %1910 = vrot.lane.b32.xlu0 %v1062, 120
      %v1911 = vpop.permute.xlu0 %1910
      %1912 = vrot.lane.b32.xlu0 %v1063, 120
      %v1913 = vpop.permute.xlu0 %1912
      %v1919 = vsel %vm675, %v1890, 0
      %v1922 = vsel %vm675, %v1891, 0
      %v1925 = vsel %vm675, %v1892, 0
      %v1928 = vsel %vm675, %v1893, 0
      %v1931 = vsel %vm675, %v1894, 0
      %v1934 = vsel %vm675, %v1895, 0
      %v1937 = vsel %vm675, %v1896, 0
      %v1940 = vsel %vm675, %v1897, 0
      %v1943 = vsel %vm675, %v1898, 0
      %v1946 = vsel %vm675, %v1899, 0
      %v1949 = vsel %vm675, %v1900, 0
      %v1952 = vsel %vm675, %v1901, 0
      %v1955 = vsel %vm675, %v1902, 0
      %v1958 = vsel %vm675, %v1903, 0
      %v1961 = vsel %vm675, %v1904, 0
      %v1964 = vsel %vm675, %v1905, 0
      %1966 = vmatprep.subr.bf16.mxu0 0
      %1967 = vmatpush1.bf16.msra.mxu0 %v1907
      %1968 = vmatprep.subr.bf16.mxu0 0
      %1969 = vmatpush1.bf16.msra.mxu0 %v1909
      %1970 = vmatprep.subr.bf16.mxu0 0
      %1971 = vmatpush1.bf16.msra.mxu0 %v1911
      %1972 = vmatprep.subr.bf16.mxu0 0
      %1973 = vmatpush1.bf16.msra.mxu0 %v1913
      %1974 = vmatprep.subr.bf16.mxu0 0
      %1975 = vmatpush1.bf16.msra.mxu0 0
      %1976 = vmatprep.subr.bf16.mxu0 0
      %1977 = vmatpush1.bf16.msra.mxu0 0
      %1978 = vmatprep.subr.bf16.mxu0 0
      %1979 = vmatpush1.bf16.msra.mxu0 0
      %1980 = vmatprep.subr.bf16.mxu0 0
      %1981 = vmatpush1.bf16.msra.mxu0 0
      %1982 = vmatprep.subr.bf16.mxu0 0
      %1983 = vmatpush1.bf16.msra.mxu0 0
      %1984 = vmatprep.subr.bf16.mxu0 0
      %1985 = vmatpush1.bf16.msra.mxu0 0
      %1986 = vmatprep.subr.bf16.mxu0 0
      %1987 = vmatpush1.bf16.msra.mxu0 0
      %1988 = vmatprep.subr.bf16.mxu0 0
      %1989 = vmatpush1.bf16.msra.mxu0 0
      %1990 = vmatprep.subr.bf16.mxu0 0
      %1991 = vmatpush1.bf16.msra.mxu0 0
      %1992 = vmatprep.subr.bf16.mxu0 0
      %1993 = vmatpush1.bf16.msra.mxu0 0
      %1994 = vmatprep.subr.bf16.mxu0 0
      %1995 = vmatpush1.bf16.msra.mxu0 0
      %1996 = vmatprep.subr.bf16.mxu0 0
      %1997 = vmatpush1.bf16.msra.mxu0 0
      %1998 = vmatprep.mubr.bf16.mxu0 0
      %1999 = vmatmul.mubr.bf16.gmra.mrb[0].mxu0 %v1919
      %v2000 = vpop.f32.mrb[0].mxu0
      %v2001 = vadd.f32 0.0, %v2000
      %v2002 = vpop.f32.mrb[0].mxu0
      %v2003 = vpop.f32.mrb[0].mxu0
      %v2004 = vadd.f32 0.0, %v2003
      %v2005 = vpop.f32.mrb[0].mxu0
      %2006 = vmatprep.mubr.bf16.mxu0 0
      %2007 = vmatmul.mubr.bf16.gmra.mrb[0].mxu0 %v1922
      %v2008 = vpop.f32.mrb[0].mxu0
      %v2009 = vadd.f32 0.0, %v2008
      %v2010 = vpop.f32.mrb[0].mxu0
      %v2011 = vpop.f32.mrb[0].mxu0
      %v2012 = vadd.f32 0.0, %v2011
      %v2013 = vpop.f32.mrb[0].mxu0
      %2014 = vmatprep.mubr.bf16.mxu0 0
      %2015 = vmatmul.mubr.bf16.gmra.mrb[0].mxu0 %v1925
      %v2016 = vpop.f32.mrb[0].mxu0
      %v2017 = vadd.f32 0.0, %v2016
      %v2018 = vpop.f32.mrb[0].mxu0
      %v2019 = vpop.f32.mrb[0].mxu0
      %v2020 = vadd.f32 0.0, %v2019
      %v2021 = vpop.f32.mrb[0].mxu0
      %2022 = vmatprep.mubr.bf16.mxu0 0
      %2023 = vmatmul.mubr.bf16.gmra.mrb[0].mxu0 %v1928
      %v2024 = vpop.f32.mrb[0].mxu0
      %v2025 = vadd.f32 0.0, %v2024
      %v2026 = vpop.f32.mrb[0].mxu0
      %v2027 = vpop.f32.mrb[0].mxu0
      %v2028 = vadd.f32 0.0, %v2027
      %v2029 = vpop.f32.mrb[0].mxu0
      %2030 = vmatprep.mubr.bf16.mxu0 0
      %2031 = vmatmul.mubr.bf16.gmra.mrb[0].mxu0 %v1931
      %v2032 = vpop.f32.mrb[0].mxu0
      %v2033 = vadd.f32 0.0, %v2032
      %v2034 = vpop.f32.mrb[0].mxu0
      %v2035 = vpop.f32.mrb[0].mxu0
      %v2036 = vadd.f32 0.0, %v2035
      %v2037 = vpop.f32.mrb[0].mxu0
      %2038 = vmatprep.mubr.bf16.mxu0 0
      %2039 = vmatmul.mubr.bf16.gmra.mrb[0].mxu0 %v1934
      %v2040 = vpop.f32.mrb[0].mxu0
      %v2041 = vadd.f32 0.0, %v2040
      %v2042 = vpop.f32.mrb[0].mxu0
      %v2043 = vpop.f32.mrb[0].mxu0
      %v2044 = vadd.f32 0.0, %v2043
      %v2045 = vpop.f32.mrb[0].mxu0
      %2046 = vmatprep.mubr.bf16.mxu0 0
      %2047 = vmatmul.mubr.bf16.gmra.mrb[0].mxu0 %v1937
      %v2048 = vpop.f32.mrb[0].mxu0
      %v2049 = vadd.f32 0.0, %v2048
      %v2050 = vpop.f32.mrb[0].mxu0
      %v2051 = vpop.f32.mrb[0].mxu0
      %v2052 = vadd.f32 0.0, %v2051
      %v2053 = vpop.f32.mrb[0].mxu0
      %2054 = vmatprep.mubr.bf16.mxu0 0
      %2055 = vmatmul.mubr.bf16.gmra.mrb[0].mxu0 %v1940
      %v2056 = vpop.f32.mrb[0].mxu0
      %v2057 = vadd.f32 0.0, %v2056
      %v2058 = vpop.f32.mrb[0].mxu0
      %v2059 = vpop.f32.mrb[0].mxu0
      %v2060 = vadd.f32 0.0, %v2059
      %v2061 = vpop.f32.mrb[0].mxu0
      %2062 = vmatprep.mubr.bf16.mxu0 0
      %2063 = vmatmul.mubr.bf16.gmra.mrb[0].mxu0 %v1943
      %v2064 = vpop.f32.mrb[0].mxu0
      %v2065 = vadd.f32 0.0, %v2064
      %v2066 = vpop.f32.mrb[0].mxu0
      %v2067 = vpop.f32.mrb[0].mxu0
      %v2068 = vadd.f32 0.0, %v2067
      %v2069 = vpop.f32.mrb[0].mxu0
      %2070 = vmatprep.mubr.bf16.mxu0 0
      %2071 = vmatmul.mubr.bf16.gmra.mrb[0].mxu0 %v1946
      %v2072 = vpop.f32.mrb[0].mxu0
      %v2073 = vadd.f32 0.0, %v2072
      %v2074 = vpop.f32.mrb[0].mxu0
      %v2075 = vpop.f32.mrb[0].mxu0
      %v2076 = vadd.f32 0.0, %v2075
      %v2077 = vpop.f32.mrb[0].mxu0
      %2078 = vmatprep.mubr.bf16.mxu0 0
      %2079 = vmatmul.mubr.bf16.gmra.mrb[0].mxu0 %v1949
      %v2080 = vpop.f32.mrb[0].mxu0
      %v2081 = vadd.f32 0.0, %v2080
      %v2082 = vpop.f32.mrb[0].mxu0
      %v2083 = vpop.f32.mrb[0].mxu0
      %v2084 = vadd.f32 0.0, %v2083
      %v2085 = vpop.f32.mrb[0].mxu0
      %2086 = vmatprep.mubr.bf16.mxu0 0
      %2087 = vmatmul.mubr.bf16.gmra.mrb[0].mxu0 %v1952
      %v2088 = vpop.f32.mrb[0].mxu0
      %v2089 = vadd.f32 0.0, %v2088
      %v2090 = vpop.f32.mrb[0].mxu0
      %v2091 = vpop.f32.mrb[0].mxu0
      %v2092 = vadd.f32 0.0, %v2091
      %v2093 = vpop.f32.mrb[0].mxu0
      %2094 = vmatprep.mubr.bf16.mxu0 0
      %2095 = vmatmul.mubr.bf16.gmra.mrb[0].mxu0 %v1955
      %v2096 = vpop.f32.mrb[0].mxu0
      %v2097 = vadd.f32 0.0, %v2096
      %v2098 = vpop.f32.mrb[0].mxu0
      %v2099 = vpop.f32.mrb[0].mxu0
      %v2100 = vadd.f32 0.0, %v2099
      %v2101 = vpop.f32.mrb[0].mxu0
      %2102 = vmatprep.mubr.bf16.mxu0 0
      %2103 = vmatmul.mubr.bf16.gmra.mrb[0].mxu0 %v1958
      %v2104 = vpop.f32.mrb[0].mxu0
      %v2105 = vadd.f32 0.0, %v2104
      %v2106 = vpop.f32.mrb[0].mxu0
      %v2107 = vpop.f32.mrb[0].mxu0
      %v2108 = vadd.f32 0.0, %v2107
      %v2109 = vpop.f32.mrb[0].mxu0
      %2110 = vmatprep.mubr.bf16.mxu0 0
      %2111 = vmatmul.mubr.bf16.gmra.mrb[0].mxu0 %v1961
      %v2112 = vpop.f32.mrb[0].mxu0
      %v2113 = vadd.f32 0.0, %v2112
      %v2114 = vpop.f32.mrb[0].mxu0
      %v2115 = vpop.f32.mrb[0].mxu0
      %v2116 = vadd.f32 0.0, %v2115
      %v2117 = vpop.f32.mrb[0].mxu0
      %2118 = vmatprep.mubr.bf16.mxu0 0
      %2119 = vmatmul.mubr.bf16.gmra.mrb[0].mxu0 %v1964
      %v2120 = vpop.f32.mrb[0].mxu0
      %v2121 = vadd.f32 0.0, %v2120
      %v2122 = vpop.f32.mrb[0].mxu0
      %v2123 = vpop.f32.mrb[0].mxu0
      %v2124 = vadd.f32 0.0, %v2123
      %v2125 = vpop.f32.mrb[0].mxu0
      %2126 = vdwg.mxu0
      %2127 = vrot.lane.b32.xlu0 %v417, 112
      %v2128 = vpop.permute.xlu0 %2127
      %2129 = vrot.lane.b32.xlu0 %v418, 112
      %v2130 = vpop.permute.xlu0 %2129
      %2131 = vrot.lane.b32.xlu0 %v419, 112
      %v2132 = vpop.permute.xlu0 %2131
      %2133 = vrot.lane.b32.xlu0 %v420, 112
      %v2134 = vpop.permute.xlu0 %2133
      %2135 = vrot.lane.b32.xlu0 %v421, 112
      %v2136 = vpop.permute.xlu0 %2135
      %2137 = vrot.lane.b32.xlu0 %v422, 112
      %v2138 = vpop.permute.xlu0 %2137
      %2139 = vrot.lane.b32.xlu0 %v423, 112
      %v2140 = vpop.permute.xlu0 %2139
      %2141 = vrot.lane.b32.xlu0 %v424, 112
      %v2142 = vpop.permute.xlu0 %2141
      %2143 = vrot.lane.b32.xlu0 %v425, 112
      %v2144 = vpop.permute.xlu0 %2143
      %2145 = vrot.lane.b32.xlu0 %v426, 112
      %v2146 = vpop.permute.xlu0 %2145
      %2147 = vrot.lane.b32.xlu0 %v427, 112
      %v2148 = vpop.permute.xlu0 %2147
      %2149 = vrot.lane.b32.xlu0 %v428, 112
      %v2150 = vpop.permute.xlu0 %2149
      %2151 = vrot.lane.b32.xlu0 %v429, 112
      %v2152 = vpop.permute.xlu0 %2151
      %2153 = vrot.lane.b32.xlu0 %v430, 112
      %v2154 = vpop.permute.xlu0 %2153
      %2155 = vrot.lane.b32.xlu0 %v431, 112
      %v2156 = vpop.permute.xlu0 %2155
      %2157 = vrot.lane.b32.xlu0 %v432, 112
      %v2158 = vpop.permute.xlu0 %2157
      %2159 = vrot.lane.b32.xlu0 %v449, 112
      %v2160 = vpop.permute.xlu0 %2159
      %2161 = vrot.lane.b32.xlu0 %v450, 112
      %v2162 = vpop.permute.xlu0 %2161
      %2163 = vrot.lane.b32.xlu0 %v451, 112
      %v2164 = vpop.permute.xlu0 %2163
      %2165 = vrot.lane.b32.xlu0 %v452, 112
      %v2166 = vpop.permute.xlu0 %2165
      %v2168 = vsel %vm453, %v2128, 0
      %v2171 = vsel %vm453, %v2130, 0
      %v2174 = vsel %vm453, %v2132, 0
      %v2177 = vsel %vm453, %v2134, 0
      %v2180 = vsel %vm453, %v2136, 0
      %v2183 = vsel %vm453, %v2138, 0
      %v2186 = vsel %vm453, %v2140, 0
      %v2189 = vsel %vm453, %v2142, 0
      %v2192 = vsel %vm453, %v2144, 0
      %v2195 = vsel %vm453, %v2146, 0
      %v2198 = vsel %vm453, %v2148, 0
      %v2201 = vsel %vm453, %v2150, 0
      %v2204 = vsel %vm453, %v2152, 0
      %v2207 = vsel %vm453, %v2154, 0
      %v2210 = vsel %vm453, %v2156, 0
      %v2213 = vsel %vm453, %v2158, 0
      %v2216 = vsel %vm453, %v2160, 0
      %v2219 = vsel %vm453, %v2162, 0
      %v2222 = vsel %vm453, %v2164, 0
      %v2225 = vsel %vm453, %v2166, 0
      %2227 = vmatprep.subr.bf16.mxu0 0
      %2228 = vmatpush1.bf16.xpose.msra.mxu0 %v2216
      %2229 = vmatprep.subr.bf16.mxu0 0
      %2230 = vmatpush1.bf16.xpose.msra.mxu0 %v2219
      %2231 = vmatprep.subr.bf16.mxu0 0
      %2232 = vmatpush1.bf16.xpose.msra.mxu0 %v2222
      %2233 = vmatprep.subr.bf16.mxu0 0
      %2234 = vmatpush1.bf16.xpose.msra.mxu0 %v2225
      %2235 = vmatprep.subr.bf16.mxu0 0
      %2236 = vmatpush1.bf16.xpose.msra.mxu0 0
      %2237 = vmatprep.subr.bf16.mxu0 0
      %2238 = vmatpush1.bf16.xpose.msra.mxu0 0
      %2239 = vmatprep.subr.bf16.mxu0 0
      %2240 = vmatpush1.bf16.xpose.msra.mxu0 0
      %2241 = vmatprep.subr.bf16.mxu0 0
      %2242 = vmatpush1.bf16.xpose.msra.mxu0 0
      %2243 = vmatprep.subr.bf16.mxu0 0
      %2244 = vmatpush1.bf16.xpose.msra.mxu0 0
      %2245 = vmatprep.subr.bf16.mxu0 0
      %2246 = vmatpush1.bf16.xpose.msra.mxu0 0
      %2247 = vmatprep.subr.bf16.mxu0 0
      %2248 = vmatpush1.bf16.xpose.msra.mxu0 0
      %2249 = vmatprep.subr.bf16.mxu0 0
      %2250 = vmatpush1.bf16.xpose.msra.mxu0 0
      %2251 = vmatprep.subr.bf16.mxu0 0
      %2252 = vmatpush1.bf16.xpose.msra.mxu0 0
      %2253 = vmatprep.subr.bf16.mxu0 0
      %2254 = vmatpush1.bf16.xpose.msra.mxu0 0
      %2255 = vmatprep.subr.bf16.mxu0 0
      %2256 = vmatpush1.bf16.xpose.msra.mxu0 0
      %2257 = vmatprep.subr.bf16.mxu0 0
      %2258 = vmatpush1.bf16.xpose.msra.mxu0 0
      %2259 = vmatprep.mubr.bf16.mxu0 0
      %2260 = vmatmul.mubr.bf16.gmra.mrb[0].mxu0 %v2168
      %v2261 = vpop.f32.mrb[0].mxu0
      %v2262 = vadd.f32 0.0, %v2261
      %v2263 = vpop.f32.mrb[0].mxu0
      %v2264 = vpop.f32.mrb[0].mxu0
      %v2265 = vadd.f32 0.0, %v2264
      %v2266 = vpop.f32.mrb[0].mxu0
      %2267 = vmatprep.mubr.bf16.mxu0 0
      %2268 = vmatmul.mubr.bf16.gmra.mrb[0].mxu0 %v2171
      %v2269 = vpop.f32.mrb[0].mxu0
      %v2270 = vadd.f32 0.0, %v2269
      %v2271 = vpop.f32.mrb[0].mxu0
      %v2272 = vpop.f32.mrb[0].mxu0
      %v2273 = vadd.f32 0.0, %v2272
      %v2274 = vpop.f32.mrb[0].mxu0
      %2275 = vmatprep.mubr.bf16.mxu0 0
      %2276 = vmatmul.mubr.bf16.gmra.mrb[0].mxu0 %v2174
      %v2277 = vpop.f32.mrb[0].mxu0
      %v2278 = vadd.f32 0.0, %v2277
      %v2279 = vpop.f32.mrb[0].mxu0
      %v2280 = vpop.f32.mrb[0].mxu0
      %v2281 = vadd.f32 0.0, %v2280
      %v2282 = vpop.f32.mrb[0].mxu0
      %2283 = vmatprep.mubr.bf16.mxu0 0
      %2284 = vmatmul.mubr.bf16.gmra.mrb[0].mxu0 %v2177
      %v2285 = vpop.f32.mrb[0].mxu0
      %v2286 = vadd.f32 0.0, %v2285
      %v2287 = vpop.f32.mrb[0].mxu0
      %v2288 = vpop.f32.mrb[0].mxu0
      %v2289 = vadd.f32 0.0, %v2288
      %v2290 = vpop.f32.mrb[0].mxu0
      %2291 = vmatprep.mubr.bf16.mxu0 0
      %2292 = vmatmul.mubr.bf16.gmra.mrb[0].mxu0 %v2180
      %v2293 = vpop.f32.mrb[0].mxu0
      %v2294 = vadd.f32 0.0, %v2293
      %v2295 = vpop.f32.mrb[0].mxu0
      %v2296 = vpop.f32.mrb[0].mxu0
      %v2297 = vadd.f32 0.0, %v2296
      %v2298 = vpop.f32.mrb[0].mxu0
      %2299 = vmatprep.mubr.bf16.mxu0 0
      %2300 = vmatmul.mubr.bf16.gmra.mrb[0].mxu0 %v2183
      %v2301 = vpop.f32.mrb[0].mxu0
      %v2302 = vadd.f32 0.0, %v2301
      %v2303 = vpop.f32.mrb[0].mxu0
      %v2304 = vpop.f32.mrb[0].mxu0
      %v2305 = vadd.f32 0.0, %v2304
      %v2306 = vpop.f32.mrb[0].mxu0
      %2307 = vmatprep.mubr.bf16.mxu0 0
      %2308 = vmatmul.mubr.bf16.gmra.mrb[0].mxu0 %v2186
      %v2309 = vpop.f32.mrb[0].mxu0
      %v2310 = vadd.f32 0.0, %v2309
      %v2311 = vpop.f32.mrb[0].mxu0
      %v2312 = vpop.f32.mrb[0].mxu0
      %v2313 = vadd.f32 0.0, %v2312
      %v2314 = vpop.f32.mrb[0].mxu0
      %2315 = vmatprep.mubr.bf16.mxu0 0
      %2316 = vmatmul.mubr.bf16.gmra.mrb[0].mxu0 %v2189
      %v2317 = vpop.f32.mrb[0].mxu0
      %v2318 = vadd.f32 0.0, %v2317
      %v2319 = vpop.f32.mrb[0].mxu0
      %v2320 = vpop.f32.mrb[0].mxu0
      %v2321 = vadd.f32 0.0, %v2320
      %v2322 = vpop.f32.mrb[0].mxu0
      %2323 = vmatprep.mubr.bf16.mxu0 0
      %2324 = vmatmul.mubr.bf16.gmra.mrb[0].mxu0 %v2192
      %v2325 = vpop.f32.mrb[0].mxu0
      %v2326 = vadd.f32 0.0, %v2325
      %v2327 = vpop.f32.mrb[0].mxu0
      %v2328 = vpop.f32.mrb[0].mxu0
      %v2329 = vadd.f32 0.0, %v2328
      %v2330 = vpop.f32.mrb[0].mxu0
      %2331 = vmatprep.mubr.bf16.mxu0 0
      %2332 = vmatmul.mubr.bf16.gmra.mrb[0].mxu0 %v2195
      %v2333 = vpop.f32.mrb[0].mxu0
      %v2334 = vadd.f32 0.0, %v2333
      %v2335 = vpop.f32.mrb[0].mxu0
      %v2336 = vpop.f32.mrb[0].mxu0
      %v2337 = vadd.f32 0.0, %v2336
      %v2338 = vpop.f32.mrb[0].mxu0
      %2339 = vmatprep.mubr.bf16.mxu0 0
      %2340 = vmatmul.mubr.bf16.gmra.mrb[0].mxu0 %v2198
      %v2341 = vpop.f32.mrb[0].mxu0
      %v2342 = vadd.f32 0.0, %v2341
      %v2343 = vpop.f32.mrb[0].mxu0
      %v2344 = vpop.f32.mrb[0].mxu0
      %v2345 = vadd.f32 0.0, %v2344
      %v2346 = vpop.f32.mrb[0].mxu0
      %2347 = vmatprep.mubr.bf16.mxu0 0
      %2348 = vmatmul.mubr.bf16.gmra.mrb[0].mxu0 %v2201
      %v2349 = vpop.f32.mrb[0].mxu0
      %v2350 = vadd.f32 0.0, %v2349
      %v2351 = vpop.f32.mrb[0].mxu0
      %v2352 = vpop.f32.mrb[0].mxu0
      %v2353 = vadd.f32 0.0, %v2352
      %v2354 = vpop.f32.mrb[0].mxu0
      %2355 = vmatprep.mubr.bf16.mxu0 0
      %2356 = vmatmul.mubr.bf16.gmra.mrb[0].mxu0 %v2204
      %v2357 = vpop.f32.mrb[0].mxu0
      %v2358 = vadd.f32 0.0, %v2357
      %v2359 = vpop.f32.mrb[0].mxu0
      %v2360 = vpop.f32.mrb[0].mxu0
      %v2361 = vadd.f32 0.0, %v2360
      %v2362 = vpop.f32.mrb[0].mxu0
      %2363 = vmatprep.mubr.bf16.mxu0 0
      %2364 = vmatmul.mubr.bf16.gmra.mrb[0].mxu0 %v2207
      %v2365 = vpop.f32.mrb[0].mxu0
      %v2366 = vadd.f32 0.0, %v2365
      %v2367 = vpop.f32.mrb[0].mxu0
      %v2368 = vpop.f32.mrb[0].mxu0
      %v2369 = vadd.f32 0.0, %v2368
      %v2370 = vpop.f32.mrb[0].mxu0
      %2371 = vmatprep.mubr.bf16.mxu0 0
      %2372 = vmatmul.mubr.bf16.gmra.mrb[0].mxu0 %v2210
      %v2373 = vpop.f32.mrb[0].mxu0
      %v2374 = vadd.f32 0.0, %v2373
      %v2375 = vpop.f32.mrb[0].mxu0
      %v2376 = vpop.f32.mrb[0].mxu0
      %v2377 = vadd.f32 0.0, %v2376
      %v2378 = vpop.f32.mrb[0].mxu0
      %2379 = vmatprep.mubr.bf16.mxu0 0
      %2380 = vmatmul.mubr.bf16.gmra.mrb[0].mxu0 %v2213
      %v2381 = vpop.f32.mrb[0].mxu0
      %v2382 = vadd.f32 0.0, %v2381
      %v2383 = vpop.f32.mrb[0].mxu0
      %v2384 = vpop.f32.mrb[0].mxu0
      %v2385 = vadd.f32 0.0, %v2384
      %v2386 = vpop.f32.mrb[0].mxu0
      %2387 = vdwg.mxu0
      %v2388 = vsel %vm675, %v2262, -inf
      %2389 = vmax.xlane.f32.xlu0 %v2388
      %v2390 = vpop.xlane.xlu0 %2389
      %v2391 = vsel %vm675, %v2265, -inf
      %2392 = vmax.xlane.f32.xlu0 %v2391
      %v2393 = vpop.xlane.xlu0 %2392
      %v2394 = vsel %vm675, %v2270, -inf
      %2395 = vmax.xlane.f32.xlu0 %v2394
      %v2396 = vpop.xlane.xlu0 %2395
      %v2397 = vsel %vm675, %v2273, -inf
      %2398 = vmax.xlane.f32.xlu0 %v2397
      %v2399 = vpop.xlane.xlu0 %2398
      %v2400 = vsel %vm675, %v2278, -inf
      %2401 = vmax.xlane.f32.xlu0 %v2400
      %v2402 = vpop.xlane.xlu0 %2401
      %v2403 = vsel %vm675, %v2281, -inf
      %2404 = vmax.xlane.f32.xlu0 %v2403
      %v2405 = vpop.xlane.xlu0 %2404
      %v2406 = vsel %vm675, %v2286, -inf
      %2407 = vmax.xlane.f32.xlu0 %v2406
      %v2408 = vpop.xlane.xlu0 %2407
      %v2409 = vsel %vm675, %v2289, -inf
      %2410 = vmax.xlane.f32.xlu0 %v2409
      %v2411 = vpop.xlane.xlu0 %2410
      %v2412 = vsel %vm675, %v2294, -inf
      %2413 = vmax.xlane.f32.xlu0 %v2412
      %v2414 = vpop.xlane.xlu0 %2413
      %v2415 = vsel %vm675, %v2297, -inf
      %2416 = vmax.xlane.f32.xlu0 %v2415
      %v2417 = vpop.xlane.xlu0 %2416
      %v2418 = vsel %vm675, %v2302, -inf
      %2419 = vmax.xlane.f32.xlu0 %v2418
      %v2420 = vpop.xlane.xlu0 %2419
      %v2421 = vsel %vm675, %v2305, -inf
      %2422 = vmax.xlane.f32.xlu0 %v2421
      %v2423 = vpop.xlane.xlu0 %2422
      %v2424 = vsel %vm675, %v2310, -inf
      %2425 = vmax.xlane.f32.xlu0 %v2424
      %v2426 = vpop.xlane.xlu0 %2425
      %v2427 = vsel %vm675, %v2313, -inf
      %2428 = vmax.xlane.f32.xlu0 %v2427
      %v2429 = vpop.xlane.xlu0 %2428
      %v2430 = vsel %vm675, %v2318, -inf
      %2431 = vmax.xlane.f32.xlu0 %v2430
      %v2432 = vpop.xlane.xlu0 %2431
      %v2433 = vsel %vm675, %v2321, -inf
      %2434 = vmax.xlane.f32.xlu0 %v2433
      %v2435 = vpop.xlane.xlu0 %2434
      %v2436 = vsel %vm675, %v2326, -inf
      %2437 = vmax.xlane.f32.xlu0 %v2436
      %v2438 = vpop.xlane.xlu0 %2437
      %v2439 = vsel %vm675, %v2329, -inf
      %2440 = vmax.xlane.f32.xlu0 %v2439
      %v2441 = vpop.xlane.xlu0 %2440
      %v2442 = vsel %vm675, %v2334, -inf
      %2443 = vmax.xlane.f32.xlu0 %v2442
      %v2444 = vpop.xlane.xlu0 %2443
      %v2445 = vsel %vm675, %v2337, -inf
      %2446 = vmax.xlane.f32.xlu0 %v2445
      %v2447 = vpop.xlane.xlu0 %2446
      %v2448 = vsel %vm675, %v2342, -inf
      %2449 = vmax.xlane.f32.xlu0 %v2448
      %v2450 = vpop.xlane.xlu0 %2449
      %v2451 = vsel %vm675, %v2345, -inf
      %2452 = vmax.xlane.f32.xlu0 %v2451
      %v2453 = vpop.xlane.xlu0 %2452
      %v2454 = vsel %vm675, %v2350, -inf
      %2455 = vmax.xlane.f32.xlu0 %v2454
      %v2456 = vpop.xlane.xlu0 %2455
      %v2457 = vsel %vm675, %v2353, -inf
      %2458 = vmax.xlane.f32.xlu0 %v2457
      %v2459 = vpop.xlane.xlu0 %2458
      %v2460 = vsel %vm675, %v2358, -inf
      %2461 = vmax.xlane.f32.xlu0 %v2460
      %v2462 = vpop.xlane.xlu0 %2461
      %v2463 = vsel %vm675, %v2361, -inf
      %2464 = vmax.xlane.f32.xlu0 %v2463
      %v2465 = vpop.xlane.xlu0 %2464
      %v2466 = vsel %vm675, %v2366, -inf
      %2467 = vmax.xlane.f32.xlu0 %v2466
      %v2468 = vpop.xlane.xlu0 %2467
      %v2469 = vsel %vm675, %v2369, -inf
      %2470 = vmax.xlane.f32.xlu0 %v2469
      %v2471 = vpop.xlane.xlu0 %2470
      %v2472 = vsel %vm675, %v2374, -inf
      %2473 = vmax.xlane.f32.xlu0 %v2472
      %v2474 = vpop.xlane.xlu0 %2473
      %v2475 = vsel %vm675, %v2377, -inf
      %2476 = vmax.xlane.f32.xlu0 %v2475
      %v2477 = vpop.xlane.xlu0 %2476
      %v2478 = vsel %vm675, %v2382, -inf
      %2479 = vmax.xlane.f32.xlu0 %v2478
      %v2480 = vpop.xlane.xlu0 %2479
      %v2481 = vsel %vm675, %v2385, -inf
      %2482 = vmax.xlane.f32.xlu0 %v2481
      %v2483 = vpop.xlane.xlu0 %2482
      %v2484 = vsub.f32 %v2262, %v2390
      %v2485 = vsub.f32 %v2265, %v2393
      %v2486 = vsub.f32 %v2270, %v2396
      %v2487 = vsub.f32 %v2273, %v2399
      %v2488 = vsub.f32 %v2278, %v2402
      %v2489 = vsub.f32 %v2281, %v2405
      %v2490 = vsub.f32 %v2286, %v2408
      %v2491 = vsub.f32 %v2289, %v2411
      %v2492 = vsub.f32 %v2294, %v2414
      %v2493 = vsub.f32 %v2297, %v2417
      %v2494 = vsub.f32 %v2302, %v2420
      %v2495 = vsub.f32 %v2305, %v2423
      %v2496 = vsub.f32 %v2310, %v2426
      %v2497 = vsub.f32 %v2313, %v2429
      %v2498 = vsub.f32 %v2318, %v2432
      %v2499 = vsub.f32 %v2321, %v2435
      %v2500 = vsub.f32 %v2326, %v2438
      %v2501 = vsub.f32 %v2329, %v2441
      %v2502 = vsub.f32 %v2334, %v2444
      %v2503 = vsub.f32 %v2337, %v2447
      %v2504 = vsub.f32 %v2342, %v2450
      %v2505 = vsub.f32 %v2345, %v2453
      %v2506 = vsub.f32 %v2350, %v2456
      %v2507 = vsub.f32 %v2353, %v2459
      %v2508 = vsub.f32 %v2358, %v2462
      %v2509 = vsub.f32 %v2361, %v2465
      %v2510 = vsub.f32 %v2366, %v2468
      %v2511 = vsub.f32 %v2369, %v2471
      %v2512 = vsub.f32 %v2374, %v2474
      %v2513 = vsub.f32 %v2377, %v2477
      %v2514 = vsub.f32 %v2382, %v2480
      %v2515 = vsub.f32 %v2385, %v2483
      %v2516 = vmul.f32 %v2484, 1.442695
      %v2517 = vpow.pop %v2516
      %v2518 = vmul.f32 %v2485, 1.442695
      %v2519 = vpow.pop %v2518
      %v2520 = vmul.f32 %v2486, 1.442695
      %v2521 = vpow.pop %v2520
      %v2522 = vmul.f32 %v2487, 1.442695
      %v2523 = vpow.pop %v2522
      %v2524 = vmul.f32 %v2488, 1.442695
      %v2525 = vpow.pop %v2524
      %v2526 = vmul.f32 %v2489, 1.442695
      %v2527 = vpow.pop %v2526
      %v2528 = vmul.f32 %v2490, 1.442695
      %v2529 = vpow.pop %v2528
      %v2530 = vmul.f32 %v2491, 1.442695
      %v2531 = vpow.pop %v2530
      %v2532 = vmul.f32 %v2492, 1.442695
      %v2533 = vpow.pop %v2532
      %v2534 = vmul.f32 %v2493, 1.442695
      %v2535 = vpow.pop %v2534
      %v2536 = vmul.f32 %v2494, 1.442695
      %v2537 = vpow.pop %v2536
      %v2538 = vmul.f32 %v2495, 1.442695
      %v2539 = vpow.pop %v2538
      %v2540 = vmul.f32 %v2496, 1.442695
      %v2541 = vpow.pop %v2540
      %v2542 = vmul.f32 %v2497, 1.442695
      %v2543 = vpow.pop %v2542
      %v2544 = vmul.f32 %v2498, 1.442695
      %v2545 = vpow.pop %v2544
      %v2546 = vmul.f32 %v2499, 1.442695
      %v2547 = vpow.pop %v2546
      %v2548 = vmul.f32 %v2500, 1.442695
      %v2549 = vpow.pop %v2548
      %v2550 = vmul.f32 %v2501, 1.442695
      %v2551 = vpow.pop %v2550
      %v2552 = vmul.f32 %v2502, 1.442695
      %v2553 = vpow.pop %v2552
      %v2554 = vmul.f32 %v2503, 1.442695
      %v2555 = vpow.pop %v2554
      %v2556 = vmul.f32 %v2504, 1.442695
      %v2557 = vpow.pop %v2556
      %v2558 = vmul.f32 %v2505, 1.442695
      %v2559 = vpow.pop %v2558
      %v2560 = vmul.f32 %v2506, 1.442695
      %v2561 = vpow.pop %v2560
      %v2562 = vmul.f32 %v2507, 1.442695
      %v2563 = vpow.pop %v2562
      %v2564 = vmul.f32 %v2508, 1.442695
      %v2565 = vpow.pop %v2564
      %v2566 = vmul.f32 %v2509, 1.442695
      %v2567 = vpow.pop %v2566
      %v2568 = vmul.f32 %v2510, 1.442695
      %v2569 = vpow.pop %v2568
      %v2570 = vmul.f32 %v2511, 1.442695
      %v2571 = vpow.pop %v2570
      %v2572 = vmul.f32 %v2512, 1.442695
      %v2573 = vpow.pop %v2572
      %v2574 = vmul.f32 %v2513, 1.442695
      %v2575 = vpow.pop %v2574
      %v2576 = vmul.f32 %v2514, 1.442695
      %v2577 = vpow.pop %v2576
      %v2578 = vmul.f32 %v2515, 1.442695
      %v2579 = vpow.pop %v2578
      %v2580 = vsel %vm675, %v2517, 0.0
      %2581 = vadd.xlane.f32.xlu0 %v2580
      %v2582 = vpop.xlane.xlu0 %2581
      %v2583 = vsel %vm675, %v2519, 0.0
      %2584 = vadd.xlane.f32.xlu0 %v2583
      %v2585 = vpop.xlane.xlu0 %2584
      %v2586 = vsel %vm675, %v2521, 0.0
      %2587 = vadd.xlane.f32.xlu0 %v2586
      %v2588 = vpop.xlane.xlu0 %2587
      %v2589 = vsel %vm675, %v2523, 0.0
      %2590 = vadd.xlane.f32.xlu0 %v2589
      %v2591 = vpop.xlane.xlu0 %2590
      %v2592 = vsel %vm675, %v2525, 0.0
      %2593 = vadd.xlane.f32.xlu0 %v2592
      %v2594 = vpop.xlane.xlu0 %2593
      %v2595 = vsel %vm675, %v2527, 0.0
      %2596 = vadd.xlane.f32.xlu0 %v2595
      %v2597 = vpop.xlane.xlu0 %2596
      %v2598 = vsel %vm675, %v2529, 0.0
      %2599 = vadd.xlane.f32.xlu0 %v2598
      %v2600 = vpop.xlane.xlu0 %2599
      %v2601 = vsel %vm675, %v2531, 0.0
      %2602 = vadd.xlane.f32.xlu0 %v2601
      %v2603 = vpop.xlane.xlu0 %2602
      %v2604 = vsel %vm675, %v2533, 0.0
      %2605 = vadd.xlane.f32.xlu0 %v2604
      %v2606 = vpop.xlane.xlu0 %2605
      %v2607 = vsel %vm675, %v2535, 0.0
      %2608 = vadd.xlane.f32.xlu0 %v2607
      %v2609 = vpop.xlane.xlu0 %2608
      %v2610 = vsel %vm675, %v2537, 0.0
      %2611 = vadd.xlane.f32.xlu0 %v2610
      %v2612 = vpop.xlane.xlu0 %2611
      %v2613 = vsel %vm675, %v2539, 0.0
      %2614 = vadd.xlane.f32.xlu0 %v2613
      %v2615 = vpop.xlane.xlu0 %2614
      %v2616 = vsel %vm675, %v2541, 0.0
      %2617 = vadd.xlane.f32.xlu0 %v2616
      %v2618 = vpop.xlane.xlu0 %2617
      %v2619 = vsel %vm675, %v2543, 0.0
      %2620 = vadd.xlane.f32.xlu0 %v2619
      %v2621 = vpop.xlane.xlu0 %2620
      %v2622 = vsel %vm675, %v2545, 0.0
      %2623 = vadd.xlane.f32.xlu0 %v2622
      %v2624 = vpop.xlane.xlu0 %2623
      %v2625 = vsel %vm675, %v2547, 0.0
      %2626 = vadd.xlane.f32.xlu0 %v2625
      %v2627 = vpop.xlane.xlu0 %2626
      %v2628 = vsel %vm675, %v2549, 0.0
      %2629 = vadd.xlane.f32.xlu0 %v2628
      %v2630 = vpop.xlane.xlu0 %2629
      %v2631 = vsel %vm675, %v2551, 0.0
      %2632 = vadd.xlane.f32.xlu0 %v2631
      %v2633 = vpop.xlane.xlu0 %2632
      %v2634 = vsel %vm675, %v2553, 0.0
      %2635 = vadd.xlane.f32.xlu0 %v2634
      %v2636 = vpop.xlane.xlu0 %2635
      %v2637 = vsel %vm675, %v2555, 0.0
      %2638 = vadd.xlane.f32.xlu0 %v2637
      %v2639 = vpop.xlane.xlu0 %2638
      %v2640 = vsel %vm675, %v2557, 0.0
      %2641 = vadd.xlane.f32.xlu0 %v2640
      %v2642 = vpop.xlane.xlu0 %2641
      %v2643 = vsel %vm675, %v2559, 0.0
      %2644 = vadd.xlane.f32.xlu0 %v2643
      %v2645 = vpop.xlane.xlu0 %2644
      %v2646 = vsel %vm675, %v2561, 0.0
      %2647 = vadd.xlane.f32.xlu0 %v2646
      %v2648 = vpop.xlane.xlu0 %2647
      %v2649 = vsel %vm675, %v2563, 0.0
      %2650 = vadd.xlane.f32.xlu0 %v2649
      %v2651 = vpop.xlane.xlu0 %2650
      %v2652 = vsel %vm675, %v2565, 0.0
      %2653 = vadd.xlane.f32.xlu0 %v2652
      %v2654 = vpop.xlane.xlu0 %2653
      %v2655 = vsel %vm675, %v2567, 0.0
      %2656 = vadd.xlane.f32.xlu0 %v2655
      %v2657 = vpop.xlane.xlu0 %2656
      %v2658 = vsel %vm675, %v2569, 0.0
      %2659 = vadd.xlane.f32.xlu0 %v2658
      %v2660 = vpop.xlane.xlu0 %2659
      %v2661 = vsel %vm675, %v2571, 0.0
      %2662 = vadd.xlane.f32.xlu0 %v2661
      %v2663 = vpop.xlane.xlu0 %2662
      %v2664 = vsel %vm675, %v2573, 0.0
      %2665 = vadd.xlane.f32.xlu0 %v2664
      %v2666 = vpop.xlane.xlu0 %2665
      %v2667 = vsel %vm675, %v2575, 0.0
      %2668 = vadd.xlane.f32.xlu0 %v2667
      %v2669 = vpop.xlane.xlu0 %2668
      %v2670 = vsel %vm675, %v2577, 0.0
      %2671 = vadd.xlane.f32.xlu0 %v2670
      %v2672 = vpop.xlane.xlu0 %2671
      %v2673 = vsel %vm675, %v2579, 0.0
      %2674 = vadd.xlane.f32.xlu0 %v2673
      %v2675 = vpop.xlane.xlu0 %2674
      %v2676 = vrcp.pop %v2582
      %v2677 = vrcp.pop %v2585
      %v2678 = vrcp.pop %v2588
      %v2679 = vrcp.pop %v2591
      %v2680 = vrcp.pop %v2594
      %v2681 = vrcp.pop %v2597
      %v2682 = vrcp.pop %v2600
      %v2683 = vrcp.pop %v2603
      %v2684 = vrcp.pop %v2606
      %v2685 = vrcp.pop %v2609
      %v2686 = vrcp.pop %v2612
      %v2687 = vrcp.pop %v2615
      %v2688 = vrcp.pop %v2618
      %v2689 = vrcp.pop %v2621
      %v2690 = vrcp.pop %v2624
      %v2691 = vrcp.pop %v2627
      %v2692 = vrcp.pop %v2630
      %v2693 = vrcp.pop %v2633
      %v2694 = vrcp.pop %v2636
      %v2695 = vrcp.pop %v2639
      %v2696 = vrcp.pop %v2642
      %v2697 = vrcp.pop %v2645
      %v2698 = vrcp.pop %v2648
      %v2699 = vrcp.pop %v2651
      %v2700 = vrcp.pop %v2654
      %v2701 = vrcp.pop %v2657
      %v2702 = vrcp.pop %v2660
      %v2703 = vrcp.pop %v2663
      %v2704 = vrcp.pop %v2666
      %v2705 = vrcp.pop %v2669
      %v2706 = vrcp.pop %v2672
      %v2707 = vrcp.pop %v2675
      %v2708 = vmul.f32 %v2517, %v2676
      %v2709 = vmul.f32 %v2519, %v2677
      %v2710 = vmul.f32 %v2521, %v2678
      %v2711 = vmul.f32 %v2523, %v2679
      %v2712 = vmul.f32 %v2525, %v2680
      %v2713 = vmul.f32 %v2527, %v2681
      %v2714 = vmul.f32 %v2529, %v2682
      %v2715 = vmul.f32 %v2531, %v2683
      %v2716 = vmul.f32 %v2533, %v2684
      %v2717 = vmul.f32 %v2535, %v2685
      %v2718 = vmul.f32 %v2537, %v2686
      %v2719 = vmul.f32 %v2539, %v2687
      %v2720 = vmul.f32 %v2541, %v2688
      %v2721 = vmul.f32 %v2543, %v2689
      %v2722 = vmul.f32 %v2545, %v2690
      %v2723 = vmul.f32 %v2547, %v2691
      %v2724 = vmul.f32 %v2549, %v2692
      %v2725 = vmul.f32 %v2551, %v2693
      %v2726 = vmul.f32 %v2553, %v2694
      %v2727 = vmul.f32 %v2555, %v2695
      %v2728 = vmul.f32 %v2557, %v2696
      %v2729 = vmul.f32 %v2559, %v2697
      %v2730 = vmul.f32 %v2561, %v2698
      %v2731 = vmul.f32 %v2563, %v2699
      %v2732 = vmul.f32 %v2565, %v2700
      %v2733 = vmul.f32 %v2567, %v2701
      %v2734 = vmul.f32 %v2569, %v2702
      %v2735 = vmul.f32 %v2571, %v2703
      %v2736 = vmul.f32 %v2573, %v2704
      %v2737 = vmul.f32 %v2575, %v2705
      %v2738 = vmul.f32 %v2577, %v2706
      %v2739 = vmul.f32 %v2579, %v2707
      %v2740 = vpack.c.bf16 %v2709, %v2708
      %v2741 = vpack.c.bf16 %v2711, %v2710
      %v2742 = vpack.c.bf16 %v2713, %v2712
      %v2743 = vpack.c.bf16 %v2715, %v2714
      %v2744 = vpack.c.bf16 %v2717, %v2716
      %v2745 = vpack.c.bf16 %v2719, %v2718
      %v2746 = vpack.c.bf16 %v2721, %v2720
      %v2747 = vpack.c.bf16 %v2723, %v2722
      %v2748 = vpack.c.bf16 %v2725, %v2724
      %v2749 = vpack.c.bf16 %v2727, %v2726
      %v2750 = vpack.c.bf16 %v2729, %v2728
      %v2751 = vpack.c.bf16 %v2731, %v2730
      %v2752 = vpack.c.bf16 %v2733, %v2732
      %v2753 = vpack.c.bf16 %v2735, %v2734
      %v2754 = vpack.c.bf16 %v2737, %v2736
      %v2755 = vpack.c.bf16 %v2739, %v2738
      %2756 = vrot.lane.b32.xlu0 %v1060, 112
      %v2757 = vpop.permute.xlu0 %2756
      %2758 = vrot.lane.b32.xlu0 %v1061, 112
      %v2759 = vpop.permute.xlu0 %2758
      %2760 = vrot.lane.b32.xlu0 %v1062, 112
      %v2761 = vpop.permute.xlu0 %2760
      %2762 = vrot.lane.b32.xlu0 %v1063, 112
      %v2763 = vpop.permute.xlu0 %2762
      %v2769 = vsel %vm675, %v2740, 0
      %v2772 = vsel %vm675, %v2741, 0
      %v2775 = vsel %vm675, %v2742, 0
      %v2778 = vsel %vm675, %v2743, 0
      %v2781 = vsel %vm675, %v2744, 0
      %v2784 = vsel %vm675, %v2745, 0
      %v2787 = vsel %vm675, %v2746, 0
      %v2790 = vsel %vm675, %v2747, 0
      %v2793 = vsel %vm675, %v2748, 0
      %v2796 = vsel %vm675, %v2749, 0
      %v2799 = vsel %vm675, %v2750, 0
      %v2802 = vsel %vm675, %v2751, 0
      %v2805 = vsel %vm675, %v2752, 0
      %v2808 = vsel %vm675, %v2753, 0
      %v2811 = vsel %vm675, %v2754, 0
      %v2814 = vsel %vm675, %v2755, 0
      %2816 = vmatprep.subr.bf16.mxu0 0
      %2817 = vmatpush1.bf16.msra.mxu0 %v2757
      %2818 = vmatprep.subr.bf16.mxu0 0
      %2819 = vmatpush1.bf16.msra.mxu0 %v2759
      %2820 = vmatprep.subr.bf16.mxu0 0
      %2821 = vmatpush1.bf16.msra.mxu0 %v2761
      %2822 = vmatprep.subr.bf16.mxu0 0
      %2823 = vmatpush1.bf16.msra.mxu0 %v2763
      %2824 = vmatprep.subr.bf16.mxu0 0
      %2825 = vmatpush1.bf16.msra.mxu0 0
      %2826 = vmatprep.subr.bf16.mxu0 0
      %2827 = vmatpush1.bf16.msra.mxu0 0
      %2828 = vmatprep.subr.bf16.mxu0 0
      %2829 = vmatpush1.bf16.msra.mxu0 0
      %2830 = vmatprep.subr.bf16.mxu0 0
      %2831 = vmatpush1.bf16.msra.mxu0 0
      %2832 = vmatprep.subr.bf16.mxu0 0
      %2833 = vmatpush1.bf16.msra.mxu0 0
      %2834 = vmatprep.subr.bf16.mxu0 0
      %2835 = vmatpush1.bf16.msra.mxu0 0
      %2836 = vmatprep.subr.bf16.mxu0 0
      %2837 = vmatpush1.bf16.msra.mxu0 0
      %2838 = vmatprep.subr.bf16.mxu0 0
      %2839 = vmatpush1.bf16.msra.mxu0 0
      %2840 = vmatprep.subr.bf16.mxu0 0
      %2841 = vmatpush1.bf16.msra.mxu0 0
      %2842 = vmatprep.subr.bf16.mxu0 0
      %2843 = vmatpush1.bf16.msra.mxu0 0
      %2844 = vmatprep.subr.bf16.mxu0 0
      %2845 = vmatpush1.bf16.msra.mxu0 0
      %2846 = vmatprep.subr.bf16.mxu0 0
      %2847 = vmatpush1.bf16.msra.mxu0 0
      %2848 = vmatprep.mubr.bf16.mxu0 0
      %2849 = vmatmul.mubr.bf16.gmra.mrb[0].mxu0 %v2769
      %v2850 = vpop.f32.mrb[0].mxu0
      %v2851 = vadd.f32 0.0, %v2850
      %v2852 = vpop.f32.mrb[0].mxu0
      %v2853 = vpop.f32.mrb[0].mxu0
      %v2854 = vadd.f32 0.0, %v2853
      %v2855 = vpop.f32.mrb[0].mxu0
      %2856 = vmatprep.mubr.bf16.mxu0 0
      %2857 = vmatmul.mubr.bf16.gmra.mrb[0].mxu0 %v2772
      %v2858 = vpop.f32.mrb[0].mxu0
      %v2859 = vadd.f32 0.0, %v2858
      %v2860 = vpop.f32.mrb[0].mxu0
      %v2861 = vpop.f32.mrb[0].mxu0
      %v2862 = vadd.f32 0.0, %v2861
      %v2863 = vpop.f32.mrb[0].mxu0
      %2864 = vmatprep.mubr.bf16.mxu0 0
      %2865 = vmatmul.mubr.bf16.gmra.mrb[0].mxu0 %v2775
      %v2866 = vpop.f32.mrb[0].mxu0
      %v2867 = vadd.f32 0.0, %v2866
      %v2868 = vpop.f32.mrb[0].mxu0
      %v2869 = vpop.f32.mrb[0].mxu0
      %v2870 = vadd.f32 0.0, %v2869
      %v2871 = vpop.f32.mrb[0].mxu0
      %2872 = vmatprep.mubr.bf16.mxu0 0
      %2873 = vmatmul.mubr.bf16.gmra.mrb[0].mxu0 %v2778
      %v2874 = vpop.f32.mrb[0].mxu0
      %v2875 = vadd.f32 0.0, %v2874
      %v2876 = vpop.f32.mrb[0].mxu0
      %v2877 = vpop.f32.mrb[0].mxu0
      %v2878 = vadd.f32 0.0, %v2877
      %v2879 = vpop.f32.mrb[0].mxu0
      %2880 = vmatprep.mubr.bf16.mxu0 0
      %2881 = vmatmul.mubr.bf16.gmra.mrb[0].mxu0 %v2781
      %v2882 = vpop.f32.mrb[0].mxu0
      %v2883 = vadd.f32 0.0, %v2882
      %v2884 = vpop.f32.mrb[0].mxu0
      %v2885 = vpop.f32.mrb[0].mxu0
      %v2886 = vadd.f32 0.0, %v2885
      %v2887 = vpop.f32.mrb[0].mxu0
      %2888 = vmatprep.mubr.bf16.mxu0 0
      %2889 = vmatmul.mubr.bf16.gmra.mrb[0].mxu0 %v2784
      %v2890 = vpop.f32.mrb[0].mxu0
      %v2891 = vadd.f32 0.0, %v2890
      %v2892 = vpop.f32.mrb[0].mxu0
      %v2893 = vpop.f32.mrb[0].mxu0
      %v2894 = vadd.f32 0.0, %v2893
      %v2895 = vpop.f32.mrb[0].mxu0
      %2896 = vmatprep.mubr.bf16.mxu0 0
      %2897 = vmatmul.mubr.bf16.gmra.mrb[0].mxu0 %v2787
      %v2898 = vpop.f32.mrb[0].mxu0
      %v2899 = vadd.f32 0.0, %v2898
      %v2900 = vpop.f32.mrb[0].mxu0
      %v2901 = vpop.f32.mrb[0].mxu0
      %v2902 = vadd.f32 0.0, %v2901
      %v2903 = vpop.f32.mrb[0].mxu0
      %2904 = vmatprep.mubr.bf16.mxu0 0
      %2905 = vmatmul.mubr.bf16.gmra.mrb[0].mxu0 %v2790
      %v2906 = vpop.f32.mrb[0].mxu0
      %v2907 = vadd.f32 0.0, %v2906
      %v2908 = vpop.f32.mrb[0].mxu0
      %v2909 = vpop.f32.mrb[0].mxu0
      %v2910 = vadd.f32 0.0, %v2909
      %v2911 = vpop.f32.mrb[0].mxu0
      %2912 = vmatprep.mubr.bf16.mxu0 0
      %2913 = vmatmul.mubr.bf16.gmra.mrb[0].mxu0 %v2793
      %v2914 = vpop.f32.mrb[0].mxu0
      %v2915 = vadd.f32 0.0, %v2914
      %v2916 = vpop.f32.mrb[0].mxu0
      %v2917 = vpop.f32.mrb[0].mxu0
      %v2918 = vadd.f32 0.0, %v2917
      %v2919 = vpop.f32.mrb[0].mxu0
      %2920 = vmatprep.mubr.bf16.mxu0 0
      %2921 = vmatmul.mubr.bf16.gmra.mrb[0].mxu0 %v2796
      %v2922 = vpop.f32.mrb[0].mxu0
      %v2923 = vadd.f32 0.0, %v2922
      %v2924 = vpop.f32.mrb[0].mxu0
      %v2925 = vpop.f32.mrb[0].mxu0
      %v2926 = vadd.f32 0.0, %v2925
      %v2927 = vpop.f32.mrb[0].mxu0
      %2928 = vmatprep.mubr.bf16.mxu0 0
      %2929 = vmatmul.mubr.bf16.gmra.mrb[0].mxu0 %v2799
      %v2930 = vpop.f32.mrb[0].mxu0
      %v2931 = vadd.f32 0.0, %v2930
      %v2932 = vpop.f32.mrb[0].mxu0
      %v2933 = vpop.f32.mrb[0].mxu0
      %v2934 = vadd.f32 0.0, %v2933
      %v2935 = vpop.f32.mrb[0].mxu0
      %2936 = vmatprep.mubr.bf16.mxu0 0
      %2937 = vmatmul.mubr.bf16.gmra.mrb[0].mxu0 %v2802
      %v2938 = vpop.f32.mrb[0].mxu0
      %v2939 = vadd.f32 0.0, %v2938
      %v2940 = vpop.f32.mrb[0].mxu0
      %v2941 = vpop.f32.mrb[0].mxu0
      %v2942 = vadd.f32 0.0, %v2941
      %v2943 = vpop.f32.mrb[0].mxu0
      %2944 = vmatprep.mubr.bf16.mxu0 0
      %2945 = vmatmul.mubr.bf16.gmra.mrb[0].mxu0 %v2805
      %v2946 = vpop.f32.mrb[0].mxu0
      %v2947 = vadd.f32 0.0, %v2946
      %v2948 = vpop.f32.mrb[0].mxu0
      %v2949 = vpop.f32.mrb[0].mxu0
      %v2950 = vadd.f32 0.0, %v2949
      %v2951 = vpop.f32.mrb[0].mxu0
      %2952 = vmatprep.mubr.bf16.mxu0 0
      %2953 = vmatmul.mubr.bf16.gmra.mrb[0].mxu0 %v2808
      %v2954 = vpop.f32.mrb[0].mxu0
      %v2955 = vadd.f32 0.0, %v2954
      %v2956 = vpop.f32.mrb[0].mxu0
      %v2957 = vpop.f32.mrb[0].mxu0
      %v2958 = vadd.f32 0.0, %v2957
      %v2959 = vpop.f32.mrb[0].mxu0
      %2960 = vmatprep.mubr.bf16.mxu0 0
      %2961 = vmatmul.mubr.bf16.gmra.mrb[0].mxu0 %v2811
      %v2962 = vpop.f32.mrb[0].mxu0
      %v2963 = vadd.f32 0.0, %v2962
      %v2964 = vpop.f32.mrb[0].mxu0
      %v2965 = vpop.f32.mrb[0].mxu0
      %v2966 = vadd.f32 0.0, %v2965
      %v2967 = vpop.f32.mrb[0].mxu0
      %2968 = vmatprep.mubr.bf16.mxu0 0
      %2969 = vmatmul.mubr.bf16.gmra.mrb[0].mxu0 %v2814
      %v2970 = vpop.f32.mrb[0].mxu0
      %v2971 = vadd.f32 0.0, %v2970
      %v2972 = vpop.f32.mrb[0].mxu0
      %v2973 = vpop.f32.mrb[0].mxu0
      %v2974 = vadd.f32 0.0, %v2973
      %v2975 = vpop.f32.mrb[0].mxu0
      %2976 = vdwg.mxu0
      %2977 = vrot.lane.b32.xlu0 %v417, 104
      %v2978 = vpop.permute.xlu0 %2977
      %2979 = vrot.lane.b32.xlu0 %v418, 104
      %v2980 = vpop.permute.xlu0 %2979
      %2981 = vrot.lane.b32.xlu0 %v419, 104
      %v2982 = vpop.permute.xlu0 %2981
      %2983 = vrot.lane.b32.xlu0 %v420, 104
      %v2984 = vpop.permute.xlu0 %2983
      %2985 = vrot.lane.b32.xlu0 %v421, 104
      %v2986 = vpop.permute.xlu0 %2985
      %2987 = vrot.lane.b32.xlu0 %v422, 104
      %v2988 = vpop.permute.xlu0 %2987
      %2989 = vrot.lane.b32.xlu0 %v423, 104
      %v2990 = vpop.permute.xlu0 %2989
      %2991 = vrot.lane.b32.xlu0 %v424, 104
      %v2992 = vpop.permute.xlu0 %2991
      %2993 = vrot.lane.b32.xlu0 %v425, 104
      %v2994 = vpop.permute.xlu0 %2993
      %2995 = vrot.lane.b32.xlu0 %v426, 104
      %v2996 = vpop.permute.xlu0 %2995
      %2997 = vrot.lane.b32.xlu0 %v427, 104
      %v2998 = vpop.permute.xlu0 %2997
      %2999 = vrot.lane.b32.xlu0 %v428, 104
      %v3000 = vpop.permute.xlu0 %2999
      %3001 = vrot.lane.b32.xlu0 %v429, 104
      %v3002 = vpop.permute.xlu0 %3001
      %3003 = vrot.lane.b32.xlu0 %v430, 104
      %v3004 = vpop.permute.xlu0 %3003
      %3005 = vrot.lane.b32.xlu0 %v431, 104
      %v3006 = vpop.permute.xlu0 %3005
      %3007 = vrot.lane.b32.xlu0 %v432, 104
      %v3008 = vpop.permute.xlu0 %3007
      %3009 = vrot.lane.b32.xlu0 %v449, 104
      %v3010 = vpop.permute.xlu0 %3009
      %3011 = vrot.lane.b32.xlu0 %v450, 104
      %v3012 = vpop.permute.xlu0 %3011
      %3013 = vrot.lane.b32.xlu0 %v451, 104
      %v3014 = vpop.permute.xlu0 %3013
      %3015 = vrot.lane.b32.xlu0 %v452, 104
      %v3016 = vpop.permute.xlu0 %3015
      %v3018 = vsel %vm453, %v2978, 0
      %v3021 = vsel %vm453, %v2980, 0
      %v3024 = vsel %vm453, %v2982, 0
      %v3027 = vsel %vm453, %v2984, 0
      %v3030 = vsel %vm453, %v2986, 0
      %v3033 = vsel %vm453, %v2988, 0
      %v3036 = vsel %vm453, %v2990, 0
      %v3039 = vsel %vm453, %v2992, 0
      %v3042 = vsel %vm453, %v2994, 0
      %v3045 = vsel %vm453, %v2996, 0
      %v3048 = vsel %vm453, %v2998, 0
      %v3051 = vsel %vm453, %v3000, 0
      %v3054 = vsel %vm453, %v3002, 0
      %v3057 = vsel %vm453, %v3004, 0
      %v3060 = vsel %vm453, %v3006, 0
      %v3063 = vsel %vm453, %v3008, 0
      %v3066 = vsel %vm453, %v3010, 0
      %v3069 = vsel %vm453, %v3012, 0
      %v3072 = vsel %vm453, %v3014, 0
      %v3075 = vsel %vm453, %v3016, 0
      %3077 = vmatprep.subr.bf16.mxu0 0
      %3078 = vmatpush1.bf16.xpose.msra.mxu0 %v3066
      %3079 = vmatprep.subr.bf16.mxu0 0
      %3080 = vmatpush1.bf16.xpose.msra.mxu0 %v3069
      %3081 = vmatprep.subr.bf16.mxu0 0
      %3082 = vmatpush1.bf16.xpose.msra.mxu0 %v3072
      %3083 = vmatprep.subr.bf16.mxu0 0
      %3084 = vmatpush1.bf16.xpose.msra.mxu0 %v3075
      %3085 = vmatprep.subr.bf16.mxu0 0
      %3086 = vmatpush1.bf16.xpose.msra.mxu0 0
      %3087 = vmatprep.subr.bf16.mxu0 0
      %3088 = vmatpush1.bf16.xpose.msra.mxu0 0
      %3089 = vmatprep.subr.bf16.mxu0 0
      %3090 = vmatpush1.bf16.xpose.msra.mxu0 0
      %3091 = vmatprep.subr.bf16.mxu0 0
      %3092 = vmatpush1.bf16.xpose.msra.mxu0 0
      %3093 = vmatprep.subr.bf16.mxu0 0
      %3094 = vmatpush1.bf16.xpose.msra.mxu0 0
      %3095 = vmatprep.subr.bf16.mxu0 0
      %3096 = vmatpush1.bf16.xpose.msra.mxu0 0
      %3097 = vmatprep.subr.bf16.mxu0 0
      %3098 = vmatpush1.bf16.xpose.msra.mxu0 0
      %3099 = vmatprep.subr.bf16.mxu0 0
      %3100 = vmatpush1.bf16.xpose.msra.mxu0 0
      %3101 = vmatprep.subr.bf16.mxu0 0
      %3102 = vmatpush1.bf16.xpose.msra.mxu0 0
      %3103 = vmatprep.subr.bf16.mxu0 0
      %3104 = vmatpush1.bf16.xpose.msra.mxu0 0
      %3105 = vmatprep.subr.bf16.mxu0 0
      %3106 = vmatpush1.bf16.xpose.msra.mxu0 0
      %3107 = vmatprep.subr.bf16.mxu0 0
      %3108 = vmatpush1.bf16.xpose.msra.mxu0 0
      %3109 = vmatprep.mubr.bf16.mxu0 0
      %3110 = vmatmul.mubr.bf16.gmra.mrb[0].mxu0 %v3018
      %v3111 = vpop.f32.mrb[0].mxu0
      %v3112 = vadd.f32 0.0, %v3111
      %v3113 = vpop.f32.mrb[0].mxu0
      %v3114 = vpop.f32.mrb[0].mxu0
      %v3115 = vadd.f32 0.0, %v3114
      %v3116 = vpop.f32.mrb[0].mxu0
      %3117 = vmatprep.mubr.bf16.mxu0 0
      %3118 = vmatmul.mubr.bf16.gmra.mrb[0].mxu0 %v3021
      %v3119 = vpop.f32.mrb[0].mxu0
      %v3120 = vadd.f32 0.0, %v3119
      %v3121 = vpop.f32.mrb[0].mxu0
      %v3122 = vpop.f32.mrb[0].mxu0
      %v3123 = vadd.f32 0.0, %v3122
      %v3124 = vpop.f32.mrb[0].mxu0
      %3125 = vmatprep.mubr.bf16.mxu0 0
      %3126 = vmatmul.mubr.bf16.gmra.mrb[0].mxu0 %v3024
      %v3127 = vpop.f32.mrb[0].mxu0
      %v3128 = vadd.f32 0.0, %v3127
      %v3129 = vpop.f32.mrb[0].mxu0
      %v3130 = vpop.f32.mrb[0].mxu0
      %v3131 = vadd.f32 0.0, %v3130
      %v3132 = vpop.f32.mrb[0].mxu0
      %3133 = vmatprep.mubr.bf16.mxu0 0
      %3134 = vmatmul.mubr.bf16.gmra.mrb[0].mxu0 %v3027
      %v3135 = vpop.f32.mrb[0].mxu0
      %v3136 = vadd.f32 0.0, %v3135
      %v3137 = vpop.f32.mrb[0].mxu0
      %v3138 = vpop.f32.mrb[0].mxu0
      %v3139 = vadd.f32 0.0, %v3138
      %v3140 = vpop.f32.mrb[0].mxu0
      %3141 = vmatprep.mubr.bf16.mxu0 0
      %3142 = vmatmul.mubr.bf16.gmra.mrb[0].mxu0 %v3030
      %v3143 = vpop.f32.mrb[0].mxu0
      %v3144 = vadd.f32 0.0, %v3143
      %v3145 = vpop.f32.mrb[0].mxu0
      %v3146 = vpop.f32.mrb[0].mxu0
      %v3147 = vadd.f32 0.0, %v3146
      %v3148 = vpop.f32.mrb[0].mxu0
      %3149 = vmatprep.mubr.bf16.mxu0 0
      %3150 = vmatmul.mubr.bf16.gmra.mrb[0].mxu0 %v3033
      %v3151 = vpop.f32.mrb[0].mxu0
      %v3152 = vadd.f32 0.0, %v3151
      %v3153 = vpop.f32.mrb[0].mxu0
      %v3154 = vpop.f32.mrb[0].mxu0
      %v3155 = vadd.f32 0.0, %v3154
      %v3156 = vpop.f32.mrb[0].mxu0
      %3157 = vmatprep.mubr.bf16.mxu0 0
      %3158 = vmatmul.mubr.bf16.gmra.mrb[0].mxu0 %v3036
      %v3159 = vpop.f32.mrb[0].mxu0
      %v3160 = vadd.f32 0.0, %v3159
      %v3161 = vpop.f32.mrb[0].mxu0
      %v3162 = vpop.f32.mrb[0].mxu0
      %v3163 = vadd.f32 0.0, %v3162
      %v3164 = vpop.f32.mrb[0].mxu0
      %3165 = vmatprep.mubr.bf16.mxu0 0
      %3166 = vmatmul.mubr.bf16.gmra.mrb[0].mxu0 %v3039
      %v3167 = vpop.f32.mrb[0].mxu0
      %v3168 = vadd.f32 0.0, %v3167
      %v3169 = vpop.f32.mrb[0].mxu0
      %v3170 = vpop.f32.mrb[0].mxu0
      %v3171 = vadd.f32 0.0, %v3170
      %v3172 = vpop.f32.mrb[0].mxu0
      %3173 = vmatprep.mubr.bf16.mxu0 0
      %3174 = vmatmul.mubr.bf16.gmra.mrb[0].mxu0 %v3042
      %v3175 = vpop.f32.mrb[0].mxu0
      %v3176 = vadd.f32 0.0, %v3175
      %v3177 = vpop.f32.mrb[0].mxu0
      %v3178 = vpop.f32.mrb[0].mxu0
      %v3179 = vadd.f32 0.0, %v3178
      %v3180 = vpop.f32.mrb[0].mxu0
      %3181 = vmatprep.mubr.bf16.mxu0 0
      %3182 = vmatmul.mubr.bf16.gmra.mrb[0].mxu0 %v3045
      %v3183 = vpop.f32.mrb[0].mxu0
      %v3184 = vadd.f32 0.0, %v3183
      %v3185 = vpop.f32.mrb[0].mxu0
      %v3186 = vpop.f32.mrb[0].mxu0
      %v3187 = vadd.f32 0.0, %v3186
      %v3188 = vpop.f32.mrb[0].mxu0
      %3189 = vmatprep.mubr.bf16.mxu0 0
      %3190 = vmatmul.mubr.bf16.gmra.mrb[0].mxu0 %v3048
      %v3191 = vpop.f32.mrb[0].mxu0
      %v3192 = vadd.f32 0.0, %v3191
      %v3193 = vpop.f32.mrb[0].mxu0
      %v3194 = vpop.f32.mrb[0].mxu0
      %v3195 = vadd.f32 0.0, %v3194
      %v3196 = vpop.f32.mrb[0].mxu0
      %3197 = vmatprep.mubr.bf16.mxu0 0
      %3198 = vmatmul.mubr.bf16.gmra.mrb[0].mxu0 %v3051
      %v3199 = vpop.f32.mrb[0].mxu0
      %v3200 = vadd.f32 0.0, %v3199
      %v3201 = vpop.f32.mrb[0].mxu0
      %v3202 = vpop.f32.mrb[0].mxu0
      %v3203 = vadd.f32 0.0, %v3202
      %v3204 = vpop.f32.mrb[0].mxu0
      %3205 = vmatprep.mubr.bf16.mxu0 0
      %3206 = vmatmul.mubr.bf16.gmra.mrb[0].mxu0 %v3054
      %v3207 = vpop.f32.mrb[0].mxu0
      %v3208 = vadd.f32 0.0, %v3207
      %v3209 = vpop.f32.mrb[0].mxu0
      %v3210 = vpop.f32.mrb[0].mxu0
      %v3211 = vadd.f32 0.0, %v3210
      %v3212 = vpop.f32.mrb[0].mxu0
      %3213 = vmatprep.mubr.bf16.mxu0 0
      %3214 = vmatmul.mubr.bf16.gmra.mrb[0].mxu0 %v3057
      %v3215 = vpop.f32.mrb[0].mxu0
      %v3216 = vadd.f32 0.0, %v3215
      %v3217 = vpop.f32.mrb[0].mxu0
      %v3218 = vpop.f32.mrb[0].mxu0
      %v3219 = vadd.f32 0.0, %v3218
      %v3220 = vpop.f32.mrb[0].mxu0
      %3221 = vmatprep.mubr.bf16.mxu0 0
      %3222 = vmatmul.mubr.bf16.gmra.mrb[0].mxu0 %v3060
      %v3223 = vpop.f32.mrb[0].mxu0
      %v3224 = vadd.f32 0.0, %v3223
      %v3225 = vpop.f32.mrb[0].mxu0
      %v3226 = vpop.f32.mrb[0].mxu0
      %v3227 = vadd.f32 0.0, %v3226
      %v3228 = vpop.f32.mrb[0].mxu0
      %3229 = vmatprep.mubr.bf16.mxu0 0
      %3230 = vmatmul.mubr.bf16.gmra.mrb[0].mxu0 %v3063
      %v3231 = vpop.f32.mrb[0].mxu0
      %v3232 = vadd.f32 0.0, %v3231
      %v3233 = vpop.f32.mrb[0].mxu0
      %v3234 = vpop.f32.mrb[0].mxu0
      %v3235 = vadd.f32 0.0, %v3234
      %v3236 = vpop.f32.mrb[0].mxu0
      %3237 = vdwg.mxu0
      %v3238 = vsel %vm675, %v3112, -inf
      %3239 = vmax.xlane.f32.xlu0 %v3238
      %v3240 = vpop.xlane.xlu0 %3239
      %v3241 = vsel %vm675, %v3115, -inf
      %3242 = vmax.xlane.f32.xlu0 %v3241
      %v3243 = vpop.xlane.xlu0 %3242
      %v3244 = vsel %vm675, %v3120, -inf
      %3245 = vmax.xlane.f32.xlu0 %v3244
      %v3246 = vpop.xlane.xlu0 %3245
      %v3247 = vsel %vm675, %v3123, -inf
      %3248 = vmax.xlane.f32.xlu0 %v3247
      %v3249 = vpop.xlane.xlu0 %3248
      %v3250 = vsel %vm675, %v3128, -inf
      %3251 = vmax.xlane.f32.xlu0 %v3250
      %v3252 = vpop.xlane.xlu0 %3251
      %v3253 = vsel %vm675, %v3131, -inf
      %3254 = vmax.xlane.f32.xlu0 %v3253
      %v3255 = vpop.xlane.xlu0 %3254
      %v3256 = vsel %vm675, %v3136, -inf
      %3257 = vmax.xlane.f32.xlu0 %v3256
      %v3258 = vpop.xlane.xlu0 %3257
      %v3259 = vsel %vm675, %v3139, -inf
      %3260 = vmax.xlane.f32.xlu0 %v3259
      %v3261 = vpop.xlane.xlu0 %3260
      %v3262 = vsel %vm675, %v3144, -inf
      %3263 = vmax.xlane.f32.xlu0 %v3262
      %v3264 = vpop.xlane.xlu0 %3263
      %v3265 = vsel %vm675, %v3147, -inf
      %3266 = vmax.xlane.f32.xlu0 %v3265
      %v3267 = vpop.xlane.xlu0 %3266
      %v3268 = vsel %vm675, %v3152, -inf
      %3269 = vmax.xlane.f32.xlu0 %v3268
      %v3270 = vpop.xlane.xlu0 %3269
      %v3271 = vsel %vm675, %v3155, -inf
      %3272 = vmax.xlane.f32.xlu0 %v3271
      %v3273 = vpop.xlane.xlu0 %3272
      %v3274 = vsel %vm675, %v3160, -inf
      %3275 = vmax.xlane.f32.xlu0 %v3274
      %v3276 = vpop.xlane.xlu0 %3275
      %v3277 = vsel %vm675, %v3163, -inf
      %3278 = vmax.xlane.f32.xlu0 %v3277
      %v3279 = vpop.xlane.xlu0 %3278
      %v3280 = vsel %vm675, %v3168, -inf
      %3281 = vmax.xlane.f32.xlu0 %v3280
      %v3282 = vpop.xlane.xlu0 %3281
      %v3283 = vsel %vm675, %v3171, -inf
      %3284 = vmax.xlane.f32.xlu0 %v3283
      %v3285 = vpop.xlane.xlu0 %3284
      %v3286 = vsel %vm675, %v3176, -inf
      %3287 = vmax.xlane.f32.xlu0 %v3286
      %v3288 = vpop.xlane.xlu0 %3287
      %v3289 = vsel %vm675, %v3179, -inf
      %3290 = vmax.xlane.f32.xlu0 %v3289
      %v3291 = vpop.xlane.xlu0 %3290
      %v3292 = vsel %vm675, %v3184, -inf
      %3293 = vmax.xlane.f32.xlu0 %v3292
      %v3294 = vpop.xlane.xlu0 %3293
      %v3295 = vsel %vm675, %v3187, -inf
      %3296 = vmax.xlane.f32.xlu0 %v3295
      %v3297 = vpop.xlane.xlu0 %3296
      %v3298 = vsel %vm675, %v3192, -inf
      %3299 = vmax.xlane.f32.xlu0 %v3298
      %v3300 = vpop.xlane.xlu0 %3299
      %v3301 = vsel %vm675, %v3195, -inf
      %3302 = vmax.xlane.f32.xlu0 %v3301
      %v3303 = vpop.xlane.xlu0 %3302
      %v3304 = vsel %vm675, %v3200, -inf
      %3305 = vmax.xlane.f32.xlu0 %v3304
      %v3306 = vpop.xlane.xlu0 %3305
      %v3307 = vsel %vm675, %v3203, -inf
      %3308 = vmax.xlane.f32.xlu0 %v3307
      %v3309 = vpop.xlane.xlu0 %3308
      %v3310 = vsel %vm675, %v3208, -inf
      %3311 = vmax.xlane.f32.xlu0 %v3310
      %v3312 = vpop.xlane.xlu0 %3311
      %v3313 = vsel %vm675, %v3211, -inf
      %3314 = vmax.xlane.f32.xlu0 %v3313
      %v3315 = vpop.xlane.xlu0 %3314
      %v3316 = vsel %vm675, %v3216, -inf
      %3317 = vmax.xlane.f32.xlu0 %v3316
      %v3318 = vpop.xlane.xlu0 %3317
      %v3319 = vsel %vm675, %v3219, -inf
      %3320 = vmax.xlane.f32.xlu0 %v3319
      %v3321 = vpop.xlane.xlu0 %3320
      %v3322 = vsel %vm675, %v3224, -inf
      %3323 = vmax.xlane.f32.xlu0 %v3322
      %v3324 = vpop.xlane.xlu0 %3323
      %v3325 = vsel %vm675, %v3227, -inf
      %3326 = vmax.xlane.f32.xlu0 %v3325
      %v3327 = vpop.xlane.xlu0 %3326
      %v3328 = vsel %vm675, %v3232, -inf
      %3329 = vmax.xlane.f32.xlu0 %v3328
      %v3330 = vpop.xlane.xlu0 %3329
      %v3331 = vsel %vm675, %v3235, -inf
      %3332 = vmax.xlane.f32.xlu0 %v3331
      %v3333 = vpop.xlane.xlu0 %3332
      %v3334 = vsub.f32 %v3112, %v3240
      %v3335 = vsub.f32 %v3115, %v3243
      %v3336 = vsub.f32 %v3120, %v3246
      %v3337 = vsub.f32 %v3123, %v3249
      %v3338 = vsub.f32 %v3128, %v3252
      %v3339 = vsub.f32 %v3131, %v3255
      %v3340 = vsub.f32 %v3136, %v3258
      %v3341 = vsub.f32 %v3139, %v3261
      %v3342 = vsub.f32 %v3144, %v3264
      %v3343 = vsub.f32 %v3147, %v3267
      %v3344 = vsub.f32 %v3152, %v3270
      %v3345 = vsub.f32 %v3155, %v3273
      %v3346 = vsub.f32 %v3160, %v3276
      %v3347 = vsub.f32 %v3163, %v3279
      %v3348 = vsub.f32 %v3168, %v3282
      %v3349 = vsub.f32 %v3171, %v3285
      %v3350 = vsub.f32 %v3176, %v3288
      %v3351 = vsub.f32 %v3179, %v3291
      %v3352 = vsub.f32 %v3184, %v3294
      %v3353 = vsub.f32 %v3187, %v3297
      %v3354 = vsub.f32 %v3192, %v3300
      %v3355 = vsub.f32 %v3195, %v3303
      %v3356 = vsub.f32 %v3200, %v3306
      %v3357 = vsub.f32 %v3203, %v3309
      %v3358 = vsub.f32 %v3208, %v3312
      %v3359 = vsub.f32 %v3211, %v3315
      %v3360 = vsub.f32 %v3216, %v3318
      %v3361 = vsub.f32 %v3219, %v3321
      %v3362 = vsub.f32 %v3224, %v3324
      %v3363 = vsub.f32 %v3227, %v3327
      %v3364 = vsub.f32 %v3232, %v3330
      %v3365 = vsub.f32 %v3235, %v3333
      %v3366 = vmul.f32 %v3334, 1.442695
      %v3367 = vpow.pop %v3366
      %v3368 = vmul.f32 %v3335, 1.442695
      %v3369 = vpow.pop %v3368
      %v3370 = vmul.f32 %v3336, 1.442695
      %v3371 = vpow.pop %v3370
      %v3372 = vmul.f32 %v3337, 1.442695
      %v3373 = vpow.pop %v3372
      %v3374 = vmul.f32 %v3338, 1.442695
      %v3375 = vpow.pop %v3374
      %v3376 = vmul.f32 %v3339, 1.442695
      %v3377 = vpow.pop %v3376
      %v3378 = vmul.f32 %v3340, 1.442695
      %v3379 = vpow.pop %v3378
      %v3380 = vmul.f32 %v3341, 1.442695
      %v3381 = vpow.pop %v3380
      %v3382 = vmul.f32 %v3342, 1.442695
      %v3383 = vpow.pop %v3382
      %v3384 = vmul.f32 %v3343, 1.442695
      %v3385 = vpow.pop %v3384
      %v3386 = vmul.f32 %v3344, 1.442695
      %v3387 = vpow.pop %v3386
      %v3388 = vmul.f32 %v3345, 1.442695
      %v3389 = vpow.pop %v3388
      %v3390 = vmul.f32 %v3346, 1.442695
      %v3391 = vpow.pop %v3390
      %v3392 = vmul.f32 %v3347, 1.442695
      %v3393 = vpow.pop %v3392
      %v3394 = vmul.f32 %v3348, 1.442695
      %v3395 = vpow.pop %v3394
      %v3396 = vmul.f32 %v3349, 1.442695
      %v3397 = vpow.pop %v3396
      %v3398 = vmul.f32 %v3350, 1.442695
      %v3399 = vpow.pop %v3398
      %v3400 = vmul.f32 %v3351, 1.442695
      %v3401 = vpow.pop %v3400
      %v3402 = vmul.f32 %v3352, 1.442695
      %v3403 = vpow.pop %v3402
      %v3404 = vmul.f32 %v3353, 1.442695
      %v3405 = vpow.pop %v3404
      %v3406 = vmul.f32 %v3354, 1.442695
      %v3407 = vpow.pop %v3406
      %v3408 = vmul.f32 %v3355, 1.442695
      %v3409 = vpow.pop %v3408
      %v3410 = vmul.f32 %v3356, 1.442695
      %v3411 = vpow.pop %v3410
      %v3412 = vmul.f32 %v3357, 1.442695
      %v3413 = vpow.pop %v3412
      %v3414 = vmul.f32 %v3358, 1.442695
      %v3415 = vpow.pop %v3414
      %v3416 = vmul.f32 %v3359, 1.442695
      %v3417 = vpow.pop %v3416
      %v3418 = vmul.f32 %v3360, 1.442695
      %v3419 = vpow.pop %v3418
      %v3420 = vmul.f32 %v3361, 1.442695
      %v3421 = vpow.pop %v3420
      %v3422 = vmul.f32 %v3362, 1.442695
      %v3423 = vpow.pop %v3422
      %v3424 = vmul.f32 %v3363, 1.442695
      %v3425 = vpow.pop %v3424
      %v3426 = vmul.f32 %v3364, 1.442695
      %v3427 = vpow.pop %v3426
      %v3428 = vmul.f32 %v3365, 1.442695
      %v3429 = vpow.pop %v3428
      %v3430 = vsel %vm675, %v3367, 0.0
      %3431 = vadd.xlane.f32.xlu0 %v3430
      %v3432 = vpop.xlane.xlu0 %3431
      %v3433 = vsel %vm675, %v3369, 0.0
      %3434 = vadd.xlane.f32.xlu0 %v3433
      %v3435 = vpop.xlane.xlu0 %3434
      %v3436 = vsel %vm675, %v3371, 0.0
      %3437 = vadd.xlane.f32.xlu0 %v3436
      %v3438 = vpop.xlane.xlu0 %3437
      %v3439 = vsel %vm675, %v3373, 0.0
      %3440 = vadd.xlane.f32.xlu0 %v3439
      %v3441 = vpop.xlane.xlu0 %3440
      %v3442 = vsel %vm675, %v3375, 0.0
      %3443 = vadd.xlane.f32.xlu0 %v3442
      %v3444 = vpop.xlane.xlu0 %3443
      %v3445 = vsel %vm675, %v3377, 0.0
      %3446 = vadd.xlane.f32.xlu0 %v3445
      %v3447 = vpop.xlane.xlu0 %3446
      %v3448 = vsel %vm675, %v3379, 0.0
      %3449 = vadd.xlane.f32.xlu0 %v3448
      %v3450 = vpop.xlane.xlu0 %3449
      %v3451 = vsel %vm675, %v3381, 0.0
      %3452 = vadd.xlane.f32.xlu0 %v3451
      %v3453 = vpop.xlane.xlu0 %3452
      %v3454 = vsel %vm675, %v3383, 0.0
      %3455 = vadd.xlane.f32.xlu0 %v3454
      %v3456 = vpop.xlane.xlu0 %3455
      %v3457 = vsel %vm675, %v3385, 0.0
      %3458 = vadd.xlane.f32.xlu0 %v3457
      %v3459 = vpop.xlane.xlu0 %3458
      %v3460 = vsel %vm675, %v3387, 0.0
      %3461 = vadd.xlane.f32.xlu0 %v3460
      %v3462 = vpop.xlane.xlu0 %3461
      %v3463 = vsel %vm675, %v3389, 0.0
      %3464 = vadd.xlane.f32.xlu0 %v3463
      %v3465 = vpop.xlane.xlu0 %3464
      %v3466 = vsel %vm675, %v3391, 0.0
      %3467 = vadd.xlane.f32.xlu0 %v3466
      %v3468 = vpop.xlane.xlu0 %3467
      %v3469 = vsel %vm675, %v3393, 0.0
      %3470 = vadd.xlane.f32.xlu0 %v3469
      %v3471 = vpop.xlane.xlu0 %3470
      %v3472 = vsel %vm675, %v3395, 0.0
      %3473 = vadd.xlane.f32.xlu0 %v3472
      %v3474 = vpop.xlane.xlu0 %3473
      %v3475 = vsel %vm675, %v3397, 0.0
      %3476 = vadd.xlane.f32.xlu0 %v3475
      %v3477 = vpop.xlane.xlu0 %3476
      %v3478 = vsel %vm675, %v3399, 0.0
      %3479 = vadd.xlane.f32.xlu0 %v3478
      %v3480 = vpop.xlane.xlu0 %3479
      %v3481 = vsel %vm675, %v3401, 0.0
      %3482 = vadd.xlane.f32.xlu0 %v3481
      %v3483 = vpop.xlane.xlu0 %3482
      %v3484 = vsel %vm675, %v3403, 0.0
      %3485 = vadd.xlane.f32.xlu0 %v3484
      %v3486 = vpop.xlane.xlu0 %3485
      %v3487 = vsel %vm675, %v3405, 0.0
      %3488 = vadd.xlane.f32.xlu0 %v3487
      %v3489 = vpop.xlane.xlu0 %3488
      %v3490 = vsel %vm675, %v3407, 0.0
      %3491 = vadd.xlane.f32.xlu0 %v3490
      %v3492 = vpop.xlane.xlu0 %3491
      %v3493 = vsel %vm675, %v3409, 0.0
      %3494 = vadd.xlane.f32.xlu0 %v3493
      %v3495 = vpop.xlane.xlu0 %3494
      %v3496 = vsel %vm675, %v3411, 0.0
      %3497 = vadd.xlane.f32.xlu0 %v3496
      %v3498 = vpop.xlane.xlu0 %3497
      %v3499 = vsel %vm675, %v3413, 0.0
      %3500 = vadd.xlane.f32.xlu0 %v3499
      %v3501 = vpop.xlane.xlu0 %3500
      %v3502 = vsel %vm675, %v3415, 0.0
      %3503 = vadd.xlane.f32.xlu0 %v3502
      %v3504 = vpop.xlane.xlu0 %3503
      %v3505 = vsel %vm675, %v3417, 0.0
      %3506 = vadd.xlane.f32.xlu0 %v3505
      %v3507 = vpop.xlane.xlu0 %3506
      %v3508 = vsel %vm675, %v3419, 0.0
      %3509 = vadd.xlane.f32.xlu0 %v3508
      %v3510 = vpop.xlane.xlu0 %3509
      %v3511 = vsel %vm675, %v3421, 0.0
      %3512 = vadd.xlane.f32.xlu0 %v3511
      %v3513 = vpop.xlane.xlu0 %3512
      %v3514 = vsel %vm675, %v3423, 0.0
      %3515 = vadd.xlane.f32.xlu0 %v3514
      %v3516 = vpop.xlane.xlu0 %3515
      %v3517 = vsel %vm675, %v3425, 0.0
      %3518 = vadd.xlane.f32.xlu0 %v3517
      %v3519 = vpop.xlane.xlu0 %3518
      %v3520 = vsel %vm675, %v3427, 0.0
      %3521 = vadd.xlane.f32.xlu0 %v3520
      %v3522 = vpop.xlane.xlu0 %3521
      %v3523 = vsel %vm675, %v3429, 0.0
      %3524 = vadd.xlane.f32.xlu0 %v3523
      %v3525 = vpop.xlane.xlu0 %3524
      %v3526 = vrcp.pop %v3432
      %v3527 = vrcp.pop %v3435
      %v3528 = vrcp.pop %v3438
      %v3529 = vrcp.pop %v3441
      %v3530 = vrcp.pop %v3444
      %v3531 = vrcp.pop %v3447
      %v3532 = vrcp.pop %v3450
      %v3533 = vrcp.pop %v3453
      %v3534 = vrcp.pop %v3456
      %v3535 = vrcp.pop %v3459
      %v3536 = vrcp.pop %v3462
      %v3537 = vrcp.pop %v3465
      %v3538 = vrcp.pop %v3468
      %v3539 = vrcp.pop %v3471
      %v3540 = vrcp.pop %v3474
      %v3541 = vrcp.pop %v3477
      %v3542 = vrcp.pop %v3480
      %v3543 = vrcp.pop %v3483
      %v3544 = vrcp.pop %v3486
      %v3545 = vrcp.pop %v3489
      %v3546 = vrcp.pop %v3492
      %v3547 = vrcp.pop %v3495
      %v3548 = vrcp.pop %v3498
      %v3549 = vrcp.pop %v3501
      %v3550 = vrcp.pop %v3504
      %v3551 = vrcp.pop %v3507
      %v3552 = vrcp.pop %v3510
      %v3553 = vrcp.pop %v3513
      %v3554 = vrcp.pop %v3516
      %v3555 = vrcp.pop %v3519
      %v3556 = vrcp.pop %v3522
      %v3557 = vrcp.pop %v3525
      %v3558 = vmul.f32 %v3367, %v3526
      %v3559 = vmul.f32 %v3369, %v3527
      %v3560 = vmul.f32 %v3371, %v3528
      %v3561 = vmul.f32 %v3373, %v3529
      %v3562 = vmul.f32 %v3375, %v3530
      %v3563 = vmul.f32 %v3377, %v3531
      %v3564 = vmul.f32 %v3379, %v3532
      %v3565 = vmul.f32 %v3381, %v3533
      %v3566 = vmul.f32 %v3383, %v3534
      %v3567 = vmul.f32 %v3385, %v3535
      %v3568 = vmul.f32 %v3387, %v3536
      %v3569 = vmul.f32 %v3389, %v3537
      %v3570 = vmul.f32 %v3391, %v3538
      %v3571 = vmul.f32 %v3393, %v3539
      %v3572 = vmul.f32 %v3395, %v3540
      %v3573 = vmul.f32 %v3397, %v3541
      %v3574 = vmul.f32 %v3399, %v3542
      %v3575 = vmul.f32 %v3401, %v3543
      %v3576 = vmul.f32 %v3403, %v3544
      %v3577 = vmul.f32 %v3405, %v3545
      %v3578 = vmul.f32 %v3407, %v3546
      %v3579 = vmul.f32 %v3409, %v3547
      %v3580 = vmul.f32 %v3411, %v3548
      %v3581 = vmul.f32 %v3413, %v3549
      %v3582 = vmul.f32 %v3415, %v3550
      %v3583 = vmul.f32 %v3417, %v3551
      %v3584 = vmul.f32 %v3419, %v3552
      %v3585 = vmul.f32 %v3421, %v3553
      %v3586 = vmul.f32 %v3423, %v3554
      %v3587 = vmul.f32 %v3425, %v3555
      %v3588 = vmul.f32 %v3427, %v3556
      %v3589 = vmul.f32 %v3429, %v3557
      %v3590 = vpack.c.bf16 %v3559, %v3558
      %v3591 = vpack.c.bf16 %v3561, %v3560
      %v3592 = vpack.c.bf16 %v3563, %v3562
      %v3593 = vpack.c.bf16 %v3565, %v3564
      %v3594 = vpack.c.bf16 %v3567, %v3566
      %v3595 = vpack.c.bf16 %v3569, %v3568
      %v3596 = vpack.c.bf16 %v3571, %v3570
      %v3597 = vpack.c.bf16 %v3573, %v3572
      %v3598 = vpack.c.bf16 %v3575, %v3574
      %v3599 = vpack.c.bf16 %v3577, %v3576
      %v3600 = vpack.c.bf16 %v3579, %v3578
      %v3601 = vpack.c.bf16 %v3581, %v3580
      %v3602 = vpack.c.bf16 %v3583, %v3582
      %v3603 = vpack.c.bf16 %v3585, %v3584
      %v3604 = vpack.c.bf16 %v3587, %v3586
      %v3605 = vpack.c.bf16 %v3589, %v3588
      %3606 = vrot.lane.b32.xlu0 %v1060, 104
      %v3607 = vpop.permute.xlu0 %3606
      %3608 = vrot.lane.b32.xlu0 %v1061, 104
      %v3609 = vpop.permute.xlu0 %3608
      %3610 = vrot.lane.b32.xlu0 %v1062, 104
      %v3611 = vpop.permute.xlu0 %3610
      %3612 = vrot.lane.b32.xlu0 %v1063, 104
      %v3613 = vpop.permute.xlu0 %3612
      %v3619 = vsel %vm675, %v3590, 0
      %v3622 = vsel %vm675, %v3591, 0
      %v3625 = vsel %vm675, %v3592, 0
      %v3628 = vsel %vm675, %v3593, 0
      %v3631 = vsel %vm675, %v3594, 0
      %v3634 = vsel %vm675, %v3595, 0
      %v3637 = vsel %vm675, %v3596, 0
      %v3640 = vsel %vm675, %v3597, 0
      %v3643 = vsel %vm675, %v3598, 0
      %v3646 = vsel %vm675, %v3599, 0
      %v3649 = vsel %vm675, %v3600, 0
      %v3652 = vsel %vm675, %v3601, 0
      %v3655 = vsel %vm675, %v3602, 0
      %v3658 = vsel %vm675, %v3603, 0
      %v3661 = vsel %vm675, %v3604, 0
      %v3664 = vsel %vm675, %v3605, 0
      %3666 = vmatprep.subr.bf16.mxu0 0
      %3667 = vmatpush1.bf16.msra.mxu0 %v3607
      %3668 = vmatprep.subr.bf16.mxu0 0
      %3669 = vmatpush1.bf16.msra.mxu0 %v3609
      %3670 = vmatprep.subr.bf16.mxu0 0
      %3671 = vmatpush1.bf16.msra.mxu0 %v3611
      %3672 = vmatprep.subr.bf16.mxu0 0
      %3673 = vmatpush1.bf16.msra.mxu0 %v3613
      %3674 = vmatprep.subr.bf16.mxu0 0
      %3675 = vmatpush1.bf16.msra.mxu0 0
      %3676 = vmatprep.subr.bf16.mxu0 0
      %3677 = vmatpush1.bf16.msra.mxu0 0
      %3678 = vmatprep.subr.bf16.mxu0 0
      %3679 = vmatpush1.bf16.msra.mxu0 0
      %3680 = vmatprep.subr.bf16.mxu0 0
      %3681 = vmatpush1.bf16.msra.mxu0 0
      %3682 = vmatprep.subr.bf16.mxu0 0
      %3683 = vmatpush1.bf16.msra.mxu0 0
      %3684 = vmatprep.subr.bf16.mxu0 0
      %3685 = vmatpush1.bf16.msra.mxu0 0
      %3686 = vmatprep.subr.bf16.mxu0 0
      %3687 = vmatpush1.bf16.msra.mxu0 0
      %3688 = vmatprep.subr.bf16.mxu0 0
      %3689 = vmatpush1.bf16.msra.mxu0 0
      %3690 = vmatprep.subr.bf16.mxu0 0
      %3691 = vmatpush1.bf16.msra.mxu0 0
      %3692 = vmatprep.subr.bf16.mxu0 0
      %3693 = vmatpush1.bf16.msra.mxu0 0
      %3694 = vmatprep.subr.bf16.mxu0 0
      %3695 = vmatpush1.bf16.msra.mxu0 0
      %3696 = vmatprep.subr.bf16.mxu0 0
      %3697 = vmatpush1.bf16.msra.mxu0 0
      %3698 = vmatprep.mubr.bf16.mxu0 0
      %3699 = vmatmul.mubr.bf16.gmra.mrb[0].mxu0 %v3619
      %v3700 = vpop.f32.mrb[0].mxu0
      %v3701 = vadd.f32 0.0, %v3700
      %v3702 = vpop.f32.mrb[0].mxu0
      %v3703 = vpop.f32.mrb[0].mxu0
      %v3704 = vadd.f32 0.0, %v3703
      %v3705 = vpop.f32.mrb[0].mxu0
      %3706 = vmatprep.mubr.bf16.mxu0 0
      %3707 = vmatmul.mubr.bf16.gmra.mrb[0].mxu0 %v3622
      %v3708 = vpop.f32.mrb[0].mxu0
      %v3709 = vadd.f32 0.0, %v3708
      %v3710 = vpop.f32.mrb[0].mxu0
      %v3711 = vpop.f32.mrb[0].mxu0
      %v3712 = vadd.f32 0.0, %v3711
      %v3713 = vpop.f32.mrb[0].mxu0
      %3714 = vmatprep.mubr.bf16.mxu0 0
      %3715 = vmatmul.mubr.bf16.gmra.mrb[0].mxu0 %v3625
      %v3716 = vpop.f32.mrb[0].mxu0
      %v3717 = vadd.f32 0.0, %v3716
      %v3718 = vpop.f32.mrb[0].mxu0
      %v3719 = vpop.f32.mrb[0].mxu0
      %v3720 = vadd.f32 0.0, %v3719
      %v3721 = vpop.f32.mrb[0].mxu0
      %3722 = vmatprep.mubr.bf16.mxu0 0
      %3723 = vmatmul.mubr.bf16.gmra.mrb[0].mxu0 %v3628
      %v3724 = vpop.f32.mrb[0].mxu0
      %v3725 = vadd.f32 0.0, %v3724
      %v3726 = vpop.f32.mrb[0].mxu0
      %v3727 = vpop.f32.mrb[0].mxu0
      %v3728 = vadd.f32 0.0, %v3727
      %v3729 = vpop.f32.mrb[0].mxu0
      %3730 = vmatprep.mubr.bf16.mxu0 0
      %3731 = vmatmul.mubr.bf16.gmra.mrb[0].mxu0 %v3631
      %v3732 = vpop.f32.mrb[0].mxu0
      %v3733 = vadd.f32 0.0, %v3732
      %v3734 = vpop.f32.mrb[0].mxu0
      %v3735 = vpop.f32.mrb[0].mxu0
      %v3736 = vadd.f32 0.0, %v3735
      %v3737 = vpop.f32.mrb[0].mxu0
      %3738 = vmatprep.mubr.bf16.mxu0 0
      %3739 = vmatmul.mubr.bf16.gmra.mrb[0].mxu0 %v3634
      %v3740 = vpop.f32.mrb[0].mxu0
      %v3741 = vadd.f32 0.0, %v3740
      %v3742 = vpop.f32.mrb[0].mxu0
      %v3743 = vpop.f32.mrb[0].mxu0
      %v3744 = vadd.f32 0.0, %v3743
      %v3745 = vpop.f32.mrb[0].mxu0
      %3746 = vmatprep.mubr.bf16.mxu0 0
      %3747 = vmatmul.mubr.bf16.gmra.mrb[0].mxu0 %v3637
      %v3748 = vpop.f32.mrb[0].mxu0
      %v3749 = vadd.f32 0.0, %v3748
      %v3750 = vpop.f32.mrb[0].mxu0
      %v3751 = vpop.f32.mrb[0].mxu0
      %v3752 = vadd.f32 0.0, %v3751
      %v3753 = vpop.f32.mrb[0].mxu0
      %3754 = vmatprep.mubr.bf16.mxu0 0
      %3755 = vmatmul.mubr.bf16.gmra.mrb[0].mxu0 %v3640
      %v3756 = vpop.f32.mrb[0].mxu0
      %v3757 = vadd.f32 0.0, %v3756
      %v3758 = vpop.f32.mrb[0].mxu0
      %v3759 = vpop.f32.mrb[0].mxu0
      %v3760 = vadd.f32 0.0, %v3759
      %v3761 = vpop.f32.mrb[0].mxu0
      %3762 = vmatprep.mubr.bf16.mxu0 0
      %3763 = vmatmul.mubr.bf16.gmra.mrb[0].mxu0 %v3643
      %v3764 = vpop.f32.mrb[0].mxu0
      %v3765 = vadd.f32 0.0, %v3764
      %v3766 = vpop.f32.mrb[0].mxu0
      %v3767 = vpop.f32.mrb[0].mxu0
      %v3768 = vadd.f32 0.0, %v3767
      %v3769 = vpop.f32.mrb[0].mxu0
      %3770 = vmatprep.mubr.bf16.mxu0 0
      %3771 = vmatmul.mubr.bf16.gmra.mrb[0].mxu0 %v3646
      %v3772 = vpop.f32.mrb[0].mxu0
      %v3773 = vadd.f32 0.0, %v3772
      %v3774 = vpop.f32.mrb[0].mxu0
      %v3775 = vpop.f32.mrb[0].mxu0
      %v3776 = vadd.f32 0.0, %v3775
      %v3777 = vpop.f32.mrb[0].mxu0
      %3778 = vmatprep.mubr.bf16.mxu0 0
      %3779 = vmatmul.mubr.bf16.gmra.mrb[0].mxu0 %v3649
      %v3780 = vpop.f32.mrb[0].mxu0
      %v3781 = vadd.f32 0.0, %v3780
      %v3782 = vpop.f32.mrb[0].mxu0
      %v3783 = vpop.f32.mrb[0].mxu0
      %v3784 = vadd.f32 0.0, %v3783
      %v3785 = vpop.f32.mrb[0].mxu0
      %3786 = vmatprep.mubr.bf16.mxu0 0
      %3787 = vmatmul.mubr.bf16.gmra.mrb[0].mxu0 %v3652
      %v3788 = vpop.f32.mrb[0].mxu0
      %v3789 = vadd.f32 0.0, %v3788
      %v3790 = vpop.f32.mrb[0].mxu0
      %v3791 = vpop.f32.mrb[0].mxu0
      %v3792 = vadd.f32 0.0, %v3791
      %v3793 = vpop.f32.mrb[0].mxu0
      %3794 = vmatprep.mubr.bf16.mxu0 0
      %3795 = vmatmul.mubr.bf16.gmra.mrb[0].mxu0 %v3655
      %v3796 = vpop.f32.mrb[0].mxu0
      %v3797 = vadd.f32 0.0, %v3796
      %v3798 = vpop.f32.mrb[0].mxu0
      %v3799 = vpop.f32.mrb[0].mxu0
      %v3800 = vadd.f32 0.0, %v3799
      %v3801 = vpop.f32.mrb[0].mxu0
      %3802 = vmatprep.mubr.bf16.mxu0 0
      %3803 = vmatmul.mubr.bf16.gmra.mrb[0].mxu0 %v3658
      %v3804 = vpop.f32.mrb[0].mxu0
      %v3805 = vadd.f32 0.0, %v3804
      %v3806 = vpop.f32.mrb[0].mxu0
      %v3807 = vpop.f32.mrb[0].mxu0
      %v3808 = vadd.f32 0.0, %v3807
      %v3809 = vpop.f32.mrb[0].mxu0
      %3810 = vmatprep.mubr.bf16.mxu0 0
      %3811 = vmatmul.mubr.bf16.gmra.mrb[0].mxu0 %v3661
      %v3812 = vpop.f32.mrb[0].mxu0
      %v3813 = vadd.f32 0.0, %v3812
      %v3814 = vpop.f32.mrb[0].mxu0
      %v3815 = vpop.f32.mrb[0].mxu0
      %v3816 = vadd.f32 0.0, %v3815
      %v3817 = vpop.f32.mrb[0].mxu0
      %3818 = vmatprep.mubr.bf16.mxu0 0
      %3819 = vmatmul.mubr.bf16.gmra.mrb[0].mxu0 %v3664
      %v3820 = vpop.f32.mrb[0].mxu0
      %v3821 = vadd.f32 0.0, %v3820
      %v3822 = vpop.f32.mrb[0].mxu0
      %v3823 = vpop.f32.mrb[0].mxu0
      %v3824 = vadd.f32 0.0, %v3823
      %v3825 = vpop.f32.mrb[0].mxu0
      %3826 = vdwg.mxu0
      %3827 = vrot.lane.b32.xlu0 %v417, 96
      %v3828 = vpop.permute.xlu0 %3827
      %3829 = vrot.lane.b32.xlu0 %v418, 96
      %v3830 = vpop.permute.xlu0 %3829
      %3831 = vrot.lane.b32.xlu0 %v419, 96
      %v3832 = vpop.permute.xlu0 %3831
      %3833 = vrot.lane.b32.xlu0 %v420, 96
      %v3834 = vpop.permute.xlu0 %3833
      %3835 = vrot.lane.b32.xlu0 %v421, 96
      %v3836 = vpop.permute.xlu0 %3835
      %3837 = vrot.lane.b32.xlu0 %v422, 96
      %v3838 = vpop.permute.xlu0 %3837
      %3839 = vrot.lane.b32.xlu0 %v423, 96
      %v3840 = vpop.permute.xlu0 %3839
      %3841 = vrot.lane.b32.xlu0 %v424, 96
      %v3842 = vpop.permute.xlu0 %3841
      %3843 = vrot.lane.b32.xlu0 %v425, 96
      %v3844 = vpop.permute.xlu0 %3843
      %3845 = vrot.lane.b32.xlu0 %v426, 96
      %v3846 = vpop.permute.xlu0 %3845
      %3847 = vrot.lane.b32.xlu0 %v427, 96
      %v3848 = vpop.permute.xlu0 %3847
      %3849 = vrot.lane.b32.xlu0 %v428, 96
      %v3850 = vpop.permute.xlu0 %3849
      %3851 = vrot.lane.b32.xlu0 %v429, 96
      %v3852 = vpop.permute.xlu0 %3851
      %3853 = vrot.lane.b32.xlu0 %v430, 96
      %v3854 = vpop.permute.xlu0 %3853
      %3855 = vrot.lane.b32.xlu0 %v431, 96
      %v3856 = vpop.permute.xlu0 %3855
      %3857 = vrot.lane.b32.xlu0 %v432, 96
      %v3858 = vpop.permute.xlu0 %3857
      %3859 = vrot.lane.b32.xlu0 %v449, 96
      %v3860 = vpop.permute.xlu0 %3859
      %3861 = vrot.lane.b32.xlu0 %v450, 96
      %v3862 = vpop.permute.xlu0 %3861
      %3863 = vrot.lane.b32.xlu0 %v451, 96
      %v3864 = vpop.permute.xlu0 %3863
      %3865 = vrot.lane.b32.xlu0 %v452, 96
      %v3866 = vpop.permute.xlu0 %3865
      %v3868 = vsel %vm453, %v3828, 0
      %v3871 = vsel %vm453, %v3830, 0
      %v3874 = vsel %vm453, %v3832, 0
      %v3877 = vsel %vm453, %v3834, 0
      %v3880 = vsel %vm453, %v3836, 0
      %v3883 = vsel %vm453, %v3838, 0
      %v3886 = vsel %vm453, %v3840, 0
      %v3889 = vsel %vm453, %v3842, 0
      %v3892 = vsel %vm453, %v3844, 0
      %v3895 = vsel %vm453, %v3846, 0
      %v3898 = vsel %vm453, %v3848, 0
      %v3901 = vsel %vm453, %v3850, 0
      %v3904 = vsel %vm453, %v3852, 0
      %v3907 = vsel %vm453, %v3854, 0
      %v3910 = vsel %vm453, %v3856, 0
      %v3913 = vsel %vm453, %v3858, 0
      %v3916 = vsel %vm453, %v3860, 0
      %v3919 = vsel %vm453, %v3862, 0
      %v3922 = vsel %vm453, %v3864, 0
      %v3925 = vsel %vm453, %v3866, 0
      %3927 = vmatprep.subr.bf16.mxu0 0
      %3928 = vmatpush1.bf16.xpose.msra.mxu0 %v3916
      %3929 = vmatprep.subr.bf16.mxu0 0
      %3930 = vmatpush1.bf16.xpose.msra.mxu0 %v3919
      %3931 = vmatprep.subr.bf16.mxu0 0
      %3932 = vmatpush1.bf16.xpose.msra.mxu0 %v3922
      %3933 = vmatprep.subr.bf16.mxu0 0
      %3934 = vmatpush1.bf16.xpose.msra.mxu0 %v3925
      %3935 = vmatprep.subr.bf16.mxu0 0
      %3936 = vmatpush1.bf16.xpose.msra.mxu0 0
      %3937 = vmatprep.subr.bf16.mxu0 0
      %3938 = vmatpush1.bf16.xpose.msra.mxu0 0
      %3939 = vmatprep.subr.bf16.mxu0 0
      %3940 = vmatpush1.bf16.xpose.msra.mxu0 0
      %3941 = vmatprep.subr.bf16.mxu0 0
      %3942 = vmatpush1.bf16.xpose.msra.mxu0 0
      %3943 = vmatprep.subr.bf16.mxu0 0
      %3944 = vmatpush1.bf16.xpose.msra.mxu0 0
      %3945 = vmatprep.subr.bf16.mxu0 0
      %3946 = vmatpush1.bf16.xpose.msra.mxu0 0
      %3947 = vmatprep.subr.bf16.mxu0 0
      %3948 = vmatpush1.bf16.xpose.msra.mxu0 0
      %3949 = vmatprep.subr.bf16.mxu0 0
      %3950 = vmatpush1.bf16.xpose.msra.mxu0 0
      %3951 = vmatprep.subr.bf16.mxu0 0
      %3952 = vmatpush1.bf16.xpose.msra.mxu0 0
      %3953 = vmatprep.subr.bf16.mxu0 0
      %3954 = vmatpush1.bf16.xpose.msra.mxu0 0
      %3955 = vmatprep.subr.bf16.mxu0 0
      %3956 = vmatpush1.bf16.xpose.msra.mxu0 0
      %3957 = vmatprep.subr.bf16.mxu0 0
      %3958 = vmatpush1.bf16.xpose.msra.mxu0 0
      %3959 = vmatprep.mubr.bf16.mxu0 0
      %3960 = vmatmul.mubr.bf16.gmra.mrb[0].mxu0 %v3868
      %v3961 = vpop.f32.mrb[0].mxu0
      %v3962 = vadd.f32 0.0, %v3961
      %v3963 = vpop.f32.mrb[0].mxu0
      %v3964 = vpop.f32.mrb[0].mxu0
      %v3965 = vadd.f32 0.0, %v3964
      %v3966 = vpop.f32.mrb[0].mxu0
      %3967 = vmatprep.mubr.bf16.mxu0 0
      %3968 = vmatmul.mubr.bf16.gmra.mrb[0].mxu0 %v3871
      %v3969 = vpop.f32.mrb[0].mxu0
      %v3970 = vadd.f32 0.0, %v3969
      %v3971 = vpop.f32.mrb[0].mxu0
      %v3972 = vpop.f32.mrb[0].mxu0
      %v3973 = vadd.f32 0.0, %v3972
      %v3974 = vpop.f32.mrb[0].mxu0
      %3975 = vmatprep.mubr.bf16.mxu0 0
      %3976 = vmatmul.mubr.bf16.gmra.mrb[0].mxu0 %v3874
      %v3977 = vpop.f32.mrb[0].mxu0
      %v3978 = vadd.f32 0.0, %v3977
      %v3979 = vpop.f32.mrb[0].mxu0
      %v3980 = vpop.f32.mrb[0].mxu0
      %v3981 = vadd.f32 0.0, %v3980
      %v3982 = vpop.f32.mrb[0].mxu0
      %3983 = vmatprep.mubr.bf16.mxu0 0
      %3984 = vmatmul.mubr.bf16.gmra.mrb[0].mxu0 %v3877
      %v3985 = vpop.f32.mrb[0].mxu0
      %v3986 = vadd.f32 0.0, %v3985
      %v3987 = vpop.f32.mrb[0].mxu0
      %v3988 = vpop.f32.mrb[0].mxu0
      %v3989 = vadd.f32 0.0, %v3988
      %v3990 = vpop.f32.mrb[0].mxu0
      %3991 = vmatprep.mubr.bf16.mxu0 0
      %3992 = vmatmul.mubr.bf16.gmra.mrb[0].mxu0 %v3880
      %v3993 = vpop.f32.mrb[0].mxu0
      %v3994 = vadd.f32 0.0, %v3993
      %v3995 = vpop.f32.mrb[0].mxu0
      %v3996 = vpop.f32.mrb[0].mxu0
      %v3997 = vadd.f32 0.0, %v3996
      %v3998 = vpop.f32.mrb[0].mxu0
      %3999 = vmatprep.mubr.bf16.mxu0 0
      %4000 = vmatmul.mubr.bf16.gmra.mrb[0].mxu0 %v3883
      %v4001 = vpop.f32.mrb[0].mxu0
      %v4002 = vadd.f32 0.0, %v4001
      %v4003 = vpop.f32.mrb[0].mxu0
      %v4004 = vpop.f32.mrb[0].mxu0
      %v4005 = vadd.f32 0.0, %v4004
      %v4006 = vpop.f32.mrb[0].mxu0
      %4007 = vmatprep.mubr.bf16.mxu0 0
      %4008 = vmatmul.mubr.bf16.gmra.mrb[0].mxu0 %v3886
      %v4009 = vpop.f32.mrb[0].mxu0
      %v4010 = vadd.f32 0.0, %v4009
      %v4011 = vpop.f32.mrb[0].mxu0
      %v4012 = vpop.f32.mrb[0].mxu0
      %v4013 = vadd.f32 0.0, %v4012
      %v4014 = vpop.f32.mrb[0].mxu0
      %4015 = vmatprep.mubr.bf16.mxu0 0
      %4016 = vmatmul.mubr.bf16.gmra.mrb[0].mxu0 %v3889
      %v4017 = vpop.f32.mrb[0].mxu0
      %v4018 = vadd.f32 0.0, %v4017
      %v4019 = vpop.f32.mrb[0].mxu0
      %v4020 = vpop.f32.mrb[0].mxu0
      %v4021 = vadd.f32 0.0, %v4020
      %v4022 = vpop.f32.mrb[0].mxu0
      %4023 = vmatprep.mubr.bf16.mxu0 0
      %4024 = vmatmul.mubr.bf16.gmra.mrb[0].mxu0 %v3892
      %v4025 = vpop.f32.mrb[0].mxu0
      %v4026 = vadd.f32 0.0, %v4025
      %v4027 = vpop.f32.mrb[0].mxu0
      %v4028 = vpop.f32.mrb[0].mxu0
      %v4029 = vadd.f32 0.0, %v4028
      %v4030 = vpop.f32.mrb[0].mxu0
      %4031 = vmatprep.mubr.bf16.mxu0 0
      %4032 = vmatmul.mubr.bf16.gmra.mrb[0].mxu0 %v3895
      %v4033 = vpop.f32.mrb[0].mxu0
      %v4034 = vadd.f32 0.0, %v4033
      %v4035 = vpop.f32.mrb[0].mxu0
      %v4036 = vpop.f32.mrb[0].mxu0
      %v4037 = vadd.f32 0.0, %v4036
      %v4038 = vpop.f32.mrb[0].mxu0
      %4039 = vmatprep.mubr.bf16.mxu0 0
      %4040 = vmatmul.mubr.bf16.gmra.mrb[0].mxu0 %v3898
      %v4041 = vpop.f32.mrb[0].mxu0
      %v4042 = vadd.f32 0.0, %v4041
      %v4043 = vpop.f32.mrb[0].mxu0
      %v4044 = vpop.f32.mrb[0].mxu0
      %v4045 = vadd.f32 0.0, %v4044
      %v4046 = vpop.f32.mrb[0].mxu0
      %4047 = vmatprep.mubr.bf16.mxu0 0
      %4048 = vmatmul.mubr.bf16.gmra.mrb[0].mxu0 %v3901
      %v4049 = vpop.f32.mrb[0].mxu0
      %v4050 = vadd.f32 0.0, %v4049
      %v4051 = vpop.f32.mrb[0].mxu0
      %v4052 = vpop.f32.mrb[0].mxu0
      %v4053 = vadd.f32 0.0, %v4052
      %v4054 = vpop.f32.mrb[0].mxu0
      %4055 = vmatprep.mubr.bf16.mxu0 0
      %4056 = vmatmul.mubr.bf16.gmra.mrb[0].mxu0 %v3904
      %v4057 = vpop.f32.mrb[0].mxu0
      %v4058 = vadd.f32 0.0, %v4057
      %v4059 = vpop.f32.mrb[0].mxu0
      %v4060 = vpop.f32.mrb[0].mxu0
      %v4061 = vadd.f32 0.0, %v4060
      %v4062 = vpop.f32.mrb[0].mxu0
      %4063 = vmatprep.mubr.bf16.mxu0 0
      %4064 = vmatmul.mubr.bf16.gmra.mrb[0].mxu0 %v3907
      %v4065 = vpop.f32.mrb[0].mxu0
      %v4066 = vadd.f32 0.0, %v4065
      %v4067 = vpop.f32.mrb[0].mxu0
      %v4068 = vpop.f32.mrb[0].mxu0
      %v4069 = vadd.f32 0.0, %v4068
      %v4070 = vpop.f32.mrb[0].mxu0
      %4071 = vmatprep.mubr.bf16.mxu0 0
      %4072 = vmatmul.mubr.bf16.gmra.mrb[0].mxu0 %v3910
      %v4073 = vpop.f32.mrb[0].mxu0
      %v4074 = vadd.f32 0.0, %v4073
      %v4075 = vpop.f32.mrb[0].mxu0
      %v4076 = vpop.f32.mrb[0].mxu0
      %v4077 = vadd.f32 0.0, %v4076
      %v4078 = vpop.f32.mrb[0].mxu0
      %4079 = vmatprep.mubr.bf16.mxu0 0
      %4080 = vmatmul.mubr.bf16.gmra.mrb[0].mxu0 %v3913
      %v4081 = vpop.f32.mrb[0].mxu0
      %v4082 = vadd.f32 0.0, %v4081
      %v4083 = vpop.f32.mrb[0].mxu0
      %v4084 = vpop.f32.mrb[0].mxu0
      %v4085 = vadd.f32 0.0, %v4084
      %v4086 = vpop.f32.mrb[0].mxu0
      %4087 = vdwg.mxu0
      %v4088 = vsel %vm675, %v3962, -inf
      %4089 = vmax.xlane.f32.xlu0 %v4088
      %v4090 = vpop.xlane.xlu0 %4089
      %v4091 = vsel %vm675, %v3965, -inf
      %4092 = vmax.xlane.f32.xlu0 %v4091
      %v4093 = vpop.xlane.xlu0 %4092
      %v4094 = vsel %vm675, %v3970, -inf
      %4095 = vmax.xlane.f32.xlu0 %v4094
      %v4096 = vpop.xlane.xlu0 %4095
      %v4097 = vsel %vm675, %v3973, -inf
      %4098 = vmax.xlane.f32.xlu0 %v4097
      %v4099 = vpop.xlane.xlu0 %4098
      %v4100 = vsel %vm675, %v3978, -inf
      %4101 = vmax.xlane.f32.xlu0 %v4100
      %v4102 = vpop.xlane.xlu0 %4101
      %v4103 = vsel %vm675, %v3981, -inf
      %4104 = vmax.xlane.f32.xlu0 %v4103
      %v4105 = vpop.xlane.xlu0 %4104
      %v4106 = vsel %vm675, %v3986, -inf
      %4107 = vmax.xlane.f32.xlu0 %v4106
      %v4108 = vpop.xlane.xlu0 %4107
      %v4109 = vsel %vm675, %v3989, -inf
      %4110 = vmax.xlane.f32.xlu0 %v4109
      %v4111 = vpop.xlane.xlu0 %4110
      %v4112 = vsel %vm675, %v3994, -inf
      %4113 = vmax.xlane.f32.xlu0 %v4112
      %v4114 = vpop.xlane.xlu0 %4113
      %v4115 = vsel %vm675, %v3997, -inf
      %4116 = vmax.xlane.f32.xlu0 %v4115
      %v4117 = vpop.xlane.xlu0 %4116
      %v4118 = vsel %vm675, %v4002, -inf
      %4119 = vmax.xlane.f32.xlu0 %v4118
      %v4120 = vpop.xlane.xlu0 %4119
      %v4121 = vsel %vm675, %v4005, -inf
      %4122 = vmax.xlane.f32.xlu0 %v4121
      %v4123 = vpop.xlane.xlu0 %4122
      %v4124 = vsel %vm675, %v4010, -inf
      %4125 = vmax.xlane.f32.xlu0 %v4124
      %v4126 = vpop.xlane.xlu0 %4125
      %v4127 = vsel %vm675, %v4013, -inf
      %4128 = vmax.xlane.f32.xlu0 %v4127
      %v4129 = vpop.xlane.xlu0 %4128
      %v4130 = vsel %vm675, %v4018, -inf
      %4131 = vmax.xlane.f32.xlu0 %v4130
      %v4132 = vpop.xlane.xlu0 %4131
      %v4133 = vsel %vm675, %v4021, -inf
      %4134 = vmax.xlane.f32.xlu0 %v4133
      %v4135 = vpop.xlane.xlu0 %4134
      %v4136 = vsel %vm675, %v4026, -inf
      %4137 = vmax.xlane.f32.xlu0 %v4136
      %v4138 = vpop.xlane.xlu0 %4137
      %v4139 = vsel %vm675, %v4029, -inf
      %4140 = vmax.xlane.f32.xlu0 %v4139
      %v4141 = vpop.xlane.xlu0 %4140
      %v4142 = vsel %vm675, %v4034, -inf
      %4143 = vmax.xlane.f32.xlu0 %v4142
      %v4144 = vpop.xlane.xlu0 %4143
      %v4145 = vsel %vm675, %v4037, -inf
      %4146 = vmax.xlane.f32.xlu0 %v4145
      %v4147 = vpop.xlane.xlu0 %4146
      %v4148 = vsel %vm675, %v4042, -inf
      %4149 = vmax.xlane.f32.xlu0 %v4148
      %v4150 = vpop.xlane.xlu0 %4149
      %v4151 = vsel %vm675, %v4045, -inf
      %4152 = vmax.xlane.f32.xlu0 %v4151
      %v4153 = vpop.xlane.xlu0 %4152
      %v4154 = vsel %vm675, %v4050, -inf
      %4155 = vmax.xlane.f32.xlu0 %v4154
      %v4156 = vpop.xlane.xlu0 %4155
      %v4157 = vsel %vm675, %v4053, -inf
      %4158 = vmax.xlane.f32.xlu0 %v4157
      %v4159 = vpop.xlane.xlu0 %4158
      %v4160 = vsel %vm675, %v4058, -inf
      %4161 = vmax.xlane.f32.xlu0 %v4160
      %v4162 = vpop.xlane.xlu0 %4161
      %v4163 = vsel %vm675, %v4061, -inf
      %4164 = vmax.xlane.f32.xlu0 %v4163
      %v4165 = vpop.xlane.xlu0 %4164
      %v4166 = vsel %vm675, %v4066, -inf
      %4167 = vmax.xlane.f32.xlu0 %v4166
      %v4168 = vpop.xlane.xlu0 %4167
      %v4169 = vsel %vm675, %v4069, -inf
      %4170 = vmax.xlane.f32.xlu0 %v4169
      %v4171 = vpop.xlane.xlu0 %4170
      %v4172 = vsel %vm675, %v4074, -inf
      %4173 = vmax.xlane.f32.xlu0 %v4172
      %v4174 = vpop.xlane.xlu0 %4173
      %v4175 = vsel %vm675, %v4077, -inf
      %4176 = vmax.xlane.f32.xlu0 %v4175
      %v4177 = vpop.xlane.xlu0 %4176
      %v4178 = vsel %vm675, %v4082, -inf
      %4179 = vmax.xlane.f32.xlu0 %v4178
      %v4180 = vpop.xlane.xlu0 %4179
      %v4181 = vsel %vm675, %v4085, -inf
      %4182 = vmax.xlane.f32.xlu0 %v4181
      %v4183 = vpop.xlane.xlu0 %4182
      %v4184 = vsub.f32 %v3962, %v4090
      %v4185 = vsub.f32 %v3965, %v4093
      %v4186 = vsub.f32 %v3970, %v4096
      %v4187 = vsub.f32 %v3973, %v4099
      %v4188 = vsub.f32 %v3978, %v4102
      %v4189 = vsub.f32 %v3981, %v4105
      %v4190 = vsub.f32 %v3986, %v4108
      %v4191 = vsub.f32 %v3989, %v4111
      %v4192 = vsub.f32 %v3994, %v4114
      %v4193 = vsub.f32 %v3997, %v4117
      %v4194 = vsub.f32 %v4002, %v4120
      %v4195 = vsub.f32 %v4005, %v4123
      %v4196 = vsub.f32 %v4010, %v4126
      %v4197 = vsub.f32 %v4013, %v4129
      %v4198 = vsub.f32 %v4018, %v4132
      %v4199 = vsub.f32 %v4021, %v4135
      %v4200 = vsub.f32 %v4026, %v4138
      %v4201 = vsub.f32 %v4029, %v4141
      %v4202 = vsub.f32 %v4034, %v4144
      %v4203 = vsub.f32 %v4037, %v4147
      %v4204 = vsub.f32 %v4042, %v4150
      %v4205 = vsub.f32 %v4045, %v4153
      %v4206 = vsub.f32 %v4050, %v4156
      %v4207 = vsub.f32 %v4053, %v4159
      %v4208 = vsub.f32 %v4058, %v4162
      %v4209 = vsub.f32 %v4061, %v4165
      %v4210 = vsub.f32 %v4066, %v4168
      %v4211 = vsub.f32 %v4069, %v4171
      %v4212 = vsub.f32 %v4074, %v4174
      %v4213 = vsub.f32 %v4077, %v4177
      %v4214 = vsub.f32 %v4082, %v4180
      %v4215 = vsub.f32 %v4085, %v4183
      %v4216 = vmul.f32 %v4184, 1.442695
      %v4217 = vpow.pop %v4216
      %v4218 = vmul.f32 %v4185, 1.442695
      %v4219 = vpow.pop %v4218
      %v4220 = vmul.f32 %v4186, 1.442695
      %v4221 = vpow.pop %v4220
      %v4222 = vmul.f32 %v4187, 1.442695
      %v4223 = vpow.pop %v4222
      %v4224 = vmul.f32 %v4188, 1.442695
      %v4225 = vpow.pop %v4224
      %v4226 = vmul.f32 %v4189, 1.442695
      %v4227 = vpow.pop %v4226
      %v4228 = vmul.f32 %v4190, 1.442695
      %v4229 = vpow.pop %v4228
      %v4230 = vmul.f32 %v4191, 1.442695
      %v4231 = vpow.pop %v4230
      %v4232 = vmul.f32 %v4192, 1.442695
      %v4233 = vpow.pop %v4232
      %v4234 = vmul.f32 %v4193, 1.442695
      %v4235 = vpow.pop %v4234
      %v4236 = vmul.f32 %v4194, 1.442695
      %v4237 = vpow.pop %v4236
      %v4238 = vmul.f32 %v4195, 1.442695
      %v4239 = vpow.pop %v4238
      %v4240 = vmul.f32 %v4196, 1.442695
      %v4241 = vpow.pop %v4240
      %v4242 = vmul.f32 %v4197, 1.442695
      %v4243 = vpow.pop %v4242
      %v4244 = vmul.f32 %v4198, 1.442695
      %v4245 = vpow.pop %v4244
      %v4246 = vmul.f32 %v4199, 1.442695
      %v4247 = vpow.pop %v4246
      %v4248 = vmul.f32 %v4200, 1.442695
      %v4249 = vpow.pop %v4248
      %v4250 = vmul.f32 %v4201, 1.442695
      %v4251 = vpow.pop %v4250
      %v4252 = vmul.f32 %v4202, 1.442695
      %v4253 = vpow.pop %v4252
      %v4254 = vmul.f32 %v4203, 1.442695
      %v4255 = vpow.pop %v4254
      %v4256 = vmul.f32 %v4204, 1.442695
      %v4257 = vpow.pop %v4256
      %v4258 = vmul.f32 %v4205, 1.442695
      %v4259 = vpow.pop %v4258
      %v4260 = vmul.f32 %v4206, 1.442695
      %v4261 = vpow.pop %v4260
      %v4262 = vmul.f32 %v4207, 1.442695
      %v4263 = vpow.pop %v4262
      %v4264 = vmul.f32 %v4208, 1.442695
      %v4265 = vpow.pop %v4264
      %v4266 = vmul.f32 %v4209, 1.442695
      %v4267 = vpow.pop %v4266
      %v4268 = vmul.f32 %v4210, 1.442695
      %v4269 = vpow.pop %v4268
      %v4270 = vmul.f32 %v4211, 1.442695
      %v4271 = vpow.pop %v4270
      %v4272 = vmul.f32 %v4212, 1.442695
      %v4273 = vpow.pop %v4272
      %v4274 = vmul.f32 %v4213, 1.442695
      %v4275 = vpow.pop %v4274
      %v4276 = vmul.f32 %v4214, 1.442695
      %v4277 = vpow.pop %v4276
      %v4278 = vmul.f32 %v4215, 1.442695
      %v4279 = vpow.pop %v4278
      %v4280 = vsel %vm675, %v4217, 0.0
      %4281 = vadd.xlane.f32.xlu0 %v4280
      %v4282 = vpop.xlane.xlu0 %4281
      %v4283 = vsel %vm675, %v4219, 0.0
      %4284 = vadd.xlane.f32.xlu0 %v4283
      %v4285 = vpop.xlane.xlu0 %4284
      %v4286 = vsel %vm675, %v4221, 0.0
      %4287 = vadd.xlane.f32.xlu0 %v4286
      %v4288 = vpop.xlane.xlu0 %4287
      %v4289 = vsel %vm675, %v4223, 0.0
      %4290 = vadd.xlane.f32.xlu0 %v4289
      %v4291 = vpop.xlane.xlu0 %4290
      %v4292 = vsel %vm675, %v4225, 0.0
      %4293 = vadd.xlane.f32.xlu0 %v4292
      %v4294 = vpop.xlane.xlu0 %4293
      %v4295 = vsel %vm675, %v4227, 0.0
      %4296 = vadd.xlane.f32.xlu0 %v4295
      %v4297 = vpop.xlane.xlu0 %4296
      %v4298 = vsel %vm675, %v4229, 0.0
      %4299 = vadd.xlane.f32.xlu0 %v4298
      %v4300 = vpop.xlane.xlu0 %4299
      %v4301 = vsel %vm675, %v4231, 0.0
      %4302 = vadd.xlane.f32.xlu0 %v4301
      %v4303 = vpop.xlane.xlu0 %4302
      %v4304 = vsel %vm675, %v4233, 0.0
      %4305 = vadd.xlane.f32.xlu0 %v4304
      %v4306 = vpop.xlane.xlu0 %4305
      %v4307 = vsel %vm675, %v4235, 0.0
      %4308 = vadd.xlane.f32.xlu0 %v4307
      %v4309 = vpop.xlane.xlu0 %4308
      %v4310 = vsel %vm675, %v4237, 0.0
      %4311 = vadd.xlane.f32.xlu0 %v4310
      %v4312 = vpop.xlane.xlu0 %4311
      %v4313 = vsel %vm675, %v4239, 0.0
      %4314 = vadd.xlane.f32.xlu0 %v4313
      %v4315 = vpop.xlane.xlu0 %4314
      %v4316 = vsel %vm675, %v4241, 0.0
      %4317 = vadd.xlane.f32.xlu0 %v4316
      %v4318 = vpop.xlane.xlu0 %4317
      %v4319 = vsel %vm675, %v4243, 0.0
      %4320 = vadd.xlane.f32.xlu0 %v4319
      %v4321 = vpop.xlane.xlu0 %4320
      %v4322 = vsel %vm675, %v4245, 0.0
      %4323 = vadd.xlane.f32.xlu0 %v4322
      %v4324 = vpop.xlane.xlu0 %4323
      %v4325 = vsel %vm675, %v4247, 0.0
      %4326 = vadd.xlane.f32.xlu0 %v4325
      %v4327 = vpop.xlane.xlu0 %4326
      %v4328 = vsel %vm675, %v4249, 0.0
      %4329 = vadd.xlane.f32.xlu0 %v4328
      %v4330 = vpop.xlane.xlu0 %4329
      %v4331 = vsel %vm675, %v4251, 0.0
      %4332 = vadd.xlane.f32.xlu0 %v4331
      %v4333 = vpop.xlane.xlu0 %4332
      %v4334 = vsel %vm675, %v4253, 0.0
      %4335 = vadd.xlane.f32.xlu0 %v4334
      %v4336 = vpop.xlane.xlu0 %4335
      %v4337 = vsel %vm675, %v4255, 0.0
      %4338 = vadd.xlane.f32.xlu0 %v4337
      %v4339 = vpop.xlane.xlu0 %4338
      %v4340 = vsel %vm675, %v4257, 0.0
      %4341 = vadd.xlane.f32.xlu0 %v4340
      %v4342 = vpop.xlane.xlu0 %4341
      %v4343 = vsel %vm675, %v4259, 0.0
      %4344 = vadd.xlane.f32.xlu0 %v4343
      %v4345 = vpop.xlane.xlu0 %4344
      %v4346 = vsel %vm675, %v4261, 0.0
      %4347 = vadd.xlane.f32.xlu0 %v4346
      %v4348 = vpop.xlane.xlu0 %4347
      %v4349 = vsel %vm675, %v4263, 0.0
      %4350 = vadd.xlane.f32.xlu0 %v4349
      %v4351 = vpop.xlane.xlu0 %4350
      %v4352 = vsel %vm675, %v4265, 0.0
      %4353 = vadd.xlane.f32.xlu0 %v4352
      %v4354 = vpop.xlane.xlu0 %4353
      %v4355 = vsel %vm675, %v4267, 0.0
      %4356 = vadd.xlane.f32.xlu0 %v4355
      %v4357 = vpop.xlane.xlu0 %4356
      %v4358 = vsel %vm675, %v4269, 0.0
      %4359 = vadd.xlane.f32.xlu0 %v4358
      %v4360 = vpop.xlane.xlu0 %4359
      %v4361 = vsel %vm675, %v4271, 0.0
      %4362 = vadd.xlane.f32.xlu0 %v4361
      %v4363 = vpop.xlane.xlu0 %4362
      %v4364 = vsel %vm675, %v4273, 0.0
      %4365 = vadd.xlane.f32.xlu0 %v4364
      %v4366 = vpop.xlane.xlu0 %4365
      %v4367 = vsel %vm675, %v4275, 0.0
      %4368 = vadd.xlane.f32.xlu0 %v4367
      %v4369 = vpop.xlane.xlu0 %4368
      %v4370 = vsel %vm675, %v4277, 0.0
      %4371 = vadd.xlane.f32.xlu0 %v4370
      %v4372 = vpop.xlane.xlu0 %4371
      %v4373 = vsel %vm675, %v4279, 0.0
      %4374 = vadd.xlane.f32.xlu0 %v4373
      %v4375 = vpop.xlane.xlu0 %4374
      %v4376 = vrcp.pop %v4282
      %v4377 = vrcp.pop %v4285
      %v4378 = vrcp.pop %v4288
      %v4379 = vrcp.pop %v4291
      %v4380 = vrcp.pop %v4294
      %v4381 = vrcp.pop %v4297
      %v4382 = vrcp.pop %v4300
      %v4383 = vrcp.pop %v4303
      %v4384 = vrcp.pop %v4306
      %v4385 = vrcp.pop %v4309
      %v4386 = vrcp.pop %v4312
      %v4387 = vrcp.pop %v4315
      %v4388 = vrcp.pop %v4318
      %v4389 = vrcp.pop %v4321
      %v4390 = vrcp.pop %v4324
      %v4391 = vrcp.pop %v4327
      %v4392 = vrcp.pop %v4330
      %v4393 = vrcp.pop %v4333
      %v4394 = vrcp.pop %v4336
      %v4395 = vrcp.pop %v4339
      %v4396 = vrcp.pop %v4342
      %v4397 = vrcp.pop %v4345
      %v4398 = vrcp.pop %v4348
      %v4399 = vrcp.pop %v4351
      %v4400 = vrcp.pop %v4354
      %v4401 = vrcp.pop %v4357
      %v4402 = vrcp.pop %v4360
      %v4403 = vrcp.pop %v4363
      %v4404 = vrcp.pop %v4366
      %v4405 = vrcp.pop %v4369
      %v4406 = vrcp.pop %v4372
      %v4407 = vrcp.pop %v4375
      %v4408 = vmul.f32 %v4217, %v4376
      %v4409 = vmul.f32 %v4219, %v4377
      %v4410 = vmul.f32 %v4221, %v4378
      %v4411 = vmul.f32 %v4223, %v4379
      %v4412 = vmul.f32 %v4225, %v4380
      %v4413 = vmul.f32 %v4227, %v4381
      %v4414 = vmul.f32 %v4229, %v4382
      %v4415 = vmul.f32 %v4231, %v4383
      %v4416 = vmul.f32 %v4233, %v4384
      %v4417 = vmul.f32 %v4235, %v4385
      %v4418 = vmul.f32 %v4237, %v4386
      %v4419 = vmul.f32 %v4239, %v4387
      %v4420 = vmul.f32 %v4241, %v4388
      %v4421 = vmul.f32 %v4243, %v4389
      %v4422 = vmul.f32 %v4245, %v4390
      %v4423 = vmul.f32 %v4247, %v4391
      %v4424 = vmul.f32 %v4249, %v4392
      %v4425 = vmul.f32 %v4251, %v4393
      %v4426 = vmul.f32 %v4253, %v4394
      %v4427 = vmul.f32 %v4255, %v4395
      %v4428 = vmul.f32 %v4257, %v4396
      %v4429 = vmul.f32 %v4259, %v4397
      %v4430 = vmul.f32 %v4261, %v4398
      %v4431 = vmul.f32 %v4263, %v4399
      %v4432 = vmul.f32 %v4265, %v4400
      %v4433 = vmul.f32 %v4267, %v4401
      %v4434 = vmul.f32 %v4269, %v4402
      %v4435 = vmul.f32 %v4271, %v4403
      %v4436 = vmul.f32 %v4273, %v4404
      %v4437 = vmul.f32 %v4275, %v4405
      %v4438 = vmul.f32 %v4277, %v4406
      %v4439 = vmul.f32 %v4279, %v4407
      %v4440 = vpack.c.bf16 %v4409, %v4408
      %v4441 = vpack.c.bf16 %v4411, %v4410
      %v4442 = vpack.c.bf16 %v4413, %v4412
      %v4443 = vpack.c.bf16 %v4415, %v4414
      %v4444 = vpack.c.bf16 %v4417, %v4416
      %v4445 = vpack.c.bf16 %v4419, %v4418
      %v4446 = vpack.c.bf16 %v4421, %v4420
      %v4447 = vpack.c.bf16 %v4423, %v4422
      %v4448 = vpack.c.bf16 %v4425, %v4424
      %v4449 = vpack.c.bf16 %v4427, %v4426
      %v4450 = vpack.c.bf16 %v4429, %v4428
      %v4451 = vpack.c.bf16 %v4431, %v4430
      %v4452 = vpack.c.bf16 %v4433, %v4432
      %v4453 = vpack.c.bf16 %v4435, %v4434
      %v4454 = vpack.c.bf16 %v4437, %v4436
      %v4455 = vpack.c.bf16 %v4439, %v4438
      %4456 = vrot.lane.b32.xlu0 %v1060, 96
      %v4457 = vpop.permute.xlu0 %4456
      %4458 = vrot.lane.b32.xlu0 %v1061, 96
      %v4459 = vpop.permute.xlu0 %4458
      %4460 = vrot.lane.b32.xlu0 %v1062, 96
      %v4461 = vpop.permute.xlu0 %4460
      %4462 = vrot.lane.b32.xlu0 %v1063, 96
      %v4463 = vpop.permute.xlu0 %4462
      %v4469 = vsel %vm675, %v4440, 0
      %v4472 = vsel %vm675, %v4441, 0
      %v4475 = vsel %vm675, %v4442, 0
      %v4478 = vsel %vm675, %v4443, 0
      %v4481 = vsel %vm675, %v4444, 0
      %v4484 = vsel %vm675, %v4445, 0
      %v4487 = vsel %vm675, %v4446, 0
      %v4490 = vsel %vm675, %v4447, 0
      %v4493 = vsel %vm675, %v4448, 0
      %v4496 = vsel %vm675, %v4449, 0
      %v4499 = vsel %vm675, %v4450, 0
      %v4502 = vsel %vm675, %v4451, 0
      %v4505 = vsel %vm675, %v4452, 0
      %v4508 = vsel %vm675, %v4453, 0
      %v4511 = vsel %vm675, %v4454, 0
      %v4514 = vsel %vm675, %v4455, 0
      %4516 = vmatprep.subr.bf16.mxu0 0
      %4517 = vmatpush1.bf16.msra.mxu0 %v4457
      %4518 = vmatprep.subr.bf16.mxu0 0
      %4519 = vmatpush1.bf16.msra.mxu0 %v4459
      %4520 = vmatprep.subr.bf16.mxu0 0
      %4521 = vmatpush1.bf16.msra.mxu0 %v4461
      %4522 = vmatprep.subr.bf16.mxu0 0
      %4523 = vmatpush1.bf16.msra.mxu0 %v4463
      %4524 = vmatprep.subr.bf16.mxu0 0
      %4525 = vmatpush1.bf16.msra.mxu0 0
      %4526 = vmatprep.subr.bf16.mxu0 0
      %4527 = vmatpush1.bf16.msra.mxu0 0
      %4528 = vmatprep.subr.bf16.mxu0 0
      %4529 = vmatpush1.bf16.msra.mxu0 0
      %4530 = vmatprep.subr.bf16.mxu0 0
      %4531 = vmatpush1.bf16.msra.mxu0 0
      %4532 = vmatprep.subr.bf16.mxu0 0
      %4533 = vmatpush1.bf16.msra.mxu0 0
      %4534 = vmatprep.subr.bf16.mxu0 0
      %4535 = vmatpush1.bf16.msra.mxu0 0
      %4536 = vmatprep.subr.bf16.mxu0 0
      %4537 = vmatpush1.bf16.msra.mxu0 0
      %4538 = vmatprep.subr.bf16.mxu0 0
      %4539 = vmatpush1.bf16.msra.mxu0 0
      %4540 = vmatprep.subr.bf16.mxu0 0
      %4541 = vmatpush1.bf16.msra.mxu0 0
      %4542 = vmatprep.subr.bf16.mxu0 0
      %4543 = vmatpush1.bf16.msra.mxu0 0
      %4544 = vmatprep.subr.bf16.mxu0 0
      %4545 = vmatpush1.bf16.msra.mxu0 0
      %4546 = vmatprep.subr.bf16.mxu0 0
      %4547 = vmatpush1.bf16.msra.mxu0 0
      %4548 = vmatprep.mubr.bf16.mxu0 0
      %4549 = vmatmul.mubr.bf16.gmra.mrb[0].mxu0 %v4469
      %v4550 = vpop.f32.mrb[0].mxu0
      %v4551 = vadd.f32 0.0, %v4550
      %v4552 = vpop.f32.mrb[0].mxu0
      %v4553 = vpop.f32.mrb[0].mxu0
      %v4554 = vadd.f32 0.0, %v4553
      %v4555 = vpop.f32.mrb[0].mxu0
      %4556 = vmatprep.mubr.bf16.mxu0 0
      %4557 = vmatmul.mubr.bf16.gmra.mrb[0].mxu0 %v4472
      %v4558 = vpop.f32.mrb[0].mxu0
      %v4559 = vadd.f32 0.0, %v4558
      %v4560 = vpop.f32.mrb[0].mxu0
      %v4561 = vpop.f32.mrb[0].mxu0
      %v4562 = vadd.f32 0.0, %v4561
      %v4563 = vpop.f32.mrb[0].mxu0
      %4564 = vmatprep.mubr.bf16.mxu0 0
      %4565 = vmatmul.mubr.bf16.gmra.mrb[0].mxu0 %v4475
      %v4566 = vpop.f32.mrb[0].mxu0
      %v4567 = vadd.f32 0.0, %v4566
      %v4568 = vpop.f32.mrb[0].mxu0
      %v4569 = vpop.f32.mrb[0].mxu0
      %v4570 = vadd.f32 0.0, %v4569
      %v4571 = vpop.f32.mrb[0].mxu0
      %4572 = vmatprep.mubr.bf16.mxu0 0
      %4573 = vmatmul.mubr.bf16.gmra.mrb[0].mxu0 %v4478
      %v4574 = vpop.f32.mrb[0].mxu0
      %v4575 = vadd.f32 0.0, %v4574
      %v4576 = vpop.f32.mrb[0].mxu0
      %v4577 = vpop.f32.mrb[0].mxu0
      %v4578 = vadd.f32 0.0, %v4577
      %v4579 = vpop.f32.mrb[0].mxu0
      %4580 = vmatprep.mubr.bf16.mxu0 0
      %4581 = vmatmul.mubr.bf16.gmra.mrb[0].mxu0 %v4481
      %v4582 = vpop.f32.mrb[0].mxu0
      %v4583 = vadd.f32 0.0, %v4582
      %v4584 = vpop.f32.mrb[0].mxu0
      %v4585 = vpop.f32.mrb[0].mxu0
      %v4586 = vadd.f32 0.0, %v4585
      %v4587 = vpop.f32.mrb[0].mxu0
      %4588 = vmatprep.mubr.bf16.mxu0 0
      %4589 = vmatmul.mubr.bf16.gmra.mrb[0].mxu0 %v4484
      %v4590 = vpop.f32.mrb[0].mxu0
      %v4591 = vadd.f32 0.0, %v4590
      %v4592 = vpop.f32.mrb[0].mxu0
      %v4593 = vpop.f32.mrb[0].mxu0
      %v4594 = vadd.f32 0.0, %v4593
      %v4595 = vpop.f32.mrb[0].mxu0
      %4596 = vmatprep.mubr.bf16.mxu0 0
      %4597 = vmatmul.mubr.bf16.gmra.mrb[0].mxu0 %v4487
      %v4598 = vpop.f32.mrb[0].mxu0
      %v4599 = vadd.f32 0.0, %v4598
      %v4600 = vpop.f32.mrb[0].mxu0
      %v4601 = vpop.f32.mrb[0].mxu0
      %v4602 = vadd.f32 0.0, %v4601
      %v4603 = vpop.f32.mrb[0].mxu0
      %4604 = vmatprep.mubr.bf16.mxu0 0
      %4605 = vmatmul.mubr.bf16.gmra.mrb[0].mxu0 %v4490
      %v4606 = vpop.f32.mrb[0].mxu0
      %v4607 = vadd.f32 0.0, %v4606
      %v4608 = vpop.f32.mrb[0].mxu0
      %v4609 = vpop.f32.mrb[0].mxu0
      %v4610 = vadd.f32 0.0, %v4609
      %v4611 = vpop.f32.mrb[0].mxu0
      %4612 = vmatprep.mubr.bf16.mxu0 0
      %4613 = vmatmul.mubr.bf16.gmra.mrb[0].mxu0 %v4493
      %v4614 = vpop.f32.mrb[0].mxu0
      %v4615 = vadd.f32 0.0, %v4614
      %v4616 = vpop.f32.mrb[0].mxu0
      %v4617 = vpop.f32.mrb[0].mxu0
      %v4618 = vadd.f32 0.0, %v4617
      %v4619 = vpop.f32.mrb[0].mxu0
      %4620 = vmatprep.mubr.bf16.mxu0 0
      %4621 = vmatmul.mubr.bf16.gmra.mrb[0].mxu0 %v4496
      %v4622 = vpop.f32.mrb[0].mxu0
      %v4623 = vadd.f32 0.0, %v4622
      %v4624 = vpop.f32.mrb[0].mxu0
      %v4625 = vpop.f32.mrb[0].mxu0
      %v4626 = vadd.f32 0.0, %v4625
      %v4627 = vpop.f32.mrb[0].mxu0
      %4628 = vmatprep.mubr.bf16.mxu0 0
      %4629 = vmatmul.mubr.bf16.gmra.mrb[0].mxu0 %v4499
      %v4630 = vpop.f32.mrb[0].mxu0
      %v4631 = vadd.f32 0.0, %v4630
      %v4632 = vpop.f32.mrb[0].mxu0
      %v4633 = vpop.f32.mrb[0].mxu0
      %v4634 = vadd.f32 0.0, %v4633
      %v4635 = vpop.f32.mrb[0].mxu0
      %4636 = vmatprep.mubr.bf16.mxu0 0
      %4637 = vmatmul.mubr.bf16.gmra.mrb[0].mxu0 %v4502
      %v4638 = vpop.f32.mrb[0].mxu0
      %v4639 = vadd.f32 0.0, %v4638
      %v4640 = vpop.f32.mrb[0].mxu0
      %v4641 = vpop.f32.mrb[0].mxu0
      %v4642 = vadd.f32 0.0, %v4641
      %v4643 = vpop.f32.mrb[0].mxu0
      %4644 = vmatprep.mubr.bf16.mxu0 0
      %4645 = vmatmul.mubr.bf16.gmra.mrb[0].mxu0 %v4505
      %v4646 = vpop.f32.mrb[0].mxu0
      %v4647 = vadd.f32 0.0, %v4646
      %v4648 = vpop.f32.mrb[0].mxu0
      %v4649 = vpop.f32.mrb[0].mxu0
      %v4650 = vadd.f32 0.0, %v4649
      %v4651 = vpop.f32.mrb[0].mxu0
      %4652 = vmatprep.mubr.bf16.mxu0 0
      %4653 = vmatmul.mubr.bf16.gmra.mrb[0].mxu0 %v4508
      %v4654 = vpop.f32.mrb[0].mxu0
      %v4655 = vadd.f32 0.0, %v4654
      %v4656 = vpop.f32.mrb[0].mxu0
      %v4657 = vpop.f32.mrb[0].mxu0
      %v4658 = vadd.f32 0.0, %v4657
      %v4659 = vpop.f32.mrb[0].mxu0
      %4660 = vmatprep.mubr.bf16.mxu0 0
      %4661 = vmatmul.mubr.bf16.gmra.mrb[0].mxu0 %v4511
      %v4662 = vpop.f32.mrb[0].mxu0
      %v4663 = vadd.f32 0.0, %v4662
      %v4664 = vpop.f32.mrb[0].mxu0
      %v4665 = vpop.f32.mrb[0].mxu0
      %v4666 = vadd.f32 0.0, %v4665
      %v4667 = vpop.f32.mrb[0].mxu0
      %4668 = vmatprep.mubr.bf16.mxu0 0
      %4669 = vmatmul.mubr.bf16.gmra.mrb[0].mxu0 %v4514
      %v4670 = vpop.f32.mrb[0].mxu0
      %v4671 = vadd.f32 0.0, %v4670
      %v4672 = vpop.f32.mrb[0].mxu0
      %v4673 = vpop.f32.mrb[0].mxu0
      %v4674 = vadd.f32 0.0, %v4673
      %v4675 = vpop.f32.mrb[0].mxu0
      %4676 = vdwg.mxu0
      %4677 = vrot.lane.b32.xlu0 %v417, 88
      %v4678 = vpop.permute.xlu0 %4677
      %4679 = vrot.lane.b32.xlu0 %v418, 88
      %v4680 = vpop.permute.xlu0 %4679
      %4681 = vrot.lane.b32.xlu0 %v419, 88
      %v4682 = vpop.permute.xlu0 %4681
      %4683 = vrot.lane.b32.xlu0 %v420, 88
      %v4684 = vpop.permute.xlu0 %4683
      %4685 = vrot.lane.b32.xlu0 %v421, 88
      %v4686 = vpop.permute.xlu0 %4685
      %4687 = vrot.lane.b32.xlu0 %v422, 88
      %v4688 = vpop.permute.xlu0 %4687
      %4689 = vrot.lane.b32.xlu0 %v423, 88
      %v4690 = vpop.permute.xlu0 %4689
      %4691 = vrot.lane.b32.xlu0 %v424, 88
      %v4692 = vpop.permute.xlu0 %4691
      %4693 = vrot.lane.b32.xlu0 %v425, 88
      %v4694 = vpop.permute.xlu0 %4693
      %4695 = vrot.lane.b32.xlu0 %v426, 88
      %v4696 = vpop.permute.xlu0 %4695
      %4697 = vrot.lane.b32.xlu0 %v427, 88
      %v4698 = vpop.permute.xlu0 %4697
      %4699 = vrot.lane.b32.xlu0 %v428, 88
      %v4700 = vpop.permute.xlu0 %4699
      %4701 = vrot.lane.b32.xlu0 %v429, 88
      %v4702 = vpop.permute.xlu0 %4701
      %4703 = vrot.lane.b32.xlu0 %v430, 88
      %v4704 = vpop.permute.xlu0 %4703
      %4705 = vrot.lane.b32.xlu0 %v431, 88
      %v4706 = vpop.permute.xlu0 %4705
      %4707 = vrot.lane.b32.xlu0 %v432, 88
      %v4708 = vpop.permute.xlu0 %4707
      %4709 = vrot.lane.b32.xlu0 %v449, 88
      %v4710 = vpop.permute.xlu0 %4709
      %4711 = vrot.lane.b32.xlu0 %v450, 88
      %v4712 = vpop.permute.xlu0 %4711
      %4713 = vrot.lane.b32.xlu0 %v451, 88
      %v4714 = vpop.permute.xlu0 %4713
      %4715 = vrot.lane.b32.xlu0 %v452, 88
      %v4716 = vpop.permute.xlu0 %4715
      %v4718 = vsel %vm453, %v4678, 0
      %v4721 = vsel %vm453, %v4680, 0
      %v4724 = vsel %vm453, %v4682, 0
      %v4727 = vsel %vm453, %v4684, 0
      %v4730 = vsel %vm453, %v4686, 0
      %v4733 = vsel %vm453, %v4688, 0
      %v4736 = vsel %vm453, %v4690, 0
      %v4739 = vsel %vm453, %v4692, 0
      %v4742 = vsel %vm453, %v4694, 0
      %v4745 = vsel %vm453, %v4696, 0
      %v4748 = vsel %vm453, %v4698, 0
      %v4751 = vsel %vm453, %v4700, 0
      %v4754 = vsel %vm453, %v4702, 0
      %v4757 = vsel %vm453, %v4704, 0
      %v4760 = vsel %vm453, %v4706, 0
      %v4763 = vsel %vm453, %v4708, 0
      %v4766 = vsel %vm453, %v4710, 0
      %v4769 = vsel %vm453, %v4712, 0
      %v4772 = vsel %vm453, %v4714, 0
      %v4775 = vsel %vm453, %v4716, 0
      %4777 = vmatprep.subr.bf16.mxu0 0
      %4778 = vmatpush1.bf16.xpose.msra.mxu0 %v4766
      %4779 = vmatprep.subr.bf16.mxu0 0
      %4780 = vmatpush1.bf16.xpose.msra.mxu0 %v4769
      %4781 = vmatprep.subr.bf16.mxu0 0
      %4782 = vmatpush1.bf16.xpose.msra.mxu0 %v4772
      %4783 = vmatprep.subr.bf16.mxu0 0
      %4784 = vmatpush1.bf16.xpose.msra.mxu0 %v4775
      %4785 = vmatprep.subr.bf16.mxu0 0
      %4786 = vmatpush1.bf16.xpose.msra.mxu0 0
      %4787 = vmatprep.subr.bf16.mxu0 0
      %4788 = vmatpush1.bf16.xpose.msra.mxu0 0
      %4789 = vmatprep.subr.bf16.mxu0 0
      %4790 = vmatpush1.bf16.xpose.msra.mxu0 0
      %4791 = vmatprep.subr.bf16.mxu0 0
      %4792 = vmatpush1.bf16.xpose.msra.mxu0 0
      %4793 = vmatprep.subr.bf16.mxu0 0
      %4794 = vmatpush1.bf16.xpose.msra.mxu0 0
      %4795 = vmatprep.subr.bf16.mxu0 0
      %4796 = vmatpush1.bf16.xpose.msra.mxu0 0
      %4797 = vmatprep.subr.bf16.mxu0 0
      %4798 = vmatpush1.bf16.xpose.msra.mxu0 0
      %4799 = vmatprep.subr.bf16.mxu0 0
      %4800 = vmatpush1.bf16.xpose.msra.mxu0 0
      %4801 = vmatprep.subr.bf16.mxu0 0
      %4802 = vmatpush1.bf16.xpose.msra.mxu0 0
      %4803 = vmatprep.subr.bf16.mxu0 0
      %4804 = vmatpush1.bf16.xpose.msra.mxu0 0
      %4805 = vmatprep.subr.bf16.mxu0 0
      %4806 = vmatpush1.bf16.xpose.msra.mxu0 0
      %4807 = vmatprep.subr.bf16.mxu0 0
      %4808 = vmatpush1.bf16.xpose.msra.mxu0 0
      %4809 = vmatprep.mubr.bf16.mxu0 0
      %4810 = vmatmul.mubr.bf16.gmra.mrb[0].mxu0 %v4718
      %v4811 = vpop.f32.mrb[0].mxu0
      %v4812 = vadd.f32 0.0, %v4811
      %v4813 = vpop.f32.mrb[0].mxu0
      %v4814 = vpop.f32.mrb[0].mxu0
      %v4815 = vadd.f32 0.0, %v4814
      %v4816 = vpop.f32.mrb[0].mxu0
      %4817 = vmatprep.mubr.bf16.mxu0 0
      %4818 = vmatmul.mubr.bf16.gmra.mrb[0].mxu0 %v4721
      %v4819 = vpop.f32.mrb[0].mxu0
      %v4820 = vadd.f32 0.0, %v4819
      %v4821 = vpop.f32.mrb[0].mxu0
      %v4822 = vpop.f32.mrb[0].mxu0
      %v4823 = vadd.f32 0.0, %v4822
      %v4824 = vpop.f32.mrb[0].mxu0
      %4825 = vmatprep.mubr.bf16.mxu0 0
      %4826 = vmatmul.mubr.bf16.gmra.mrb[0].mxu0 %v4724
      %v4827 = vpop.f32.mrb[0].mxu0
      %v4828 = vadd.f32 0.0, %v4827
      %v4829 = vpop.f32.mrb[0].mxu0
      %v4830 = vpop.f32.mrb[0].mxu0
      %v4831 = vadd.f32 0.0, %v4830
      %v4832 = vpop.f32.mrb[0].mxu0
      %4833 = vmatprep.mubr.bf16.mxu0 0
      %4834 = vmatmul.mubr.bf16.gmra.mrb[0].mxu0 %v4727
      %v4835 = vpop.f32.mrb[0].mxu0
      %v4836 = vadd.f32 0.0, %v4835
      %v4837 = vpop.f32.mrb[0].mxu0
      %v4838 = vpop.f32.mrb[0].mxu0
      %v4839 = vadd.f32 0.0, %v4838
      %v4840 = vpop.f32.mrb[0].mxu0
      %4841 = vmatprep.mubr.bf16.mxu0 0
      %4842 = vmatmul.mubr.bf16.gmra.mrb[0].mxu0 %v4730
      %v4843 = vpop.f32.mrb[0].mxu0
      %v4844 = vadd.f32 0.0, %v4843
      %v4845 = vpop.f32.mrb[0].mxu0
      %v4846 = vpop.f32.mrb[0].mxu0
      %v4847 = vadd.f32 0.0, %v4846
      %v4848 = vpop.f32.mrb[0].mxu0
      %4849 = vmatprep.mubr.bf16.mxu0 0
      %4850 = vmatmul.mubr.bf16.gmra.mrb[0].mxu0 %v4733
      %v4851 = vpop.f32.mrb[0].mxu0
      %v4852 = vadd.f32 0.0, %v4851
      %v4853 = vpop.f32.mrb[0].mxu0
      %v4854 = vpop.f32.mrb[0].mxu0
      %v4855 = vadd.f32 0.0, %v4854
      %v4856 = vpop.f32.mrb[0].mxu0
      %4857 = vmatprep.mubr.bf16.mxu0 0
      %4858 = vmatmul.mubr.bf16.gmra.mrb[0].mxu0 %v4736
      %v4859 = vpop.f32.mrb[0].mxu0
      %v4860 = vadd.f32 0.0, %v4859
      %v4861 = vpop.f32.mrb[0].mxu0
      %v4862 = vpop.f32.mrb[0].mxu0
      %v4863 = vadd.f32 0.0, %v4862
      %v4864 = vpop.f32.mrb[0].mxu0
      %4865 = vmatprep.mubr.bf16.mxu0 0
      %4866 = vmatmul.mubr.bf16.gmra.mrb[0].mxu0 %v4739
      %v4867 = vpop.f32.mrb[0].mxu0
      %v4868 = vadd.f32 0.0, %v4867
      %v4869 = vpop.f32.mrb[0].mxu0
      %v4870 = vpop.f32.mrb[0].mxu0
      %v4871 = vadd.f32 0.0, %v4870
      %v4872 = vpop.f32.mrb[0].mxu0
      %4873 = vmatprep.mubr.bf16.mxu0 0
      %4874 = vmatmul.mubr.bf16.gmra.mrb[0].mxu0 %v4742
      %v4875 = vpop.f32.mrb[0].mxu0
      %v4876 = vadd.f32 0.0, %v4875
      %v4877 = vpop.f32.mrb[0].mxu0
      %v4878 = vpop.f32.mrb[0].mxu0
      %v4879 = vadd.f32 0.0, %v4878
      %v4880 = vpop.f32.mrb[0].mxu0
      %4881 = vmatprep.mubr.bf16.mxu0 0
      %4882 = vmatmul.mubr.bf16.gmra.mrb[0].mxu0 %v4745
      %v4883 = vpop.f32.mrb[0].mxu0
      %v4884 = vadd.f32 0.0, %v4883
      %v4885 = vpop.f32.mrb[0].mxu0
      %v4886 = vpop.f32.mrb[0].mxu0
      %v4887 = vadd.f32 0.0, %v4886
      %v4888 = vpop.f32.mrb[0].mxu0
      %4889 = vmatprep.mubr.bf16.mxu0 0
      %4890 = vmatmul.mubr.bf16.gmra.mrb[0].mxu0 %v4748
      %v4891 = vpop.f32.mrb[0].mxu0
      %v4892 = vadd.f32 0.0, %v4891
      %v4893 = vpop.f32.mrb[0].mxu0
      %v4894 = vpop.f32.mrb[0].mxu0
      %v4895 = vadd.f32 0.0, %v4894
      %v4896 = vpop.f32.mrb[0].mxu0
      %4897 = vmatprep.mubr.bf16.mxu0 0
      %4898 = vmatmul.mubr.bf16.gmra.mrb[0].mxu0 %v4751
      %v4899 = vpop.f32.mrb[0].mxu0
      %v4900 = vadd.f32 0.0, %v4899
      %v4901 = vpop.f32.mrb[0].mxu0
      %v4902 = vpop.f32.mrb[0].mxu0
      %v4903 = vadd.f32 0.0, %v4902
      %v4904 = vpop.f32.mrb[0].mxu0
      %4905 = vmatprep.mubr.bf16.mxu0 0
      %4906 = vmatmul.mubr.bf16.gmra.mrb[0].mxu0 %v4754
      %v4907 = vpop.f32.mrb[0].mxu0
      %v4908 = vadd.f32 0.0, %v4907
      %v4909 = vpop.f32.mrb[0].mxu0
      %v4910 = vpop.f32.mrb[0].mxu0
      %v4911 = vadd.f32 0.0, %v4910
      %v4912 = vpop.f32.mrb[0].mxu0
      %4913 = vmatprep.mubr.bf16.mxu0 0
      %4914 = vmatmul.mubr.bf16.gmra.mrb[0].mxu0 %v4757
      %v4915 = vpop.f32.mrb[0].mxu0
      %v4916 = vadd.f32 0.0, %v4915
      %v4917 = vpop.f32.mrb[0].mxu0
      %v4918 = vpop.f32.mrb[0].mxu0
      %v4919 = vadd.f32 0.0, %v4918
      %v4920 = vpop.f32.mrb[0].mxu0
      %4921 = vmatprep.mubr.bf16.mxu0 0
      %4922 = vmatmul.mubr.bf16.gmra.mrb[0].mxu0 %v4760
      %v4923 = vpop.f32.mrb[0].mxu0
      %v4924 = vadd.f32 0.0, %v4923
      %v4925 = vpop.f32.mrb[0].mxu0
      %v4926 = vpop.f32.mrb[0].mxu0
      %v4927 = vadd.f32 0.0, %v4926
      %v4928 = vpop.f32.mrb[0].mxu0
      %4929 = vmatprep.mubr.bf16.mxu0 0
      %4930 = vmatmul.mubr.bf16.gmra.mrb[0].mxu0 %v4763
      %v4931 = vpop.f32.mrb[0].mxu0
      %v4932 = vadd.f32 0.0, %v4931
      %v4933 = vpop.f32.mrb[0].mxu0
      %v4934 = vpop.f32.mrb[0].mxu0
      %v4935 = vadd.f32 0.0, %v4934
      %v4936 = vpop.f32.mrb[0].mxu0
      %4937 = vdwg.mxu0
      %v4938 = vsel %vm675, %v4812, -inf
      %4939 = vmax.xlane.f32.xlu0 %v4938
      %v4940 = vpop.xlane.xlu0 %4939
      %v4941 = vsel %vm675, %v4815, -inf
      %4942 = vmax.xlane.f32.xlu0 %v4941
      %v4943 = vpop.xlane.xlu0 %4942
      %v4944 = vsel %vm675, %v4820, -inf
      %4945 = vmax.xlane.f32.xlu0 %v4944
      %v4946 = vpop.xlane.xlu0 %4945
      %v4947 = vsel %vm675, %v4823, -inf
      %4948 = vmax.xlane.f32.xlu0 %v4947
      %v4949 = vpop.xlane.xlu0 %4948
      %v4950 = vsel %vm675, %v4828, -inf
      %4951 = vmax.xlane.f32.xlu0 %v4950
      %v4952 = vpop.xlane.xlu0 %4951
      %v4953 = vsel %vm675, %v4831, -inf
      %4954 = vmax.xlane.f32.xlu0 %v4953
      %v4955 = vpop.xlane.xlu0 %4954
      %v4956 = vsel %vm675, %v4836, -inf
      %4957 = vmax.xlane.f32.xlu0 %v4956
      %v4958 = vpop.xlane.xlu0 %4957
      %v4959 = vsel %vm675, %v4839, -inf
      %4960 = vmax.xlane.f32.xlu0 %v4959
      %v4961 = vpop.xlane.xlu0 %4960
      %v4962 = vsel %vm675, %v4844, -inf
      %4963 = vmax.xlane.f32.xlu0 %v4962
      %v4964 = vpop.xlane.xlu0 %4963
      %v4965 = vsel %vm675, %v4847, -inf
      %4966 = vmax.xlane.f32.xlu0 %v4965
      %v4967 = vpop.xlane.xlu0 %4966
      %v4968 = vsel %vm675, %v4852, -inf
      %4969 = vmax.xlane.f32.xlu0 %v4968
      %v4970 = vpop.xlane.xlu0 %4969
      %v4971 = vsel %vm675, %v4855, -inf
      %4972 = vmax.xlane.f32.xlu0 %v4971
      %v4973 = vpop.xlane.xlu0 %4972
      %v4974 = vsel %vm675, %v4860, -inf
      %4975 = vmax.xlane.f32.xlu0 %v4974
      %v4976 = vpop.xlane.xlu0 %4975
      %v4977 = vsel %vm675, %v4863, -inf
      %4978 = vmax.xlane.f32.xlu0 %v4977
      %v4979 = vpop.xlane.xlu0 %4978
      %v4980 = vsel %vm675, %v4868, -inf
      %4981 = vmax.xlane.f32.xlu0 %v4980
      %v4982 = vpop.xlane.xlu0 %4981
      %v4983 = vsel %vm675, %v4871, -inf
      %4984 = vmax.xlane.f32.xlu0 %v4983
      %v4985 = vpop.xlane.xlu0 %4984
      %v4986 = vsel %vm675, %v4876, -inf
      %4987 = vmax.xlane.f32.xlu0 %v4986
      %v4988 = vpop.xlane.xlu0 %4987
      %v4989 = vsel %vm675, %v4879, -inf
      %4990 = vmax.xlane.f32.xlu0 %v4989
      %v4991 = vpop.xlane.xlu0 %4990
      %v4992 = vsel %vm675, %v4884, -inf
      %4993 = vmax.xlane.f32.xlu0 %v4992
      %v4994 = vpop.xlane.xlu0 %4993
      %v4995 = vsel %vm675, %v4887, -inf
      %4996 = vmax.xlane.f32.xlu0 %v4995
      %v4997 = vpop.xlane.xlu0 %4996
      %v4998 = vsel %vm675, %v4892, -inf
      %4999 = vmax.xlane.f32.xlu0 %v4998
      %v5000 = vpop.xlane.xlu0 %4999
      %v5001 = vsel %vm675, %v4895, -inf
      %5002 = vmax.xlane.f32.xlu0 %v5001
      %v5003 = vpop.xlane.xlu0 %5002
      %v5004 = vsel %vm675, %v4900, -inf
      %5005 = vmax.xlane.f32.xlu0 %v5004
      %v5006 = vpop.xlane.xlu0 %5005
      %v5007 = vsel %vm675, %v4903, -inf
      %5008 = vmax.xlane.f32.xlu0 %v5007
      %v5009 = vpop.xlane.xlu0 %5008
      %v5010 = vsel %vm675, %v4908, -inf
      %5011 = vmax.xlane.f32.xlu0 %v5010
      %v5012 = vpop.xlane.xlu0 %5011
      %v5013 = vsel %vm675, %v4911, -inf
      %5014 = vmax.xlane.f32.xlu0 %v5013
      %v5015 = vpop.xlane.xlu0 %5014
      %v5016 = vsel %vm675, %v4916, -inf
      %5017 = vmax.xlane.f32.xlu0 %v5016
      %v5018 = vpop.xlane.xlu0 %5017
      %v5019 = vsel %vm675, %v4919, -inf
      %5020 = vmax.xlane.f32.xlu0 %v5019
      %v5021 = vpop.xlane.xlu0 %5020
      %v5022 = vsel %vm675, %v4924, -inf
      %5023 = vmax.xlane.f32.xlu0 %v5022
      %v5024 = vpop.xlane.xlu0 %5023
      %v5025 = vsel %vm675, %v4927, -inf
      %5026 = vmax.xlane.f32.xlu0 %v5025
      %v5027 = vpop.xlane.xlu0 %5026
      %v5028 = vsel %vm675, %v4932, -inf
      %5029 = vmax.xlane.f32.xlu0 %v5028
      %v5030 = vpop.xlane.xlu0 %5029
      %v5031 = vsel %vm675, %v4935, -inf
      %5032 = vmax.xlane.f32.xlu0 %v5031
      %v5033 = vpop.xlane.xlu0 %5032
      %v5034 = vsub.f32 %v4812, %v4940
      %v5035 = vsub.f32 %v4815, %v4943
      %v5036 = vsub.f32 %v4820, %v4946
      %v5037 = vsub.f32 %v4823, %v4949
      %v5038 = vsub.f32 %v4828, %v4952
      %v5039 = vsub.f32 %v4831, %v4955
      %v5040 = vsub.f32 %v4836, %v4958
      %v5041 = vsub.f32 %v4839, %v4961
      %v5042 = vsub.f32 %v4844, %v4964
      %v5043 = vsub.f32 %v4847, %v4967
      %v5044 = vsub.f32 %v4852, %v4970
      %v5045 = vsub.f32 %v4855, %v4973
      %v5046 = vsub.f32 %v4860, %v4976
      %v5047 = vsub.f32 %v4863, %v4979
      %v5048 = vsub.f32 %v4868, %v4982
      %v5049 = vsub.f32 %v4871, %v4985
      %v5050 = vsub.f32 %v4876, %v4988
      %v5051 = vsub.f32 %v4879, %v4991
      %v5052 = vsub.f32 %v4884, %v4994
      %v5053 = vsub.f32 %v4887, %v4997
      %v5054 = vsub.f32 %v4892, %v5000
      %v5055 = vsub.f32 %v4895, %v5003
      %v5056 = vsub.f32 %v4900, %v5006
      %v5057 = vsub.f32 %v4903, %v5009
      %v5058 = vsub.f32 %v4908, %v5012
      %v5059 = vsub.f32 %v4911, %v5015
      %v5060 = vsub.f32 %v4916, %v5018
      %v5061 = vsub.f32 %v4919, %v5021
      %v5062 = vsub.f32 %v4924, %v5024
      %v5063 = vsub.f32 %v4927, %v5027
      %v5064 = vsub.f32 %v4932, %v5030
      %v5065 = vsub.f32 %v4935, %v5033
      %v5066 = vmul.f32 %v5034, 1.442695
      %v5067 = vpow.pop %v5066
      %v5068 = vmul.f32 %v5035, 1.442695
      %v5069 = vpow.pop %v5068
      %v5070 = vmul.f32 %v5036, 1.442695
      %v5071 = vpow.pop %v5070
      %v5072 = vmul.f32 %v5037, 1.442695
      %v5073 = vpow.pop %v5072
      %v5074 = vmul.f32 %v5038, 1.442695
      %v5075 = vpow.pop %v5074
      %v5076 = vmul.f32 %v5039, 1.442695
      %v5077 = vpow.pop %v5076
      %v5078 = vmul.f32 %v5040, 1.442695
      %v5079 = vpow.pop %v5078
      %v5080 = vmul.f32 %v5041, 1.442695
      %v5081 = vpow.pop %v5080
      %v5082 = vmul.f32 %v5042, 1.442695
      %v5083 = vpow.pop %v5082
      %v5084 = vmul.f32 %v5043, 1.442695
      %v5085 = vpow.pop %v5084
      %v5086 = vmul.f32 %v5044, 1.442695
      %v5087 = vpow.pop %v5086
      %v5088 = vmul.f32 %v5045, 1.442695
      %v5089 = vpow.pop %v5088
      %v5090 = vmul.f32 %v5046, 1.442695
      %v5091 = vpow.pop %v5090
      %v5092 = vmul.f32 %v5047, 1.442695
      %v5093 = vpow.pop %v5092
      %v5094 = vmul.f32 %v5048, 1.442695
      %v5095 = vpow.pop %v5094
      %v5096 = vmul.f32 %v5049, 1.442695
      %v5097 = vpow.pop %v5096
      %v5098 = vmul.f32 %v5050, 1.442695
      %v5099 = vpow.pop %v5098
      %v5100 = vmul.f32 %v5051, 1.442695
      %v5101 = vpow.pop %v5100
      %v5102 = vmul.f32 %v5052, 1.442695
      %v5103 = vpow.pop %v5102
      %v5104 = vmul.f32 %v5053, 1.442695
      %v5105 = vpow.pop %v5104
      %v5106 = vmul.f32 %v5054, 1.442695
      %v5107 = vpow.pop %v5106
      %v5108 = vmul.f32 %v5055, 1.442695
      %v5109 = vpow.pop %v5108
      %v5110 = vmul.f32 %v5056, 1.442695
      %v5111 = vpow.pop %v5110
      %v5112 = vmul.f32 %v5057, 1.442695
      %v5113 = vpow.pop %v5112
      %v5114 = vmul.f32 %v5058, 1.442695
      %v5115 = vpow.pop %v5114
      %v5116 = vmul.f32 %v5059, 1.442695
      %v5117 = vpow.pop %v5116
      %v5118 = vmul.f32 %v5060, 1.442695
      %v5119 = vpow.pop %v5118
      %v5120 = vmul.f32 %v5061, 1.442695
      %v5121 = vpow.pop %v5120
      %v5122 = vmul.f32 %v5062, 1.442695
      %v5123 = vpow.pop %v5122
      %v5124 = vmul.f32 %v5063, 1.442695
      %v5125 = vpow.pop %v5124
      %v5126 = vmul.f32 %v5064, 1.442695
      %v5127 = vpow.pop %v5126
      %v5128 = vmul.f32 %v5065, 1.442695
      %v5129 = vpow.pop %v5128
      %v5130 = vsel %vm675, %v5067, 0.0
      %5131 = vadd.xlane.f32.xlu0 %v5130
      %v5132 = vpop.xlane.xlu0 %5131
      %v5133 = vsel %vm675, %v5069, 0.0
      %5134 = vadd.xlane.f32.xlu0 %v5133
      %v5135 = vpop.xlane.xlu0 %5134
      %v5136 = vsel %vm675, %v5071, 0.0
      %5137 = vadd.xlane.f32.xlu0 %v5136
      %v5138 = vpop.xlane.xlu0 %5137
      %v5139 = vsel %vm675, %v5073, 0.0
      %5140 = vadd.xlane.f32.xlu0 %v5139
      %v5141 = vpop.xlane.xlu0 %5140
      %v5142 = vsel %vm675, %v5075, 0.0
      %5143 = vadd.xlane.f32.xlu0 %v5142
      %v5144 = vpop.xlane.xlu0 %5143
      %v5145 = vsel %vm675, %v5077, 0.0
      %5146 = vadd.xlane.f32.xlu0 %v5145
      %v5147 = vpop.xlane.xlu0 %5146
      %v5148 = vsel %vm675, %v5079, 0.0
      %5149 = vadd.xlane.f32.xlu0 %v5148
      %v5150 = vpop.xlane.xlu0 %5149
      %v5151 = vsel %vm675, %v5081, 0.0
      %5152 = vadd.xlane.f32.xlu0 %v5151
      %v5153 = vpop.xlane.xlu0 %5152
      %v5154 = vsel %vm675, %v5083, 0.0
      %5155 = vadd.xlane.f32.xlu0 %v5154
      %v5156 = vpop.xlane.xlu0 %5155
      %v5157 = vsel %vm675, %v5085, 0.0
      %5158 = vadd.xlane.f32.xlu0 %v5157
      %v5159 = vpop.xlane.xlu0 %5158
      %v5160 = vsel %vm675, %v5087, 0.0
      %5161 = vadd.xlane.f32.xlu0 %v5160
      %v5162 = vpop.xlane.xlu0 %5161
      %v5163 = vsel %vm675, %v5089, 0.0
      %5164 = vadd.xlane.f32.xlu0 %v5163
      %v5165 = vpop.xlane.xlu0 %5164
      %v5166 = vsel %vm675, %v5091, 0.0
      %5167 = vadd.xlane.f32.xlu0 %v5166
      %v5168 = vpop.xlane.xlu0 %5167
      %v5169 = vsel %vm675, %v5093, 0.0
      %5170 = vadd.xlane.f32.xlu0 %v5169
      %v5171 = vpop.xlane.xlu0 %5170
      %v5172 = vsel %vm675, %v5095, 0.0
      %5173 = vadd.xlane.f32.xlu0 %v5172
      %v5174 = vpop.xlane.xlu0 %5173
      %v5175 = vsel %vm675, %v5097, 0.0
      %5176 = vadd.xlane.f32.xlu0 %v5175
      %v5177 = vpop.xlane.xlu0 %5176
      %v5178 = vsel %vm675, %v5099, 0.0
      %5179 = vadd.xlane.f32.xlu0 %v5178
      %v5180 = vpop.xlane.xlu0 %5179
      %v5181 = vsel %vm675, %v5101, 0.0
      %5182 = vadd.xlane.f32.xlu0 %v5181
      %v5183 = vpop.xlane.xlu0 %5182
      %v5184 = vsel %vm675, %v5103, 0.0
      %5185 = vadd.xlane.f32.xlu0 %v5184
      %v5186 = vpop.xlane.xlu0 %5185
      %v5187 = vsel %vm675, %v5105, 0.0
      %5188 = vadd.xlane.f32.xlu0 %v5187
      %v5189 = vpop.xlane.xlu0 %5188
      %v5190 = vsel %vm675, %v5107, 0.0
      %5191 = vadd.xlane.f32.xlu0 %v5190
      %v5192 = vpop.xlane.xlu0 %5191
      %v5193 = vsel %vm675, %v5109, 0.0
      %5194 = vadd.xlane.f32.xlu0 %v5193
      %v5195 = vpop.xlane.xlu0 %5194
      %v5196 = vsel %vm675, %v5111, 0.0
      %5197 = vadd.xlane.f32.xlu0 %v5196
      %v5198 = vpop.xlane.xlu0 %5197
      %v5199 = vsel %vm675, %v5113, 0.0
      %5200 = vadd.xlane.f32.xlu0 %v5199
      %v5201 = vpop.xlane.xlu0 %5200
      %v5202 = vsel %vm675, %v5115, 0.0
      %5203 = vadd.xlane.f32.xlu0 %v5202
      %v5204 = vpop.xlane.xlu0 %5203
      %v5205 = vsel %vm675, %v5117, 0.0
      %5206 = vadd.xlane.f32.xlu0 %v5205
      %v5207 = vpop.xlane.xlu0 %5206
      %v5208 = vsel %vm675, %v5119, 0.0
      %5209 = vadd.xlane.f32.xlu0 %v5208
      %v5210 = vpop.xlane.xlu0 %5209
      %v5211 = vsel %vm675, %v5121, 0.0
      %5212 = vadd.xlane.f32.xlu0 %v5211
      %v5213 = vpop.xlane.xlu0 %5212
      %v5214 = vsel %vm675, %v5123, 0.0
      %5215 = vadd.xlane.f32.xlu0 %v5214
      %v5216 = vpop.xlane.xlu0 %5215
      %v5217 = vsel %vm675, %v5125, 0.0
      %5218 = vadd.xlane.f32.xlu0 %v5217
      %v5219 = vpop.xlane.xlu0 %5218
      %v5220 = vsel %vm675, %v5127, 0.0
      %5221 = vadd.xlane.f32.xlu0 %v5220
      %v5222 = vpop.xlane.xlu0 %5221
      %v5223 = vsel %vm675, %v5129, 0.0
      %5224 = vadd.xlane.f32.xlu0 %v5223
      %v5225 = vpop.xlane.xlu0 %5224
      %v5226 = vrcp.pop %v5132
      %v5227 = vrcp.pop %v5135
      %v5228 = vrcp.pop %v5138
      %v5229 = vrcp.pop %v5141
      %v5230 = vrcp.pop %v5144
      %v5231 = vrcp.pop %v5147
      %v5232 = vrcp.pop %v5150
      %v5233 = vrcp.pop %v5153
      %v5234 = vrcp.pop %v5156
      %v5235 = vrcp.pop %v5159
      %v5236 = vrcp.pop %v5162
      %v5237 = vrcp.pop %v5165
      %v5238 = vrcp.pop %v5168
      %v5239 = vrcp.pop %v5171
      %v5240 = vrcp.pop %v5174
      %v5241 = vrcp.pop %v5177
      %v5242 = vrcp.pop %v5180
      %v5243 = vrcp.pop %v5183
      %v5244 = vrcp.pop %v5186
      %v5245 = vrcp.pop %v5189
      %v5246 = vrcp.pop %v5192
      %v5247 = vrcp.pop %v5195
      %v5248 = vrcp.pop %v5198
      %v5249 = vrcp.pop %v5201
      %v5250 = vrcp.pop %v5204
      %v5251 = vrcp.pop %v5207
      %v5252 = vrcp.pop %v5210
      %v5253 = vrcp.pop %v5213
      %v5254 = vrcp.pop %v5216
      %v5255 = vrcp.pop %v5219
      %v5256 = vrcp.pop %v5222
      %v5257 = vrcp.pop %v5225
      %v5258 = vmul.f32 %v5067, %v5226
      %v5259 = vmul.f32 %v5069, %v5227
      %v5260 = vmul.f32 %v5071, %v5228
      %v5261 = vmul.f32 %v5073, %v5229
      %v5262 = vmul.f32 %v5075, %v5230
      %v5263 = vmul.f32 %v5077, %v5231
      %v5264 = vmul.f32 %v5079, %v5232
      %v5265 = vmul.f32 %v5081, %v5233
      %v5266 = vmul.f32 %v5083, %v5234
      %v5267 = vmul.f32 %v5085, %v5235
      %v5268 = vmul.f32 %v5087, %v5236
      %v5269 = vmul.f32 %v5089, %v5237
      %v5270 = vmul.f32 %v5091, %v5238
      %v5271 = vmul.f32 %v5093, %v5239
      %v5272 = vmul.f32 %v5095, %v5240
      %v5273 = vmul.f32 %v5097, %v5241
      %v5274 = vmul.f32 %v5099, %v5242
      %v5275 = vmul.f32 %v5101, %v5243
      %v5276 = vmul.f32 %v5103, %v5244
      %v5277 = vmul.f32 %v5105, %v5245
      %v5278 = vmul.f32 %v5107, %v5246
      %v5279 = vmul.f32 %v5109, %v5247
      %v5280 = vmul.f32 %v5111, %v5248
      %v5281 = vmul.f32 %v5113, %v5249
      %v5282 = vmul.f32 %v5115, %v5250
      %v5283 = vmul.f32 %v5117, %v5251
      %v5284 = vmul.f32 %v5119, %v5252
      %v5285 = vmul.f32 %v5121, %v5253
      %v5286 = vmul.f32 %v5123, %v5254
      %v5287 = vmul.f32 %v5125, %v5255
      %v5288 = vmul.f32 %v5127, %v5256
      %v5289 = vmul.f32 %v5129, %v5257
      %v5290 = vpack.c.bf16 %v5259, %v5258
      %v5291 = vpack.c.bf16 %v5261, %v5260
      %v5292 = vpack.c.bf16 %v5263, %v5262
      %v5293 = vpack.c.bf16 %v5265, %v5264
      %v5294 = vpack.c.bf16 %v5267, %v5266
      %v5295 = vpack.c.bf16 %v5269, %v5268
      %v5296 = vpack.c.bf16 %v5271, %v5270
      %v5297 = vpack.c.bf16 %v5273, %v5272
      %v5298 = vpack.c.bf16 %v5275, %v5274
      %v5299 = vpack.c.bf16 %v5277, %v5276
      %v5300 = vpack.c.bf16 %v5279, %v5278
      %v5301 = vpack.c.bf16 %v5281, %v5280
      %v5302 = vpack.c.bf16 %v5283, %v5282
      %v5303 = vpack.c.bf16 %v5285, %v5284
      %v5304 = vpack.c.bf16 %v5287, %v5286
      %v5305 = vpack.c.bf16 %v5289, %v5288
      %5306 = vrot.lane.b32.xlu0 %v1060, 88
      %v5307 = vpop.permute.xlu0 %5306
      %5308 = vrot.lane.b32.xlu0 %v1061, 88
      %v5309 = vpop.permute.xlu0 %5308
      %5310 = vrot.lane.b32.xlu0 %v1062, 88
      %v5311 = vpop.permute.xlu0 %5310
      %5312 = vrot.lane.b32.xlu0 %v1063, 88
      %v5313 = vpop.permute.xlu0 %5312
      %v5319 = vsel %vm675, %v5290, 0
      %v5322 = vsel %vm675, %v5291, 0
      %v5325 = vsel %vm675, %v5292, 0
      %v5328 = vsel %vm675, %v5293, 0
      %v5331 = vsel %vm675, %v5294, 0
      %v5334 = vsel %vm675, %v5295, 0
      %v5337 = vsel %vm675, %v5296, 0
      %v5340 = vsel %vm675, %v5297, 0
      %v5343 = vsel %vm675, %v5298, 0
      %v5346 = vsel %vm675, %v5299, 0
      %v5349 = vsel %vm675, %v5300, 0
      %v5352 = vsel %vm675, %v5301, 0
      %v5355 = vsel %vm675, %v5302, 0
      %v5358 = vsel %vm675, %v5303, 0
      %v5361 = vsel %vm675, %v5304, 0
      %v5364 = vsel %vm675, %v5305, 0
      %5366 = vmatprep.subr.bf16.mxu0 0
      %5367 = vmatpush1.bf16.msra.mxu0 %v5307
      %5368 = vmatprep.subr.bf16.mxu0 0
      %5369 = vmatpush1.bf16.msra.mxu0 %v5309
      %5370 = vmatprep.subr.bf16.mxu0 0
      %5371 = vmatpush1.bf16.msra.mxu0 %v5311
      %5372 = vmatprep.subr.bf16.mxu0 0
      %5373 = vmatpush1.bf16.msra.mxu0 %v5313
      %5374 = vmatprep.subr.bf16.mxu0 0
      %5375 = vmatpush1.bf16.msra.mxu0 0
      %5376 = vmatprep.subr.bf16.mxu0 0
      %5377 = vmatpush1.bf16.msra.mxu0 0
      %5378 = vmatprep.subr.bf16.mxu0 0
      %5379 = vmatpush1.bf16.msra.mxu0 0
      %5380 = vmatprep.subr.bf16.mxu0 0
      %5381 = vmatpush1.bf16.msra.mxu0 0
      %5382 = vmatprep.subr.bf16.mxu0 0
      %5383 = vmatpush1.bf16.msra.mxu0 0
      %5384 = vmatprep.subr.bf16.mxu0 0
      %5385 = vmatpush1.bf16.msra.mxu0 0
      %5386 = vmatprep.subr.bf16.mxu0 0
      %5387 = vmatpush1.bf16.msra.mxu0 0
      %5388 = vmatprep.subr.bf16.mxu0 0
      %5389 = vmatpush1.bf16.msra.mxu0 0
      %5390 = vmatprep.subr.bf16.mxu0 0
      %5391 = vmatpush1.bf16.msra.mxu0 0
      %5392 = vmatprep.subr.bf16.mxu0 0
      %5393 = vmatpush1.bf16.msra.mxu0 0
      %5394 = vmatprep.subr.bf16.mxu0 0
      %5395 = vmatpush1.bf16.msra.mxu0 0
      %5396 = vmatprep.subr.bf16.mxu0 0
      %5397 = vmatpush1.bf16.msra.mxu0 0
      %5398 = vmatprep.mubr.bf16.mxu0 0
      %5399 = vmatmul.mubr.bf16.gmra.mrb[0].mxu0 %v5319
      %v5400 = vpop.f32.mrb[0].mxu0
      %v5401 = vadd.f32 0.0, %v5400
      %v5402 = vpop.f32.mrb[0].mxu0
      %v5403 = vpop.f32.mrb[0].mxu0
      %v5404 = vadd.f32 0.0, %v5403
      %v5405 = vpop.f32.mrb[0].mxu0
      %5406 = vmatprep.mubr.bf16.mxu0 0
      %5407 = vmatmul.mubr.bf16.gmra.mrb[0].mxu0 %v5322
      %v5408 = vpop.f32.mrb[0].mxu0
      %v5409 = vadd.f32 0.0, %v5408
      %v5410 = vpop.f32.mrb[0].mxu0
      %v5411 = vpop.f32.mrb[0].mxu0
      %v5412 = vadd.f32 0.0, %v5411
      %v5413 = vpop.f32.mrb[0].mxu0
      %5414 = vmatprep.mubr.bf16.mxu0 0
      %5415 = vmatmul.mubr.bf16.gmra.mrb[0].mxu0 %v5325
      %v5416 = vpop.f32.mrb[0].mxu0
      %v5417 = vadd.f32 0.0, %v5416
      %v5418 = vpop.f32.mrb[0].mxu0
      %v5419 = vpop.f32.mrb[0].mxu0
      %v5420 = vadd.f32 0.0, %v5419
      %v5421 = vpop.f32.mrb[0].mxu0
      %5422 = vmatprep.mubr.bf16.mxu0 0
      %5423 = vmatmul.mubr.bf16.gmra.mrb[0].mxu0 %v5328
      %v5424 = vpop.f32.mrb[0].mxu0
      %v5425 = vadd.f32 0.0, %v5424
      %v5426 = vpop.f32.mrb[0].mxu0
      %v5427 = vpop.f32.mrb[0].mxu0
      %v5428 = vadd.f32 0.0, %v5427
      %v5429 = vpop.f32.mrb[0].mxu0
      %5430 = vmatprep.mubr.bf16.mxu0 0
      %5431 = vmatmul.mubr.bf16.gmra.mrb[0].mxu0 %v5331
      %v5432 = vpop.f32.mrb[0].mxu0
      %v5433 = vadd.f32 0.0, %v5432
      %v5434 = vpop.f32.mrb[0].mxu0
      %v5435 = vpop.f32.mrb[0].mxu0
      %v5436 = vadd.f32 0.0, %v5435
      %v5437 = vpop.f32.mrb[0].mxu0
      %5438 = vmatprep.mubr.bf16.mxu0 0
      %5439 = vmatmul.mubr.bf16.gmra.mrb[0].mxu0 %v5334
      %v5440 = vpop.f32.mrb[0].mxu0
      %v5441 = vadd.f32 0.0, %v5440
      %v5442 = vpop.f32.mrb[0].mxu0
      %v5443 = vpop.f32.mrb[0].mxu0
      %v5444 = vadd.f32 0.0, %v5443
      %v5445 = vpop.f32.mrb[0].mxu0
      %5446 = vmatprep.mubr.bf16.mxu0 0
      %5447 = vmatmul.mubr.bf16.gmra.mrb[0].mxu0 %v5337
      %v5448 = vpop.f32.mrb[0].mxu0
      %v5449 = vadd.f32 0.0, %v5448
      %v5450 = vpop.f32.mrb[0].mxu0
      %v5451 = vpop.f32.mrb[0].mxu0
      %v5452 = vadd.f32 0.0, %v5451
      %v5453 = vpop.f32.mrb[0].mxu0
      %5454 = vmatprep.mubr.bf16.mxu0 0
      %5455 = vmatmul.mubr.bf16.gmra.mrb[0].mxu0 %v5340
      %v5456 = vpop.f32.mrb[0].mxu0
      %v5457 = vadd.f32 0.0, %v5456
      %v5458 = vpop.f32.mrb[0].mxu0
      %v5459 = vpop.f32.mrb[0].mxu0
      %v5460 = vadd.f32 0.0, %v5459
      %v5461 = vpop.f32.mrb[0].mxu0
      %5462 = vmatprep.mubr.bf16.mxu0 0
      %5463 = vmatmul.mubr.bf16.gmra.mrb[0].mxu0 %v5343
      %v5464 = vpop.f32.mrb[0].mxu0
      %v5465 = vadd.f32 0.0, %v5464
      %v5466 = vpop.f32.mrb[0].mxu0
      %v5467 = vpop.f32.mrb[0].mxu0
      %v5468 = vadd.f32 0.0, %v5467
      %v5469 = vpop.f32.mrb[0].mxu0
      %5470 = vmatprep.mubr.bf16.mxu0 0
      %5471 = vmatmul.mubr.bf16.gmra.mrb[0].mxu0 %v5346
      %v5472 = vpop.f32.mrb[0].mxu0
      %v5473 = vadd.f32 0.0, %v5472
      %v5474 = vpop.f32.mrb[0].mxu0
      %v5475 = vpop.f32.mrb[0].mxu0
      %v5476 = vadd.f32 0.0, %v5475
      %v5477 = vpop.f32.mrb[0].mxu0
      %5478 = vmatprep.mubr.bf16.mxu0 0
      %5479 = vmatmul.mubr.bf16.gmra.mrb[0].mxu0 %v5349
      %v5480 = vpop.f32.mrb[0].mxu0
      %v5481 = vadd.f32 0.0, %v5480
      %v5482 = vpop.f32.mrb[0].mxu0
      %v5483 = vpop.f32.mrb[0].mxu0
      %v5484 = vadd.f32 0.0, %v5483
      %v5485 = vpop.f32.mrb[0].mxu0
      %5486 = vmatprep.mubr.bf16.mxu0 0
      %5487 = vmatmul.mubr.bf16.gmra.mrb[0].mxu0 %v5352
      %v5488 = vpop.f32.mrb[0].mxu0
      %v5489 = vadd.f32 0.0, %v5488
      %v5490 = vpop.f32.mrb[0].mxu0
      %v5491 = vpop.f32.mrb[0].mxu0
      %v5492 = vadd.f32 0.0, %v5491
      %v5493 = vpop.f32.mrb[0].mxu0
      %5494 = vmatprep.mubr.bf16.mxu0 0
      %5495 = vmatmul.mubr.bf16.gmra.mrb[0].mxu0 %v5355
      %v5496 = vpop.f32.mrb[0].mxu0
      %v5497 = vadd.f32 0.0, %v5496
      %v5498 = vpop.f32.mrb[0].mxu0
      %v5499 = vpop.f32.mrb[0].mxu0
      %v5500 = vadd.f32 0.0, %v5499
      %v5501 = vpop.f32.mrb[0].mxu0
      %5502 = vmatprep.mubr.bf16.mxu0 0
      %5503 = vmatmul.mubr.bf16.gmra.mrb[0].mxu0 %v5358
      %v5504 = vpop.f32.mrb[0].mxu0
      %v5505 = vadd.f32 0.0, %v5504
      %v5506 = vpop.f32.mrb[0].mxu0
      %v5507 = vpop.f32.mrb[0].mxu0
      %v5508 = vadd.f32 0.0, %v5507
      %v5509 = vpop.f32.mrb[0].mxu0
      %5510 = vmatprep.mubr.bf16.mxu0 0
      %5511 = vmatmul.mubr.bf16.gmra.mrb[0].mxu0 %v5361
      %v5512 = vpop.f32.mrb[0].mxu0
      %v5513 = vadd.f32 0.0, %v5512
      %v5514 = vpop.f32.mrb[0].mxu0
      %v5515 = vpop.f32.mrb[0].mxu0
      %v5516 = vadd.f32 0.0, %v5515
      %v5517 = vpop.f32.mrb[0].mxu0
      %5518 = vmatprep.mubr.bf16.mxu0 0
      %5519 = vmatmul.mubr.bf16.gmra.mrb[0].mxu0 %v5364
      %v5520 = vpop.f32.mrb[0].mxu0
      %v5521 = vadd.f32 0.0, %v5520
      %v5522 = vpop.f32.mrb[0].mxu0
      %v5523 = vpop.f32.mrb[0].mxu0
      %v5524 = vadd.f32 0.0, %v5523
      %v5525 = vpop.f32.mrb[0].mxu0
      %5526 = vdwg.mxu0
      %5527 = vrot.lane.b32.xlu0 %v417, 80
      %v5528 = vpop.permute.xlu0 %5527
      %5529 = vrot.lane.b32.xlu0 %v418, 80
      %v5530 = vpop.permute.xlu0 %5529
      %5531 = vrot.lane.b32.xlu0 %v419, 80
      %v5532 = vpop.permute.xlu0 %5531
      %5533 = vrot.lane.b32.xlu0 %v420, 80
      %v5534 = vpop.permute.xlu0 %5533
      %5535 = vrot.lane.b32.xlu0 %v421, 80
      %v5536 = vpop.permute.xlu0 %5535
      %5537 = vrot.lane.b32.xlu0 %v422, 80
      %v5538 = vpop.permute.xlu0 %5537
      %5539 = vrot.lane.b32.xlu0 %v423, 80
      %v5540 = vpop.permute.xlu0 %5539
      %5541 = vrot.lane.b32.xlu0 %v424, 80
      %v5542 = vpop.permute.xlu0 %5541
      %5543 = vrot.lane.b32.xlu0 %v425, 80
      %v5544 = vpop.permute.xlu0 %5543
      %5545 = vrot.lane.b32.xlu0 %v426, 80
      %v5546 = vpop.permute.xlu0 %5545
      %5547 = vrot.lane.b32.xlu0 %v427, 80
      %v5548 = vpop.permute.xlu0 %5547
      %5549 = vrot.lane.b32.xlu0 %v428, 80
      %v5550 = vpop.permute.xlu0 %5549
      %5551 = vrot.lane.b32.xlu0 %v429, 80
      %v5552 = vpop.permute.xlu0 %5551
      %5553 = vrot.lane.b32.xlu0 %v430, 80
      %v5554 = vpop.permute.xlu0 %5553
      %5555 = vrot.lane.b32.xlu0 %v431, 80
      %v5556 = vpop.permute.xlu0 %5555
      %5557 = vrot.lane.b32.xlu0 %v432, 80
      %v5558 = vpop.permute.xlu0 %5557
      %5559 = vrot.lane.b32.xlu0 %v449, 80
      %v5560 = vpop.permute.xlu0 %5559
      %5561 = vrot.lane.b32.xlu0 %v450, 80
      %v5562 = vpop.permute.xlu0 %5561
      %5563 = vrot.lane.b32.xlu0 %v451, 80
      %v5564 = vpop.permute.xlu0 %5563
      %5565 = vrot.lane.b32.xlu0 %v452, 80
      %v5566 = vpop.permute.xlu0 %5565
      %v5568 = vsel %vm453, %v5528, 0
      %v5571 = vsel %vm453, %v5530, 0
      %v5574 = vsel %vm453, %v5532, 0
      %v5577 = vsel %vm453, %v5534, 0
      %v5580 = vsel %vm453, %v5536, 0
      %v5583 = vsel %vm453, %v5538, 0
      %v5586 = vsel %vm453, %v5540, 0
      %v5589 = vsel %vm453, %v5542, 0
      %v5592 = vsel %vm453, %v5544, 0
      %v5595 = vsel %vm453, %v5546, 0
      %v5598 = vsel %vm453, %v5548, 0
      %v5601 = vsel %vm453, %v5550, 0
      %v5604 = vsel %vm453, %v5552, 0
      %v5607 = vsel %vm453, %v5554, 0
      %v5610 = vsel %vm453, %v5556, 0
      %v5613 = vsel %vm453, %v5558, 0
      %v5616 = vsel %vm453, %v5560, 0
      %v5619 = vsel %vm453, %v5562, 0
      %v5622 = vsel %vm453, %v5564, 0
      %v5625 = vsel %vm453, %v5566, 0
      %5627 = vmatprep.subr.bf16.mxu0 0
      %5628 = vmatpush1.bf16.xpose.msra.mxu0 %v5616
      %5629 = vmatprep.subr.bf16.mxu0 0
      %5630 = vmatpush1.bf16.xpose.msra.mxu0 %v5619
      %5631 = vmatprep.subr.bf16.mxu0 0
      %5632 = vmatpush1.bf16.xpose.msra.mxu0 %v5622
      %5633 = vmatprep.subr.bf16.mxu0 0
      %5634 = vmatpush1.bf16.xpose.msra.mxu0 %v5625
      %5635 = vmatprep.subr.bf16.mxu0 0
      %5636 = vmatpush1.bf16.xpose.msra.mxu0 0
      %5637 = vmatprep.subr.bf16.mxu0 0
      %5638 = vmatpush1.bf16.xpose.msra.mxu0 0
      %5639 = vmatprep.subr.bf16.mxu0 0
      %5640 = vmatpush1.bf16.xpose.msra.mxu0 0
      %5641 = vmatprep.subr.bf16.mxu0 0
      %5642 = vmatpush1.bf16.xpose.msra.mxu0 0
      %5643 = vmatprep.subr.bf16.mxu0 0
      %5644 = vmatpush1.bf16.xpose.msra.mxu0 0
      %5645 = vmatprep.subr.bf16.mxu0 0
      %5646 = vmatpush1.bf16.xpose.msra.mxu0 0
      %5647 = vmatprep.subr.bf16.mxu0 0
      %5648 = vmatpush1.bf16.xpose.msra.mxu0 0
      %5649 = vmatprep.subr.bf16.mxu0 0
      %5650 = vmatpush1.bf16.xpose.msra.mxu0 0
      %5651 = vmatprep.subr.bf16.mxu0 0
      %5652 = vmatpush1.bf16.xpose.msra.mxu0 0
      %5653 = vmatprep.subr.bf16.mxu0 0
      %5654 = vmatpush1.bf16.xpose.msra.mxu0 0
      %5655 = vmatprep.subr.bf16.mxu0 0
      %5656 = vmatpush1.bf16.xpose.msra.mxu0 0
      %5657 = vmatprep.subr.bf16.mxu0 0
      %5658 = vmatpush1.bf16.xpose.msra.mxu0 0
      %5659 = vmatprep.mubr.bf16.mxu0 0
      %5660 = vmatmul.mubr.bf16.gmra.mrb[0].mxu0 %v5568
      %v5661 = vpop.f32.mrb[0].mxu0
      %v5662 = vadd.f32 0.0, %v5661
      %v5663 = vpop.f32.mrb[0].mxu0
      %v5664 = vpop.f32.mrb[0].mxu0
      %v5665 = vadd.f32 0.0, %v5664
      %v5666 = vpop.f32.mrb[0].mxu0
      %5667 = vmatprep.mubr.bf16.mxu0 0
      %5668 = vmatmul.mubr.bf16.gmra.mrb[0].mxu0 %v5571
      %v5669 = vpop.f32.mrb[0].mxu0
      %v5670 = vadd.f32 0.0, %v5669
      %v5671 = vpop.f32.mrb[0].mxu0
      %v5672 = vpop.f32.mrb[0].mxu0
      %v5673 = vadd.f32 0.0, %v5672
      %v5674 = vpop.f32.mrb[0].mxu0
      %5675 = vmatprep.mubr.bf16.mxu0 0
      %5676 = vmatmul.mubr.bf16.gmra.mrb[0].mxu0 %v5574
      %v5677 = vpop.f32.mrb[0].mxu0
      %v5678 = vadd.f32 0.0, %v5677
      %v5679 = vpop.f32.mrb[0].mxu0
      %v5680 = vpop.f32.mrb[0].mxu0
      %v5681 = vadd.f32 0.0, %v5680
      %v5682 = vpop.f32.mrb[0].mxu0
      %5683 = vmatprep.mubr.bf16.mxu0 0
      %5684 = vmatmul.mubr.bf16.gmra.mrb[0].mxu0 %v5577
      %v5685 = vpop.f32.mrb[0].mxu0
      %v5686 = vadd.f32 0.0, %v5685
      %v5687 = vpop.f32.mrb[0].mxu0
      %v5688 = vpop.f32.mrb[0].mxu0
      %v5689 = vadd.f32 0.0, %v5688
      %v5690 = vpop.f32.mrb[0].mxu0
      %5691 = vmatprep.mubr.bf16.mxu0 0
      %5692 = vmatmul.mubr.bf16.gmra.mrb[0].mxu0 %v5580
      %v5693 = vpop.f32.mrb[0].mxu0
      %v5694 = vadd.f32 0.0, %v5693
      %v5695 = vpop.f32.mrb[0].mxu0
      %v5696 = vpop.f32.mrb[0].mxu0
      %v5697 = vadd.f32 0.0, %v5696
      %v5698 = vpop.f32.mrb[0].mxu0
      %5699 = vmatprep.mubr.bf16.mxu0 0
      %5700 = vmatmul.mubr.bf16.gmra.mrb[0].mxu0 %v5583
      %v5701 = vpop.f32.mrb[0].mxu0
      %v5702 = vadd.f32 0.0, %v5701
      %v5703 = vpop.f32.mrb[0].mxu0
      %v5704 = vpop.f32.mrb[0].mxu0
      %v5705 = vadd.f32 0.0, %v5704
      %v5706 = vpop.f32.mrb[0].mxu0
      %5707 = vmatprep.mubr.bf16.mxu0 0
      %5708 = vmatmul.mubr.bf16.gmra.mrb[0].mxu0 %v5586
      %v5709 = vpop.f32.mrb[0].mxu0
      %v5710 = vadd.f32 0.0, %v5709
      %v5711 = vpop.f32.mrb[0].mxu0
      %v5712 = vpop.f32.mrb[0].mxu0
      %v5713 = vadd.f32 0.0, %v5712
      %v5714 = vpop.f32.mrb[0].mxu0
      %5715 = vmatprep.mubr.bf16.mxu0 0
      %5716 = vmatmul.mubr.bf16.gmra.mrb[0].mxu0 %v5589
      %v5717 = vpop.f32.mrb[0].mxu0
      %v5718 = vadd.f32 0.0, %v5717
      %v5719 = vpop.f32.mrb[0].mxu0
      %v5720 = vpop.f32.mrb[0].mxu0
      %v5721 = vadd.f32 0.0, %v5720
      %v5722 = vpop.f32.mrb[0].mxu0
      %5723 = vmatprep.mubr.bf16.mxu0 0
      %5724 = vmatmul.mubr.bf16.gmra.mrb[0].mxu0 %v5592
      %v5725 = vpop.f32.mrb[0].mxu0
      %v5726 = vadd.f32 0.0, %v5725
      %v5727 = vpop.f32.mrb[0].mxu0
      %v5728 = vpop.f32.mrb[0].mxu0
      %v5729 = vadd.f32 0.0, %v5728
      %v5730 = vpop.f32.mrb[0].mxu0
      %5731 = vmatprep.mubr.bf16.mxu0 0
      %5732 = vmatmul.mubr.bf16.gmra.mrb[0].mxu0 %v5595
      %v5733 = vpop.f32.mrb[0].mxu0
      %v5734 = vadd.f32 0.0, %v5733
      %v5735 = vpop.f32.mrb[0].mxu0
      %v5736 = vpop.f32.mrb[0].mxu0
      %v5737 = vadd.f32 0.0, %v5736
      %v5738 = vpop.f32.mrb[0].mxu0
      %5739 = vmatprep.mubr.bf16.mxu0 0
      %5740 = vmatmul.mubr.bf16.gmra.mrb[0].mxu0 %v5598
      %v5741 = vpop.f32.mrb[0].mxu0
      %v5742 = vadd.f32 0.0, %v5741
      %v5743 = vpop.f32.mrb[0].mxu0
      %v5744 = vpop.f32.mrb[0].mxu0
      %v5745 = vadd.f32 0.0, %v5744
      %v5746 = vpop.f32.mrb[0].mxu0
      %5747 = vmatprep.mubr.bf16.mxu0 0
      %5748 = vmatmul.mubr.bf16.gmra.mrb[0].mxu0 %v5601
      %v5749 = vpop.f32.mrb[0].mxu0
      %v5750 = vadd.f32 0.0, %v5749
      %v5751 = vpop.f32.mrb[0].mxu0
      %v5752 = vpop.f32.mrb[0].mxu0
      %v5753 = vadd.f32 0.0, %v5752
      %v5754 = vpop.f32.mrb[0].mxu0
      %5755 = vmatprep.mubr.bf16.mxu0 0
      %5756 = vmatmul.mubr.bf16.gmra.mrb[0].mxu0 %v5604
      %v5757 = vpop.f32.mrb[0].mxu0
      %v5758 = vadd.f32 0.0, %v5757
      %v5759 = vpop.f32.mrb[0].mxu0
      %v5760 = vpop.f32.mrb[0].mxu0
      %v5761 = vadd.f32 0.0, %v5760
      %v5762 = vpop.f32.mrb[0].mxu0
      %5763 = vmatprep.mubr.bf16.mxu0 0
      %5764 = vmatmul.mubr.bf16.gmra.mrb[0].mxu0 %v5607
      %v5765 = vpop.f32.mrb[0].mxu0
      %v5766 = vadd.f32 0.0, %v5765
      %v5767 = vpop.f32.mrb[0].mxu0
      %v5768 = vpop.f32.mrb[0].mxu0
      %v5769 = vadd.f32 0.0, %v5768
      %v5770 = vpop.f32.mrb[0].mxu0
      %5771 = vmatprep.mubr.bf16.mxu0 0
      %5772 = vmatmul.mubr.bf16.gmra.mrb[0].mxu0 %v5610
      %v5773 = vpop.f32.mrb[0].mxu0
      %v5774 = vadd.f32 0.0, %v5773
      %v5775 = vpop.f32.mrb[0].mxu0
      %v5776 = vpop.f32.mrb[0].mxu0
      %v5777 = vadd.f32 0.0, %v5776
      %v5778 = vpop.f32.mrb[0].mxu0
      %5779 = vmatprep.mubr.bf16.mxu0 0
      %5780 = vmatmul.mubr.bf16.gmra.mrb[0].mxu0 %v5613
      %v5781 = vpop.f32.mrb[0].mxu0
      %v5782 = vadd.f32 0.0, %v5781
      %v5783 = vpop.f32.mrb[0].mxu0
      %v5784 = vpop.f32.mrb[0].mxu0
      %v5785 = vadd.f32 0.0, %v5784
      %v5786 = vpop.f32.mrb[0].mxu0
      %5787 = vdwg.mxu0
      %v5788 = vsel %vm675, %v5662, -inf
      %5789 = vmax.xlane.f32.xlu0 %v5788
      %v5790 = vpop.xlane.xlu0 %5789
      %v5791 = vsel %vm675, %v5665, -inf
      %5792 = vmax.xlane.f32.xlu0 %v5791
      %v5793 = vpop.xlane.xlu0 %5792
      %v5794 = vsel %vm675, %v5670, -inf
      %5795 = vmax.xlane.f32.xlu0 %v5794
      %v5796 = vpop.xlane.xlu0 %5795
      %v5797 = vsel %vm675, %v5673, -inf
      %5798 = vmax.xlane.f32.xlu0 %v5797
      %v5799 = vpop.xlane.xlu0 %5798
      %v5800 = vsel %vm675, %v5678, -inf
      %5801 = vmax.xlane.f32.xlu0 %v5800
      %v5802 = vpop.xlane.xlu0 %5801
      %v5803 = vsel %vm675, %v5681, -inf
      %5804 = vmax.xlane.f32.xlu0 %v5803
      %v5805 = vpop.xlane.xlu0 %5804
      %v5806 = vsel %vm675, %v5686, -inf
      %5807 = vmax.xlane.f32.xlu0 %v5806
      %v5808 = vpop.xlane.xlu0 %5807
      %v5809 = vsel %vm675, %v5689, -inf
      %5810 = vmax.xlane.f32.xlu0 %v5809
      %v5811 = vpop.xlane.xlu0 %5810
      %v5812 = vsel %vm675, %v5694, -inf
      %5813 = vmax.xlane.f32.xlu0 %v5812
      %v5814 = vpop.xlane.xlu0 %5813
      %v5815 = vsel %vm675, %v5697, -inf
      %5816 = vmax.xlane.f32.xlu0 %v5815
      %v5817 = vpop.xlane.xlu0 %5816
      %v5818 = vsel %vm675, %v5702, -inf
      %5819 = vmax.xlane.f32.xlu0 %v5818
      %v5820 = vpop.xlane.xlu0 %5819
      %v5821 = vsel %vm675, %v5705, -inf
      %5822 = vmax.xlane.f32.xlu0 %v5821
      %v5823 = vpop.xlane.xlu0 %5822
      %v5824 = vsel %vm675, %v5710, -inf
      %5825 = vmax.xlane.f32.xlu0 %v5824
      %v5826 = vpop.xlane.xlu0 %5825
      %v5827 = vsel %vm675, %v5713, -inf
      %5828 = vmax.xlane.f32.xlu0 %v5827
      %v5829 = vpop.xlane.xlu0 %5828
      %v5830 = vsel %vm675, %v5718, -inf
      %5831 = vmax.xlane.f32.xlu0 %v5830
      %v5832 = vpop.xlane.xlu0 %5831
      %v5833 = vsel %vm675, %v5721, -inf
      %5834 = vmax.xlane.f32.xlu0 %v5833
      %v5835 = vpop.xlane.xlu0 %5834
      %v5836 = vsel %vm675, %v5726, -inf
      %5837 = vmax.xlane.f32.xlu0 %v5836
      %v5838 = vpop.xlane.xlu0 %5837
      %v5839 = vsel %vm675, %v5729, -inf
      %5840 = vmax.xlane.f32.xlu0 %v5839
      %v5841 = vpop.xlane.xlu0 %5840
      %v5842 = vsel %vm675, %v5734, -inf
      %5843 = vmax.xlane.f32.xlu0 %v5842
      %v5844 = vpop.xlane.xlu0 %5843
      %v5845 = vsel %vm675, %v5737, -inf
      %5846 = vmax.xlane.f32.xlu0 %v5845
      %v5847 = vpop.xlane.xlu0 %5846
      %v5848 = vsel %vm675, %v5742, -inf
      %5849 = vmax.xlane.f32.xlu0 %v5848
      %v5850 = vpop.xlane.xlu0 %5849
      %v5851 = vsel %vm675, %v5745, -inf
      %5852 = vmax.xlane.f32.xlu0 %v5851
      %v5853 = vpop.xlane.xlu0 %5852
      %v5854 = vsel %vm675, %v5750, -inf
      %5855 = vmax.xlane.f32.xlu0 %v5854
      %v5856 = vpop.xlane.xlu0 %5855
      %v5857 = vsel %vm675, %v5753, -inf
      %5858 = vmax.xlane.f32.xlu0 %v5857
      %v5859 = vpop.xlane.xlu0 %5858
      %v5860 = vsel %vm675, %v5758, -inf
      %5861 = vmax.xlane.f32.xlu0 %v5860
      %v5862 = vpop.xlane.xlu0 %5861
      %v5863 = vsel %vm675, %v5761, -inf
      %5864 = vmax.xlane.f32.xlu0 %v5863
      %v5865 = vpop.xlane.xlu0 %5864
      %v5866 = vsel %vm675, %v5766, -inf
      %5867 = vmax.xlane.f32.xlu0 %v5866
      %v5868 = vpop.xlane.xlu0 %5867
      %v5869 = vsel %vm675, %v5769, -inf
      %5870 = vmax.xlane.f32.xlu0 %v5869
      %v5871 = vpop.xlane.xlu0 %5870
      %v5872 = vsel %vm675, %v5774, -inf
      %5873 = vmax.xlane.f32.xlu0 %v5872
      %v5874 = vpop.xlane.xlu0 %5873
      %v5875 = vsel %vm675, %v5777, -inf
      %5876 = vmax.xlane.f32.xlu0 %v5875
      %v5877 = vpop.xlane.xlu0 %5876
      %v5878 = vsel %vm675, %v5782, -inf
      %5879 = vmax.xlane.f32.xlu0 %v5878
      %v5880 = vpop.xlane.xlu0 %5879
      %v5881 = vsel %vm675, %v5785, -inf
      %5882 = vmax.xlane.f32.xlu0 %v5881
      %v5883 = vpop.xlane.xlu0 %5882
      %v5884 = vsub.f32 %v5662, %v5790
      %v5885 = vsub.f32 %v5665, %v5793
      %v5886 = vsub.f32 %v5670, %v5796
      %v5887 = vsub.f32 %v5673, %v5799
      %v5888 = vsub.f32 %v5678, %v5802
      %v5889 = vsub.f32 %v5681, %v5805
      %v5890 = vsub.f32 %v5686, %v5808
      %v5891 = vsub.f32 %v5689, %v5811
      %v5892 = vsub.f32 %v5694, %v5814
      %v5893 = vsub.f32 %v5697, %v5817
      %v5894 = vsub.f32 %v5702, %v5820
      %v5895 = vsub.f32 %v5705, %v5823
      %v5896 = vsub.f32 %v5710, %v5826
      %v5897 = vsub.f32 %v5713, %v5829
      %v5898 = vsub.f32 %v5718, %v5832
      %v5899 = vsub.f32 %v5721, %v5835
      %v5900 = vsub.f32 %v5726, %v5838
      %v5901 = vsub.f32 %v5729, %v5841
      %v5902 = vsub.f32 %v5734, %v5844
      %v5903 = vsub.f32 %v5737, %v5847
      %v5904 = vsub.f32 %v5742, %v5850
      %v5905 = vsub.f32 %v5745, %v5853
      %v5906 = vsub.f32 %v5750, %v5856
      %v5907 = vsub.f32 %v5753, %v5859
      %v5908 = vsub.f32 %v5758, %v5862
      %v5909 = vsub.f32 %v5761, %v5865
      %v5910 = vsub.f32 %v5766, %v5868
      %v5911 = vsub.f32 %v5769, %v5871
      %v5912 = vsub.f32 %v5774, %v5874
      %v5913 = vsub.f32 %v5777, %v5877
      %v5914 = vsub.f32 %v5782, %v5880
      %v5915 = vsub.f32 %v5785, %v5883
      %v5916 = vmul.f32 %v5884, 1.442695
      %v5917 = vpow.pop %v5916
      %v5918 = vmul.f32 %v5885, 1.442695
      %v5919 = vpow.pop %v5918
      %v5920 = vmul.f32 %v5886, 1.442695
      %v5921 = vpow.pop %v5920
      %v5922 = vmul.f32 %v5887, 1.442695
      %v5923 = vpow.pop %v5922
      %v5924 = vmul.f32 %v5888, 1.442695
      %v5925 = vpow.pop %v5924
      %v5926 = vmul.f32 %v5889, 1.442695
      %v5927 = vpow.pop %v5926
      %v5928 = vmul.f32 %v5890, 1.442695
      %v5929 = vpow.pop %v5928
      %v5930 = vmul.f32 %v5891, 1.442695
      %v5931 = vpow.pop %v5930
      %v5932 = vmul.f32 %v5892, 1.442695
      %v5933 = vpow.pop %v5932
      %v5934 = vmul.f32 %v5893, 1.442695
      %v5935 = vpow.pop %v5934
      %v5936 = vmul.f32 %v5894, 1.442695
      %v5937 = vpow.pop %v5936
      %v5938 = vmul.f32 %v5895, 1.442695
      %v5939 = vpow.pop %v5938
      %v5940 = vmul.f32 %v5896, 1.442695
      %v5941 = vpow.pop %v5940
      %v5942 = vmul.f32 %v5897, 1.442695
      %v5943 = vpow.pop %v5942
      %v5944 = vmul.f32 %v5898, 1.442695
      %v5945 = vpow.pop %v5944
      %v5946 = vmul.f32 %v5899, 1.442695
      %v5947 = vpow.pop %v5946
      %v5948 = vmul.f32 %v5900, 1.442695
      %v5949 = vpow.pop %v5948
      %v5950 = vmul.f32 %v5901, 1.442695
      %v5951 = vpow.pop %v5950
      %v5952 = vmul.f32 %v5902, 1.442695
      %v5953 = vpow.pop %v5952
      %v5954 = vmul.f32 %v5903, 1.442695
      %v5955 = vpow.pop %v5954
      %v5956 = vmul.f32 %v5904, 1.442695
      %v5957 = vpow.pop %v5956
      %v5958 = vmul.f32 %v5905, 1.442695
      %v5959 = vpow.pop %v5958
      %v5960 = vmul.f32 %v5906, 1.442695
      %v5961 = vpow.pop %v5960
      %v5962 = vmul.f32 %v5907, 1.442695
      %v5963 = vpow.pop %v5962
      %v5964 = vmul.f32 %v5908, 1.442695
      %v5965 = vpow.pop %v5964
      %v5966 = vmul.f32 %v5909, 1.442695
      %v5967 = vpow.pop %v5966
      %v5968 = vmul.f32 %v5910, 1.442695
      %v5969 = vpow.pop %v5968
      %v5970 = vmul.f32 %v5911, 1.442695
      %v5971 = vpow.pop %v5970
      %v5972 = vmul.f32 %v5912, 1.442695
      %v5973 = vpow.pop %v5972
      %v5974 = vmul.f32 %v5913, 1.442695
      %v5975 = vpow.pop %v5974
      %v5976 = vmul.f32 %v5914, 1.442695
      %v5977 = vpow.pop %v5976
      %v5978 = vmul.f32 %v5915, 1.442695
      %v5979 = vpow.pop %v5978
      %v5980 = vsel %vm675, %v5917, 0.0
      %5981 = vadd.xlane.f32.xlu0 %v5980
      %v5982 = vpop.xlane.xlu0 %5981
      %v5983 = vsel %vm675, %v5919, 0.0
      %5984 = vadd.xlane.f32.xlu0 %v5983
      %v5985 = vpop.xlane.xlu0 %5984
      %v5986 = vsel %vm675, %v5921, 0.0
      %5987 = vadd.xlane.f32.xlu0 %v5986
      %v5988 = vpop.xlane.xlu0 %5987
      %v5989 = vsel %vm675, %v5923, 0.0
      %5990 = vadd.xlane.f32.xlu0 %v5989
      %v5991 = vpop.xlane.xlu0 %5990
      %v5992 = vsel %vm675, %v5925, 0.0
      %5993 = vadd.xlane.f32.xlu0 %v5992
      %v5994 = vpop.xlane.xlu0 %5993
      %v5995 = vsel %vm675, %v5927, 0.0
      %5996 = vadd.xlane.f32.xlu0 %v5995
      %v5997 = vpop.xlane.xlu0 %5996
      %v5998 = vsel %vm675, %v5929, 0.0
      %5999 = vadd.xlane.f32.xlu0 %v5998
      %v6000 = vpop.xlane.xlu0 %5999
      %v6001 = vsel %vm675, %v5931, 0.0
      %6002 = vadd.xlane.f32.xlu0 %v6001
      %v6003 = vpop.xlane.xlu0 %6002
      %v6004 = vsel %vm675, %v5933, 0.0
      %6005 = vadd.xlane.f32.xlu0 %v6004
      %v6006 = vpop.xlane.xlu0 %6005
      %v6007 = vsel %vm675, %v5935, 0.0
      %6008 = vadd.xlane.f32.xlu0 %v6007
      %v6009 = vpop.xlane.xlu0 %6008
      %v6010 = vsel %vm675, %v5937, 0.0
      %6011 = vadd.xlane.f32.xlu0 %v6010
      %v6012 = vpop.xlane.xlu0 %6011
      %v6013 = vsel %vm675, %v5939, 0.0
      %6014 = vadd.xlane.f32.xlu0 %v6013
      %v6015 = vpop.xlane.xlu0 %6014
      %v6016 = vsel %vm675, %v5941, 0.0
      %6017 = vadd.xlane.f32.xlu0 %v6016
      %v6018 = vpop.xlane.xlu0 %6017
      %v6019 = vsel %vm675, %v5943, 0.0
      %6020 = vadd.xlane.f32.xlu0 %v6019
      %v6021 = vpop.xlane.xlu0 %6020
      %v6022 = vsel %vm675, %v5945, 0.0
      %6023 = vadd.xlane.f32.xlu0 %v6022
      %v6024 = vpop.xlane.xlu0 %6023
      %v6025 = vsel %vm675, %v5947, 0.0
      %6026 = vadd.xlane.f32.xlu0 %v6025
      %v6027 = vpop.xlane.xlu0 %6026
      %v6028 = vsel %vm675, %v5949, 0.0
      %6029 = vadd.xlane.f32.xlu0 %v6028
      %v6030 = vpop.xlane.xlu0 %6029
      %v6031 = vsel %vm675, %v5951, 0.0
      %6032 = vadd.xlane.f32.xlu0 %v6031
      %v6033 = vpop.xlane.xlu0 %6032
      %v6034 = vsel %vm675, %v5953, 0.0
      %6035 = vadd.xlane.f32.xlu0 %v6034
      %v6036 = vpop.xlane.xlu0 %6035
      %v6037 = vsel %vm675, %v5955, 0.0
      %6038 = vadd.xlane.f32.xlu0 %v6037
      %v6039 = vpop.xlane.xlu0 %6038
      %v6040 = vsel %vm675, %v5957, 0.0
      %6041 = vadd.xlane.f32.xlu0 %v6040
      %v6042 = vpop.xlane.xlu0 %6041
      %v6043 = vsel %vm675, %v5959, 0.0
      %6044 = vadd.xlane.f32.xlu0 %v6043
      %v6045 = vpop.xlane.xlu0 %6044
      %v6046 = vsel %vm675, %v5961, 0.0
      %6047 = vadd.xlane.f32.xlu0 %v6046
      %v6048 = vpop.xlane.xlu0 %6047
      %v6049 = vsel %vm675, %v5963, 0.0
      %6050 = vadd.xlane.f32.xlu0 %v6049
      %v6051 = vpop.xlane.xlu0 %6050
      %v6052 = vsel %vm675, %v5965, 0.0
      %6053 = vadd.xlane.f32.xlu0 %v6052
      %v6054 = vpop.xlane.xlu0 %6053
      %v6055 = vsel %vm675, %v5967, 0.0
      %6056 = vadd.xlane.f32.xlu0 %v6055
      %v6057 = vpop.xlane.xlu0 %6056
      %v6058 = vsel %vm675, %v5969, 0.0
      %6059 = vadd.xlane.f32.xlu0 %v6058
      %v6060 = vpop.xlane.xlu0 %6059
      %v6061 = vsel %vm675, %v5971, 0.0
      %6062 = vadd.xlane.f32.xlu0 %v6061
      %v6063 = vpop.xlane.xlu0 %6062
      %v6064 = vsel %vm675, %v5973, 0.0
      %6065 = vadd.xlane.f32.xlu0 %v6064
      %v6066 = vpop.xlane.xlu0 %6065
      %v6067 = vsel %vm675, %v5975, 0.0
      %6068 = vadd.xlane.f32.xlu0 %v6067
      %v6069 = vpop.xlane.xlu0 %6068
      %v6070 = vsel %vm675, %v5977, 0.0
      %6071 = vadd.xlane.f32.xlu0 %v6070
      %v6072 = vpop.xlane.xlu0 %6071
      %v6073 = vsel %vm675, %v5979, 0.0
      %6074 = vadd.xlane.f32.xlu0 %v6073
      %v6075 = vpop.xlane.xlu0 %6074
      %v6076 = vrcp.pop %v5982
      %v6077 = vrcp.pop %v5985
      %v6078 = vrcp.pop %v5988
      %v6079 = vrcp.pop %v5991
      %v6080 = vrcp.pop %v5994
      %v6081 = vrcp.pop %v5997
      %v6082 = vrcp.pop %v6000
      %v6083 = vrcp.pop %v6003
      %v6084 = vrcp.pop %v6006
      %v6085 = vrcp.pop %v6009
      %v6086 = vrcp.pop %v6012
      %v6087 = vrcp.pop %v6015
      %v6088 = vrcp.pop %v6018
      %v6089 = vrcp.pop %v6021
      %v6090 = vrcp.pop %v6024
      %v6091 = vrcp.pop %v6027
      %v6092 = vrcp.pop %v6030
      %v6093 = vrcp.pop %v6033
      %v6094 = vrcp.pop %v6036
      %v6095 = vrcp.pop %v6039
      %v6096 = vrcp.pop %v6042
      %v6097 = vrcp.pop %v6045
      %v6098 = vrcp.pop %v6048
      %v6099 = vrcp.pop %v6051
      %v6100 = vrcp.pop %v6054
      %v6101 = vrcp.pop %v6057
      %v6102 = vrcp.pop %v6060
      %v6103 = vrcp.pop %v6063
      %v6104 = vrcp.pop %v6066
      %v6105 = vrcp.pop %v6069
      %v6106 = vrcp.pop %v6072
      %v6107 = vrcp.pop %v6075
      %v6108 = vmul.f32 %v5917, %v6076
      %v6109 = vmul.f32 %v5919, %v6077
      %v6110 = vmul.f32 %v5921, %v6078
      %v6111 = vmul.f32 %v5923, %v6079
      %v6112 = vmul.f32 %v5925, %v6080
      %v6113 = vmul.f32 %v5927, %v6081
      %v6114 = vmul.f32 %v5929, %v6082
      %v6115 = vmul.f32 %v5931, %v6083
      %v6116 = vmul.f32 %v5933, %v6084
      %v6117 = vmul.f32 %v5935, %v6085
      %v6118 = vmul.f32 %v5937, %v6086
      %v6119 = vmul.f32 %v5939, %v6087
      %v6120 = vmul.f32 %v5941, %v6088
      %v6121 = vmul.f32 %v5943, %v6089
      %v6122 = vmul.f32 %v5945, %v6090
      %v6123 = vmul.f32 %v5947, %v6091
      %v6124 = vmul.f32 %v5949, %v6092
      %v6125 = vmul.f32 %v5951, %v6093
      %v6126 = vmul.f32 %v5953, %v6094
      %v6127 = vmul.f32 %v5955, %v6095
      %v6128 = vmul.f32 %v5957, %v6096
      %v6129 = vmul.f32 %v5959, %v6097
      %v6130 = vmul.f32 %v5961, %v6098
      %v6131 = vmul.f32 %v5963, %v6099
      %v6132 = vmul.f32 %v5965, %v6100
      %v6133 = vmul.f32 %v5967, %v6101
      %v6134 = vmul.f32 %v5969, %v6102
      %v6135 = vmul.f32 %v5971, %v6103
      %v6136 = vmul.f32 %v5973, %v6104
      %v6137 = vmul.f32 %v5975, %v6105
      %v6138 = vmul.f32 %v5977, %v6106
      %v6139 = vmul.f32 %v5979, %v6107
      %v6140 = vpack.c.bf16 %v6109, %v6108
      %v6141 = vpack.c.bf16 %v6111, %v6110
      %v6142 = vpack.c.bf16 %v6113, %v6112
      %v6143 = vpack.c.bf16 %v6115, %v6114
      %v6144 = vpack.c.bf16 %v6117, %v6116
      %v6145 = vpack.c.bf16 %v6119, %v6118
      %v6146 = vpack.c.bf16 %v6121, %v6120
      %v6147 = vpack.c.bf16 %v6123, %v6122
      %v6148 = vpack.c.bf16 %v6125, %v6124
      %v6149 = vpack.c.bf16 %v6127, %v6126
      %v6150 = vpack.c.bf16 %v6129, %v6128
      %v6151 = vpack.c.bf16 %v6131, %v6130
      %v6152 = vpack.c.bf16 %v6133, %v6132
      %v6153 = vpack.c.bf16 %v6135, %v6134
      %v6154 = vpack.c.bf16 %v6137, %v6136
      %v6155 = vpack.c.bf16 %v6139, %v6138
      %6156 = vrot.lane.b32.xlu0 %v1060, 80
      %v6157 = vpop.permute.xlu0 %6156
      %6158 = vrot.lane.b32.xlu0 %v1061, 80
      %v6159 = vpop.permute.xlu0 %6158
      %6160 = vrot.lane.b32.xlu0 %v1062, 80
      %v6161 = vpop.permute.xlu0 %6160
      %6162 = vrot.lane.b32.xlu0 %v1063, 80
      %v6163 = vpop.permute.xlu0 %6162
      %v6169 = vsel %vm675, %v6140, 0
      %v6172 = vsel %vm675, %v6141, 0
      %v6175 = vsel %vm675, %v6142, 0
      %v6178 = vsel %vm675, %v6143, 0
      %v6181 = vsel %vm675, %v6144, 0
      %v6184 = vsel %vm675, %v6145, 0
      %v6187 = vsel %vm675, %v6146, 0
      %v6190 = vsel %vm675, %v6147, 0
      %v6193 = vsel %vm675, %v6148, 0
      %v6196 = vsel %vm675, %v6149, 0
      %v6199 = vsel %vm675, %v6150, 0
      %v6202 = vsel %vm675, %v6151, 0
      %v6205 = vsel %vm675, %v6152, 0
      %v6208 = vsel %vm675, %v6153, 0
      %v6211 = vsel %vm675, %v6154, 0
      %v6214 = vsel %vm675, %v6155, 0
      %6216 = vmatprep.subr.bf16.mxu0 0
      %6217 = vmatpush1.bf16.msra.mxu0 %v6157
      %6218 = vmatprep.subr.bf16.mxu0 0
      %6219 = vmatpush1.bf16.msra.mxu0 %v6159
      %6220 = vmatprep.subr.bf16.mxu0 0
      %6221 = vmatpush1.bf16.msra.mxu0 %v6161
      %6222 = vmatprep.subr.bf16.mxu0 0
      %6223 = vmatpush1.bf16.msra.mxu0 %v6163
      %6224 = vmatprep.subr.bf16.mxu0 0
      %6225 = vmatpush1.bf16.msra.mxu0 0
      %6226 = vmatprep.subr.bf16.mxu0 0
      %6227 = vmatpush1.bf16.msra.mxu0 0
      %6228 = vmatprep.subr.bf16.mxu0 0
      %6229 = vmatpush1.bf16.msra.mxu0 0
      %6230 = vmatprep.subr.bf16.mxu0 0
      %6231 = vmatpush1.bf16.msra.mxu0 0
      %6232 = vmatprep.subr.bf16.mxu0 0
      %6233 = vmatpush1.bf16.msra.mxu0 0
      %6234 = vmatprep.subr.bf16.mxu0 0
      %6235 = vmatpush1.bf16.msra.mxu0 0
      %6236 = vmatprep.subr.bf16.mxu0 0
      %6237 = vmatpush1.bf16.msra.mxu0 0
      %6238 = vmatprep.subr.bf16.mxu0 0
      %6239 = vmatpush1.bf16.msra.mxu0 0
      %6240 = vmatprep.subr.bf16.mxu0 0
      %6241 = vmatpush1.bf16.msra.mxu0 0
      %6242 = vmatprep.subr.bf16.mxu0 0
      %6243 = vmatpush1.bf16.msra.mxu0 0
      %6244 = vmatprep.subr.bf16.mxu0 0
      %6245 = vmatpush1.bf16.msra.mxu0 0
      %6246 = vmatprep.subr.bf16.mxu0 0
      %6247 = vmatpush1.bf16.msra.mxu0 0
      %6248 = vmatprep.mubr.bf16.mxu0 0
      %6249 = vmatmul.mubr.bf16.gmra.mrb[0].mxu0 %v6169
      %v6250 = vpop.f32.mrb[0].mxu0
      %v6251 = vadd.f32 0.0, %v6250
      %v6252 = vpop.f32.mrb[0].mxu0
      %v6253 = vpop.f32.mrb[0].mxu0
      %v6254 = vadd.f32 0.0, %v6253
      %v6255 = vpop.f32.mrb[0].mxu0
      %6256 = vmatprep.mubr.bf16.mxu0 0
      %6257 = vmatmul.mubr.bf16.gmra.mrb[0].mxu0 %v6172
      %v6258 = vpop.f32.mrb[0].mxu0
      %v6259 = vadd.f32 0.0, %v6258
      %v6260 = vpop.f32.mrb[0].mxu0
      %v6261 = vpop.f32.mrb[0].mxu0
      %v6262 = vadd.f32 0.0, %v6261
      %v6263 = vpop.f32.mrb[0].mxu0
      %6264 = vmatprep.mubr.bf16.mxu0 0
      %6265 = vmatmul.mubr.bf16.gmra.mrb[0].mxu0 %v6175
      %v6266 = vpop.f32.mrb[0].mxu0
      %v6267 = vadd.f32 0.0, %v6266
      %v6268 = vpop.f32.mrb[0].mxu0
      %v6269 = vpop.f32.mrb[0].mxu0
      %v6270 = vadd.f32 0.0, %v6269
      %v6271 = vpop.f32.mrb[0].mxu0
      %6272 = vmatprep.mubr.bf16.mxu0 0
      %6273 = vmatmul.mubr.bf16.gmra.mrb[0].mxu0 %v6178
      %v6274 = vpop.f32.mrb[0].mxu0
      %v6275 = vadd.f32 0.0, %v6274
      %v6276 = vpop.f32.mrb[0].mxu0
      %v6277 = vpop.f32.mrb[0].mxu0
      %v6278 = vadd.f32 0.0, %v6277
      %v6279 = vpop.f32.mrb[0].mxu0
      %6280 = vmatprep.mubr.bf16.mxu0 0
      %6281 = vmatmul.mubr.bf16.gmra.mrb[0].mxu0 %v6181
      %v6282 = vpop.f32.mrb[0].mxu0
      %v6283 = vadd.f32 0.0, %v6282
      %v6284 = vpop.f32.mrb[0].mxu0
      %v6285 = vpop.f32.mrb[0].mxu0
      %v6286 = vadd.f32 0.0, %v6285
      %v6287 = vpop.f32.mrb[0].mxu0
      %6288 = vmatprep.mubr.bf16.mxu0 0
      %6289 = vmatmul.mubr.bf16.gmra.mrb[0].mxu0 %v6184
      %v6290 = vpop.f32.mrb[0].mxu0
      %v6291 = vadd.f32 0.0, %v6290
      %v6292 = vpop.f32.mrb[0].mxu0
      %v6293 = vpop.f32.mrb[0].mxu0
      %v6294 = vadd.f32 0.0, %v6293
      %v6295 = vpop.f32.mrb[0].mxu0
      %6296 = vmatprep.mubr.bf16.mxu0 0
      %6297 = vmatmul.mubr.bf16.gmra.mrb[0].mxu0 %v6187
      %v6298 = vpop.f32.mrb[0].mxu0
      %v6299 = vadd.f32 0.0, %v6298
      %v6300 = vpop.f32.mrb[0].mxu0
      %v6301 = vpop.f32.mrb[0].mxu0
      %v6302 = vadd.f32 0.0, %v6301
      %v6303 = vpop.f32.mrb[0].mxu0
      %6304 = vmatprep.mubr.bf16.mxu0 0
      %6305 = vmatmul.mubr.bf16.gmra.mrb[0].mxu0 %v6190
      %v6306 = vpop.f32.mrb[0].mxu0
      %v6307 = vadd.f32 0.0, %v6306
      %v6308 = vpop.f32.mrb[0].mxu0
      %v6309 = vpop.f32.mrb[0].mxu0
      %v6310 = vadd.f32 0.0, %v6309
      %v6311 = vpop.f32.mrb[0].mxu0
      %6312 = vmatprep.mubr.bf16.mxu0 0
      %6313 = vmatmul.mubr.bf16.gmra.mrb[0].mxu0 %v6193
      %v6314 = vpop.f32.mrb[0].mxu0
      %v6315 = vadd.f32 0.0, %v6314
      %v6316 = vpop.f32.mrb[0].mxu0
      %v6317 = vpop.f32.mrb[0].mxu0
      %v6318 = vadd.f32 0.0, %v6317
      %v6319 = vpop.f32.mrb[0].mxu0
      %6320 = vmatprep.mubr.bf16.mxu0 0
      %6321 = vmatmul.mubr.bf16.gmra.mrb[0].mxu0 %v6196
      %v6322 = vpop.f32.mrb[0].mxu0
      %v6323 = vadd.f32 0.0, %v6322
      %v6324 = vpop.f32.mrb[0].mxu0
      %v6325 = vpop.f32.mrb[0].mxu0
      %v6326 = vadd.f32 0.0, %v6325
      %v6327 = vpop.f32.mrb[0].mxu0
      %6328 = vmatprep.mubr.bf16.mxu0 0
      %6329 = vmatmul.mubr.bf16.gmra.mrb[0].mxu0 %v6199
      %v6330 = vpop.f32.mrb[0].mxu0
      %v6331 = vadd.f32 0.0, %v6330
      %v6332 = vpop.f32.mrb[0].mxu0
      %v6333 = vpop.f32.mrb[0].mxu0
      %v6334 = vadd.f32 0.0, %v6333
      %v6335 = vpop.f32.mrb[0].mxu0
      %6336 = vmatprep.mubr.bf16.mxu0 0
      %6337 = vmatmul.mubr.bf16.gmra.mrb[0].mxu0 %v6202
      %v6338 = vpop.f32.mrb[0].mxu0
      %v6339 = vadd.f32 0.0, %v6338
      %v6340 = vpop.f32.mrb[0].mxu0
      %v6341 = vpop.f32.mrb[0].mxu0
      %v6342 = vadd.f32 0.0, %v6341
      %v6343 = vpop.f32.mrb[0].mxu0
      %6344 = vmatprep.mubr.bf16.mxu0 0
      %6345 = vmatmul.mubr.bf16.gmra.mrb[0].mxu0 %v6205
      %v6346 = vpop.f32.mrb[0].mxu0
      %v6347 = vadd.f32 0.0, %v6346
      %v6348 = vpop.f32.mrb[0].mxu0
      %v6349 = vpop.f32.mrb[0].mxu0
      %v6350 = vadd.f32 0.0, %v6349
      %v6351 = vpop.f32.mrb[0].mxu0
      %6352 = vmatprep.mubr.bf16.mxu0 0
      %6353 = vmatmul.mubr.bf16.gmra.mrb[0].mxu0 %v6208
      %v6354 = vpop.f32.mrb[0].mxu0
      %v6355 = vadd.f32 0.0, %v6354
      %v6356 = vpop.f32.mrb[0].mxu0
      %v6357 = vpop.f32.mrb[0].mxu0
      %v6358 = vadd.f32 0.0, %v6357
      %v6359 = vpop.f32.mrb[0].mxu0
      %6360 = vmatprep.mubr.bf16.mxu0 0
      %6361 = vmatmul.mubr.bf16.gmra.mrb[0].mxu0 %v6211
      %v6362 = vpop.f32.mrb[0].mxu0
      %v6363 = vadd.f32 0.0, %v6362
      %v6364 = vpop.f32.mrb[0].mxu0
      %v6365 = vpop.f32.mrb[0].mxu0
      %v6366 = vadd.f32 0.0, %v6365
      %v6367 = vpop.f32.mrb[0].mxu0
      %6368 = vmatprep.mubr.bf16.mxu0 0
      %6369 = vmatmul.mubr.bf16.gmra.mrb[0].mxu0 %v6214
      %v6370 = vpop.f32.mrb[0].mxu0
      %v6371 = vadd.f32 0.0, %v6370
      %v6372 = vpop.f32.mrb[0].mxu0
      %v6373 = vpop.f32.mrb[0].mxu0
      %v6374 = vadd.f32 0.0, %v6373
      %v6375 = vpop.f32.mrb[0].mxu0
      %6376 = vdwg.mxu0
      %6377 = vrot.lane.b32.xlu0 %v417, 72
      %v6378 = vpop.permute.xlu0 %6377
      %6379 = vrot.lane.b32.xlu0 %v418, 72
      %v6380 = vpop.permute.xlu0 %6379
      %6381 = vrot.lane.b32.xlu0 %v419, 72
      %v6382 = vpop.permute.xlu0 %6381
      %6383 = vrot.lane.b32.xlu0 %v420, 72
      %v6384 = vpop.permute.xlu0 %6383
      %6385 = vrot.lane.b32.xlu0 %v421, 72
      %v6386 = vpop.permute.xlu0 %6385
      %6387 = vrot.lane.b32.xlu0 %v422, 72
      %v6388 = vpop.permute.xlu0 %6387
      %6389 = vrot.lane.b32.xlu0 %v423, 72
      %v6390 = vpop.permute.xlu0 %6389
      %6391 = vrot.lane.b32.xlu0 %v424, 72
      %v6392 = vpop.permute.xlu0 %6391
      %6393 = vrot.lane.b32.xlu0 %v425, 72
      %v6394 = vpop.permute.xlu0 %6393
      %6395 = vrot.lane.b32.xlu0 %v426, 72
      %v6396 = vpop.permute.xlu0 %6395
      %6397 = vrot.lane.b32.xlu0 %v427, 72
      %v6398 = vpop.permute.xlu0 %6397
      %6399 = vrot.lane.b32.xlu0 %v428, 72
      %v6400 = vpop.permute.xlu0 %6399
      %6401 = vrot.lane.b32.xlu0 %v429, 72
      %v6402 = vpop.permute.xlu0 %6401
      %6403 = vrot.lane.b32.xlu0 %v430, 72
      %v6404 = vpop.permute.xlu0 %6403
      %6405 = vrot.lane.b32.xlu0 %v431, 72
      %v6406 = vpop.permute.xlu0 %6405
      %6407 = vrot.lane.b32.xlu0 %v432, 72
      %v6408 = vpop.permute.xlu0 %6407
      %6409 = vrot.lane.b32.xlu0 %v449, 72
      %v6410 = vpop.permute.xlu0 %6409
      %6411 = vrot.lane.b32.xlu0 %v450, 72
      %v6412 = vpop.permute.xlu0 %6411
      %6413 = vrot.lane.b32.xlu0 %v451, 72
      %v6414 = vpop.permute.xlu0 %6413
      %6415 = vrot.lane.b32.xlu0 %v452, 72
      %v6416 = vpop.permute.xlu0 %6415
      %v6418 = vsel %vm453, %v6378, 0
      %v6421 = vsel %vm453, %v6380, 0
      %v6424 = vsel %vm453, %v6382, 0
      %v6427 = vsel %vm453, %v6384, 0
      %v6430 = vsel %vm453, %v6386, 0
      %v6433 = vsel %vm453, %v6388, 0
      %v6436 = vsel %vm453, %v6390, 0
      %v6439 = vsel %vm453, %v6392, 0
      %v6442 = vsel %vm453, %v6394, 0
      %v6445 = vsel %vm453, %v6396, 0
      %v6448 = vsel %vm453, %v6398, 0
      %v6451 = vsel %vm453, %v6400, 0
      %v6454 = vsel %vm453, %v6402, 0
      %v6457 = vsel %vm453, %v6404, 0
      %v6460 = vsel %vm453, %v6406, 0
      %v6463 = vsel %vm453, %v6408, 0
      %v6466 = vsel %vm453, %v6410, 0
      %v6469 = vsel %vm453, %v6412, 0
      %v6472 = vsel %vm453, %v6414, 0
      %v6475 = vsel %vm453, %v6416, 0
      %6477 = vmatprep.subr.bf16.mxu0 0
      %6478 = vmatpush1.bf16.xpose.msra.mxu0 %v6466
      %6479 = vmatprep.subr.bf16.mxu0 0
      %6480 = vmatpush1.bf16.xpose.msra.mxu0 %v6469
      %6481 = vmatprep.subr.bf16.mxu0 0
      %6482 = vmatpush1.bf16.xpose.msra.mxu0 %v6472
      %6483 = vmatprep.subr.bf16.mxu0 0
      %6484 = vmatpush1.bf16.xpose.msra.mxu0 %v6475
      %6485 = vmatprep.subr.bf16.mxu0 0
      %6486 = vmatpush1.bf16.xpose.msra.mxu0 0
      %6487 = vmatprep.subr.bf16.mxu0 0
      %6488 = vmatpush1.bf16.xpose.msra.mxu0 0
      %6489 = vmatprep.subr.bf16.mxu0 0
      %6490 = vmatpush1.bf16.xpose.msra.mxu0 0
      %6491 = vmatprep.subr.bf16.mxu0 0
      %6492 = vmatpush1.bf16.xpose.msra.mxu0 0
      %6493 = vmatprep.subr.bf16.mxu0 0
      %6494 = vmatpush1.bf16.xpose.msra.mxu0 0
      %6495 = vmatprep.subr.bf16.mxu0 0
      %6496 = vmatpush1.bf16.xpose.msra.mxu0 0
      %6497 = vmatprep.subr.bf16.mxu0 0
      %6498 = vmatpush1.bf16.xpose.msra.mxu0 0
      %6499 = vmatprep.subr.bf16.mxu0 0
      %6500 = vmatpush1.bf16.xpose.msra.mxu0 0
      %6501 = vmatprep.subr.bf16.mxu0 0
      %6502 = vmatpush1.bf16.xpose.msra.mxu0 0
      %6503 = vmatprep.subr.bf16.mxu0 0
      %6504 = vmatpush1.bf16.xpose.msra.mxu0 0
      %6505 = vmatprep.subr.bf16.mxu0 0
      %6506 = vmatpush1.bf16.xpose.msra.mxu0 0
      %6507 = vmatprep.subr.bf16.mxu0 0
      %6508 = vmatpush1.bf16.xpose.msra.mxu0 0
      %6509 = vmatprep.mubr.bf16.mxu0 0
      %6510 = vmatmul.mubr.bf16.gmra.mrb[0].mxu0 %v6418
      %v6511 = vpop.f32.mrb[0].mxu0
      %v6512 = vadd.f32 0.0, %v6511
      %v6513 = vpop.f32.mrb[0].mxu0
      %v6514 = vpop.f32.mrb[0].mxu0
      %v6515 = vadd.f32 0.0, %v6514
      %v6516 = vpop.f32.mrb[0].mxu0
      %6517 = vmatprep.mubr.bf16.mxu0 0
      %6518 = vmatmul.mubr.bf16.gmra.mrb[0].mxu0 %v6421
      %v6519 = vpop.f32.mrb[0].mxu0
      %v6520 = vadd.f32 0.0, %v6519
      %v6521 = vpop.f32.mrb[0].mxu0
      %v6522 = vpop.f32.mrb[0].mxu0
      %v6523 = vadd.f32 0.0, %v6522
      %v6524 = vpop.f32.mrb[0].mxu0
      %6525 = vmatprep.mubr.bf16.mxu0 0
      %6526 = vmatmul.mubr.bf16.gmra.mrb[0].mxu0 %v6424
      %v6527 = vpop.f32.mrb[0].mxu0
      %v6528 = vadd.f32 0.0, %v6527
      %v6529 = vpop.f32.mrb[0].mxu0
      %v6530 = vpop.f32.mrb[0].mxu0
      %v6531 = vadd.f32 0.0, %v6530
      %v6532 = vpop.f32.mrb[0].mxu0
      %6533 = vmatprep.mubr.bf16.mxu0 0
      %6534 = vmatmul.mubr.bf16.gmra.mrb[0].mxu0 %v6427
      %v6535 = vpop.f32.mrb[0].mxu0
      %v6536 = vadd.f32 0.0, %v6535
      %v6537 = vpop.f32.mrb[0].mxu0
      %v6538 = vpop.f32.mrb[0].mxu0
      %v6539 = vadd.f32 0.0, %v6538
      %v6540 = vpop.f32.mrb[0].mxu0
      %6541 = vmatprep.mubr.bf16.mxu0 0
      %6542 = vmatmul.mubr.bf16.gmra.mrb[0].mxu0 %v6430
      %v6543 = vpop.f32.mrb[0].mxu0
      %v6544 = vadd.f32 0.0, %v6543
      %v6545 = vpop.f32.mrb[0].mxu0
      %v6546 = vpop.f32.mrb[0].mxu0
      %v6547 = vadd.f32 0.0, %v6546
      %v6548 = vpop.f32.mrb[0].mxu0
      %6549 = vmatprep.mubr.bf16.mxu0 0
      %6550 = vmatmul.mubr.bf16.gmra.mrb[0].mxu0 %v6433
      %v6551 = vpop.f32.mrb[0].mxu0
      %v6552 = vadd.f32 0.0, %v6551
      %v6553 = vpop.f32.mrb[0].mxu0
      %v6554 = vpop.f32.mrb[0].mxu0
      %v6555 = vadd.f32 0.0, %v6554
      %v6556 = vpop.f32.mrb[0].mxu0
      %6557 = vmatprep.mubr.bf16.mxu0 0
      %6558 = vmatmul.mubr.bf16.gmra.mrb[0].mxu0 %v6436
      %v6559 = vpop.f32.mrb[0].mxu0
      %v6560 = vadd.f32 0.0, %v6559
      %v6561 = vpop.f32.mrb[0].mxu0
      %v6562 = vpop.f32.mrb[0].mxu0
      %v6563 = vadd.f32 0.0, %v6562
      %v6564 = vpop.f32.mrb[0].mxu0
      %6565 = vmatprep.mubr.bf16.mxu0 0
      %6566 = vmatmul.mubr.bf16.gmra.mrb[0].mxu0 %v6439
      %v6567 = vpop.f32.mrb[0].mxu0
      %v6568 = vadd.f32 0.0, %v6567
      %v6569 = vpop.f32.mrb[0].mxu0
      %v6570 = vpop.f32.mrb[0].mxu0
      %v6571 = vadd.f32 0.0, %v6570
      %v6572 = vpop.f32.mrb[0].mxu0
      %6573 = vmatprep.mubr.bf16.mxu0 0
      %6574 = vmatmul.mubr.bf16.gmra.mrb[0].mxu0 %v6442
      %v6575 = vpop.f32.mrb[0].mxu0
      %v6576 = vadd.f32 0.0, %v6575
      %v6577 = vpop.f32.mrb[0].mxu0
      %v6578 = vpop.f32.mrb[0].mxu0
      %v6579 = vadd.f32 0.0, %v6578
      %v6580 = vpop.f32.mrb[0].mxu0
      %6581 = vmatprep.mubr.bf16.mxu0 0
      %6582 = vmatmul.mubr.bf16.gmra.mrb[0].mxu0 %v6445
      %v6583 = vpop.f32.mrb[0].mxu0
      %v6584 = vadd.f32 0.0, %v6583
      %v6585 = vpop.f32.mrb[0].mxu0
      %v6586 = vpop.f32.mrb[0].mxu0
      %v6587 = vadd.f32 0.0, %v6586
      %v6588 = vpop.f32.mrb[0].mxu0
      %6589 = vmatprep.mubr.bf16.mxu0 0
      %6590 = vmatmul.mubr.bf16.gmra.mrb[0].mxu0 %v6448
      %v6591 = vpop.f32.mrb[0].mxu0
      %v6592 = vadd.f32 0.0, %v6591
      %v6593 = vpop.f32.mrb[0].mxu0
      %v6594 = vpop.f32.mrb[0].mxu0
      %v6595 = vadd.f32 0.0, %v6594
      %v6596 = vpop.f32.mrb[0].mxu0
      %6597 = vmatprep.mubr.bf16.mxu0 0
      %6598 = vmatmul.mubr.bf16.gmra.mrb[0].mxu0 %v6451
      %v6599 = vpop.f32.mrb[0].mxu0
      %v6600 = vadd.f32 0.0, %v6599
      %v6601 = vpop.f32.mrb[0].mxu0
      %v6602 = vpop.f32.mrb[0].mxu0
      %v6603 = vadd.f32 0.0, %v6602
      %v6604 = vpop.f32.mrb[0].mxu0
      %6605 = vmatprep.mubr.bf16.mxu0 0
      %6606 = vmatmul.mubr.bf16.gmra.mrb[0].mxu0 %v6454
      %v6607 = vpop.f32.mrb[0].mxu0
      %v6608 = vadd.f32 0.0, %v6607
      %v6609 = vpop.f32.mrb[0].mxu0
      %v6610 = vpop.f32.mrb[0].mxu0
      %v6611 = vadd.f32 0.0, %v6610
      %v6612 = vpop.f32.mrb[0].mxu0
      %6613 = vmatprep.mubr.bf16.mxu0 0
      %6614 = vmatmul.mubr.bf16.gmra.mrb[0].mxu0 %v6457
      %v6615 = vpop.f32.mrb[0].mxu0
      %v6616 = vadd.f32 0.0, %v6615
      %v6617 = vpop.f32.mrb[0].mxu0
      %v6618 = vpop.f32.mrb[0].mxu0
      %v6619 = vadd.f32 0.0, %v6618
      %v6620 = vpop.f32.mrb[0].mxu0
      %6621 = vmatprep.mubr.bf16.mxu0 0
      %6622 = vmatmul.mubr.bf16.gmra.mrb[0].mxu0 %v6460
      %v6623 = vpop.f32.mrb[0].mxu0
      %v6624 = vadd.f32 0.0, %v6623
      %v6625 = vpop.f32.mrb[0].mxu0
      %v6626 = vpop.f32.mrb[0].mxu0
      %v6627 = vadd.f32 0.0, %v6626
      %v6628 = vpop.f32.mrb[0].mxu0
      %6629 = vmatprep.mubr.bf16.mxu0 0
      %6630 = vmatmul.mubr.bf16.gmra.mrb[0].mxu0 %v6463
      %v6631 = vpop.f32.mrb[0].mxu0
      %v6632 = vadd.f32 0.0, %v6631
      %v6633 = vpop.f32.mrb[0].mxu0
      %v6634 = vpop.f32.mrb[0].mxu0
      %v6635 = vadd.f32 0.0, %v6634
      %v6636 = vpop.f32.mrb[0].mxu0
      %6637 = vdwg.mxu0
      %v6638 = vsel %vm675, %v6512, -inf
      %6639 = vmax.xlane.f32.xlu0 %v6638
      %v6640 = vpop.xlane.xlu0 %6639
      %v6641 = vsel %vm675, %v6515, -inf
      %6642 = vmax.xlane.f32.xlu0 %v6641
      %v6643 = vpop.xlane.xlu0 %6642
      %v6644 = vsel %vm675, %v6520, -inf
      %6645 = vmax.xlane.f32.xlu0 %v6644
      %v6646 = vpop.xlane.xlu0 %6645
      %v6647 = vsel %vm675, %v6523, -inf
      %6648 = vmax.xlane.f32.xlu0 %v6647
      %v6649 = vpop.xlane.xlu0 %6648
      %v6650 = vsel %vm675, %v6528, -inf
      %6651 = vmax.xlane.f32.xlu0 %v6650
      %v6652 = vpop.xlane.xlu0 %6651
      %v6653 = vsel %vm675, %v6531, -inf
      %6654 = vmax.xlane.f32.xlu0 %v6653
      %v6655 = vpop.xlane.xlu0 %6654
      %v6656 = vsel %vm675, %v6536, -inf
      %6657 = vmax.xlane.f32.xlu0 %v6656
      %v6658 = vpop.xlane.xlu0 %6657
      %v6659 = vsel %vm675, %v6539, -inf
      %6660 = vmax.xlane.f32.xlu0 %v6659
      %v6661 = vpop.xlane.xlu0 %6660
      %v6662 = vsel %vm675, %v6544, -inf
      %6663 = vmax.xlane.f32.xlu0 %v6662
      %v6664 = vpop.xlane.xlu0 %6663
      %v6665 = vsel %vm675, %v6547, -inf
      %6666 = vmax.xlane.f32.xlu0 %v6665
      %v6667 = vpop.xlane.xlu0 %6666
      %v6668 = vsel %vm675, %v6552, -inf
      %6669 = vmax.xlane.f32.xlu0 %v6668
      %v6670 = vpop.xlane.xlu0 %6669
      %v6671 = vsel %vm675, %v6555, -inf
      %6672 = vmax.xlane.f32.xlu0 %v6671
      %v6673 = vpop.xlane.xlu0 %6672
      %v6674 = vsel %vm675, %v6560, -inf
      %6675 = vmax.xlane.f32.xlu0 %v6674
      %v6676 = vpop.xlane.xlu0 %6675
      %v6677 = vsel %vm675, %v6563, -inf
      %6678 = vmax.xlane.f32.xlu0 %v6677
      %v6679 = vpop.xlane.xlu0 %6678
      %v6680 = vsel %vm675, %v6568, -inf
      %6681 = vmax.xlane.f32.xlu0 %v6680
      %v6682 = vpop.xlane.xlu0 %6681
      %v6683 = vsel %vm675, %v6571, -inf
      %6684 = vmax.xlane.f32.xlu0 %v6683
      %v6685 = vpop.xlane.xlu0 %6684
      %v6686 = vsel %vm675, %v6576, -inf
      %6687 = vmax.xlane.f32.xlu0 %v6686
      %v6688 = vpop.xlane.xlu0 %6687
      %v6689 = vsel %vm675, %v6579, -inf
      %6690 = vmax.xlane.f32.xlu0 %v6689
      %v6691 = vpop.xlane.xlu0 %6690
      %v6692 = vsel %vm675, %v6584, -inf
      %6693 = vmax.xlane.f32.xlu0 %v6692
      %v6694 = vpop.xlane.xlu0 %6693
      %v6695 = vsel %vm675, %v6587, -inf
      %6696 = vmax.xlane.f32.xlu0 %v6695
      %v6697 = vpop.xlane.xlu0 %6696
      %v6698 = vsel %vm675, %v6592, -inf
      %6699 = vmax.xlane.f32.xlu0 %v6698
      %v6700 = vpop.xlane.xlu0 %6699
      %v6701 = vsel %vm675, %v6595, -inf
      %6702 = vmax.xlane.f32.xlu0 %v6701
      %v6703 = vpop.xlane.xlu0 %6702
      %v6704 = vsel %vm675, %v6600, -inf
      %6705 = vmax.xlane.f32.xlu0 %v6704
      %v6706 = vpop.xlane.xlu0 %6705
      %v6707 = vsel %vm675, %v6603, -inf
      %6708 = vmax.xlane.f32.xlu0 %v6707
      %v6709 = vpop.xlane.xlu0 %6708
      %v6710 = vsel %vm675, %v6608, -inf
      %6711 = vmax.xlane.f32.xlu0 %v6710
      %v6712 = vpop.xlane.xlu0 %6711
      %v6713 = vsel %vm675, %v6611, -inf
      %6714 = vmax.xlane.f32.xlu0 %v6713
      %v6715 = vpop.xlane.xlu0 %6714
      %v6716 = vsel %vm675, %v6616, -inf
      %6717 = vmax.xlane.f32.xlu0 %v6716
      %v6718 = vpop.xlane.xlu0 %6717
      %v6719 = vsel %vm675, %v6619, -inf
      %6720 = vmax.xlane.f32.xlu0 %v6719
      %v6721 = vpop.xlane.xlu0 %6720
      %v6722 = vsel %vm675, %v6624, -inf
      %6723 = vmax.xlane.f32.xlu0 %v6722
      %v6724 = vpop.xlane.xlu0 %6723
      %v6725 = vsel %vm675, %v6627, -inf
      %6726 = vmax.xlane.f32.xlu0 %v6725
      %v6727 = vpop.xlane.xlu0 %6726
      %v6728 = vsel %vm675, %v6632, -inf
      %6729 = vmax.xlane.f32.xlu0 %v6728
      %v6730 = vpop.xlane.xlu0 %6729
      %v6731 = vsel %vm675, %v6635, -inf
      %6732 = vmax.xlane.f32.xlu0 %v6731
      %v6733 = vpop.xlane.xlu0 %6732
      %v6734 = vsub.f32 %v6512, %v6640
      %v6735 = vsub.f32 %v6515, %v6643
      %v6736 = vsub.f32 %v6520, %v6646
      %v6737 = vsub.f32 %v6523, %v6649
      %v6738 = vsub.f32 %v6528, %v6652
      %v6739 = vsub.f32 %v6531, %v6655
      %v6740 = vsub.f32 %v6536, %v6658
      %v6741 = vsub.f32 %v6539, %v6661
      %v6742 = vsub.f32 %v6544, %v6664
      %v6743 = vsub.f32 %v6547, %v6667
      %v6744 = vsub.f32 %v6552, %v6670
      %v6745 = vsub.f32 %v6555, %v6673
      %v6746 = vsub.f32 %v6560, %v6676
      %v6747 = vsub.f32 %v6563, %v6679
      %v6748 = vsub.f32 %v6568, %v6682
      %v6749 = vsub.f32 %v6571, %v6685
      %v6750 = vsub.f32 %v6576, %v6688
      %v6751 = vsub.f32 %v6579, %v6691
      %v6752 = vsub.f32 %v6584, %v6694
      %v6753 = vsub.f32 %v6587, %v6697
      %v6754 = vsub.f32 %v6592, %v6700
      %v6755 = vsub.f32 %v6595, %v6703
      %v6756 = vsub.f32 %v6600, %v6706
      %v6757 = vsub.f32 %v6603, %v6709
      %v6758 = vsub.f32 %v6608, %v6712
      %v6759 = vsub.f32 %v6611, %v6715
      %v6760 = vsub.f32 %v6616, %v6718
      %v6761 = vsub.f32 %v6619, %v6721
      %v6762 = vsub.f32 %v6624, %v6724
      %v6763 = vsub.f32 %v6627, %v6727
      %v6764 = vsub.f32 %v6632, %v6730
      %v6765 = vsub.f32 %v6635, %v6733
      %v6766 = vmul.f32 %v6734, 1.442695
      %v6767 = vpow.pop %v6766
      %v6768 = vmul.f32 %v6735, 1.442695
      %v6769 = vpow.pop %v6768
      %v6770 = vmul.f32 %v6736, 1.442695
      %v6771 = vpow.pop %v6770
      %v6772 = vmul.f32 %v6737, 1.442695
      %v6773 = vpow.pop %v6772
      %v6774 = vmul.f32 %v6738, 1.442695
      %v6775 = vpow.pop %v6774
      %v6776 = vmul.f32 %v6739, 1.442695
      %v6777 = vpow.pop %v6776
      %v6778 = vmul.f32 %v6740, 1.442695
      %v6779 = vpow.pop %v6778
      %v6780 = vmul.f32 %v6741, 1.442695
      %v6781 = vpow.pop %v6780
      %v6782 = vmul.f32 %v6742, 1.442695
      %v6783 = vpow.pop %v6782
      %v6784 = vmul.f32 %v6743, 1.442695
      %v6785 = vpow.pop %v6784
      %v6786 = vmul.f32 %v6744, 1.442695
      %v6787 = vpow.pop %v6786
      %v6788 = vmul.f32 %v6745, 1.442695
      %v6789 = vpow.pop %v6788
      %v6790 = vmul.f32 %v6746, 1.442695
      %v6791 = vpow.pop %v6790
      %v6792 = vmul.f32 %v6747, 1.442695
      %v6793 = vpow.pop %v6792
      %v6794 = vmul.f32 %v6748, 1.442695
      %v6795 = vpow.pop %v6794
      %v6796 = vmul.f32 %v6749, 1.442695
      %v6797 = vpow.pop %v6796
      %v6798 = vmul.f32 %v6750, 1.442695
      %v6799 = vpow.pop %v6798
      %v6800 = vmul.f32 %v6751, 1.442695
      %v6801 = vpow.pop %v6800
      %v6802 = vmul.f32 %v6752, 1.442695
      %v6803 = vpow.pop %v6802
      %v6804 = vmul.f32 %v6753, 1.442695
      %v6805 = vpow.pop %v6804
      %v6806 = vmul.f32 %v6754, 1.442695
      %v6807 = vpow.pop %v6806
      %v6808 = vmul.f32 %v6755, 1.442695
      %v6809 = vpow.pop %v6808
      %v6810 = vmul.f32 %v6756, 1.442695
      %v6811 = vpow.pop %v6810
      %v6812 = vmul.f32 %v6757, 1.442695
      %v6813 = vpow.pop %v6812
      %v6814 = vmul.f32 %v6758, 1.442695
      %v6815 = vpow.pop %v6814
      %v6816 = vmul.f32 %v6759, 1.442695
      %v6817 = vpow.pop %v6816
      %v6818 = vmul.f32 %v6760, 1.442695
      %v6819 = vpow.pop %v6818
      %v6820 = vmul.f32 %v6761, 1.442695
      %v6821 = vpow.pop %v6820
      %v6822 = vmul.f32 %v6762, 1.442695
      %v6823 = vpow.pop %v6822
      %v6824 = vmul.f32 %v6763, 1.442695
      %v6825 = vpow.pop %v6824
      %v6826 = vmul.f32 %v6764, 1.442695
      %v6827 = vpow.pop %v6826
      %v6828 = vmul.f32 %v6765, 1.442695
      %v6829 = vpow.pop %v6828
      %v6830 = vsel %vm675, %v6767, 0.0
      %6831 = vadd.xlane.f32.xlu0 %v6830
      %v6832 = vpop.xlane.xlu0 %6831
      %v6833 = vsel %vm675, %v6769, 0.0
      %6834 = vadd.xlane.f32.xlu0 %v6833
      %v6835 = vpop.xlane.xlu0 %6834
      %v6836 = vsel %vm675, %v6771, 0.0
      %6837 = vadd.xlane.f32.xlu0 %v6836
      %v6838 = vpop.xlane.xlu0 %6837
      %v6839 = vsel %vm675, %v6773, 0.0
      %6840 = vadd.xlane.f32.xlu0 %v6839
      %v6841 = vpop.xlane.xlu0 %6840
      %v6842 = vsel %vm675, %v6775, 0.0
      %6843 = vadd.xlane.f32.xlu0 %v6842
      %v6844 = vpop.xlane.xlu0 %6843
      %v6845 = vsel %vm675, %v6777, 0.0
      %6846 = vadd.xlane.f32.xlu0 %v6845
      %v6847 = vpop.xlane.xlu0 %6846
      %v6848 = vsel %vm675, %v6779, 0.0
      %6849 = vadd.xlane.f32.xlu0 %v6848
      %v6850 = vpop.xlane.xlu0 %6849
      %v6851 = vsel %vm675, %v6781, 0.0
      %6852 = vadd.xlane.f32.xlu0 %v6851
      %v6853 = vpop.xlane.xlu0 %6852
      %v6854 = vsel %vm675, %v6783, 0.0
      %6855 = vadd.xlane.f32.xlu0 %v6854
      %v6856 = vpop.xlane.xlu0 %6855
      %v6857 = vsel %vm675, %v6785, 0.0
      %6858 = vadd.xlane.f32.xlu0 %v6857
      %v6859 = vpop.xlane.xlu0 %6858
      %v6860 = vsel %vm675, %v6787, 0.0
      %6861 = vadd.xlane.f32.xlu0 %v6860
      %v6862 = vpop.xlane.xlu0 %6861
      %v6863 = vsel %vm675, %v6789, 0.0
      %6864 = vadd.xlane.f32.xlu0 %v6863
      %v6865 = vpop.xlane.xlu0 %6864
      %v6866 = vsel %vm675, %v6791, 0.0
      %6867 = vadd.xlane.f32.xlu0 %v6866
      %v6868 = vpop.xlane.xlu0 %6867
      %v6869 = vsel %vm675, %v6793, 0.0
      %6870 = vadd.xlane.f32.xlu0 %v6869
      %v6871 = vpop.xlane.xlu0 %6870
      %v6872 = vsel %vm675, %v6795, 0.0
      %6873 = vadd.xlane.f32.xlu0 %v6872
      %v6874 = vpop.xlane.xlu0 %6873
      %v6875 = vsel %vm675, %v6797, 0.0
      %6876 = vadd.xlane.f32.xlu0 %v6875
      %v6877 = vpop.xlane.xlu0 %6876
      %v6878 = vsel %vm675, %v6799, 0.0
      %6879 = vadd.xlane.f32.xlu0 %v6878
      %v6880 = vpop.xlane.xlu0 %6879
      %v6881 = vsel %vm675, %v6801, 0.0
      %6882 = vadd.xlane.f32.xlu0 %v6881
      %v6883 = vpop.xlane.xlu0 %6882
      %v6884 = vsel %vm675, %v6803, 0.0
      %6885 = vadd.xlane.f32.xlu0 %v6884
      %v6886 = vpop.xlane.xlu0 %6885
      %v6887 = vsel %vm675, %v6805, 0.0
      %6888 = vadd.xlane.f32.xlu0 %v6887
      %v6889 = vpop.xlane.xlu0 %6888
      %v6890 = vsel %vm675, %v6807, 0.0
      %6891 = vadd.xlane.f32.xlu0 %v6890
      %v6892 = vpop.xlane.xlu0 %6891
      %v6893 = vsel %vm675, %v6809, 0.0
      %6894 = vadd.xlane.f32.xlu0 %v6893
      %v6895 = vpop.xlane.xlu0 %6894
      %v6896 = vsel %vm675, %v6811, 0.0
      %6897 = vadd.xlane.f32.xlu0 %v6896
      %v6898 = vpop.xlane.xlu0 %6897
      %v6899 = vsel %vm675, %v6813, 0.0
      %6900 = vadd.xlane.f32.xlu0 %v6899
      %v6901 = vpop.xlane.xlu0 %6900
      %v6902 = vsel %vm675, %v6815, 0.0
      %6903 = vadd.xlane.f32.xlu0 %v6902
      %v6904 = vpop.xlane.xlu0 %6903
      %v6905 = vsel %vm675, %v6817, 0.0
      %6906 = vadd.xlane.f32.xlu0 %v6905
      %v6907 = vpop.xlane.xlu0 %6906
      %v6908 = vsel %vm675, %v6819, 0.0
      %6909 = vadd.xlane.f32.xlu0 %v6908
      %v6910 = vpop.xlane.xlu0 %6909
      %v6911 = vsel %vm675, %v6821, 0.0
      %6912 = vadd.xlane.f32.xlu0 %v6911
      %v6913 = vpop.xlane.xlu0 %6912
      %v6914 = vsel %vm675, %v6823, 0.0
      %6915 = vadd.xlane.f32.xlu0 %v6914
      %v6916 = vpop.xlane.xlu0 %6915
      %v6917 = vsel %vm675, %v6825, 0.0
      %6918 = vadd.xlane.f32.xlu0 %v6917
      %v6919 = vpop.xlane.xlu0 %6918
      %v6920 = vsel %vm675, %v6827, 0.0
      %6921 = vadd.xlane.f32.xlu0 %v6920
      %v6922 = vpop.xlane.xlu0 %6921
      %v6923 = vsel %vm675, %v6829, 0.0
      %6924 = vadd.xlane.f32.xlu0 %v6923
      %v6925 = vpop.xlane.xlu0 %6924
      %v6926 = vrcp.pop %v6832
      %v6927 = vrcp.pop %v6835
      %v6928 = vrcp.pop %v6838
      %v6929 = vrcp.pop %v6841
      %v6930 = vrcp.pop %v6844
      %v6931 = vrcp.pop %v6847
      %v6932 = vrcp.pop %v6850
      %v6933 = vrcp.pop %v6853
      %v6934 = vrcp.pop %v6856
      %v6935 = vrcp.pop %v6859
      %v6936 = vrcp.pop %v6862
      %v6937 = vrcp.pop %v6865
      %v6938 = vrcp.pop %v6868
      %v6939 = vrcp.pop %v6871
      %v6940 = vrcp.pop %v6874
      %v6941 = vrcp.pop %v6877
      %v6942 = vrcp.pop %v6880
      %v6943 = vrcp.pop %v6883
      %v6944 = vrcp.pop %v6886
      %v6945 = vrcp.pop %v6889
      %v6946 = vrcp.pop %v6892
      %v6947 = vrcp.pop %v6895
      %v6948 = vrcp.pop %v6898
      %v6949 = vrcp.pop %v6901
      %v6950 = vrcp.pop %v6904
      %v6951 = vrcp.pop %v6907
      %v6952 = vrcp.pop %v6910
      %v6953 = vrcp.pop %v6913
      %v6954 = vrcp.pop %v6916
      %v6955 = vrcp.pop %v6919
      %v6956 = vrcp.pop %v6922
      %v6957 = vrcp.pop %v6925
      %v6958 = vmul.f32 %v6767, %v6926
      %v6959 = vmul.f32 %v6769, %v6927
      %v6960 = vmul.f32 %v6771, %v6928
      %v6961 = vmul.f32 %v6773, %v6929
      %v6962 = vmul.f32 %v6775, %v6930
      %v6963 = vmul.f32 %v6777, %v6931
      %v6964 = vmul.f32 %v6779, %v6932
      %v6965 = vmul.f32 %v6781, %v6933
      %v6966 = vmul.f32 %v6783, %v6934
      %v6967 = vmul.f32 %v6785, %v6935
      %v6968 = vmul.f32 %v6787, %v6936
      %v6969 = vmul.f32 %v6789, %v6937
      %v6970 = vmul.f32 %v6791, %v6938
      %v6971 = vmul.f32 %v6793, %v6939
      %v6972 = vmul.f32 %v6795, %v6940
      %v6973 = vmul.f32 %v6797, %v6941
      %v6974 = vmul.f32 %v6799, %v6942
      %v6975 = vmul.f32 %v6801, %v6943
      %v6976 = vmul.f32 %v6803, %v6944
      %v6977 = vmul.f32 %v6805, %v6945
      %v6978 = vmul.f32 %v6807, %v6946
      %v6979 = vmul.f32 %v6809, %v6947
      %v6980 = vmul.f32 %v6811, %v6948
      %v6981 = vmul.f32 %v6813, %v6949
      %v6982 = vmul.f32 %v6815, %v6950
      %v6983 = vmul.f32 %v6817, %v6951
      %v6984 = vmul.f32 %v6819, %v6952
      %v6985 = vmul.f32 %v6821, %v6953
      %v6986 = vmul.f32 %v6823, %v6954
      %v6987 = vmul.f32 %v6825, %v6955
      %v6988 = vmul.f32 %v6827, %v6956
      %v6989 = vmul.f32 %v6829, %v6957
      %v6990 = vpack.c.bf16 %v6959, %v6958
      %v6991 = vpack.c.bf16 %v6961, %v6960
      %v6992 = vpack.c.bf16 %v6963, %v6962
      %v6993 = vpack.c.bf16 %v6965, %v6964
      %v6994 = vpack.c.bf16 %v6967, %v6966
      %v6995 = vpack.c.bf16 %v6969, %v6968
      %v6996 = vpack.c.bf16 %v6971, %v6970
      %v6997 = vpack.c.bf16 %v6973, %v6972
      %v6998 = vpack.c.bf16 %v6975, %v6974
      %v6999 = vpack.c.bf16 %v6977, %v6976
      %v7000 = vpack.c.bf16 %v6979, %v6978
      %v7001 = vpack.c.bf16 %v6981, %v6980
      %v7002 = vpack.c.bf16 %v6983, %v6982
      %v7003 = vpack.c.bf16 %v6985, %v6984
      %v7004 = vpack.c.bf16 %v6987, %v6986
      %v7005 = vpack.c.bf16 %v6989, %v6988
      %7006 = vrot.lane.b32.xlu0 %v1060, 72
      %v7007 = vpop.permute.xlu0 %7006
      %7008 = vrot.lane.b32.xlu0 %v1061, 72
      %v7009 = vpop.permute.xlu0 %7008
      %7010 = vrot.lane.b32.xlu0 %v1062, 72
      %v7011 = vpop.permute.xlu0 %7010
      %7012 = vrot.lane.b32.xlu0 %v1063, 72
      %v7013 = vpop.permute.xlu0 %7012
      %v7019 = vsel %vm675, %v6990, 0
      %v7022 = vsel %vm675, %v6991, 0
      %v7025 = vsel %vm675, %v6992, 0
      %v7028 = vsel %vm675, %v6993, 0
      %v7031 = vsel %vm675, %v6994, 0
      %v7034 = vsel %vm675, %v6995, 0
      %v7037 = vsel %vm675, %v6996, 0
      %v7040 = vsel %vm675, %v6997, 0
      %v7043 = vsel %vm675, %v6998, 0
      %v7046 = vsel %vm675, %v6999, 0
      %v7049 = vsel %vm675, %v7000, 0
      %v7052 = vsel %vm675, %v7001, 0
      %v7055 = vsel %vm675, %v7002, 0
      %v7058 = vsel %vm675, %v7003, 0
      %v7061 = vsel %vm675, %v7004, 0
      %v7064 = vsel %vm675, %v7005, 0
      %7066 = vmatprep.subr.bf16.mxu0 0
      %7067 = vmatpush1.bf16.msra.mxu0 %v7007
      %7068 = vmatprep.subr.bf16.mxu0 0
      %7069 = vmatpush1.bf16.msra.mxu0 %v7009
      %7070 = vmatprep.subr.bf16.mxu0 0
      %7071 = vmatpush1.bf16.msra.mxu0 %v7011
      %7072 = vmatprep.subr.bf16.mxu0 0
      %7073 = vmatpush1.bf16.msra.mxu0 %v7013
      %7074 = vmatprep.subr.bf16.mxu0 0
      %7075 = vmatpush1.bf16.msra.mxu0 0
      %7076 = vmatprep.subr.bf16.mxu0 0
      %7077 = vmatpush1.bf16.msra.mxu0 0
      %7078 = vmatprep.subr.bf16.mxu0 0
      %7079 = vmatpush1.bf16.msra.mxu0 0
      %7080 = vmatprep.subr.bf16.mxu0 0
      %7081 = vmatpush1.bf16.msra.mxu0 0
      %7082 = vmatprep.subr.bf16.mxu0 0
      %7083 = vmatpush1.bf16.msra.mxu0 0
      %7084 = vmatprep.subr.bf16.mxu0 0
      %7085 = vmatpush1.bf16.msra.mxu0 0
      %7086 = vmatprep.subr.bf16.mxu0 0
      %7087 = vmatpush1.bf16.msra.mxu0 0
      %7088 = vmatprep.subr.bf16.mxu0 0
      %7089 = vmatpush1.bf16.msra.mxu0 0
      %7090 = vmatprep.subr.bf16.mxu0 0
      %7091 = vmatpush1.bf16.msra.mxu0 0
      %7092 = vmatprep.subr.bf16.mxu0 0
      %7093 = vmatpush1.bf16.msra.mxu0 0
      %7094 = vmatprep.subr.bf16.mxu0 0
      %7095 = vmatpush1.bf16.msra.mxu0 0
      %7096 = vmatprep.subr.bf16.mxu0 0
      %7097 = vmatpush1.bf16.msra.mxu0 0
      %7098 = vmatprep.mubr.bf16.mxu0 0
      %7099 = vmatmul.mubr.bf16.gmra.mrb[0].mxu0 %v7019
      %v7100 = vpop.f32.mrb[0].mxu0
      %v7101 = vadd.f32 0.0, %v7100
      %v7102 = vpop.f32.mrb[0].mxu0
      %v7103 = vpop.f32.mrb[0].mxu0
      %v7104 = vadd.f32 0.0, %v7103
      %v7105 = vpop.f32.mrb[0].mxu0
      %7106 = vmatprep.mubr.bf16.mxu0 0
      %7107 = vmatmul.mubr.bf16.gmra.mrb[0].mxu0 %v7022
      %v7108 = vpop.f32.mrb[0].mxu0
      %v7109 = vadd.f32 0.0, %v7108
      %v7110 = vpop.f32.mrb[0].mxu0
      %v7111 = vpop.f32.mrb[0].mxu0
      %v7112 = vadd.f32 0.0, %v7111
      %v7113 = vpop.f32.mrb[0].mxu0
      %7114 = vmatprep.mubr.bf16.mxu0 0
      %7115 = vmatmul.mubr.bf16.gmra.mrb[0].mxu0 %v7025
      %v7116 = vpop.f32.mrb[0].mxu0
      %v7117 = vadd.f32 0.0, %v7116
      %v7118 = vpop.f32.mrb[0].mxu0
      %v7119 = vpop.f32.mrb[0].mxu0
      %v7120 = vadd.f32 0.0, %v7119
      %v7121 = vpop.f32.mrb[0].mxu0
      %7122 = vmatprep.mubr.bf16.mxu0 0
      %7123 = vmatmul.mubr.bf16.gmra.mrb[0].mxu0 %v7028
      %v7124 = vpop.f32.mrb[0].mxu0
      %v7125 = vadd.f32 0.0, %v7124
      %v7126 = vpop.f32.mrb[0].mxu0
      %v7127 = vpop.f32.mrb[0].mxu0
      %v7128 = vadd.f32 0.0, %v7127
      %v7129 = vpop.f32.mrb[0].mxu0
      %7130 = vmatprep.mubr.bf16.mxu0 0
      %7131 = vmatmul.mubr.bf16.gmra.mrb[0].mxu0 %v7031
      %v7132 = vpop.f32.mrb[0].mxu0
      %v7133 = vadd.f32 0.0, %v7132
      %v7134 = vpop.f32.mrb[0].mxu0
      %v7135 = vpop.f32.mrb[0].mxu0
      %v7136 = vadd.f32 0.0, %v7135
      %v7137 = vpop.f32.mrb[0].mxu0
      %7138 = vmatprep.mubr.bf16.mxu0 0
      %7139 = vmatmul.mubr.bf16.gmra.mrb[0].mxu0 %v7034
      %v7140 = vpop.f32.mrb[0].mxu0
      %v7141 = vadd.f32 0.0, %v7140
      %v7142 = vpop.f32.mrb[0].mxu0
      %v7143 = vpop.f32.mrb[0].mxu0
      %v7144 = vadd.f32 0.0, %v7143
      %v7145 = vpop.f32.mrb[0].mxu0
      %7146 = vmatprep.mubr.bf16.mxu0 0
      %7147 = vmatmul.mubr.bf16.gmra.mrb[0].mxu0 %v7037
      %v7148 = vpop.f32.mrb[0].mxu0
      %v7149 = vadd.f32 0.0, %v7148
      %v7150 = vpop.f32.mrb[0].mxu0
      %v7151 = vpop.f32.mrb[0].mxu0
      %v7152 = vadd.f32 0.0, %v7151
      %v7153 = vpop.f32.mrb[0].mxu0
      %7154 = vmatprep.mubr.bf16.mxu0 0
      %7155 = vmatmul.mubr.bf16.gmra.mrb[0].mxu0 %v7040
      %v7156 = vpop.f32.mrb[0].mxu0
      %v7157 = vadd.f32 0.0, %v7156
      %v7158 = vpop.f32.mrb[0].mxu0
      %v7159 = vpop.f32.mrb[0].mxu0
      %v7160 = vadd.f32 0.0, %v7159
      %v7161 = vpop.f32.mrb[0].mxu0
      %7162 = vmatprep.mubr.bf16.mxu0 0
      %7163 = vmatmul.mubr.bf16.gmra.mrb[0].mxu0 %v7043
      %v7164 = vpop.f32.mrb[0].mxu0
      %v7165 = vadd.f32 0.0, %v7164
      %v7166 = vpop.f32.mrb[0].mxu0
      %v7167 = vpop.f32.mrb[0].mxu0
      %v7168 = vadd.f32 0.0, %v7167
      %v7169 = vpop.f32.mrb[0].mxu0
      %7170 = vmatprep.mubr.bf16.mxu0 0
      %7171 = vmatmul.mubr.bf16.gmra.mrb[0].mxu0 %v7046
      %v7172 = vpop.f32.mrb[0].mxu0
      %v7173 = vadd.f32 0.0, %v7172
      %v7174 = vpop.f32.mrb[0].mxu0
      %v7175 = vpop.f32.mrb[0].mxu0
      %v7176 = vadd.f32 0.0, %v7175
      %v7177 = vpop.f32.mrb[0].mxu0
      %7178 = vmatprep.mubr.bf16.mxu0 0
      %7179 = vmatmul.mubr.bf16.gmra.mrb[0].mxu0 %v7049
      %v7180 = vpop.f32.mrb[0].mxu0
      %v7181 = vadd.f32 0.0, %v7180
      %v7182 = vpop.f32.mrb[0].mxu0
      %v7183 = vpop.f32.mrb[0].mxu0
      %v7184 = vadd.f32 0.0, %v7183
      %v7185 = vpop.f32.mrb[0].mxu0
      %7186 = vmatprep.mubr.bf16.mxu0 0
      %7187 = vmatmul.mubr.bf16.gmra.mrb[0].mxu0 %v7052
      %v7188 = vpop.f32.mrb[0].mxu0
      %v7189 = vadd.f32 0.0, %v7188
      %v7190 = vpop.f32.mrb[0].mxu0
      %v7191 = vpop.f32.mrb[0].mxu0
      %v7192 = vadd.f32 0.0, %v7191
      %v7193 = vpop.f32.mrb[0].mxu0
      %7194 = vmatprep.mubr.bf16.mxu0 0
      %7195 = vmatmul.mubr.bf16.gmra.mrb[0].mxu0 %v7055
      %v7196 = vpop.f32.mrb[0].mxu0
      %v7197 = vadd.f32 0.0, %v7196
      %v7198 = vpop.f32.mrb[0].mxu0
      %v7199 = vpop.f32.mrb[0].mxu0
      %v7200 = vadd.f32 0.0, %v7199
      %v7201 = vpop.f32.mrb[0].mxu0
      %7202 = vmatprep.mubr.bf16.mxu0 0
      %7203 = vmatmul.mubr.bf16.gmra.mrb[0].mxu0 %v7058
      %v7204 = vpop.f32.mrb[0].mxu0
      %v7205 = vadd.f32 0.0, %v7204
      %v7206 = vpop.f32.mrb[0].mxu0
      %v7207 = vpop.f32.mrb[0].mxu0
      %v7208 = vadd.f32 0.0, %v7207
      %v7209 = vpop.f32.mrb[0].mxu0
      %7210 = vmatprep.mubr.bf16.mxu0 0
      %7211 = vmatmul.mubr.bf16.gmra.mrb[0].mxu0 %v7061
      %v7212 = vpop.f32.mrb[0].mxu0
      %v7213 = vadd.f32 0.0, %v7212
      %v7214 = vpop.f32.mrb[0].mxu0
      %v7215 = vpop.f32.mrb[0].mxu0
      %v7216 = vadd.f32 0.0, %v7215
      %v7217 = vpop.f32.mrb[0].mxu0
      %7218 = vmatprep.mubr.bf16.mxu0 0
      %7219 = vmatmul.mubr.bf16.gmra.mrb[0].mxu0 %v7064
      %v7220 = vpop.f32.mrb[0].mxu0
      %v7221 = vadd.f32 0.0, %v7220
      %v7222 = vpop.f32.mrb[0].mxu0
      %v7223 = vpop.f32.mrb[0].mxu0
      %v7224 = vadd.f32 0.0, %v7223
      %v7225 = vpop.f32.mrb[0].mxu0
      %7226 = vdwg.mxu0
      %7259 = vrot.lane.b32.xlu0 %v2001, 8
      %v7260 = vpop.permute.xlu0 %7259
      %7261 = vrot.lane.b32.xlu0 %v2004, 8
      %v7262 = vpop.permute.xlu0 %7261
      %7263 = vrot.lane.b32.xlu0 %v2009, 8
      %v7264 = vpop.permute.xlu0 %7263
      %7265 = vrot.lane.b32.xlu0 %v2012, 8
      %v7266 = vpop.permute.xlu0 %7265
      %7267 = vrot.lane.b32.xlu0 %v2017, 8
      %v7268 = vpop.permute.xlu0 %7267
      %7269 = vrot.lane.b32.xlu0 %v2020, 8
      %v7270 = vpop.permute.xlu0 %7269
      %7271 = vrot.lane.b32.xlu0 %v2025, 8
      %v7272 = vpop.permute.xlu0 %7271
      %7273 = vrot.lane.b32.xlu0 %v2028, 8
      %v7274 = vpop.permute.xlu0 %7273
      %7275 = vrot.lane.b32.xlu0 %v2033, 8
      %v7276 = vpop.permute.xlu0 %7275
      %7277 = vrot.lane.b32.xlu0 %v2036, 8
      %v7278 = vpop.permute.xlu0 %7277
      %7279 = vrot.lane.b32.xlu0 %v2041, 8
      %v7280 = vpop.permute.xlu0 %7279
      %7281 = vrot.lane.b32.xlu0 %v2044, 8
      %v7282 = vpop.permute.xlu0 %7281
      %7283 = vrot.lane.b32.xlu0 %v2049, 8
      %v7284 = vpop.permute.xlu0 %7283
      %7285 = vrot.lane.b32.xlu0 %v2052, 8
      %v7286 = vpop.permute.xlu0 %7285
      %7287 = vrot.lane.b32.xlu0 %v2057, 8
      %v7288 = vpop.permute.xlu0 %7287
      %7289 = vrot.lane.b32.xlu0 %v2060, 8
      %v7290 = vpop.permute.xlu0 %7289
      %7291 = vrot.lane.b32.xlu0 %v2065, 8
      %v7292 = vpop.permute.xlu0 %7291
      %7293 = vrot.lane.b32.xlu0 %v2068, 8
      %v7294 = vpop.permute.xlu0 %7293
      %7295 = vrot.lane.b32.xlu0 %v2073, 8
      %v7296 = vpop.permute.xlu0 %7295
      %7297 = vrot.lane.b32.xlu0 %v2076, 8
      %v7298 = vpop.permute.xlu0 %7297
      %7299 = vrot.lane.b32.xlu0 %v2081, 8
      %v7300 = vpop.permute.xlu0 %7299
      %7301 = vrot.lane.b32.xlu0 %v2084, 8
      %v7302 = vpop.permute.xlu0 %7301
      %7303 = vrot.lane.b32.xlu0 %v2089, 8
      %v7304 = vpop.permute.xlu0 %7303
      %7305 = vrot.lane.b32.xlu0 %v2092, 8
      %v7306 = vpop.permute.xlu0 %7305
      %7307 = vrot.lane.b32.xlu0 %v2097, 8
      %v7308 = vpop.permute.xlu0 %7307
      %7309 = vrot.lane.b32.xlu0 %v2100, 8
      %v7310 = vpop.permute.xlu0 %7309
      %7311 = vrot.lane.b32.xlu0 %v2105, 8
      %v7312 = vpop.permute.xlu0 %7311
      %7313 = vrot.lane.b32.xlu0 %v2108, 8
      %v7314 = vpop.permute.xlu0 %7313
      %7315 = vrot.lane.b32.xlu0 %v2113, 8
      %v7316 = vpop.permute.xlu0 %7315
      %7317 = vrot.lane.b32.xlu0 %v2116, 8
      %v7318 = vpop.permute.xlu0 %7317
      %7319 = vrot.lane.b32.xlu0 %v2121, 8
      %v7320 = vpop.permute.xlu0 %7319
      %7321 = vrot.lane.b32.xlu0 %v2124, 8
      %v7322 = vpop.permute.xlu0 %7321
      %7387 = vrot.lane.b32.xlu0 %v2851, 16
      %v7388 = vpop.permute.xlu0 %7387
      %7389 = vrot.lane.b32.xlu0 %v2854, 16
      %v7390 = vpop.permute.xlu0 %7389
      %7391 = vrot.lane.b32.xlu0 %v2859, 16
      %v7392 = vpop.permute.xlu0 %7391
      %7393 = vrot.lane.b32.xlu0 %v2862, 16
      %v7394 = vpop.permute.xlu0 %7393
      %7395 = vrot.lane.b32.xlu0 %v2867, 16
      %v7396 = vpop.permute.xlu0 %7395
      %7397 = vrot.lane.b32.xlu0 %v2870, 16
      %v7398 = vpop.permute.xlu0 %7397
      %7399 = vrot.lane.b32.xlu0 %v2875, 16
      %v7400 = vpop.permute.xlu0 %7399
      %7401 = vrot.lane.b32.xlu0 %v2878, 16
      %v7402 = vpop.permute.xlu0 %7401
      %7403 = vrot.lane.b32.xlu0 %v2883, 16
      %v7404 = vpop.permute.xlu0 %7403
      %7405 = vrot.lane.b32.xlu0 %v2886, 16
      %v7406 = vpop.permute.xlu0 %7405
      %7407 = vrot.lane.b32.xlu0 %v2891, 16
      %v7408 = vpop.permute.xlu0 %7407
      %7409 = vrot.lane.b32.xlu0 %v2894, 16
      %v7410 = vpop.permute.xlu0 %7409
      %7411 = vrot.lane.b32.xlu0 %v2899, 16
      %v7412 = vpop.permute.xlu0 %7411
      %7413 = vrot.lane.b32.xlu0 %v2902, 16
      %v7414 = vpop.permute.xlu0 %7413
      %7415 = vrot.lane.b32.xlu0 %v2907, 16
      %v7416 = vpop.permute.xlu0 %7415
      %7417 = vrot.lane.b32.xlu0 %v2910, 16
      %v7418 = vpop.permute.xlu0 %7417
      %7419 = vrot.lane.b32.xlu0 %v2915, 16
      %v7420 = vpop.permute.xlu0 %7419
      %7421 = vrot.lane.b32.xlu0 %v2918, 16
      %v7422 = vpop.permute.xlu0 %7421
      %7423 = vrot.lane.b32.xlu0 %v2923, 16
      %v7424 = vpop.permute.xlu0 %7423
      %7425 = vrot.lane.b32.xlu0 %v2926, 16
      %v7426 = vpop.permute.xlu0 %7425
      %7427 = vrot.lane.b32.xlu0 %v2931, 16
      %v7428 = vpop.permute.xlu0 %7427
      %7429 = vrot.lane.b32.xlu0 %v2934, 16
      %v7430 = vpop.permute.xlu0 %7429
      %7431 = vrot.lane.b32.xlu0 %v2939, 16
      %v7432 = vpop.permute.xlu0 %7431
      %7433 = vrot.lane.b32.xlu0 %v2942, 16
      %v7434 = vpop.permute.xlu0 %7433
      %7435 = vrot.lane.b32.xlu0 %v2947, 16
      %v7436 = vpop.permute.xlu0 %7435
      %7437 = vrot.lane.b32.xlu0 %v2950, 16
      %v7438 = vpop.permute.xlu0 %7437
      %7439 = vrot.lane.b32.xlu0 %v2955, 16
      %v7440 = vpop.permute.xlu0 %7439
      %7441 = vrot.lane.b32.xlu0 %v2958, 16
      %v7442 = vpop.permute.xlu0 %7441
      %7443 = vrot.lane.b32.xlu0 %v2963, 16
      %v7444 = vpop.permute.xlu0 %7443
      %7445 = vrot.lane.b32.xlu0 %v2966, 16
      %v7446 = vpop.permute.xlu0 %7445
      %7447 = vrot.lane.b32.xlu0 %v2971, 16
      %v7448 = vpop.permute.xlu0 %7447
      %7449 = vrot.lane.b32.xlu0 %v2974, 16
      %v7450 = vpop.permute.xlu0 %7449
      %7515 = vrot.lane.b32.xlu0 %v3701, 24
      %v7516 = vpop.permute.xlu0 %7515
      %7517 = vrot.lane.b32.xlu0 %v3704, 24
      %v7518 = vpop.permute.xlu0 %7517
      %7519 = vrot.lane.b32.xlu0 %v3709, 24
      %v7520 = vpop.permute.xlu0 %7519
      %7521 = vrot.lane.b32.xlu0 %v3712, 24
      %v7522 = vpop.permute.xlu0 %7521
      %7523 = vrot.lane.b32.xlu0 %v3717, 24
      %v7524 = vpop.permute.xlu0 %7523
      %7525 = vrot.lane.b32.xlu0 %v3720, 24
      %v7526 = vpop.permute.xlu0 %7525
      %7527 = vrot.lane.b32.xlu0 %v3725, 24
      %v7528 = vpop.permute.xlu0 %7527
      %7529 = vrot.lane.b32.xlu0 %v3728, 24
      %v7530 = vpop.permute.xlu0 %7529
      %7531 = vrot.lane.b32.xlu0 %v3733, 24
      %v7532 = vpop.permute.xlu0 %7531
      %7533 = vrot.lane.b32.xlu0 %v3736, 24
      %v7534 = vpop.permute.xlu0 %7533
      %7535 = vrot.lane.b32.xlu0 %v3741, 24
      %v7536 = vpop.permute.xlu0 %7535
      %7537 = vrot.lane.b32.xlu0 %v3744, 24
      %v7538 = vpop.permute.xlu0 %7537
      %7539 = vrot.lane.b32.xlu0 %v3749, 24
      %v7540 = vpop.permute.xlu0 %7539
      %7541 = vrot.lane.b32.xlu0 %v3752, 24
      %v7542 = vpop.permute.xlu0 %7541
      %7543 = vrot.lane.b32.xlu0 %v3757, 24
      %v7544 = vpop.permute.xlu0 %7543
      %7545 = vrot.lane.b32.xlu0 %v3760, 24
      %v7546 = vpop.permute.xlu0 %7545
      %7547 = vrot.lane.b32.xlu0 %v3765, 24
      %v7548 = vpop.permute.xlu0 %7547
      %7549 = vrot.lane.b32.xlu0 %v3768, 24
      %v7550 = vpop.permute.xlu0 %7549
      %7551 = vrot.lane.b32.xlu0 %v3773, 24
      %v7552 = vpop.permute.xlu0 %7551
      %7553 = vrot.lane.b32.xlu0 %v3776, 24
      %v7554 = vpop.permute.xlu0 %7553
      %7555 = vrot.lane.b32.xlu0 %v3781, 24
      %v7556 = vpop.permute.xlu0 %7555
      %7557 = vrot.lane.b32.xlu0 %v3784, 24
      %v7558 = vpop.permute.xlu0 %7557
      %7559 = vrot.lane.b32.xlu0 %v3789, 24
      %v7560 = vpop.permute.xlu0 %7559
      %7561 = vrot.lane.b32.xlu0 %v3792, 24
      %v7562 = vpop.permute.xlu0 %7561
      %7563 = vrot.lane.b32.xlu0 %v3797, 24
      %v7564 = vpop.permute.xlu0 %7563
      %7565 = vrot.lane.b32.xlu0 %v3800, 24
      %v7566 = vpop.permute.xlu0 %7565
      %7567 = vrot.lane.b32.xlu0 %v3805, 24
      %v7568 = vpop.permute.xlu0 %7567
      %7569 = vrot.lane.b32.xlu0 %v3808, 24
      %v7570 = vpop.permute.xlu0 %7569
      %7571 = vrot.lane.b32.xlu0 %v3813, 24
      %v7572 = vpop.permute.xlu0 %7571
      %7573 = vrot.lane.b32.xlu0 %v3816, 24
      %v7574 = vpop.permute.xlu0 %7573
      %7575 = vrot.lane.b32.xlu0 %v3821, 24
      %v7576 = vpop.permute.xlu0 %7575
      %7577 = vrot.lane.b32.xlu0 %v3824, 24
      %v7578 = vpop.permute.xlu0 %7577
      %7643 = vrot.lane.b32.xlu0 %v4551, 32
      %v7644 = vpop.permute.xlu0 %7643
      %7645 = vrot.lane.b32.xlu0 %v4554, 32
      %v7646 = vpop.permute.xlu0 %7645
      %7647 = vrot.lane.b32.xlu0 %v4559, 32
      %v7648 = vpop.permute.xlu0 %7647
      %7649 = vrot.lane.b32.xlu0 %v4562, 32
      %v7650 = vpop.permute.xlu0 %7649
      %7651 = vrot.lane.b32.xlu0 %v4567, 32
      %v7652 = vpop.permute.xlu0 %7651
      %7653 = vrot.lane.b32.xlu0 %v4570, 32
      %v7654 = vpop.permute.xlu0 %7653
      %7655 = vrot.lane.b32.xlu0 %v4575, 32
      %v7656 = vpop.permute.xlu0 %7655
      %7657 = vrot.lane.b32.xlu0 %v4578, 32
      %v7658 = vpop.permute.xlu0 %7657
      %7659 = vrot.lane.b32.xlu0 %v4583, 32
      %v7660 = vpop.permute.xlu0 %7659
      %7661 = vrot.lane.b32.xlu0 %v4586, 32
      %v7662 = vpop.permute.xlu0 %7661
      %7663 = vrot.lane.b32.xlu0 %v4591, 32
      %v7664 = vpop.permute.xlu0 %7663
      %7665 = vrot.lane.b32.xlu0 %v4594, 32
      %v7666 = vpop.permute.xlu0 %7665
      %7667 = vrot.lane.b32.xlu0 %v4599, 32
      %v7668 = vpop.permute.xlu0 %7667
      %7669 = vrot.lane.b32.xlu0 %v4602, 32
      %v7670 = vpop.permute.xlu0 %7669
      %7671 = vrot.lane.b32.xlu0 %v4607, 32
      %v7672 = vpop.permute.xlu0 %7671
      %7673 = vrot.lane.b32.xlu0 %v4610, 32
      %v7674 = vpop.permute.xlu0 %7673
      %7675 = vrot.lane.b32.xlu0 %v4615, 32
      %v7676 = vpop.permute.xlu0 %7675
      %7677 = vrot.lane.b32.xlu0 %v4618, 32
      %v7678 = vpop.permute.xlu0 %7677
      %7679 = vrot.lane.b32.xlu0 %v4623, 32
      %v7680 = vpop.permute.xlu0 %7679
      %7681 = vrot.lane.b32.xlu0 %v4626, 32
      %v7682 = vpop.permute.xlu0 %7681
      %7683 = vrot.lane.b32.xlu0 %v4631, 32
      %v7684 = vpop.permute.xlu0 %7683
      %7685 = vrot.lane.b32.xlu0 %v4634, 32
      %v7686 = vpop.permute.xlu0 %7685
      %7687 = vrot.lane.b32.xlu0 %v4639, 32
      %v7688 = vpop.permute.xlu0 %7687
      %7689 = vrot.lane.b32.xlu0 %v4642, 32
      %v7690 = vpop.permute.xlu0 %7689
      %7691 = vrot.lane.b32.xlu0 %v4647, 32
      %v7692 = vpop.permute.xlu0 %7691
      %7693 = vrot.lane.b32.xlu0 %v4650, 32
      %v7694 = vpop.permute.xlu0 %7693
      %7695 = vrot.lane.b32.xlu0 %v4655, 32
      %v7696 = vpop.permute.xlu0 %7695
      %7697 = vrot.lane.b32.xlu0 %v4658, 32
      %v7698 = vpop.permute.xlu0 %7697
      %7699 = vrot.lane.b32.xlu0 %v4663, 32
      %v7700 = vpop.permute.xlu0 %7699
      %7701 = vrot.lane.b32.xlu0 %v4666, 32
      %v7702 = vpop.permute.xlu0 %7701
      %7703 = vrot.lane.b32.xlu0 %v4671, 32
      %v7704 = vpop.permute.xlu0 %7703
      %7705 = vrot.lane.b32.xlu0 %v4674, 32
      %v7706 = vpop.permute.xlu0 %7705
      %7771 = vrot.lane.b32.xlu0 %v5401, 40
      %v7772 = vpop.permute.xlu0 %7771
      %7773 = vrot.lane.b32.xlu0 %v5404, 40
      %v7774 = vpop.permute.xlu0 %7773
      %7775 = vrot.lane.b32.xlu0 %v5409, 40
      %v7776 = vpop.permute.xlu0 %7775
      %7777 = vrot.lane.b32.xlu0 %v5412, 40
      %v7778 = vpop.permute.xlu0 %7777
      %7779 = vrot.lane.b32.xlu0 %v5417, 40
      %v7780 = vpop.permute.xlu0 %7779
      %7781 = vrot.lane.b32.xlu0 %v5420, 40
      %v7782 = vpop.permute.xlu0 %7781
      %7783 = vrot.lane.b32.xlu0 %v5425, 40
      %v7784 = vpop.permute.xlu0 %7783
      %7785 = vrot.lane.b32.xlu0 %v5428, 40
      %v7786 = vpop.permute.xlu0 %7785
      %7787 = vrot.lane.b32.xlu0 %v5433, 40
      %v7788 = vpop.permute.xlu0 %7787
      %7789 = vrot.lane.b32.xlu0 %v5436, 40
      %v7790 = vpop.permute.xlu0 %7789
      %7791 = vrot.lane.b32.xlu0 %v5441, 40
      %v7792 = vpop.permute.xlu0 %7791
      %7793 = vrot.lane.b32.xlu0 %v5444, 40
      %v7794 = vpop.permute.xlu0 %7793
      %7795 = vrot.lane.b32.xlu0 %v5449, 40
      %v7796 = vpop.permute.xlu0 %7795
      %7797 = vrot.lane.b32.xlu0 %v5452, 40
      %v7798 = vpop.permute.xlu0 %7797
      %7799 = vrot.lane.b32.xlu0 %v5457, 40
      %v7800 = vpop.permute.xlu0 %7799
      %7801 = vrot.lane.b32.xlu0 %v5460, 40
      %v7802 = vpop.permute.xlu0 %7801
      %7803 = vrot.lane.b32.xlu0 %v5465, 40
      %v7804 = vpop.permute.xlu0 %7803
      %7805 = vrot.lane.b32.xlu0 %v5468, 40
      %v7806 = vpop.permute.xlu0 %7805
      %7807 = vrot.lane.b32.xlu0 %v5473, 40
      %v7808 = vpop.permute.xlu0 %7807
      %7809 = vrot.lane.b32.xlu0 %v5476, 40
      %v7810 = vpop.permute.xlu0 %7809
      %7811 = vrot.lane.b32.xlu0 %v5481, 40
      %v7812 = vpop.permute.xlu0 %7811
      %7813 = vrot.lane.b32.xlu0 %v5484, 40
      %v7814 = vpop.permute.xlu0 %7813
      %7815 = vrot.lane.b32.xlu0 %v5489, 40
      %v7816 = vpop.permute.xlu0 %7815
      %7817 = vrot.lane.b32.xlu0 %v5492, 40
      %v7818 = vpop.permute.xlu0 %7817
      %7819 = vrot.lane.b32.xlu0 %v5497, 40
      %v7820 = vpop.permute.xlu0 %7819
      %7821 = vrot.lane.b32.xlu0 %v5500, 40
      %v7822 = vpop.permute.xlu0 %7821
      %7823 = vrot.lane.b32.xlu0 %v5505, 40
      %v7824 = vpop.permute.xlu0 %7823
      %7825 = vrot.lane.b32.xlu0 %v5508, 40
      %v7826 = vpop.permute.xlu0 %7825
      %7827 = vrot.lane.b32.xlu0 %v5513, 40
      %v7828 = vpop.permute.xlu0 %7827
      %7829 = vrot.lane.b32.xlu0 %v5516, 40
      %v7830 = vpop.permute.xlu0 %7829
      %7831 = vrot.lane.b32.xlu0 %v5521, 40
      %v7832 = vpop.permute.xlu0 %7831
      %7833 = vrot.lane.b32.xlu0 %v5524, 40
      %v7834 = vpop.permute.xlu0 %7833
      %7899 = vrot.lane.b32.xlu0 %v6251, 48
      %v7900 = vpop.permute.xlu0 %7899
      %7901 = vrot.lane.b32.xlu0 %v6254, 48
      %v7902 = vpop.permute.xlu0 %7901
      %7903 = vrot.lane.b32.xlu0 %v6259, 48
      %v7904 = vpop.permute.xlu0 %7903
      %7905 = vrot.lane.b32.xlu0 %v6262, 48
      %v7906 = vpop.permute.xlu0 %7905
      %7907 = vrot.lane.b32.xlu0 %v6267, 48
      %v7908 = vpop.permute.xlu0 %7907
      %7909 = vrot.lane.b32.xlu0 %v6270, 48
      %v7910 = vpop.permute.xlu0 %7909
      %7911 = vrot.lane.b32.xlu0 %v6275, 48
      %v7912 = vpop.permute.xlu0 %7911
      %7913 = vrot.lane.b32.xlu0 %v6278, 48
      %v7914 = vpop.permute.xlu0 %7913
      %7915 = vrot.lane.b32.xlu0 %v6283, 48
      %v7916 = vpop.permute.xlu0 %7915
      %7917 = vrot.lane.b32.xlu0 %v6286, 48
      %v7918 = vpop.permute.xlu0 %7917
      %7919 = vrot.lane.b32.xlu0 %v6291, 48
      %v7920 = vpop.permute.xlu0 %7919
      %7921 = vrot.lane.b32.xlu0 %v6294, 48
      %v7922 = vpop.permute.xlu0 %7921
      %7923 = vrot.lane.b32.xlu0 %v6299, 48
      %v7924 = vpop.permute.xlu0 %7923
      %7925 = vrot.lane.b32.xlu0 %v6302, 48
      %v7926 = vpop.permute.xlu0 %7925
      %7927 = vrot.lane.b32.xlu0 %v6307, 48
      %v7928 = vpop.permute.xlu0 %7927
      %7929 = vrot.lane.b32.xlu0 %v6310, 48
      %v7930 = vpop.permute.xlu0 %7929
      %7931 = vrot.lane.b32.xlu0 %v6315, 48
      %v7932 = vpop.permute.xlu0 %7931
      %7933 = vrot.lane.b32.xlu0 %v6318, 48
      %v7934 = vpop.permute.xlu0 %7933
      %7935 = vrot.lane.b32.xlu0 %v6323, 48
      %v7936 = vpop.permute.xlu0 %7935
      %7937 = vrot.lane.b32.xlu0 %v6326, 48
      %v7938 = vpop.permute.xlu0 %7937
      %7939 = vrot.lane.b32.xlu0 %v6331, 48
      %v7940 = vpop.permute.xlu0 %7939
      %7941 = vrot.lane.b32.xlu0 %v6334, 48
      %v7942 = vpop.permute.xlu0 %7941
      %7943 = vrot.lane.b32.xlu0 %v6339, 48
      %v7944 = vpop.permute.xlu0 %7943
      %7945 = vrot.lane.b32.xlu0 %v6342, 48
      %v7946 = vpop.permute.xlu0 %7945
      %7947 = vrot.lane.b32.xlu0 %v6347, 48
      %v7948 = vpop.permute.xlu0 %7947
      %7949 = vrot.lane.b32.xlu0 %v6350, 48
      %v7950 = vpop.permute.xlu0 %7949
      %7951 = vrot.lane.b32.xlu0 %v6355, 48
      %v7952 = vpop.permute.xlu0 %7951
      %7953 = vrot.lane.b32.xlu0 %v6358, 48
      %v7954 = vpop.permute.xlu0 %7953
      %7955 = vrot.lane.b32.xlu0 %v6363, 48
      %v7956 = vpop.permute.xlu0 %7955
      %7957 = vrot.lane.b32.xlu0 %v6366, 48
      %v7958 = vpop.permute.xlu0 %7957
      %7959 = vrot.lane.b32.xlu0 %v6371, 48
      %v7960 = vpop.permute.xlu0 %7959
      %7961 = vrot.lane.b32.xlu0 %v6374, 48
      %v7962 = vpop.permute.xlu0 %7961
      %8027 = vrot.lane.b32.xlu0 %v7101, 56
      %v8028 = vpop.permute.xlu0 %8027
      %8029 = vrot.lane.b32.xlu0 %v7104, 56
      %v8030 = vpop.permute.xlu0 %8029
      %8031 = vrot.lane.b32.xlu0 %v7109, 56
      %v8032 = vpop.permute.xlu0 %8031
      %8033 = vrot.lane.b32.xlu0 %v7112, 56
      %v8034 = vpop.permute.xlu0 %8033
      %8035 = vrot.lane.b32.xlu0 %v7117, 56
      %v8036 = vpop.permute.xlu0 %8035
      %8037 = vrot.lane.b32.xlu0 %v7120, 56
      %v8038 = vpop.permute.xlu0 %8037
      %8039 = vrot.lane.b32.xlu0 %v7125, 56
      %v8040 = vpop.permute.xlu0 %8039
      %8041 = vrot.lane.b32.xlu0 %v7128, 56
      %v8042 = vpop.permute.xlu0 %8041
      %8043 = vrot.lane.b32.xlu0 %v7133, 56
      %v8044 = vpop.permute.xlu0 %8043
      %8045 = vrot.lane.b32.xlu0 %v7136, 56
      %v8046 = vpop.permute.xlu0 %8045
      %8047 = vrot.lane.b32.xlu0 %v7141, 56
      %v8048 = vpop.permute.xlu0 %8047
      %8049 = vrot.lane.b32.xlu0 %v7144, 56
      %v8050 = vpop.permute.xlu0 %8049
      %8051 = vrot.lane.b32.xlu0 %v7149, 56
      %v8052 = vpop.permute.xlu0 %8051
      %8053 = vrot.lane.b32.xlu0 %v7152, 56
      %v8054 = vpop.permute.xlu0 %8053
      %8055 = vrot.lane.b32.xlu0 %v7157, 56
      %v8056 = vpop.permute.xlu0 %8055
      %8057 = vrot.lane.b32.xlu0 %v7160, 56
      %v8058 = vpop.permute.xlu0 %8057
      %8059 = vrot.lane.b32.xlu0 %v7165, 56
      %v8060 = vpop.permute.xlu0 %8059
      %8061 = vrot.lane.b32.xlu0 %v7168, 56
      %v8062 = vpop.permute.xlu0 %8061
      %8063 = vrot.lane.b32.xlu0 %v7173, 56
      %v8064 = vpop.permute.xlu0 %8063
      %8065 = vrot.lane.b32.xlu0 %v7176, 56
      %v8066 = vpop.permute.xlu0 %8065
      %8067 = vrot.lane.b32.xlu0 %v7181, 56
      %v8068 = vpop.permute.xlu0 %8067
      %8069 = vrot.lane.b32.xlu0 %v7184, 56
      %v8070 = vpop.permute.xlu0 %8069
      %8071 = vrot.lane.b32.xlu0 %v7189, 56
      %v8072 = vpop.permute.xlu0 %8071
      %8073 = vrot.lane.b32.xlu0 %v7192, 56
      %v8074 = vpop.permute.xlu0 %8073
      %8075 = vrot.lane.b32.xlu0 %v7197, 56
      %v8076 = vpop.permute.xlu0 %8075
      %8077 = vrot.lane.b32.xlu0 %v7200, 56
      %v8078 = vpop.permute.xlu0 %8077
      %8079 = vrot.lane.b32.xlu0 %v7205, 56
      %v8080 = vpop.permute.xlu0 %8079
      %8081 = vrot.lane.b32.xlu0 %v7208, 56
      %v8082 = vpop.permute.xlu0 %8081
      %8083 = vrot.lane.b32.xlu0 %v7213, 56
      %v8084 = vpop.permute.xlu0 %8083
      %8085 = vrot.lane.b32.xlu0 %v7216, 56
      %v8086 = vpop.permute.xlu0 %8085
      %8087 = vrot.lane.b32.xlu0 %v7221, 56
      %v8088 = vpop.permute.xlu0 %8087
      %8089 = vrot.lane.b32.xlu0 %v7224, 56
      %v8090 = vpop.permute.xlu0 %8089
      %v8123 = vsel %vm453, %v1151, %v7260
      %v8124 = vsel %vm453, %v1154, %v7262
      %v8125 = vsel %vm453, %v1159, %v7264
      %v8126 = vsel %vm453, %v1162, %v7266
      %v8127 = vsel %vm453, %v1167, %v7268
      %v8128 = vsel %vm453, %v1170, %v7270
      %v8129 = vsel %vm453, %v1175, %v7272
      %v8130 = vsel %vm453, %v1178, %v7274
      %v8131 = vsel %vm453, %v1183, %v7276
      %v8132 = vsel %vm453, %v1186, %v7278
      %v8133 = vsel %vm453, %v1191, %v7280
      %v8134 = vsel %vm453, %v1194, %v7282
      %v8135 = vsel %vm453, %v1199, %v7284
      %v8136 = vsel %vm453, %v1202, %v7286
      %v8137 = vsel %vm453, %v1207, %v7288
      %v8138 = vsel %vm453, %v1210, %v7290
      %v8139 = vsel %vm453, %v1215, %v7292
      %v8140 = vsel %vm453, %v1218, %v7294
      %v8141 = vsel %vm453, %v1223, %v7296
      %v8142 = vsel %vm453, %v1226, %v7298
      %v8143 = vsel %vm453, %v1231, %v7300
      %v8144 = vsel %vm453, %v1234, %v7302
      %v8145 = vsel %vm453, %v1239, %v7304
      %v8146 = vsel %vm453, %v1242, %v7306
      %v8147 = vsel %vm453, %v1247, %v7308
      %v8148 = vsel %vm453, %v1250, %v7310
      %v8149 = vsel %vm453, %v1255, %v7312
      %v8150 = vsel %vm453, %v1258, %v7314
      %v8151 = vsel %vm453, %v1263, %v7316
      %v8152 = vsel %vm453, %v1266, %v7318
      %v8153 = vsel %vm453, %v1271, %v7320
      %v8154 = vsel %vm453, %v1274, %v7322
      %vm8155 = vcmask 130048
      %v8156 = vsel %vm8155, %v8123, %v7388
      %v8157 = vsel %vm8155, %v8124, %v7390
      %v8158 = vsel %vm8155, %v8125, %v7392
      %v8159 = vsel %vm8155, %v8126, %v7394
      %v8160 = vsel %vm8155, %v8127, %v7396
      %v8161 = vsel %vm8155, %v8128, %v7398
      %v8162 = vsel %vm8155, %v8129, %v7400
      %v8163 = vsel %vm8155, %v8130, %v7402
      %v8164 = vsel %vm8155, %v8131, %v7404
      %v8165 = vsel %vm8155, %v8132, %v7406
      %v8166 = vsel %vm8155, %v8133, %v7408
      %v8167 = vsel %vm8155, %v8134, %v7410
      %v8168 = vsel %vm8155, %v8135, %v7412
      %v8169 = vsel %vm8155, %v8136, %v7414
      %v8170 = vsel %vm8155, %v8137, %v7416
      %v8171 = vsel %vm8155, %v8138, %v7418
      %v8172 = vsel %vm8155, %v8139, %v7420
      %v8173 = vsel %vm8155, %v8140, %v7422
      %v8174 = vsel %vm8155, %v8141, %v7424
      %v8175 = vsel %vm8155, %v8142, %v7426
      %v8176 = vsel %vm8155, %v8143, %v7428
      %v8177 = vsel %vm8155, %v8144, %v7430
      %v8178 = vsel %vm8155, %v8145, %v7432
      %v8179 = vsel %vm8155, %v8146, %v7434
      %v8180 = vsel %vm8155, %v8147, %v7436
      %v8181 = vsel %vm8155, %v8148, %v7438
      %v8182 = vsel %vm8155, %v8149, %v7440
      %v8183 = vsel %vm8155, %v8150, %v7442
      %v8184 = vsel %vm8155, %v8151, %v7444
      %v8185 = vsel %vm8155, %v8152, %v7446
      %v8186 = vsel %vm8155, %v8153, %v7448
      %v8187 = vsel %vm8155, %v8154, %v7450
      %vm8188 = vcmask 195584
      %v8189 = vsel %vm8188, %v8156, %v7516
      %v8190 = vsel %vm8188, %v8157, %v7518
      %v8191 = vsel %vm8188, %v8158, %v7520
      %v8192 = vsel %vm8188, %v8159, %v7522
      %v8193 = vsel %vm8188, %v8160, %v7524
      %v8194 = vsel %vm8188, %v8161, %v7526
      %v8195 = vsel %vm8188, %v8162, %v7528
      %v8196 = vsel %vm8188, %v8163, %v7530
      %v8197 = vsel %vm8188, %v8164, %v7532
      %v8198 = vsel %vm8188, %v8165, %v7534
      %v8199 = vsel %vm8188, %v8166, %v7536
      %v8200 = vsel %vm8188, %v8167, %v7538
      %v8201 = vsel %vm8188, %v8168, %v7540
      %v8202 = vsel %vm8188, %v8169, %v7542
      %v8203 = vsel %vm8188, %v8170, %v7544
      %v8204 = vsel %vm8188, %v8171, %v7546
      %v8205 = vsel %vm8188, %v8172, %v7548
      %v8206 = vsel %vm8188, %v8173, %v7550
      %v8207 = vsel %vm8188, %v8174, %v7552
      %v8208 = vsel %vm8188, %v8175, %v7554
      %v8209 = vsel %vm8188, %v8176, %v7556
      %v8210 = vsel %vm8188, %v8177, %v7558
      %v8211 = vsel %vm8188, %v8178, %v7560
      %v8212 = vsel %vm8188, %v8179, %v7562
      %v8213 = vsel %vm8188, %v8180, %v7564
      %v8214 = vsel %vm8188, %v8181, %v7566
      %v8215 = vsel %vm8188, %v8182, %v7568
      %v8216 = vsel %vm8188, %v8183, %v7570
      %v8217 = vsel %vm8188, %v8184, %v7572
      %v8218 = vsel %vm8188, %v8185, %v7574
      %v8219 = vsel %vm8188, %v8186, %v7576
      %v8220 = vsel %vm8188, %v8187, %v7578
      %vm8221 = vcmask 261120
      %v8222 = vsel %vm8221, %v8189, %v7644
      %v8223 = vsel %vm8221, %v8190, %v7646
      %v8224 = vsel %vm8221, %v8191, %v7648
      %v8225 = vsel %vm8221, %v8192, %v7650
      %v8226 = vsel %vm8221, %v8193, %v7652
      %v8227 = vsel %vm8221, %v8194, %v7654
      %v8228 = vsel %vm8221, %v8195, %v7656
      %v8229 = vsel %vm8221, %v8196, %v7658
      %v8230 = vsel %vm8221, %v8197, %v7660
      %v8231 = vsel %vm8221, %v8198, %v7662
      %v8232 = vsel %vm8221, %v8199, %v7664
      %v8233 = vsel %vm8221, %v8200, %v7666
      %v8234 = vsel %vm8221, %v8201, %v7668
      %v8235 = vsel %vm8221, %v8202, %v7670
      %v8236 = vsel %vm8221, %v8203, %v7672
      %v8237 = vsel %vm8221, %v8204, %v7674
      %v8238 = vsel %vm8221, %v8205, %v7676
      %v8239 = vsel %vm8221, %v8206, %v7678
      %v8240 = vsel %vm8221, %v8207, %v7680
      %v8241 = vsel %vm8221, %v8208, %v7682
      %v8242 = vsel %vm8221, %v8209, %v7684
      %v8243 = vsel %vm8221, %v8210, %v7686
      %v8244 = vsel %vm8221, %v8211, %v7688
      %v8245 = vsel %vm8221, %v8212, %v7690
      %v8246 = vsel %vm8221, %v8213, %v7692
      %v8247 = vsel %vm8221, %v8214, %v7694
      %v8248 = vsel %vm8221, %v8215, %v7696
      %v8249 = vsel %vm8221, %v8216, %v7698
      %v8250 = vsel %vm8221, %v8217, %v7700
      %v8251 = vsel %vm8221, %v8218, %v7702
      %v8252 = vsel %vm8221, %v8219, %v7704
      %v8253 = vsel %vm8221, %v8220, %v7706
      %vm8254 = vcmask 326656
      %v8255 = vsel %vm8254, %v8222, %v7772
      %v8256 = vsel %vm8254, %v8223, %v7774
      %v8257 = vsel %vm8254, %v8224, %v7776
      %v8258 = vsel %vm8254, %v8225, %v7778
      %v8259 = vsel %vm8254, %v8226, %v7780
      %v8260 = vsel %vm8254, %v8227, %v7782
      %v8261 = vsel %vm8254, %v8228, %v7784
      %v8262 = vsel %vm8254, %v8229, %v7786
      %v8263 = vsel %vm8254, %v8230, %v7788
      %v8264 = vsel %vm8254, %v8231, %v7790
      %v8265 = vsel %vm8254, %v8232, %v7792
      %v8266 = vsel %vm8254, %v8233, %v7794
      %v8267 = vsel %vm8254, %v8234, %v7796
      %v8268 = vsel %vm8254, %v8235, %v7798
      %v8269 = vsel %vm8254, %v8236, %v7800
      %v8270 = vsel %vm8254, %v8237, %v7802
      %v8271 = vsel %vm8254, %v8238, %v7804
      %v8272 = vsel %vm8254, %v8239, %v7806
      %v8273 = vsel %vm8254, %v8240, %v7808
      %v8274 = vsel %vm8254, %v8241, %v7810
      %v8275 = vsel %vm8254, %v8242, %v7812
      %v8276 = vsel %vm8254, %v8243, %v7814
      %v8277 = vsel %vm8254, %v8244, %v7816
      %v8278 = vsel %vm8254, %v8245, %v7818
      %v8279 = vsel %vm8254, %v8246, %v7820
      %v8280 = vsel %vm8254, %v8247, %v7822
      %v8281 = vsel %vm8254, %v8248, %v7824
      %v8282 = vsel %vm8254, %v8249, %v7826
      %v8283 = vsel %vm8254, %v8250, %v7828
      %v8284 = vsel %vm8254, %v8251, %v7830
      %v8285 = vsel %vm8254, %v8252, %v7832
      %v8286 = vsel %vm8254, %v8253, %v7834
      %vm8287 = vcmask 392192
      %v8288 = vsel %vm8287, %v8255, %v7900
      %v8289 = vsel %vm8287, %v8256, %v7902
      %v8290 = vsel %vm8287, %v8257, %v7904
      %v8291 = vsel %vm8287, %v8258, %v7906
      %v8292 = vsel %vm8287, %v8259, %v7908
      %v8293 = vsel %vm8287, %v8260, %v7910
      %v8294 = vsel %vm8287, %v8261, %v7912
      %v8295 = vsel %vm8287, %v8262, %v7914
      %v8296 = vsel %vm8287, %v8263, %v7916
      %v8297 = vsel %vm8287, %v8264, %v7918
      %v8298 = vsel %vm8287, %v8265, %v7920
      %v8299 = vsel %vm8287, %v8266, %v7922
      %v8300 = vsel %vm8287, %v8267, %v7924
      %v8301 = vsel %vm8287, %v8268, %v7926
      %v8302 = vsel %vm8287, %v8269, %v7928
      %v8303 = vsel %vm8287, %v8270, %v7930
      %v8304 = vsel %vm8287, %v8271, %v7932
      %v8305 = vsel %vm8287, %v8272, %v7934
      %v8306 = vsel %vm8287, %v8273, %v7936
      %v8307 = vsel %vm8287, %v8274, %v7938
      %v8308 = vsel %vm8287, %v8275, %v7940
      %v8309 = vsel %vm8287, %v8276, %v7942
      %v8310 = vsel %vm8287, %v8277, %v7944
      %v8311 = vsel %vm8287, %v8278, %v7946
      %v8312 = vsel %vm8287, %v8279, %v7948
      %v8313 = vsel %vm8287, %v8280, %v7950
      %v8314 = vsel %vm8287, %v8281, %v7952
      %v8315 = vsel %vm8287, %v8282, %v7954
      %v8316 = vsel %vm8287, %v8283, %v7956
      %v8317 = vsel %vm8287, %v8284, %v7958
      %v8318 = vsel %vm8287, %v8285, %v7960
      %v8319 = vsel %vm8287, %v8286, %v7962
      %vm8320 = vcmask 457728
      %v8321 = vsel %vm8320, %v8288, %v8028
      %v8322 = vsel %vm8320, %v8289, %v8030
      %v8323 = vsel %vm8320, %v8290, %v8032
      %v8324 = vsel %vm8320, %v8291, %v8034
      %v8325 = vsel %vm8320, %v8292, %v8036
      %v8326 = vsel %vm8320, %v8293, %v8038
      %v8327 = vsel %vm8320, %v8294, %v8040
      %v8328 = vsel %vm8320, %v8295, %v8042
      %v8329 = vsel %vm8320, %v8296, %v8044
      %v8330 = vsel %vm8320, %v8297, %v8046
      %v8331 = vsel %vm8320, %v8298, %v8048
      %v8332 = vsel %vm8320, %v8299, %v8050
      %v8333 = vsel %vm8320, %v8300, %v8052
      %v8334 = vsel %vm8320, %v8301, %v8054
      %v8335 = vsel %vm8320, %v8302, %v8056
      %v8336 = vsel %vm8320, %v8303, %v8058
      %v8337 = vsel %vm8320, %v8304, %v8060
      %v8338 = vsel %vm8320, %v8305, %v8062
      %v8339 = vsel %vm8320, %v8306, %v8064
      %v8340 = vsel %vm8320, %v8307, %v8066
      %v8341 = vsel %vm8320, %v8308, %v8068
      %v8342 = vsel %vm8320, %v8309, %v8070
      %v8343 = vsel %vm8320, %v8310, %v8072
      %v8344 = vsel %vm8320, %v8311, %v8074
      %v8345 = vsel %vm8320, %v8312, %v8076
      %v8346 = vsel %vm8320, %v8313, %v8078
      %v8347 = vsel %vm8320, %v8314, %v8080
      %v8348 = vsel %vm8320, %v8315, %v8082
      %v8349 = vsel %vm8320, %v8316, %v8084
      %v8350 = vsel %vm8320, %v8317, %v8086
      %v8351 = vsel %vm8320, %v8318, %v8088
      %v8352 = vsel %vm8320, %v8319, %v8090
      %v8353 = vpack.c.bf16 %v8322, %v8321
      %v8354 = vpack.c.bf16 %v8324, %v8323
      %v8355 = vpack.c.bf16 %v8326, %v8325
      %v8356 = vpack.c.bf16 %v8328, %v8327
      %v8357 = vpack.c.bf16 %v8330, %v8329
      %v8358 = vpack.c.bf16 %v8332, %v8331
      %v8359 = vpack.c.bf16 %v8334, %v8333
      %v8360 = vpack.c.bf16 %v8336, %v8335
      %v8361 = vpack.c.bf16 %v8338, %v8337
      %v8362 = vpack.c.bf16 %v8340, %v8339
      %v8363 = vpack.c.bf16 %v8342, %v8341
      %v8364 = vpack.c.bf16 %v8344, %v8343
      %v8365 = vpack.c.bf16 %v8346, %v8345
      %v8366 = vpack.c.bf16 %v8348, %v8347
      %v8367 = vpack.c.bf16 %v8350, %v8349
      %v8368 = vpack.c.bf16 %v8352, %v8351
      %v8369 = vld [vmem:[%s3] sm:$0xf]
      %v8370 = vld [vmem:[%s3 + $0x4] sm:$0xf]
      %v8371 = vld [vmem:[%s3 + $0x8] sm:$0xf]
      %v8372 = vld [vmem:[%s3 + $0xc] sm:$0xf]
      %v8373 = vld [vmem:[%s3 + $0x10] sm:$0xf]
      %v8374 = vld [vmem:[%s3 + $0x14] sm:$0xf]
      %v8375 = vld [vmem:[%s3 + $0x18] sm:$0xf]
      %v8376 = vld [vmem:[%s3 + $0x1c] sm:$0xf]
      %v8377 = vld [vmem:[%s4] sm:$0x1]
      %v8379 = vlaneseq
      %v8380 = vshrl.u32 %v8379, 7
      %v8381 = vsub.s32 0, %v8380
      %v8382 = vrot.slane %v8377, %v8381
      %v8392 = vunpack.c.l.b16 %v8369
      %v8393 = vunpack.c.l.b16 %v8370
      %v8394 = vunpack.c.l.b16 %v8371
      %v8395 = vunpack.c.l.b16 %v8372
      %v8396 = vunpack.c.l.b16 %v8373
      %v8397 = vunpack.c.l.b16 %v8374
      %v8398 = vunpack.c.l.b16 %v8375
      %v8399 = vunpack.c.l.b16 %v8376
      %v8400 = vpack.c.b16 %v8393, %v8392
      %v8401 = vpack.c.b16 %v8395, %v8394
      %v8402 = vpack.c.b16 %v8397, %v8396
      %v8403 = vpack.c.b16 %v8399, %v8398
      %v8409 = vsel %vm675, %v8353, 0
      %v8412 = vsel %vm675, %v8354, 0
      %v8415 = vsel %vm675, %v8355, 0
      %v8418 = vsel %vm675, %v8356, 0
      %v8421 = vsel %vm675, %v8357, 0
      %v8424 = vsel %vm675, %v8358, 0
      %v8427 = vsel %vm675, %v8359, 0
      %v8430 = vsel %vm675, %v8360, 0
      %v8433 = vsel %vm675, %v8361, 0
      %v8436 = vsel %vm675, %v8362, 0
      %v8439 = vsel %vm675, %v8363, 0
      %v8442 = vsel %vm675, %v8364, 0
      %v8445 = vsel %vm675, %v8365, 0
      %v8448 = vsel %vm675, %v8366, 0
      %v8451 = vsel %vm675, %v8367, 0
      %v8454 = vsel %vm675, %v8368, 0
      %8456 = vmatprep.subr.bf16.mxu0 0
      %8457 = vmatpush1.bf16.msra.mxu0 %v8400
      %8458 = vmatprep.subr.bf16.mxu0 0
      %8459 = vmatpush1.bf16.msra.mxu0 %v8401
      %8460 = vmatprep.subr.bf16.mxu0 0
      %8461 = vmatpush1.bf16.msra.mxu0 %v8402
      %8462 = vmatprep.subr.bf16.mxu0 0
      %8463 = vmatpush1.bf16.msra.mxu0 %v8403
      %8464 = vmatprep.subr.bf16.mxu0 0
      %8465 = vmatpush1.bf16.msra.mxu0 0
      %8466 = vmatprep.subr.bf16.mxu0 0
      %8467 = vmatpush1.bf16.msra.mxu0 0
      %8468 = vmatprep.subr.bf16.mxu0 0
      %8469 = vmatpush1.bf16.msra.mxu0 0
      %8470 = vmatprep.subr.bf16.mxu0 0
      %8471 = vmatpush1.bf16.msra.mxu0 0
      %8472 = vmatprep.subr.bf16.mxu0 0
      %8473 = vmatpush1.bf16.msra.mxu0 0
      %8474 = vmatprep.subr.bf16.mxu0 0
      %8475 = vmatpush1.bf16.msra.mxu0 0
      %8476 = vmatprep.subr.bf16.mxu0 0
      %8477 = vmatpush1.bf16.msra.mxu0 0
      %8478 = vmatprep.subr.bf16.mxu0 0
      %8479 = vmatpush1.bf16.msra.mxu0 0
      %8480 = vmatprep.subr.bf16.mxu0 0
      %8481 = vmatpush1.bf16.msra.mxu0 0
      %8482 = vmatprep.subr.bf16.mxu0 0
      %8483 = vmatpush1.bf16.msra.mxu0 0
      %8484 = vmatprep.subr.bf16.mxu0 0
      %8485 = vmatpush1.bf16.msra.mxu0 0
      %8486 = vmatprep.subr.bf16.mxu0 0
      %8487 = vmatpush1.bf16.msra.mxu0 0
      %8488 = vmatprep.mubr.bf16.mxu0 0
      %8489 = vmatmul.mubr.bf16.gmra.mrb[0].mxu0 %v8409
      %v8490 = vpop.f32.mrb[0].mxu0
      %v8491 = vadd.f32 %v8382, %v8490
      %v8492 = vpop.f32.mrb[0].mxu0
      %v8493 = vpop.f32.mrb[0].mxu0
      %v8494 = vadd.f32 %v8382, %v8493
      %v8495 = vpop.f32.mrb[0].mxu0
      %8496 = vmatprep.mubr.bf16.mxu0 0
      %8497 = vmatmul.mubr.bf16.gmra.mrb[0].mxu0 %v8412
      %v8498 = vpop.f32.mrb[0].mxu0
      %v8499 = vadd.f32 %v8382, %v8498
      %v8500 = vpop.f32.mrb[0].mxu0
      %v8501 = vpop.f32.mrb[0].mxu0
      %v8502 = vadd.f32 %v8382, %v8501
      %v8503 = vpop.f32.mrb[0].mxu0
      %8504 = vmatprep.mubr.bf16.mxu0 0
      %8505 = vmatmul.mubr.bf16.gmra.mrb[0].mxu0 %v8415
      %v8506 = vpop.f32.mrb[0].mxu0
      %v8507 = vadd.f32 %v8382, %v8506
      %v8508 = vpop.f32.mrb[0].mxu0
      %v8509 = vpop.f32.mrb[0].mxu0
      %v8510 = vadd.f32 %v8382, %v8509
      %v8511 = vpop.f32.mrb[0].mxu0
      %8512 = vmatprep.mubr.bf16.mxu0 0
      %8513 = vmatmul.mubr.bf16.gmra.mrb[0].mxu0 %v8418
      %v8514 = vpop.f32.mrb[0].mxu0
      %v8515 = vadd.f32 %v8382, %v8514
      %v8516 = vpop.f32.mrb[0].mxu0
      %v8517 = vpop.f32.mrb[0].mxu0
      %v8518 = vadd.f32 %v8382, %v8517
      %v8519 = vpop.f32.mrb[0].mxu0
      %8520 = vmatprep.mubr.bf16.mxu0 0
      %8521 = vmatmul.mubr.bf16.gmra.mrb[0].mxu0 %v8421
      %v8522 = vpop.f32.mrb[0].mxu0
      %v8523 = vadd.f32 %v8382, %v8522
      %v8524 = vpop.f32.mrb[0].mxu0
      %v8525 = vpop.f32.mrb[0].mxu0
      %v8526 = vadd.f32 %v8382, %v8525
      %v8527 = vpop.f32.mrb[0].mxu0
      %8528 = vmatprep.mubr.bf16.mxu0 0
      %8529 = vmatmul.mubr.bf16.gmra.mrb[0].mxu0 %v8424
      %v8530 = vpop.f32.mrb[0].mxu0
      %v8531 = vadd.f32 %v8382, %v8530
      %v8532 = vpop.f32.mrb[0].mxu0
      %v8533 = vpop.f32.mrb[0].mxu0
      %v8534 = vadd.f32 %v8382, %v8533
      %v8535 = vpop.f32.mrb[0].mxu0
      %8536 = vmatprep.mubr.bf16.mxu0 0
      %8537 = vmatmul.mubr.bf16.gmra.mrb[0].mxu0 %v8427
      %v8538 = vpop.f32.mrb[0].mxu0
      %v8539 = vadd.f32 %v8382, %v8538
      %v8540 = vpop.f32.mrb[0].mxu0
      %v8541 = vpop.f32.mrb[0].mxu0
      %v8542 = vadd.f32 %v8382, %v8541
      %v8543 = vpop.f32.mrb[0].mxu0
      %8544 = vmatprep.mubr.bf16.mxu0 0
      %8545 = vmatmul.mubr.bf16.gmra.mrb[0].mxu0 %v8430
      %v8546 = vpop.f32.mrb[0].mxu0
      %v8547 = vadd.f32 %v8382, %v8546
      %v8548 = vpop.f32.mrb[0].mxu0
      %v8549 = vpop.f32.mrb[0].mxu0
      %v8550 = vadd.f32 %v8382, %v8549
      %v8551 = vpop.f32.mrb[0].mxu0
      %8552 = vmatprep.mubr.bf16.mxu0 0
      %8553 = vmatmul.mubr.bf16.gmra.mrb[0].mxu0 %v8433
      %v8554 = vpop.f32.mrb[0].mxu0
      %v8555 = vadd.f32 %v8382, %v8554
      %v8556 = vpop.f32.mrb[0].mxu0
      %v8557 = vpop.f32.mrb[0].mxu0
      %v8558 = vadd.f32 %v8382, %v8557
      %v8559 = vpop.f32.mrb[0].mxu0
      %8560 = vmatprep.mubr.bf16.mxu0 0
      %8561 = vmatmul.mubr.bf16.gmra.mrb[0].mxu0 %v8436
      %v8562 = vpop.f32.mrb[0].mxu0
      %v8563 = vadd.f32 %v8382, %v8562
      %v8564 = vpop.f32.mrb[0].mxu0
      %v8565 = vpop.f32.mrb[0].mxu0
      %v8566 = vadd.f32 %v8382, %v8565
      %v8567 = vpop.f32.mrb[0].mxu0
      %8568 = vmatprep.mubr.bf16.mxu0 0
      %8569 = vmatmul.mubr.bf16.gmra.mrb[0].mxu0 %v8439
      %v8570 = vpop.f32.mrb[0].mxu0
      %v8571 = vadd.f32 %v8382, %v8570
      %v8572 = vpop.f32.mrb[0].mxu0
      %v8573 = vpop.f32.mrb[0].mxu0
      %v8574 = vadd.f32 %v8382, %v8573
      %v8575 = vpop.f32.mrb[0].mxu0
      %8576 = vmatprep.mubr.bf16.mxu0 0
      %8577 = vmatmul.mubr.bf16.gmra.mrb[0].mxu0 %v8442
      %v8578 = vpop.f32.mrb[0].mxu0
      %v8579 = vadd.f32 %v8382, %v8578
      %v8580 = vpop.f32.mrb[0].mxu0
      %v8581 = vpop.f32.mrb[0].mxu0
      %v8582 = vadd.f32 %v8382, %v8581
      %v8583 = vpop.f32.mrb[0].mxu0
      %8584 = vmatprep.mubr.bf16.mxu0 0
      %8585 = vmatmul.mubr.bf16.gmra.mrb[0].mxu0 %v8445
      %v8586 = vpop.f32.mrb[0].mxu0
      %v8587 = vadd.f32 %v8382, %v8586
      %v8588 = vpop.f32.mrb[0].mxu0
      %v8589 = vpop.f32.mrb[0].mxu0
      %v8590 = vadd.f32 %v8382, %v8589
      %v8591 = vpop.f32.mrb[0].mxu0
      %8592 = vmatprep.mubr.bf16.mxu0 0
      %8593 = vmatmul.mubr.bf16.gmra.mrb[0].mxu0 %v8448
      %v8594 = vpop.f32.mrb[0].mxu0
      %v8595 = vadd.f32 %v8382, %v8594
      %v8596 = vpop.f32.mrb[0].mxu0
      %v8597 = vpop.f32.mrb[0].mxu0
      %v8598 = vadd.f32 %v8382, %v8597
      %v8599 = vpop.f32.mrb[0].mxu0
      %8600 = vmatprep.mubr.bf16.mxu0 0
      %8601 = vmatmul.mubr.bf16.gmra.mrb[0].mxu0 %v8451
      %v8602 = vpop.f32.mrb[0].mxu0
      %v8603 = vadd.f32 %v8382, %v8602
      %v8604 = vpop.f32.mrb[0].mxu0
      %v8605 = vpop.f32.mrb[0].mxu0
      %v8606 = vadd.f32 %v8382, %v8605
      %v8607 = vpop.f32.mrb[0].mxu0
      %8608 = vmatprep.mubr.bf16.mxu0 0
      %8609 = vmatmul.mubr.bf16.gmra.mrb[0].mxu0 %v8454
      %v8610 = vpop.f32.mrb[0].mxu0
      %v8611 = vadd.f32 %v8382, %v8610
      %v8612 = vpop.f32.mrb[0].mxu0
      %v8613 = vpop.f32.mrb[0].mxu0
      %v8614 = vadd.f32 %v8382, %v8613
      %v8615 = vpop.f32.mrb[0].mxu0
      %8616 = vdwg.mxu0
      %8617 = vst.msk [vmem:[%s302] sm:$0xff] %vm675, %v8491
      %8618 = vst.msk [vmem:[%s302 + $0x8] sm:$0xff] %vm675, %v8494
      %8619 = vst.msk [vmem:[%s302 + $0x10] sm:$0xff] %vm675, %v8499
      %8620 = vst.msk [vmem:[%s302 + $0x18] sm:$0xff] %vm675, %v8502
      %8621 = vst.msk [vmem:[%s302 + $0x20] sm:$0xff] %vm675, %v8507
      %8622 = vst.msk [vmem:[%s302 + $0x28] sm:$0xff] %vm675, %v8510
      %8623 = vst.msk [vmem:[%s302 + $0x30] sm:$0xff] %vm675, %v8515
      %8624 = vst.msk [vmem:[%s302 + $0x38] sm:$0xff] %vm675, %v8518
      %8625 = vst.msk [vmem:[%s302 + $0x40] sm:$0xff] %vm675, %v8523
      %8626 = vst.msk [vmem:[%s302 + $0x48] sm:$0xff] %vm675, %v8526
      %8627 = vst.msk [vmem:[%s302 + $0x50] sm:$0xff] %vm675, %v8531
      %8628 = vst.msk [vmem:[%s302 + $0x58] sm:$0xff] %vm675, %v8534
      %8629 = vst.msk [vmem:[%s302 + $0x60] sm:$0xff] %vm675, %v8539
      %8630 = vst.msk [vmem:[%s302 + $0x68] sm:$0xff] %vm675, %v8542
      %8631 = vst.msk [vmem:[%s302 + $0x70] sm:$0xff] %vm675, %v8547
      %8632 = vst.msk [vmem:[%s302 + $0x78] sm:$0xff] %vm675, %v8550
      %8633 = vst.msk [vmem:[%s302 + $0x80] sm:$0xff] %vm675, %v8555
      %8634 = vst.msk [vmem:[%s302 + $0x88] sm:$0xff] %vm675, %v8558
      %8635 = vst.msk [vmem:[%s302 + $0x90] sm:$0xff] %vm675, %v8563
      %8636 = vst.msk [vmem:[%s302 + $0x98] sm:$0xff] %vm675, %v8566
      %8637 = vst.msk [vmem:[%s302 + $0xa0] sm:$0xff] %vm675, %v8571
      %8638 = vst.msk [vmem:[%s302 + $0xa8] sm:$0xff] %vm675, %v8574
      %8639 = vst.msk [vmem:[%s302 + $0xb0] sm:$0xff] %vm675, %v8579
      %8640 = vst.msk [vmem:[%s302 + $0xb8] sm:$0xff] %vm675, %v8582
      %8641 = vst.msk [vmem:[%s302 + $0xc0] sm:$0xff] %vm675, %v8587
      %8642 = vst.msk [vmem:[%s302 + $0xc8] sm:$0xff] %vm675, %v8590
      %8643 = vst.msk [vmem:[%s302 + $0xd0] sm:$0xff] %vm675, %v8595
      %8644 = vst.msk [vmem:[%s302 + $0xd8] sm:$0xff] %vm675, %v8598
      %8645 = vst.msk [vmem:[%s302 + $0xe0] sm:$0xff] %vm675, %v8603
      %8646 = vst.msk [vmem:[%s302 + $0xe8] sm:$0xff] %vm675, %v8606
      %8647 = vst.msk [vmem:[%s302 + $0xf0] sm:$0xff] %vm675, %v8611
      %8648 = vst.msk [vmem:[%s302 + $0xf8] sm:$0xff] %vm675, %v8614
      %s8649 = smul.u32 32, %s21
      %p8650 = scmp.lt.s32.totalorder %s20, 1
      %s8651 = scalar_select %p8650, %s20, 1
      %p8652 = scmp.lt.s32.totalorder %s8649, 31
      %s8653 = scalar_select %p8652, %s8649, 31
      %s8654 = smul.addr %s8651, 32
      %s8655 = sadd.s32 %s8653, %s8654
      %s8656 = smul.addr %s8655, 8
      %s8657 = scalar_lea.vmem %s5, %s8656
      // Predicated region
      $region41: #{attention_forward.7} parent=39 // pred_check
        %p8658 = pneg %p170
      $region42: #{attention_forward.7} parent=39 // pred_check_branch
        %8660 = sbr.rel (%p8658) target = $region44
      $region43: #{attention_forward.7} parent=39 // pred_region
        %s8661 = smul.u32 32, %s21
      $region44: #{attention_forward.7} parent=39 // pred_fallthru
        _
    $region40: #{attention_forward.7} parent=5 // pred_fallthru
      _
    %p8662 = scmp.le.s32.totalorder 2, %s11
    // Predicated region
    $region45: #{attention_forward.7} parent=5 // pred_check
      %p8663 = pneg %p8662
    $region46: #{attention_forward.7} parent=5 // pred_check_branch
      %8665 = sbr.rel (%p8663) target = $region48
    $region47: #{attention_forward.7} parent=5 // pred_region
      %s8666 = ssub.s32 %s11, 2
      // Predicated region
      $region49: #{attention_forward.7} parent=47 // pred_check
        %p8667 = pneg %p176
      $region50: #{attention_forward.7} parent=47 // pred_check_branch
        %8669 = sbr.rel (%p8667) target = $region52
      $region51: #{attention_forward.7} parent=47 // pred_region
        %s8670 = smul.u32 32, %s23
        %p8671 = scmp.lt.s32.totalorder %s22, 1
        %s8672 = scalar_select %p8671, %s22, 1
        %p8673 = scmp.lt.s32.totalorder %s8670, 31
        %s8674 = scalar_select %p8673, %s8670, 31
        %s8675 = smul.addr %s8672, 32
        %s8676 = sadd.s32 %s8674, %s8675
        %s8677 = smul.addr %s8676, 8
        %s8678 = scalar_lea.vmem %s5, %s8677
      $region52: #{attention_forward.7} parent=47 // pred_fallthru
        _
    $region48: #{attention_forward.7} parent=5 // pred_fallthru
      _
  $region6: #{attention_forward.7} parent=0 // loop_footer
    %s15 = sadd.s32 1, %s11
  $region7: #{attention_forward.7} parent=0 // loop_footer_branch
    %10 = sbr.rel target = $region3
  $region8: #{attention_forward.7} parent=0 // loop_exit
    _

</llo_original>
